<compile_context>
chip_gen: v7x
topology: tpu7x:2x2x1
jax: 0.10.0
libtpu: 0.0.40
codegen_flags: <defaults>
</compile_context>

<pallas_src>
import functools

import jax
import jax.numpy as jnp
from jax import lax
from jax.experimental import pallas as pl
from jax.experimental.pallas import tpu as pltpu

# The kernel is weight-bandwidth bound; flip to jnp.bfloat16 for ~2x at the
# HBM roofline (MXU still accumulates in f32, epilogue stays f32).  Kept f32
# by default to match torch.float32 forward semantics exactly.
WEIGHT_DTYPE = jnp.float32


def _rup(n, m):
    return ((n + m - 1) // m) * m


def _pad_to(a, shape):
    return jnp.pad(a, [(0, s - d) for d, s in zip(a.shape, shape)])


# ---------------------------------------------------------------------------
# Fused Linear + activation kernel (tiled matmul, K-reduction accumulator)
# ---------------------------------------------------------------------------
def _linear_act_kernel(x_ref, w_ref, b_ref, o_ref, acc_ref, *, activation):
    k = pl.program_id(2)

    @pl.when(k == 0)
    def _():
        acc_ref[...] = jnp.zeros_like(acc_ref)

    acc_ref[...] += jnp.dot(
        x_ref[...], w_ref[...], preferred_element_type=jnp.float32
    )

    @pl.when(k == pl.num_programs(2) - 1)
    def _():
        y = acc_ref[...] + b_ref[...].astype(jnp.float32)
        if activation == "gelu":
            # exact (erf-based) GELU, matches torch.nn.GELU() default
            y = 0.5 * y * (1.0 + lax.erf(y * 0.7071067811865476))
        elif activation == "sigmoid":
            y = jax.nn.sigmoid(y)
        o_ref[...] = y.astype(o_ref.dtype)


def _pick_tk(K):
    """Largest K-chunk in {1024,512,256,128} that divides the padded K."""
    for cand in (1024, 512, 256, 128):
        if K % cand == 0:
            return cand
    return K


def fused_linear(x, w, b, activation, *, vmem_limit_bytes=48 * 1024 * 1024):
    """y = act(x @ w + b). x:(M,K) w:(K,N) b:(1,N); all pre-padded to
    8/128-multiples. Big tiles: one M tile, full-or-half N tile, tk<=1024."""
    M, K = x.shape
    Kw, N = w.shape
    assert Kw == K and b.shape == (1, N)
    assert M % 8 == 0 and K % 128 == 0 and N % 128 == 0

    # Batch is tiny (M == 8 after padding) -> single M tile.
    # TODO(synk): if batch ever grows large, tile M (tm ~128-256) and make it
    # the leading parallel axis; today the kernel is HBM-bound so M=8 is fine.
    tm = M
    # Full output width per tile unless the layer is wide; wide layers split N
    # into 2 "parallel" programs so v7x's 2 TensorCores each stream half the
    # weights (costs one extra ~0.35us grid step on single-TC v5e/v6e).
    tn = N // 2 if N >= 2048 else N
    tk = _pick_tk(K)

    grid = (M // tm, N // tn, K // tk)
    kernel = functools.partial(_linear_act_kernel, activation=activation)

    return pl.pallas_call(
        kernel,
        out_shape=jax.ShapeDtypeStruct((M, N), jnp.float32),
        grid_spec=pltpu.PrefetchScalarGridSpec(
            num_scalar_prefetch=0,
            grid=grid,
            in_specs=[
                pl.BlockSpec((tm, tk), lambda i, j, k: (i, k)),
                pl.BlockSpec((tk, tn), lambda i, j, k: (k, j)),
                pl.BlockSpec((1, tn), lambda i, j, k: (0, j)),
            ],
            out_specs=pl.BlockSpec((tm, tn), lambda i, j, k: (i, j)),
            scratch_shapes=[pltpu.VMEM((tm, tn), jnp.float32)],
        ),
        compiler_params=pltpu.CompilerParams(
            dimension_semantics=("parallel", "parallel", "arbitrary"),
            vmem_limit_bytes=vmem_limit_bytes,
        ),
    )(x, w, b)


# ---------------------------------------------------------------------------
# Model wrapper
# ---------------------------------------------------------------------------
def init_params(key, nchans, ntimes):
    """Deterministic torch-default uniform init. Weights stored as
    (in_features, out_features) == W^T and ZERO-PADDED ONCE here so the jitted
    forward never pads/copies the ~62 MB weight set again."""
    dims = [nchans * ntimes, 5000, 2500, 1000, 1]
    params = []
    for li, (din, dout) in enumerate(zip(dims[:-1], dims[1:])):
        kw, kb = jax.random.split(jax.random.fold_in(key, li))
        bound = 1.0 / (din ** 0.5)  # torch nn.Linear default uniform bound
        w = jax.random.uniform(kw, (din, dout), jnp.float32, -bound, bound)
        b = jax.random.uniform(kb, (1, dout), jnp.float32, -bound, bound)
        Kp, Np = _rup(din, 128), _rup(dout, 128)
        params.append((_pad_to(w, (Kp, Np)).astype(WEIGHT_DTYPE),
                       _pad_to(b, (1, Np)).astype(WEIGHT_DTYPE)))
    return params


@jax.jit
def my_nn_model_forward(x, params):
    """x: (B, nchans, ntimes) -> (B, 1), matching MyNNModel.forward."""
    B = x.shape[0]
    x2 = x.reshape(B, -1).astype(jnp.float32)  # flatten like torch
    Mp = _rup(B, 8)
    h = _pad_to(x2, (Mp, _rup(x2.shape[1], 128)))  # pad batch rows + K once

    activations = ("gelu", "gelu", "gelu", "sigmoid")
    for (w, b), act in zip(params, activations):
        # No inter-layer slice/re-pad: padded weight/bias cols are zero and
        # gelu(0)=0, so padded activation columns stay zero for the next layer
        # (whose extra weight rows are also zero).
        h = fused_linear(h, w, b, act)
    # final layer: real output is column 0, real batch rows only
    return h[:B, :1]


def _reference_forward(x, params):
    """Plain-XLA reference on the same padded params (for validation only)."""
    B = x.shape[0]
    h = x.reshape(B, -1).astype(jnp.float32)
    h = jnp.pad(h, ((0, 0), (0, params[0][0].shape[0] - h.shape[1])))
    for i, (w, b) in enumerate(params):
        h = h @ w.astype(jnp.float32) + b.astype(jnp.float32)
        h = jax.nn.gelu(h, approximate=False) if i < 3 else jax.nn.sigmoid(h)
    return h[:, :1]


if __name__ == "__main__":
    nchans, ntimes, batch = 4, 16, 2

    key = jax.random.PRNGKey(0)
    kx, kp = jax.random.split(key)
    x = jax.random.normal(kx, (batch, nchans, ntimes), dtype=jnp.float32)
    params = init_params(kp, nchans, ntimes)

    out = my_nn_model_forward(x, params)
    jax.block_until_ready(out)
    assert out.shape == (batch, 1)

    ref = _reference_forward(x, params)
    assert jnp.allclose(out, ref, atol=5e-3, rtol=5e-2), (out, ref)

    print("KERNEL_OK")
</pallas_src>

<mosaic_0001>
module attributes {stable_mosaic.version = 11 : i64} {
  func.func @_linear_act_kernel(%arg0: i32, %arg1: i32, %arg2: i32, %arg3: memref<8x1024xf32, #tpu.memory_space<vmem>>, %arg4: memref<1024x1280xf32, #tpu.memory_space<vmem>>, %arg5: memref<1x1280xf32, #tpu.memory_space<vmem>>, %arg6: memref<8x1280xf32, #tpu.memory_space<vmem>>, %arg7: memref<8x1280xf32, #tpu.memory_space<vmem>>) attributes {dimension_semantics = [#tpu.dimension_semantics<parallel>, #tpu.dimension_semantics<parallel>, #tpu.dimension_semantics<arbitrary>], iteration_bounds = array<i64: 1, 2, 5>, scalar_prefetch = 0 : i64, scratch_operands = 1 : i64, tpu.core_type = #tpu.core_type<tc>, window_params = [{transform_indices = @transform_0, window_bounds = array<i64: 8, 1024>}, {transform_indices = @transform_1, window_bounds = array<i64: 1024, 1280>}, {transform_indices = @transform_2, window_bounds = array<i64: 1, 1280>}, {transform_indices = @transform_3, window_bounds = array<i64: 8, 1280>}]} {
    %c0_i32 = arith.constant 0 : i32
    %0 = arith.cmpi eq, %arg2, %c0_i32 : i32
    %1 = arith.extui %0 : i1 to i32
    %c0_i32_0 = arith.constant 0 : i32
    %2 = arith.cmpi ne, %1, %c0_i32_0 : i32
    scf.if %2 {
      %cst_9 = arith.constant 0.000000e+00 : f32
      %12 = vector.broadcast %cst_9 : f32 to vector<8x1280xf32>
      %c0_10 = arith.constant 0 : index
      %c0_11 = arith.constant 0 : index
      %13 = vector.load %arg7[%c0_10, %c0_11] : memref<8x1280xf32, #tpu.memory_space<vmem>>, vector<8x1280xf32>
      tpu.vector_store %arg7[%c0_10, %c0_11], %12 {strides = array<i32>} : memref<8x1280xf32, #tpu.memory_space<vmem>>, vector<8x1280xf32>,
    } else {
    }
    %c0 = arith.constant 0 : index
    %c0_1 = arith.constant 0 : index
    %3 = vector.load %arg7[%c0, %c0_1] : memref<8x1280xf32, #tpu.memory_space<vmem>>, vector<8x1280xf32>
    %c0_2 = arith.constant 0 : index
    %c0_3 = arith.constant 0 : index
    %4 = vector.load %arg3[%c0_2, %c0_3] : memref<8x1024xf32, #tpu.memory_space<vmem>>, vector<8x1024xf32>
    %c0_4 = arith.constant 0 : index
    %c0_5 = arith.constant 0 : index
    %5 = vector.load %arg4[%c0_4, %c0_5] : memref<1024x1280xf32, #tpu.memory_space<vmem>>, vector<1024x1280xf32>
    %cst = arith.constant dense<0.000000e+00> : vector<8x1280xf32>
    %6 = tpu.matmul %4, %5, %cst {dimension_numbers = #tpu.dot_dimension_numbers<[1], [0], [0], [1], [0, 0, 1, 1], [], []>} : vector<8x1024xf32>, vector<1024x1280xf32>, vector<8x1280xf32> -> vector<8x1280xf32>
    %7 = arith.addf %3, %6 : vector<8x1280xf32>
    %c0_6 = arith.constant 0 : index
    %c0_7 = arith.constant 0 : index
    %8 = vector.load %arg7[%c0_6, %c0_7] : memref<8x1280xf32, #tpu.memory_space<vmem>>, vector<8x1280xf32>
    tpu.vector_store %arg7[%c0_6, %c0_7], %7 {strides = array<i32>} : memref<8x1280xf32, #tpu.memory_space<vmem>>, vector<8x1280xf32>,
    %c4_i32 = arith.constant 4 : i32
    %9 = arith.cmpi eq, %arg2, %c4_i32 : i32
    %10 = arith.extui %9 : i1 to i32
    %c0_i32_8 = arith.constant 0 : i32
    %11 = arith.cmpi ne, %10, %c0_i32_8 : i32
    scf.if %11 {
      %c0_9 = arith.constant 0 : index
      %c0_10 = arith.constant 0 : index
      %12 = vector.load %arg7[%c0_9, %c0_10] : memref<8x1280xf32, #tpu.memory_space<vmem>>, vector<8x1280xf32>
      %c0_11 = arith.constant 0 : index
      %c0_12 = arith.constant 0 : index
      %13 = vector.load %arg5[%c0_11, %c0_12] : memref<1x1280xf32, #tpu.memory_space<vmem>>, vector<1x1280xf32>
      %14 = vector.broadcast %13 : vector<1x1280xf32> to vector<8x1280xf32>
      %15 = arith.addf %12, %14 : vector<8x1280xf32>
      %cst_13 = arith.constant 5.000000e-01 : f32
      %16 = vector.broadcast %cst_13 : f32 to vector<8x1280xf32>
      %17 = arith.mulf %16, %15 : vector<8x1280xf32>
      %cst_14 = arith.constant 0.707106769 : f32
      %18 = vector.broadcast %cst_14 : f32 to vector<8x1280xf32>
      %19 = arith.mulf %15, %18 : vector<8x1280xf32>
      %20 = math.erf %19 : vector<8x1280xf32>
      %cst_15 = arith.constant 1.000000e+00 : f32
      %21 = vector.broadcast %cst_15 : f32 to vector<8x1280xf32>
      %22 = arith.addf %21, %20 : vector<8x1280xf32>
      %23 = arith.mulf %17, %22 : vector<8x1280xf32>
      %c0_16 = arith.constant 0 : index
      %c0_17 = arith.constant 0 : index
      %24 = vector.load %arg6[%c0_16, %c0_17] : memref<8x1280xf32, #tpu.memory_space<vmem>>, vector<8x1280xf32>
      tpu.vector_store %arg6[%c0_16, %c0_17], %23 {strides = array<i32>} : memref<8x1280xf32, #tpu.memory_space<vmem>>, vector<8x1280xf32>,
    } else {
    }
    return
  }
  func.func @transform_0(%arg0: i32, %arg1: i32, %arg2: i32) -> (i32, i32) {
    %c0_i32 = arith.constant 0 : i32
    return %arg0, %arg2 : i32, i32
  }
  func.func @transform_1(%arg0: i32, %arg1: i32, %arg2: i32) -> (i32, i32) {
    %c0_i32 = arith.constant 0 : i32
    return %arg2, %arg1 : i32, i32
  }
  func.func @transform_2(%arg0: i32, %arg1: i32, %arg2: i32) -> (i32, i32) {
    %c0_i32 = arith.constant 0 : i32
    %c0_i32_0 = arith.constant 0 : i32
    return %c0_i32, %arg1 : i32, i32
  }
  func.func @transform_3(%arg0: i32, %arg1: i32, %arg2: i32) -> (i32, i32) {
    %c0_i32 = arith.constant 0 : i32
    return %arg0, %arg1 : i32, i32
  }
}

module attributes {stable_mosaic.version = 11 : i64} {
  func.func @_linear_act_kernel(%arg0: i32, %arg1: i32, %arg2: i32, %arg3: memref<8x1024xf32, #tpu.memory_space<vmem>>, %arg4: memref<1024x128xf32, #tpu.memory_space<vmem>>, %arg5: memref<1x128xf32, #tpu.memory_space<vmem>>, %arg6: memref<8x128xf32, #tpu.memory_space<vmem>>, %arg7: memref<8x128xf32, #tpu.memory_space<vmem>>) attributes {dimension_semantics = [#tpu.dimension_semantics<parallel>, #tpu.dimension_semantics<parallel>, #tpu.dimension_semantics<arbitrary>], iteration_bounds = array<i64: 1, 1, 1>, scalar_prefetch = 0 : i64, scratch_operands = 1 : i64, tpu.core_type = #tpu.core_type<tc>, window_params = [{transform_indices = @transform_0, window_bounds = array<i64: 8, 1024>}, {transform_indices = @transform_1, window_bounds = array<i64: 1024, 128>}, {transform_indices = @transform_2, window_bounds = array<i64: 1, 128>}, {transform_indices = @transform_3, window_bounds = array<i64: 8, 128>}]} {
    %c0_i32 = arith.constant 0 : i32
    %0 = arith.cmpi eq, %arg2, %c0_i32 : i32
    %1 = arith.extui %0 : i1 to i32
    %c0_i32_0 = arith.constant 0 : i32
    %2 = arith.cmpi ne, %1, %c0_i32_0 : i32
    scf.if %2 {
      %cst_10 = arith.constant 0.000000e+00 : f32
      %12 = vector.broadcast %cst_10 : f32 to vector<8x128xf32>
      %c0_11 = arith.constant 0 : index
      %c0_12 = arith.constant 0 : index
      %13 = vector.load %arg7[%c0_11, %c0_12] : memref<8x128xf32, #tpu.memory_space<vmem>>, vector<8x128xf32>
      tpu.vector_store %arg7[%c0_11, %c0_12], %12 {strides = array<i32>} : memref<8x128xf32, #tpu.memory_space<vmem>>, vector<8x128xf32>,
    } else {
    }
    %c0 = arith.constant 0 : index
    %c0_1 = arith.constant 0 : index
    %3 = vector.load %arg7[%c0, %c0_1] : memref<8x128xf32, #tpu.memory_space<vmem>>, vector<8x128xf32>
    %c0_2 = arith.constant 0 : index
    %c0_3 = arith.constant 0 : index
    %4 = vector.load %arg3[%c0_2, %c0_3] : memref<8x1024xf32, #tpu.memory_space<vmem>>, vector<8x1024xf32>
    %c0_4 = arith.constant 0 : index
    %c0_5 = arith.constant 0 : index
    %5 = vector.load %arg4[%c0_4, %c0_5] : memref<1024x128xf32, #tpu.memory_space<vmem>>, vector<1024x128xf32>
    %cst = arith.constant dense<0.000000e+00> : vector<8x128xf32>
    %6 = tpu.matmul %4, %5, %cst {dimension_numbers = #tpu.dot_dimension_numbers<[1], [0], [0], [1], [0, 0, 1, 1], [], []>} : vector<8x1024xf32>, vector<1024x128xf32>, vector<8x128xf32> -> vector<8x128xf32>
    %7 = arith.addf %3, %6 : vector<8x128xf32>
    %c0_6 = arith.constant 0 : index
    %c0_7 = arith.constant 0 : index
    %8 = vector.load %arg7[%c0_6, %c0_7] : memref<8x128xf32, #tpu.memory_space<vmem>>, vector<8x128xf32>
    tpu.vector_store %arg7[%c0_6, %c0_7], %7 {strides = array<i32>} : memref<8x128xf32, #tpu.memory_space<vmem>>, vector<8x128xf32>,
    %c0_i32_8 = arith.constant 0 : i32
    %9 = arith.cmpi eq, %arg2, %c0_i32_8 : i32
    %10 = arith.extui %9 : i1 to i32
    %c0_i32_9 = arith.constant 0 : i32
    %11 = arith.cmpi ne, %10, %c0_i32_9 : i32
    scf.if %11 {
      %c0_10 = arith.constant 0 : index
      %c0_11 = arith.constant 0 : index
      %12 = vector.load %arg7[%c0_10, %c0_11] : memref<8x128xf32, #tpu.memory_space<vmem>>, vector<8x128xf32>
      %c0_12 = arith.constant 0 : index
      %c0_13 = arith.constant 0 : index
      %13 = vector.load %arg5[%c0_12, %c0_13] : memref<1x128xf32, #tpu.memory_space<vmem>>, vector<1x128xf32>
      %14 = vector.broadcast %13 : vector<1x128xf32> to vector<8x128xf32>
      %15 = arith.addf %12, %14 : vector<8x128xf32>
      %16 = arith.negf %15 : vector<8x128xf32>
      %17 = math.exp %16 : vector<8x128xf32>
      %cst_14 = arith.constant 1.000000e+00 : f32
      %18 = vector.broadcast %cst_14 : f32 to vector<8x128xf32>
      %19 = arith.addf %18, %17 : vector<8x128xf32>
      %20 = arith.divf %18, %19 : vector<8x128xf32>
      %c0_15 = arith.constant 0 : index
      %c0_16 = arith.constant 0 : index
      %21 = vector.load %arg6[%c0_15, %c0_16] : memref<8x128xf32, #tpu.memory_space<vmem>>, vector<8x128xf32>
      tpu.vector_store %arg6[%c0_15, %c0_16], %20 {strides = array<i32>} : memref<8x128xf32, #tpu.memory_space<vmem>>, vector<8x128xf32>,
    } else {
    }
    return
  }
  func.func @transform_0(%arg0: i32, %arg1: i32, %arg2: i32) -> (i32, i32) {
    %c0_i32 = arith.constant 0 : i32
    return %arg0, %arg2 : i32, i32
  }
  func.func @transform_1(%arg0: i32, %arg1: i32, %arg2: i32) -> (i32, i32) {
    %c0_i32 = arith.constant 0 : i32
    return %arg2, %arg1 : i32, i32
  }
  func.func @transform_2(%arg0: i32, %arg1: i32, %arg2: i32) -> (i32, i32) {
    %c0_i32 = arith.constant 0 : i32
    %c0_i32_0 = arith.constant 0 : i32
    return %c0_i32, %arg1 : i32, i32
  }
  func.func @transform_3(%arg0: i32, %arg1: i32, %arg2: i32) -> (i32, i32) {
    %c0_i32 = arith.constant 0 : i32
    return %arg0, %arg1 : i32, i32
  }
}

module attributes {stable_mosaic.version = 11 : i64} {
  func.func @_linear_act_kernel(%arg0: i32, %arg1: i32, %arg2: i32, %arg3: memref<8x128xf32, #tpu.memory_space<vmem>>, %arg4: memref<128x2560xf32, #tpu.memory_space<vmem>>, %arg5: memref<1x2560xf32, #tpu.memory_space<vmem>>, %arg6: memref<8x2560xf32, #tpu.memory_space<vmem>>, %arg7: memref<8x2560xf32, #tpu.memory_space<vmem>>) attributes {dimension_semantics = [#tpu.dimension_semantics<parallel>, #tpu.dimension_semantics<parallel>, #tpu.dimension_semantics<arbitrary>], iteration_bounds = array<i64: 1, 2, 1>, scalar_prefetch = 0 : i64, scratch_operands = 1 : i64, tpu.core_type = #tpu.core_type<tc>, window_params = [{transform_indices = @transform_0, window_bounds = array<i64: 8, 128>}, {transform_indices = @transform_1, window_bounds = array<i64: 128, 2560>}, {transform_indices = @transform_2, window_bounds = array<i64: 1, 2560>}, {transform_indices = @transform_3, window_bounds = array<i64: 8, 2560>}]} {
    %c0_i32 = arith.constant 0 : i32
    %0 = arith.cmpi eq, %arg2, %c0_i32 : i32
    %1 = arith.extui %0 : i1 to i32
    %c0_i32_0 = arith.constant 0 : i32
    %2 = arith.cmpi ne, %1, %c0_i32_0 : i32
    scf.if %2 {
      %cst_10 = arith.constant 0.000000e+00 : f32
      %12 = vector.broadcast %cst_10 : f32 to vector<8x2560xf32>
      %c0_11 = arith.constant 0 : index
      %c0_12 = arith.constant 0 : index
      %13 = vector.load %arg7[%c0_11, %c0_12] : memref<8x2560xf32, #tpu.memory_space<vmem>>, vector<8x2560xf32>
      tpu.vector_store %arg7[%c0_11, %c0_12], %12 {strides = array<i32>} : memref<8x2560xf32, #tpu.memory_space<vmem>>, vector<8x2560xf32>,
    } else {
    }
    %c0 = arith.constant 0 : index
    %c0_1 = arith.constant 0 : index
    %3 = vector.load %arg7[%c0, %c0_1] : memref<8x2560xf32, #tpu.memory_space<vmem>>, vector<8x2560xf32>
    %c0_2 = arith.constant 0 : index
    %c0_3 = arith.constant 0 : index
    %4 = vector.load %arg3[%c0_2, %c0_3] : memref<8x128xf32, #tpu.memory_space<vmem>>, vector<8x128xf32>
    %c0_4 = arith.constant 0 : index
    %c0_5 = arith.constant 0 : index
    %5 = vector.load %arg4[%c0_4, %c0_5] : memref<128x2560xf32, #tpu.memory_space<vmem>>, vector<128x2560xf32>
    %cst = arith.constant dense<0.000000e+00> : vector<8x2560xf32>
    %6 = tpu.matmul %4, %5, %cst {dimension_numbers = #tpu.dot_dimension_numbers<[1], [0], [0], [1], [0, 0, 1, 1], [], []>} : vector<8x128xf32>, vector<128x2560xf32>, vector<8x2560xf32> -> vector<8x2560xf32>
    %7 = arith.addf %3, %6 : vector<8x2560xf32>
    %c0_6 = arith.constant 0 : index
    %c0_7 = arith.constant 0 : index
    %8 = vector.load %arg7[%c0_6, %c0_7] : memref<8x2560xf32, #tpu.memory_space<vmem>>, vector<8x2560xf32>
    tpu.vector_store %arg7[%c0_6, %c0_7], %7 {strides = array<i32>} : memref<8x2560xf32, #tpu.memory_space<vmem>>, vector<8x2560xf32>,
    %c0_i32_8 = arith.constant 0 : i32
    %9 = arith.cmpi eq, %arg2, %c0_i32_8 : i32
    %10 = arith.extui %9 : i1 to i32
    %c0_i32_9 = arith.constant 0 : i32
    %11 = arith.cmpi ne, %10, %c0_i32_9 : i32
    scf.if %11 {
      %c0_10 = arith.constant 0 : index
      %c0_11 = arith.constant 0 : index
      %12 = vector.load %arg7[%c0_10, %c0_11] : memref<8x2560xf32, #tpu.memory_space<vmem>>, vector<8x2560xf32>
      %c0_12 = arith.constant 0 : index
      %c0_13 = arith.constant 0 : index
      %13 = vector.load %arg5[%c0_12, %c0_13] : memref<1x2560xf32, #tpu.memory_space<vmem>>, vector<1x2560xf32>
      %14 = vector.broadcast %13 : vector<1x2560xf32> to vector<8x2560xf32>
      %15 = arith.addf %12, %14 : vector<8x2560xf32>
      %cst_14 = arith.constant 5.000000e-01 : f32
      %16 = vector.broadcast %cst_14 : f32 to vector<8x2560xf32>
      %17 = arith.mulf %16, %15 : vector<8x2560xf32>
      %cst_15 = arith.constant 0.707106769 : f32
      %18 = vector.broadcast %cst_15 : f32 to vector<8x2560xf32>
      %19 = arith.mulf %15, %18 : vector<8x2560xf32>
      %20 = math.erf %19 : vector<8x2560xf32>
      %cst_16 = arith.constant 1.000000e+00 : f32
      %21 = vector.broadcast %cst_16 : f32 to vector<8x2560xf32>
      %22 = arith.addf %21, %20 : vector<8x2560xf32>
      %23 = arith.mulf %17, %22 : vector<8x2560xf32>
      %c0_17 = arith.constant 0 : index
      %c0_18 = arith.constant 0 : index
      %24 = vector.load %arg6[%c0_17, %c0_18] : memref<8x2560xf32, #tpu.memory_space<vmem>>, vector<8x2560xf32>
      tpu.vector_store %arg6[%c0_17, %c0_18], %23 {strides = array<i32>} : memref<8x2560xf32, #tpu.memory_space<vmem>>, vector<8x2560xf32>,
    } else {
    }
    return
  }
  func.func @transform_0(%arg0: i32, %arg1: i32, %arg2: i32) -> (i32, i32) {
    %c0_i32 = arith.constant 0 : i32
    return %arg0, %arg2 : i32, i32
  }
  func.func @transform_1(%arg0: i32, %arg1: i32, %arg2: i32) -> (i32, i32) {
    %c0_i32 = arith.constant 0 : i32
    return %arg2, %arg1 : i32, i32
  }
  func.func @transform_2(%arg0: i32, %arg1: i32, %arg2: i32) -> (i32, i32) {
    %c0_i32 = arith.constant 0 : i32
    %c0_i32_0 = arith.constant 0 : i32
    return %c0_i32, %arg1 : i32, i32
  }
  func.func @transform_3(%arg0: i32, %arg1: i32, %arg2: i32) -> (i32, i32) {
    %c0_i32 = arith.constant 0 : i32
    return %arg0, %arg1 : i32, i32
  }
}

module attributes {stable_mosaic.version = 11 : i64} {
  func.func @_linear_act_kernel(%arg0: i32, %arg1: i32, %arg2: i32, %arg3: memref<8x512xf32, #tpu.memory_space<vmem>>, %arg4: memref<512x1024xf32, #tpu.memory_space<vmem>>, %arg5: memref<1x1024xf32, #tpu.memory_space<vmem>>, %arg6: memref<8x1024xf32, #tpu.memory_space<vmem>>, %arg7: memref<8x1024xf32, #tpu.memory_space<vmem>>) attributes {dimension_semantics = [#tpu.dimension_semantics<parallel>, #tpu.dimension_semantics<parallel>, #tpu.dimension_semantics<arbitrary>], iteration_bounds = array<i64: 1, 1, 5>, scalar_prefetch = 0 : i64, scratch_operands = 1 : i64, tpu.core_type = #tpu.core_type<tc>, window_params = [{transform_indices = @transform_0, window_bounds = array<i64: 8, 512>}, {transform_indices = @transform_1, window_bounds = array<i64: 512, 1024>}, {transform_indices = @transform_2, window_bounds = array<i64: 1, 1024>}, {transform_indices = @transform_3, window_bounds = array<i64: 8, 1024>}]} {
    %c0_i32 = arith.constant 0 : i32
    %0 = arith.cmpi eq, %arg2, %c0_i32 : i32
    %1 = arith.extui %0 : i1 to i32
    %c0_i32_0 = arith.constant 0 : i32
    %2 = arith.cmpi ne, %1, %c0_i32_0 : i32
    scf.if %2 {
      %cst_9 = arith.constant 0.000000e+00 : f32
      %12 = vector.broadcast %cst_9 : f32 to vector<8x1024xf32>
      %c0_10 = arith.constant 0 : index
      %c0_11 = arith.constant 0 : index
      %13 = vector.load %arg7[%c0_10, %c0_11] : memref<8x1024xf32, #tpu.memory_space<vmem>>, vector<8x1024xf32>
      tpu.vector_store %arg7[%c0_10, %c0_11], %12 {strides = array<i32>} : memref<8x1024xf32, #tpu.memory_space<vmem>>, vector<8x1024xf32>,
    } else {
    }
    %c0 = arith.constant 0 : index
    %c0_1 = arith.constant 0 : index
    %3 = vector.load %arg7[%c0, %c0_1] : memref<8x1024xf32, #tpu.memory_space<vmem>>, vector<8x1024xf32>
    %c0_2 = arith.constant 0 : index
    %c0_3 = arith.constant 0 : index
    %4 = vector.load %arg3[%c0_2, %c0_3] : memref<8x512xf32, #tpu.memory_space<vmem>>, vector<8x512xf32>
    %c0_4 = arith.constant 0 : index
    %c0_5 = arith.constant 0 : index
    %5 = vector.load %arg4[%c0_4, %c0_5] : memref<512x1024xf32, #tpu.memory_space<vmem>>, vector<512x1024xf32>
    %cst = arith.constant dense<0.000000e+00> : vector<8x1024xf32>
    %6 = tpu.matmul %4, %5, %cst {dimension_numbers = #tpu.dot_dimension_numbers<[1], [0], [0], [1], [0, 0, 1, 1], [], []>} : vector<8x512xf32>, vector<512x1024xf32>, vector<8x1024xf32> -> vector<8x1024xf32>
    %7 = arith.addf %3, %6 : vector<8x1024xf32>
    %c0_6 = arith.constant 0 : index
    %c0_7 = arith.constant 0 : index
    %8 = vector.load %arg7[%c0_6, %c0_7] : memref<8x1024xf32, #tpu.memory_space<vmem>>, vector<8x1024xf32>
    tpu.vector_store %arg7[%c0_6, %c0_7], %7 {strides = array<i32>} : memref<8x1024xf32, #tpu.memory_space<vmem>>, vector<8x1024xf32>,
    %c4_i32 = arith.constant 4 : i32
    %9 = arith.cmpi eq, %arg2, %c4_i32 : i32
    %10 = arith.extui %9 : i1 to i32
    %c0_i32_8 = arith.constant 0 : i32
    %11 = arith.cmpi ne, %10, %c0_i32_8 : i32
    scf.if %11 {
      %c0_9 = arith.constant 0 : index
      %c0_10 = arith.constant 0 : index
      %12 = vector.load %arg7[%c0_9, %c0_10] : memref<8x1024xf32, #tpu.memory_space<vmem>>, vector<8x1024xf32>
      %c0_11 = arith.constant 0 : index
      %c0_12 = arith.constant 0 : index
      %13 = vector.load %arg5[%c0_11, %c0_12] : memref<1x1024xf32, #tpu.memory_space<vmem>>, vector<1x1024xf32>
      %14 = vector.broadcast %13 : vector<1x1024xf32> to vector<8x1024xf32>
      %15 = arith.addf %12, %14 : vector<8x1024xf32>
      %cst_13 = arith.constant 5.000000e-01 : f32
      %16 = vector.broadcast %cst_13 : f32 to vector<8x1024xf32>
      %17 = arith.mulf %16, %15 : vector<8x1024xf32>
      %cst_14 = arith.constant 0.707106769 : f32
      %18 = vector.broadcast %cst_14 : f32 to vector<8x1024xf32>
      %19 = arith.mulf %15, %18 : vector<8x1024xf32>
      %20 = math.erf %19 : vector<8x1024xf32>
      %cst_15 = arith.constant 1.000000e+00 : f32
      %21 = vector.broadcast %cst_15 : f32 to vector<8x1024xf32>
      %22 = arith.addf %21, %20 : vector<8x1024xf32>
      %23 = arith.mulf %17, %22 : vector<8x1024xf32>
      %c0_16 = arith.constant 0 : index
      %c0_17 = arith.constant 0 : index
      %24 = vector.load %arg6[%c0_16, %c0_17] : memref<8x1024xf32, #tpu.memory_space<vmem>>, vector<8x1024xf32>
      tpu.vector_store %arg6[%c0_16, %c0_17], %23 {strides = array<i32>} : memref<8x1024xf32, #tpu.memory_space<vmem>>, vector<8x1024xf32>,
    } else {
    }
    return
  }
  func.func @transform_0(%arg0: i32, %arg1: i32, %arg2: i32) -> (i32, i32) {
    %c0_i32 = arith.constant 0 : i32
    return %arg0, %arg2 : i32, i32
  }
  func.func @transform_1(%arg0: i32, %arg1: i32, %arg2: i32) -> (i32, i32) {
    %c0_i32 = arith.constant 0 : i32
    return %arg2, %arg1 : i32, i32
  }
  func.func @transform_2(%arg0: i32, %arg1: i32, %arg2: i32) -> (i32, i32) {
    %c0_i32 = arith.constant 0 : i32
    %c0_i32_0 = arith.constant 0 : i32
    return %c0_i32, %arg1 : i32, i32
  }
  func.func @transform_3(%arg0: i32, %arg1: i32, %arg2: i32) -> (i32, i32) {
    %c0_i32 = arith.constant 0 : i32
    return %arg0, %arg1 : i32, i32
  }
}

</mosaic_0001>

<llo_original>
// kernel: my_nn_model_forward.7
$region0: #{my_nn_model_forward.7}
  #allocation0 [shape = 'u32[]', space=smem, size = 0x4, offset = 0x4, fixed_abs, tag = 'smem constant byte address 0x4 - core index']
  #allocation1 [shape = 'u32[144,128]{1,0:T(1,128)}', space=vmem, size = 0x12000, scoped, tag = 'internal scratch']
  #allocation2 [shape = 'f32[8,128]{1,0:T(8,128)}', space=vmem, size = 0x1000, scoped, tag = 'scratch operand']
  %s0 = inlined_call_operand.vmem [shape: f32[8,1024], index: 0, kind: input, shape index: {}]
  %s1 = inlined_call_operand.vmem [shape: f32[1024,128], index: 1, kind: input, shape index: {}]
  %s2 = inlined_call_operand.vmem [shape: f32[1,128], index: 2, kind: input, shape index: {}]
  %s3 = inlined_call_operand.vmem [shape: f32[8,128], index: 3, kind: output, shape index: {}]
  %s4 = sld [smem:[#allocation0]]
  $region30: #{my_nn_model_forward.7} parent=0
    _
  %s6 = ssub.s32 1, %s4
  %s7 = scalar_select 0, %s6, %s4
  // Predicated region
  $region2: #{my_nn_model_forward.7} parent=0 // pred_check
    _
  $region3: #{my_nn_model_forward.7} parent=0 // pred_check_branch
    %9 = sbr.rel (0) target = $region5
  $region4: #{my_nn_model_forward.7} parent=0 // pred_region
    _
  $region5: #{my_nn_model_forward.7} parent=0 // pred_fallthru
    _
  // Predicated region
  $region6: #{my_nn_model_forward.7} parent=0 // pred_check
    _
  $region7: #{my_nn_model_forward.7} parent=0 // pred_check_branch
    %11 = sbr.rel (0) target = $region9
  $region8: #{my_nn_model_forward.7} parent=0 // pred_region
    _
  $region9: #{my_nn_model_forward.7} parent=0 // pred_fallthru
    _
  // Predicated region
  $region10: #{my_nn_model_forward.7} parent=0 // pred_check
    _
  $region11: #{my_nn_model_forward.7} parent=0 // pred_check_branch
    %13 = sbr.rel (0) target = $region13
  $region12: #{my_nn_model_forward.7} parent=0 // pred_region
    _
  $region13: #{my_nn_model_forward.7} parent=0 // pred_fallthru
    _
  %p14 = scmp.eq.s32.totalorder 0, 0
  // Predicated region
  $region14: #{my_nn_model_forward.7} parent=0 // pred_check
    %p15 = pneg %p14
  $region15: #{my_nn_model_forward.7} parent=0 // pred_check_branch
    %17 = sbr.rel (%p15) target = $region17
  $region16: #{my_nn_model_forward.7} parent=0 // pred_region
    %18 = vst [vmem:[#allocation2] sm:$0xff] 0.0
  $region17: #{my_nn_model_forward.7} parent=0 // pred_fallthru
    _
  %v19 = vld [vmem:[#allocation2] sm:$0xff]
  %v20 = vld [vmem:[%s0] sm:$0xff]
  %v21 = vld [vmem:[%s0 + $0x8] sm:$0xff]
  %v22 = vld [vmem:[%s0 + $0x10] sm:$0xff]
  %v23 = vld [vmem:[%s0 + $0x18] sm:$0xff]
  %v24 = vld [vmem:[%s0 + $0x20] sm:$0xff]
  %v25 = vld [vmem:[%s0 + $0x28] sm:$0xff]
  %v26 = vld [vmem:[%s0 + $0x30] sm:$0xff]
  %v27 = vld [vmem:[%s0 + $0x38] sm:$0xff]
  %v28 = vld [vmem:[%s1] sm:$0xff]
  %v29 = vld [vmem:[%s1 + $0x8] sm:$0xff]
  %v30 = vld [vmem:[%s1 + $0x10] sm:$0xff]
  %v31 = vld [vmem:[%s1 + $0x18] sm:$0xff]
  %v32 = vld [vmem:[%s1 + $0x20] sm:$0xff]
  %v33 = vld [vmem:[%s1 + $0x28] sm:$0xff]
  %v34 = vld [vmem:[%s1 + $0x30] sm:$0xff]
  %v35 = vld [vmem:[%s1 + $0x38] sm:$0xff]
  %v36 = vld [vmem:[%s1 + $0x40] sm:$0xff]
  %v37 = vld [vmem:[%s1 + $0x48] sm:$0xff]
  %v38 = vld [vmem:[%s1 + $0x50] sm:$0xff]
  %v39 = vld [vmem:[%s1 + $0x58] sm:$0xff]
  %v40 = vld [vmem:[%s1 + $0x60] sm:$0xff]
  %v41 = vld [vmem:[%s1 + $0x68] sm:$0xff]
  %v42 = vld [vmem:[%s1 + $0x70] sm:$0xff]
  %v43 = vld [vmem:[%s1 + $0x78] sm:$0xff]
  %v44 = vld [vmem:[%s1 + $0x80] sm:$0xff]
  %v45 = vld [vmem:[%s1 + $0x88] sm:$0xff]
  %v46 = vld [vmem:[%s1 + $0x90] sm:$0xff]
  %v47 = vld [vmem:[%s1 + $0x98] sm:$0xff]
  %v48 = vld [vmem:[%s1 + $0xa0] sm:$0xff]
  %v49 = vld [vmem:[%s1 + $0xa8] sm:$0xff]
  %v50 = vld [vmem:[%s1 + $0xb0] sm:$0xff]
  %v51 = vld [vmem:[%s1 + $0xb8] sm:$0xff]
  %v52 = vld [vmem:[%s1 + $0xc0] sm:$0xff]
  %v53 = vld [vmem:[%s1 + $0xc8] sm:$0xff]
  %v54 = vld [vmem:[%s1 + $0xd0] sm:$0xff]
  %v55 = vld [vmem:[%s1 + $0xd8] sm:$0xff]
  %v56 = vld [vmem:[%s1 + $0xe0] sm:$0xff]
  %v57 = vld [vmem:[%s1 + $0xe8] sm:$0xff]
  %v58 = vld [vmem:[%s1 + $0xf0] sm:$0xff]
  %v59 = vld [vmem:[%s1 + $0xf8] sm:$0xff]
  %v60 = vld [vmem:[%s1 + $0x100] sm:$0xff]
  %v61 = vld [vmem:[%s1 + $0x108] sm:$0xff]
  %v62 = vld [vmem:[%s1 + $0x110] sm:$0xff]
  %v63 = vld [vmem:[%s1 + $0x118] sm:$0xff]
  %v64 = vld [vmem:[%s1 + $0x120] sm:$0xff]
  %v65 = vld [vmem:[%s1 + $0x128] sm:$0xff]
  %v66 = vld [vmem:[%s1 + $0x130] sm:$0xff]
  %v67 = vld [vmem:[%s1 + $0x138] sm:$0xff]
  %v68 = vld [vmem:[%s1 + $0x140] sm:$0xff]
  %v69 = vld [vmem:[%s1 + $0x148] sm:$0xff]
  %v70 = vld [vmem:[%s1 + $0x150] sm:$0xff]
  %v71 = vld [vmem:[%s1 + $0x158] sm:$0xff]
  %v72 = vld [vmem:[%s1 + $0x160] sm:$0xff]
  %v73 = vld [vmem:[%s1 + $0x168] sm:$0xff]
  %v74 = vld [vmem:[%s1 + $0x170] sm:$0xff]
  %v75 = vld [vmem:[%s1 + $0x178] sm:$0xff]
  %v76 = vld [vmem:[%s1 + $0x180] sm:$0xff]
  %v77 = vld [vmem:[%s1 + $0x188] sm:$0xff]
  %v78 = vld [vmem:[%s1 + $0x190] sm:$0xff]
  %v79 = vld [vmem:[%s1 + $0x198] sm:$0xff]
  %v80 = vld [vmem:[%s1 + $0x1a0] sm:$0xff]
  %v81 = vld [vmem:[%s1 + $0x1a8] sm:$0xff]
  %v82 = vld [vmem:[%s1 + $0x1b0] sm:$0xff]
  %v83 = vld [vmem:[%s1 + $0x1b8] sm:$0xff]
  %v84 = vld [vmem:[%s1 + $0x1c0] sm:$0xff]
  %v85 = vld [vmem:[%s1 + $0x1c8] sm:$0xff]
  %v86 = vld [vmem:[%s1 + $0x1d0] sm:$0xff]
  %v87 = vld [vmem:[%s1 + $0x1d8] sm:$0xff]
  %v88 = vld [vmem:[%s1 + $0x1e0] sm:$0xff]
  %v89 = vld [vmem:[%s1 + $0x1e8] sm:$0xff]
  %v90 = vld [vmem:[%s1 + $0x1f0] sm:$0xff]
  %v91 = vld [vmem:[%s1 + $0x1f8] sm:$0xff]
  %v92 = vld [vmem:[%s1 + $0x200] sm:$0xff]
  %v93 = vld [vmem:[%s1 + $0x208] sm:$0xff]
  %v94 = vld [vmem:[%s1 + $0x210] sm:$0xff]
  %v95 = vld [vmem:[%s1 + $0x218] sm:$0xff]
  %v96 = vld [vmem:[%s1 + $0x220] sm:$0xff]
  %v97 = vld [vmem:[%s1 + $0x228] sm:$0xff]
  %v98 = vld [vmem:[%s1 + $0x230] sm:$0xff]
  %v99 = vld [vmem:[%s1 + $0x238] sm:$0xff]
  %v100 = vld [vmem:[%s1 + $0x240] sm:$0xff]
  %v101 = vld [vmem:[%s1 + $0x248] sm:$0xff]
  %v102 = vld [vmem:[%s1 + $0x250] sm:$0xff]
  %v103 = vld [vmem:[%s1 + $0x258] sm:$0xff]
  %v104 = vld [vmem:[%s1 + $0x260] sm:$0xff]
  %v105 = vld [vmem:[%s1 + $0x268] sm:$0xff]
  %v106 = vld [vmem:[%s1 + $0x270] sm:$0xff]
  %v107 = vld [vmem:[%s1 + $0x278] sm:$0xff]
  %v108 = vld [vmem:[%s1 + $0x280] sm:$0xff]
  %v109 = vld [vmem:[%s1 + $0x288] sm:$0xff]
  %v110 = vld [vmem:[%s1 + $0x290] sm:$0xff]
  %v111 = vld [vmem:[%s1 + $0x298] sm:$0xff]
  %v112 = vld [vmem:[%s1 + $0x2a0] sm:$0xff]
  %v113 = vld [vmem:[%s1 + $0x2a8] sm:$0xff]
  %v114 = vld [vmem:[%s1 + $0x2b0] sm:$0xff]
  %v115 = vld [vmem:[%s1 + $0x2b8] sm:$0xff]
  %v116 = vld [vmem:[%s1 + $0x2c0] sm:$0xff]
  %v117 = vld [vmem:[%s1 + $0x2c8] sm:$0xff]
  %v118 = vld [vmem:[%s1 + $0x2d0] sm:$0xff]
  %v119 = vld [vmem:[%s1 + $0x2d8] sm:$0xff]
  %v120 = vld [vmem:[%s1 + $0x2e0] sm:$0xff]
  %v121 = vld [vmem:[%s1 + $0x2e8] sm:$0xff]
  %v122 = vld [vmem:[%s1 + $0x2f0] sm:$0xff]
  %v123 = vld [vmem:[%s1 + $0x2f8] sm:$0xff]
  %v124 = vld [vmem:[%s1 + $0x300] sm:$0xff]
  %v125 = vld [vmem:[%s1 + $0x308] sm:$0xff]
  %v126 = vld [vmem:[%s1 + $0x310] sm:$0xff]
  %v127 = vld [vmem:[%s1 + $0x318] sm:$0xff]
  %v128 = vld [vmem:[%s1 + $0x320] sm:$0xff]
  %v129 = vld [vmem:[%s1 + $0x328] sm:$0xff]
  %v130 = vld [vmem:[%s1 + $0x330] sm:$0xff]
  %v131 = vld [vmem:[%s1 + $0x338] sm:$0xff]
  %v132 = vld [vmem:[%s1 + $0x340] sm:$0xff]
  %v133 = vld [vmem:[%s1 + $0x348] sm:$0xff]
  %v134 = vld [vmem:[%s1 + $0x350] sm:$0xff]
  %v135 = vld [vmem:[%s1 + $0x358] sm:$0xff]
  %v136 = vld [vmem:[%s1 + $0x360] sm:$0xff]
  %v137 = vld [vmem:[%s1 + $0x368] sm:$0xff]
  %v138 = vld [vmem:[%s1 + $0x370] sm:$0xff]
  %v139 = vld [vmem:[%s1 + $0x378] sm:$0xff]
  %v140 = vld [vmem:[%s1 + $0x380] sm:$0xff]
  %v141 = vld [vmem:[%s1 + $0x388] sm:$0xff]
  %v142 = vld [vmem:[%s1 + $0x390] sm:$0xff]
  %v143 = vld [vmem:[%s1 + $0x398] sm:$0xff]
  %v144 = vld [vmem:[%s1 + $0x3a0] sm:$0xff]
  %v145 = vld [vmem:[%s1 + $0x3a8] sm:$0xff]
  %v146 = vld [vmem:[%s1 + $0x3b0] sm:$0xff]
  %v147 = vld [vmem:[%s1 + $0x3b8] sm:$0xff]
  %v148 = vld [vmem:[%s1 + $0x3c0] sm:$0xff]
  %v149 = vld [vmem:[%s1 + $0x3c8] sm:$0xff]
  %v150 = vld [vmem:[%s1 + $0x3d0] sm:$0xff]
  %v151 = vld [vmem:[%s1 + $0x3d8] sm:$0xff]
  %v152 = vld [vmem:[%s1 + $0x3e0] sm:$0xff]
  %v153 = vld [vmem:[%s1 + $0x3e8] sm:$0xff]
  %v154 = vld [vmem:[%s1 + $0x3f0] sm:$0xff]
  %v155 = vld [vmem:[%s1 + $0x3f8] sm:$0xff]
  %156 = vmatprep.subr.mxu0 0.0
  %157 = vmatpush1.msra.mxu0 %v28
  %158 = vmatprep.subr.mxu0 0.0
  %159 = vmatpush1.msra.mxu0 %v29
  %160 = vmatprep.subr.mxu0 0.0
  %161 = vmatpush1.msra.mxu0 %v30
  %162 = vmatprep.subr.mxu0 0.0
  %163 = vmatpush1.msra.mxu0 %v31
  %164 = vmatprep.subr.mxu0 0.0
  %165 = vmatpush1.msra.mxu0 %v32
  %166 = vmatprep.subr.mxu0 0.0
  %167 = vmatpush1.msra.mxu0 %v33
  %168 = vmatprep.subr.mxu0 0.0
  %169 = vmatpush1.msra.mxu0 %v34
  %170 = vmatprep.subr.mxu0 0.0
  %171 = vmatpush1.msra.mxu0 %v35
  %172 = vmatprep.subr.mxu0 0.0
  %173 = vmatpush1.msra.mxu0 %v36
  %174 = vmatprep.subr.mxu0 0.0
  %175 = vmatpush1.msra.mxu0 %v37
  %176 = vmatprep.subr.mxu0 0.0
  %177 = vmatpush1.msra.mxu0 %v38
  %178 = vmatprep.subr.mxu0 0.0
  %179 = vmatpush1.msra.mxu0 %v39
  %180 = vmatprep.subr.mxu0 0.0
  %181 = vmatpush1.msra.mxu0 %v40
  %182 = vmatprep.subr.mxu0 0.0
  %183 = vmatpush1.msra.mxu0 %v41
  %184 = vmatprep.subr.mxu0 0.0
  %185 = vmatpush1.msra.mxu0 %v42
  %186 = vmatprep.subr.mxu0 0.0
  %187 = vmatpush1.msra.mxu0 %v43
  %188 = vmatprep.subr.mxu0 0.0
  %189 = vmatpush1.msra.mxu0 %v44
  %190 = vmatprep.subr.mxu0 0.0
  %191 = vmatpush1.msra.mxu0 %v45
  %192 = vmatprep.subr.mxu0 0.0
  %193 = vmatpush1.msra.mxu0 %v46
  %194 = vmatprep.subr.mxu0 0.0
  %195 = vmatpush1.msra.mxu0 %v47
  %196 = vmatprep.subr.mxu0 0.0
  %197 = vmatpush1.msra.mxu0 %v48
  %198 = vmatprep.subr.mxu0 0.0
  %199 = vmatpush1.msra.mxu0 %v49
  %200 = vmatprep.subr.mxu0 0.0
  %201 = vmatpush1.msra.mxu0 %v50
  %202 = vmatprep.subr.mxu0 0.0
  %203 = vmatpush1.msra.mxu0 %v51
  %204 = vmatprep.subr.mxu0 0.0
  %205 = vmatpush1.msra.mxu0 %v52
  %206 = vmatprep.subr.mxu0 0.0
  %207 = vmatpush1.msra.mxu0 %v53
  %208 = vmatprep.subr.mxu0 0.0
  %209 = vmatpush1.msra.mxu0 %v54
  %210 = vmatprep.subr.mxu0 0.0
  %211 = vmatpush1.msra.mxu0 %v55
  %212 = vmatprep.subr.mxu0 0.0
  %213 = vmatpush1.msra.mxu0 %v56
  %214 = vmatprep.subr.mxu0 0.0
  %215 = vmatpush1.msra.mxu0 %v57
  %216 = vmatprep.subr.mxu0 0.0
  %217 = vmatpush1.msra.mxu0 %v58
  %218 = vmatprep.subr.mxu0 0.0
  %219 = vmatpush1.msra.mxu0 %v59
  %220 = vmatprep.mubr.f32.mxu0 %v21
  %221 = vmatmul.mubr.f32.gmra.mrb[0].mxu0 %v20
  %v222 = vpop.f32.mrb[0].mxu0
  %v223 = vadd.f32 0.0, %v222
  %v224 = vpop.f32.mrb[0].mxu0
  %225 = vdwg.mxu0
  %226 = vmatprep.subr.mxu0 0.0
  %227 = vmatpush1.msra.mxu0 %v60
  %228 = vmatprep.subr.mxu0 0.0
  %229 = vmatpush1.msra.mxu0 %v61
  %230 = vmatprep.subr.mxu0 0.0
  %231 = vmatpush1.msra.mxu0 %v62
  %232 = vmatprep.subr.mxu0 0.0
  %233 = vmatpush1.msra.mxu0 %v63
  %234 = vmatprep.subr.mxu0 0.0
  %235 = vmatpush1.msra.mxu0 %v64
  %236 = vmatprep.subr.mxu0 0.0
  %237 = vmatpush1.msra.mxu0 %v65
  %238 = vmatprep.subr.mxu0 0.0
  %239 = vmatpush1.msra.mxu0 %v66
  %240 = vmatprep.subr.mxu0 0.0
  %241 = vmatpush1.msra.mxu0 %v67
  %242 = vmatprep.subr.mxu0 0.0
  %243 = vmatpush1.msra.mxu0 %v68
  %244 = vmatprep.subr.mxu0 0.0
  %245 = vmatpush1.msra.mxu0 %v69
  %246 = vmatprep.subr.mxu0 0.0
  %247 = vmatpush1.msra.mxu0 %v70
  %248 = vmatprep.subr.mxu0 0.0
  %249 = vmatpush1.msra.mxu0 %v71
  %250 = vmatprep.subr.mxu0 0.0
  %251 = vmatpush1.msra.mxu0 %v72
  %252 = vmatprep.subr.mxu0 0.0
  %253 = vmatpush1.msra.mxu0 %v73
  %254 = vmatprep.subr.mxu0 0.0
  %255 = vmatpush1.msra.mxu0 %v74
  %256 = vmatprep.subr.mxu0 0.0
  %257 = vmatpush1.msra.mxu0 %v75
  %258 = vmatprep.subr.mxu0 0.0
  %259 = vmatpush1.msra.mxu0 %v76
  %260 = vmatprep.subr.mxu0 0.0
  %261 = vmatpush1.msra.mxu0 %v77
  %262 = vmatprep.subr.mxu0 0.0
  %263 = vmatpush1.msra.mxu0 %v78
  %264 = vmatprep.subr.mxu0 0.0
  %265 = vmatpush1.msra.mxu0 %v79
  %266 = vmatprep.subr.mxu0 0.0
  %267 = vmatpush1.msra.mxu0 %v80
  %268 = vmatprep.subr.mxu0 0.0
  %269 = vmatpush1.msra.mxu0 %v81
  %270 = vmatprep.subr.mxu0 0.0
  %271 = vmatpush1.msra.mxu0 %v82
  %272 = vmatprep.subr.mxu0 0.0
  %273 = vmatpush1.msra.mxu0 %v83
  %274 = vmatprep.subr.mxu0 0.0
  %275 = vmatpush1.msra.mxu0 %v84
  %276 = vmatprep.subr.mxu0 0.0
  %277 = vmatpush1.msra.mxu0 %v85
  %278 = vmatprep.subr.mxu0 0.0
  %279 = vmatpush1.msra.mxu0 %v86
  %280 = vmatprep.subr.mxu0 0.0
  %281 = vmatpush1.msra.mxu0 %v87
  %282 = vmatprep.subr.mxu0 0.0
  %283 = vmatpush1.msra.mxu0 %v88
  %284 = vmatprep.subr.mxu0 0.0
  %285 = vmatpush1.msra.mxu0 %v89
  %286 = vmatprep.subr.mxu0 0.0
  %287 = vmatpush1.msra.mxu0 %v90
  %288 = vmatprep.subr.mxu0 0.0
  %289 = vmatpush1.msra.mxu0 %v91
  %290 = vmatprep.mubr.f32.mxu0 %v23
  %291 = vmatmul.mubr.f32.gmra.mrb[0].mxu0 %v22
  %v292 = vpop.f32.mrb[0].mxu0
  %v293 = vadd.f32 %v223, %v292
  %v294 = vpop.f32.mrb[0].mxu0
  %295 = vdwg.mxu0
  %296 = vmatprep.subr.mxu0 0.0
  %297 = vmatpush1.msra.mxu0 %v92
  %298 = vmatprep.subr.mxu0 0.0
  %299 = vmatpush1.msra.mxu0 %v93
  %300 = vmatprep.subr.mxu0 0.0
  %301 = vmatpush1.msra.mxu0 %v94
  %302 = vmatprep.subr.mxu0 0.0
  %303 = vmatpush1.msra.mxu0 %v95
  %304 = vmatprep.subr.mxu0 0.0
  %305 = vmatpush1.msra.mxu0 %v96
  %306 = vmatprep.subr.mxu0 0.0
  %307 = vmatpush1.msra.mxu0 %v97
  %308 = vmatprep.subr.mxu0 0.0
  %309 = vmatpush1.msra.mxu0 %v98
  %310 = vmatprep.subr.mxu0 0.0
  %311 = vmatpush1.msra.mxu0 %v99
  %312 = vmatprep.subr.mxu0 0.0
  %313 = vmatpush1.msra.mxu0 %v100
  %314 = vmatprep.subr.mxu0 0.0
  %315 = vmatpush1.msra.mxu0 %v101
  %316 = vmatprep.subr.mxu0 0.0
  %317 = vmatpush1.msra.mxu0 %v102
  %318 = vmatprep.subr.mxu0 0.0
  %319 = vmatpush1.msra.mxu0 %v103
  %320 = vmatprep.subr.mxu0 0.0
  %321 = vmatpush1.msra.mxu0 %v104
  %322 = vmatprep.subr.mxu0 0.0
  %323 = vmatpush1.msra.mxu0 %v105
  %324 = vmatprep.subr.mxu0 0.0
  %325 = vmatpush1.msra.mxu0 %v106
  %326 = vmatprep.subr.mxu0 0.0
  %327 = vmatpush1.msra.mxu0 %v107
  %328 = vmatprep.subr.mxu0 0.0
  %329 = vmatpush1.msra.mxu0 %v108
  %330 = vmatprep.subr.mxu0 0.0
  %331 = vmatpush1.msra.mxu0 %v109
  %332 = vmatprep.subr.mxu0 0.0
  %333 = vmatpush1.msra.mxu0 %v110
  %334 = vmatprep.subr.mxu0 0.0
  %335 = vmatpush1.msra.mxu0 %v111
  %336 = vmatprep.subr.mxu0 0.0
  %337 = vmatpush1.msra.mxu0 %v112
  %338 = vmatprep.subr.mxu0 0.0
  %339 = vmatpush1.msra.mxu0 %v113
  %340 = vmatprep.subr.mxu0 0.0
  %341 = vmatpush1.msra.mxu0 %v114
  %342 = vmatprep.subr.mxu0 0.0
  %343 = vmatpush1.msra.mxu0 %v115
  %344 = vmatprep.subr.mxu0 0.0
  %345 = vmatpush1.msra.mxu0 %v116
  %346 = vmatprep.subr.mxu0 0.0
  %347 = vmatpush1.msra.mxu0 %v117
  %348 = vmatprep.subr.mxu0 0.0
  %349 = vmatpush1.msra.mxu0 %v118
  %350 = vmatprep.subr.mxu0 0.0
  %351 = vmatpush1.msra.mxu0 %v119
  %352 = vmatprep.subr.mxu0 0.0
  %353 = vmatpush1.msra.mxu0 %v120
  %354 = vmatprep.subr.mxu0 0.0
  %355 = vmatpush1.msra.mxu0 %v121
  %356 = vmatprep.subr.mxu0 0.0
  %357 = vmatpush1.msra.mxu0 %v122
  %358 = vmatprep.subr.mxu0 0.0
  %359 = vmatpush1.msra.mxu0 %v123
  %360 = vmatprep.mubr.f32.mxu0 %v25
  %361 = vmatmul.mubr.f32.gmra.mrb[0].mxu0 %v24
  %v362 = vpop.f32.mrb[0].mxu0
  %v363 = vadd.f32 %v293, %v362
  %v364 = vpop.f32.mrb[0].mxu0
  %365 = vdwg.mxu0
  %366 = vmatprep.subr.mxu0 0.0
  %367 = vmatpush1.msra.mxu0 %v124
  %368 = vmatprep.subr.mxu0 0.0
  %369 = vmatpush1.msra.mxu0 %v125
  %370 = vmatprep.subr.mxu0 0.0
  %371 = vmatpush1.msra.mxu0 %v126
  %372 = vmatprep.subr.mxu0 0.0
  %373 = vmatpush1.msra.mxu0 %v127
  %374 = vmatprep.subr.mxu0 0.0
  %375 = vmatpush1.msra.mxu0 %v128
  %376 = vmatprep.subr.mxu0 0.0
  %377 = vmatpush1.msra.mxu0 %v129
  %378 = vmatprep.subr.mxu0 0.0
  %379 = vmatpush1.msra.mxu0 %v130
  %380 = vmatprep.subr.mxu0 0.0
  %381 = vmatpush1.msra.mxu0 %v131
  %382 = vmatprep.subr.mxu0 0.0
  %383 = vmatpush1.msra.mxu0 %v132
  %384 = vmatprep.subr.mxu0 0.0
  %385 = vmatpush1.msra.mxu0 %v133
  %386 = vmatprep.subr.mxu0 0.0
  %387 = vmatpush1.msra.mxu0 %v134
  %388 = vmatprep.subr.mxu0 0.0
  %389 = vmatpush1.msra.mxu0 %v135
  %390 = vmatprep.subr.mxu0 0.0
  %391 = vmatpush1.msra.mxu0 %v136
  %392 = vmatprep.subr.mxu0 0.0
  %393 = vmatpush1.msra.mxu0 %v137
  %394 = vmatprep.subr.mxu0 0.0
  %395 = vmatpush1.msra.mxu0 %v138
  %396 = vmatprep.subr.mxu0 0.0
  %397 = vmatpush1.msra.mxu0 %v139
  %398 = vmatprep.subr.mxu0 0.0
  %399 = vmatpush1.msra.mxu0 %v140
  %400 = vmatprep.subr.mxu0 0.0
  %401 = vmatpush1.msra.mxu0 %v141
  %402 = vmatprep.subr.mxu0 0.0
  %403 = vmatpush1.msra.mxu0 %v142
  %404 = vmatprep.subr.mxu0 0.0
  %405 = vmatpush1.msra.mxu0 %v143
  %406 = vmatprep.subr.mxu0 0.0
  %407 = vmatpush1.msra.mxu0 %v144
  %408 = vmatprep.subr.mxu0 0.0
  %409 = vmatpush1.msra.mxu0 %v145
  %410 = vmatprep.subr.mxu0 0.0
  %411 = vmatpush1.msra.mxu0 %v146
  %412 = vmatprep.subr.mxu0 0.0
  %413 = vmatpush1.msra.mxu0 %v147
  %414 = vmatprep.subr.mxu0 0.0
  %415 = vmatpush1.msra.mxu0 %v148
  %416 = vmatprep.subr.mxu0 0.0
  %417 = vmatpush1.msra.mxu0 %v149
  %418 = vmatprep.subr.mxu0 0.0
  %419 = vmatpush1.msra.mxu0 %v150
  %420 = vmatprep.subr.mxu0 0.0
  %421 = vmatpush1.msra.mxu0 %v151
  %422 = vmatprep.subr.mxu0 0.0
  %423 = vmatpush1.msra.mxu0 %v152
  %424 = vmatprep.subr.mxu0 0.0
  %425 = vmatpush1.msra.mxu0 %v153
  %426 = vmatprep.subr.mxu0 0.0
  %427 = vmatpush1.msra.mxu0 %v154
  %428 = vmatprep.subr.mxu0 0.0
  %429 = vmatpush1.msra.mxu0 %v155
  %430 = vmatprep.mubr.f32.mxu0 %v27
  %431 = vmatmul.mubr.f32.gmra.mrb[0].mxu0 %v26
  %v432 = vpop.f32.mrb[0].mxu0
  %v433 = vadd.f32 %v363, %v432
  %v434 = vpop.f32.mrb[0].mxu0
  %435 = vdwg.mxu0
  %v436 = vadd.f32 %v19, %v433
  %437 = vst [vmem:[#allocation2] sm:$0xff] %v436
  // Predicated region
  $region18: #{my_nn_model_forward.7} parent=0 // pred_check
    %p438 = pneg %p14
  $region19: #{my_nn_model_forward.7} parent=0 // pred_check_branch
    %440 = sbr.rel (%p438) target = $region21
  $region20: #{my_nn_model_forward.7} parent=0 // pred_region
    %v441 = vld [vmem:[#allocation2] sm:$0xff]
    %v442 = vld [vmem:[%s2] sm:$0x1]
    %v444 = vlaneseq
    %v445 = vshrl.u32 %v444, 7
    %v446 = vsub.s32 0, %v445
    %v447 = vrot.slane %v442, %v446
    %v449 = vadd.f32 %v441, %v447
    %v450 = vxor.u32 %v449, 2147483648
    %v451 = vmul.f32 %v450, 1.442695
    %v452 = vpow.pop %v451
    %v453 = vadd.f32 %v452, 1.0
    %v454 = vrcp.pop %v453
    %v455 = vmul.f32 1.0, %v454
    %456 = vst [vmem:[%s3] sm:$0xff] %v455
  $region21: #{my_nn_model_forward.7} parent=0 // pred_fallthru
    _
  // Predicated region
  $region22: #{my_nn_model_forward.7} parent=0 // pred_check
    _
  $region23: #{my_nn_model_forward.7} parent=0 // pred_check_branch
    %458 = sbr.rel (0) target = $region25
  $region24: #{my_nn_model_forward.7} parent=0 // pred_region
    _
  $region25: #{my_nn_model_forward.7} parent=0 // pred_fallthru
    _
  // Predicated region
  $region26: #{my_nn_model_forward.7} parent=0 // pred_check
    _
  $region27: #{my_nn_model_forward.7} parent=0 // pred_check_branch
    %460 = sbr.rel (0) target = $region29
  $region28: #{my_nn_model_forward.7} parent=0 // pred_region
    _
  $region29: #{my_nn_model_forward.7} parent=0 // pred_fallthru
    _

// kernel: my_nn_model_forward.4
$region0: #{my_nn_model_forward.4}
  #allocation0 [shape = 'u32[]', space=smem, size = 0x4, offset = 0x4, fixed_abs, tag = 'smem constant byte address 0x4 - core index']
  #allocation1 [shape = 'u32[144,128]{1,0:T(1,128)}', space=vmem, size = 0x12000, scoped, tag = 'internal scratch']
  #allocation2 [shape = 'f32[8,2560]{1,0:T(8,128)}', space=vmem, size = 0x14000, scoped, tag = 'scratch operand']
  %s0 = inlined_call_operand.vmem [shape: f32[8,128], index: 0, kind: input, shape index: {}]
  %s1 = inlined_call_operand.hbm [shape: f32[128,5120], index: 1, kind: input, shape index: {}]
  %s2 = inlined_call_operand.hbm [shape: f32[1,5120], index: 2, kind: input, shape index: {}]
  %s3 = inlined_call_operand.vmem [shape: f32[8,5120], index: 3, kind: output, shape index: {}]
  %s4 = sld [smem:[#allocation0]]
  $region61: #{my_nn_model_forward.4} parent=0
    _
  %s6 = ssub.s32 1, %s4
  %s7 = scalar_select 0, %s6, %s4
  $region1: #{my_nn_model_forward.4} parent=0
    #allocation3 [shape = 'u8[2621440]{0}', space=vmem, size = 0x280000, scoped, tag = 'input window, operand 1']
    #allocation4 [shape = 's32[2]{0}', space=sflag, size = 0x8, scoped, tag = 'scoped memory for my_nn_model_forward.4']
    #allocation5 [shape = 'u8[20480]{0}', space=vmem, size = 0x5000, scoped, tag = 'input window, operand 2']
    #allocation6 [shape = 's32[2]{0}', space=sflag, size = 0x8, scoped, tag = 'scoped memory for my_nn_model_forward.4']
    %8 = vsyncpa [#allocation4], 0
    %s9 = scalar_lea.sflag [#allocation4], 1
    %10 = vsyncpa %s9, 0
    %11 = vsyncpa [#allocation6], 0
    %s12 = scalar_lea.sflag [#allocation6], 1
    %13 = vsyncpa %s12, 0
    loop: start=0, step=1, limit=4
    $region2: #{my_nn_model_forward.4} parent=1 // loop_pre_header
      _
    $region3: #{my_nn_model_forward.4} parent=1 // loop_header
      %s15 = sphi 0, %s19
      %p16 = scmp.ge.s32.totalorder %s15, 4
      %s22 = sphi 0, %s41
      %s23 = sphi 0, %s37
      %s24 = sphi 0, %s33
      %s25 = sphi 0, %s22
      %s26 = sphi 0, %s23
      %s27 = sphi 0, %s24
      %s28 = sphi 0, %s25
      %s29 = sphi 0, %s26
      %s30 = sphi 0, %s27
      %s46 = sphi 0, %s48
      %s49 = sphi 0, %s46
      %s50 = sphi 0, %s49
      %s66 = sphi 0, %s50
      %s74 = sphi 0, %s76
      %s77 = sphi 0, %s74
      %s78 = sphi 0, %s77
      %s94 = sphi 0, %s78
      %s100 = sphi 0, %s102
      %s103 = sphi 0, %s100
      %s104 = sphi 0, %s103
      %s120 = sphi 0, %s104
      %s128 = sphi 0, %s130
      %s131 = sphi 0, %s128
      %s132 = sphi 0, %s131
      %s148 = sphi 0, %s132
    $region4: #{my_nn_model_forward.4} parent=1 // loop_header_branch
      %18 = sbr.rel (%p16) target = $region8
    $region5: #{my_nn_model_forward.4} parent=1 // loop_body
      %s20 = ssub.s32 %s15, 1
      %s21 = ssub.s32 %s15, 2
      %s31 = sadd.s32 1, %s24
      %p32 = scmp.ge.s32.totalorder %s31, 1
      %s33 = scalar_select %p32, 0, %s31
      %s34 = sadd.s32 1, %s23
      %s35 = scalar_select %p32, %s34, %s23
      %p36 = scmp.ge.s32.totalorder %s35, 2
      %s37 = scalar_select %p36, 0, %s35
      %s38 = sadd.s32 1, %s22
      %s39 = scalar_select %p36, %s38, %s22
      %p40 = scmp.ge.s32.totalorder %s39, 1
      %s41 = scalar_select %p40, 0, %s39
      %s42 = ssub.s32 %s22, %s41
      %s43 = ssub.s32 %s24, %s33
      %s44 = sor.u32 %s42, %s43
      %p45 = scmp.eq.s32.totalorder %s44, 0
      %s47 = sadd.s32 %s46, 1
      %s48 = scalar_select %p45, %s46, %s47
      %p51 = pneg %p45
      %p52 = scmp.eq.s32.totalorder %s15, 1
      %p53 = por %p51, %p52
      %p54 = scmp.ne.s32.totalorder %s46, %s49
      %p55 = scmp.eq.s32.totalorder %s15, 0
      %p56 = por %p54, %p55
      %p57 = scmp.ne.s32.totalorder %s46, %s49
      %p58 = scmp.eq.s32.totalorder %s20, 1
      %p59 = por %p57, %p58
      %p60 = scmp.ne.s32.totalorder %s49, %s50
      %p61 = scmp.eq.s32.totalorder %s20, 0
      %p62 = por %p60, %p61
      %p63 = scmp.ne.s32.totalorder %s49, %s50
      %p64 = scmp.eq.s32.totalorder %s21, 1
      %p65 = por %p63, %p64
      %p67 = scmp.ne.s32.totalorder %s50, %s66
      %p68 = scmp.eq.s32.totalorder %s21, 0
      %p69 = por %p67, %p68
      %s70 = ssub.s32 %s24, %s33
      %s71 = ssub.s32 %s23, %s37
      %s72 = sor.u32 %s70, %s71
      %p73 = scmp.eq.s32.totalorder %s72, 0
      %s75 = sadd.s32 %s74, 1
      %s76 = scalar_select %p73, %s74, %s75
      %p79 = pneg %p73
      %p80 = scmp.eq.s32.totalorder %s15, 1
      %p81 = por %p79, %p80
      %p82 = scmp.ne.s32.totalorder %s74, %s77
      %p83 = scmp.eq.s32.totalorder %s15, 0
      %p84 = por %p82, %p83
      %p85 = scmp.ne.s32.totalorder %s74, %s77
      %p86 = scmp.eq.s32.totalorder %s20, 1
      %p87 = por %p85, %p86
      %p88 = scmp.ne.s32.totalorder %s77, %s78
      %p89 = scmp.eq.s32.totalorder %s20, 0
      %p90 = por %p88, %p89
      %p91 = scmp.ne.s32.totalorder %s77, %s78
      %p92 = scmp.eq.s32.totalorder %s21, 1
      %p93 = por %p91, %p92
      %p95 = scmp.ne.s32.totalorder %s78, %s94
      %p96 = scmp.eq.s32.totalorder %s21, 0
      %p97 = por %p95, %p96
      %s98 = ssub.s32 %s23, %s37
      %p99 = scmp.eq.s32.totalorder %s98, 0
      %s101 = sadd.s32 %s100, 1
      %s102 = scalar_select %p99, %s100, %s101
      %p105 = pneg %p99
      %p106 = scmp.eq.s32.totalorder %s15, 1
      %p107 = por %p105, %p106
      %p108 = scmp.ne.s32.totalorder %s100, %s103
      %p109 = scmp.eq.s32.totalorder %s15, 0
      %p110 = por %p108, %p109
      %p111 = scmp.ne.s32.totalorder %s100, %s103
      %p112 = scmp.eq.s32.totalorder %s20, 1
      %p113 = por %p111, %p112
      %p114 = scmp.ne.s32.totalorder %s103, %s104
      %p115 = scmp.eq.s32.totalorder %s20, 0
      %p116 = por %p114, %p115
      %p117 = scmp.ne.s32.totalorder %s103, %s104
      %p118 = scmp.eq.s32.totalorder %s21, 1
      %p119 = por %p117, %p118
      %p121 = scmp.ne.s32.totalorder %s104, %s120
      %p122 = scmp.eq.s32.totalorder %s21, 0
      %p123 = por %p121, %p122
      %s124 = ssub.s32 %s22, %s41
      %s125 = ssub.s32 %s23, %s37
      %s126 = sor.u32 %s124, %s125
      %p127 = scmp.eq.s32.totalorder %s126, 0
      %s129 = sadd.s32 %s128, 1
      %s130 = scalar_select %p127, %s128, %s129
      %p133 = pneg %p127
      %p134 = scmp.eq.s32.totalorder %s15, 1
      %p135 = por %p133, %p134
      %p136 = scmp.ne.s32.totalorder %s128, %s131
      %p137 = scmp.eq.s32.totalorder %s15, 0
      %p138 = por %p136, %p137
      %p139 = scmp.ne.s32.totalorder %s128, %s131
      %p140 = scmp.eq.s32.totalorder %s20, 1
      %p141 = por %p139, %p140
      %p142 = scmp.ne.s32.totalorder %s131, %s132
      %p143 = scmp.eq.s32.totalorder %s20, 0
      %p144 = por %p142, %p143
      %p145 = scmp.ne.s32.totalorder %s131, %s132
      %p146 = scmp.eq.s32.totalorder %s21, 1
      %p147 = por %p145, %p146
      %p149 = scmp.ne.s32.totalorder %s132, %s148
      %p150 = scmp.eq.s32.totalorder %s21, 0
      %p151 = por %p149, %p150
      %p152 = scmp.le.s32.totalorder 1, %s15
      %p153 = scmp.lt.s32.totalorder %s15, 3
      %p154 = pnand %p152, %p153
      %p155 = pneg %p154
      // Predicated region
      $region9: #{my_nn_model_forward.4} parent=5 // pred_check
        _
      $region10: #{my_nn_model_forward.4} parent=5 // pred_check_branch
        %157 = sbr.rel (%p154) target = $region12
      $region11: #{my_nn_model_forward.4} parent=5 // pred_region
        %s158 = ssub.s32 %s15, 1
        // Predicated region
        $region13: #{my_nn_model_forward.4} parent=11 // pred_check
          %p159 = pneg %p62
        $region14: #{my_nn_model_forward.4} parent=11 // pred_check_branch
          %161 = sbr.rel (%p159) target = $region16
        $region15: #{my_nn_model_forward.4} parent=11 // pred_region
          %p162 = scmp.lt.s32.totalorder %s25, 0
          %s163 = scalar_select %p162, %s25, 0
          %p164 = scmp.lt.s32.totalorder %s27, 0
          %s165 = scalar_select %p164, %s27, 0
          %s166 = sadd.s32 %s165, %s163
          %s167 = smul.addr %s166, 8
          %s168 = scalar_lea.vmem %s0, %s167
        $region16: #{my_nn_model_forward.4} parent=11 // pred_fallthru
          _
      $region12: #{my_nn_model_forward.4} parent=5 // pred_fallthru
        _
      %p169 = scmp.lt.s32.totalorder %s15, 2
      // Predicated region
      $region17: #{my_nn_model_forward.4} parent=5 // pred_check
        %p170 = pneg %p169
      $region18: #{my_nn_model_forward.4} parent=5 // pred_check_branch
        %172 = sbr.rel (%p170) target = $region20
      $region19: #{my_nn_model_forward.4} parent=5 // pred_region
        // Predicated region
        $region21: #{my_nn_model_forward.4} parent=19 // pred_check
          %p173 = pneg %p84
        $region22: #{my_nn_model_forward.4} parent=19 // pred_check_branch
          %175 = sbr.rel (%p173) target = $region24
        $region23: #{my_nn_model_forward.4} parent=19 // pred_region
          %s176 = sand.u32 %s74, 1
          %s177 = scalar_lea.sflag [#allocation4], %s176
          %s178 = sand.u32 %s74, 1
          %s179 = smul.addr %s178, 2560
          %s180 = scalar_lea.vmem [#allocation3], %s179
          %s181 = smul.u32 16, %s24
          %s182 = smul.u32 20, %s23
          %s184 = ssub.s32 40960, 40960
          %185 = vsyncadd %s177, %s184
          %s186 = smul.addr %s181, 40
          %s187 = sadd.s32 %s182, %s186
          %s188 = smul.addr %s187, 128
          %s189 = scalar_lea.hbm %s1, %s188
          %s190 = sshll.u32 %s180, 4
          %s191 = int_to_ptr.vmem [resolvable:$true] %s190
          %196 = dma.hbm_to_vmem [thread:$0]  %s189, 40960, %s191, %s177, 5120, 2560, 160
        $region24: #{my_nn_model_forward.4} parent=19 // pred_fallthru
          _
        // Predicated region
        $region25: #{my_nn_model_forward.4} parent=19 // pred_check
          %p197 = pneg %p110
        $region26: #{my_nn_model_forward.4} parent=19 // pred_check_branch
          %199 = sbr.rel (%p197) target = $region28
        $region27: #{my_nn_model_forward.4} parent=19 // pred_region
          %s200 = sand.u32 %s100, 1
          %s201 = scalar_lea.sflag [#allocation6], %s200
          %s202 = sand.u32 %s100, 1
          %s203 = smul.addr %s202, 20
          %s204 = scalar_lea.vmem [#allocation5], %s203
          %s205 = smul.u32 20, %s23
          %s207 = ssub.s32 320, 320
          %208 = vsyncadd %s201, %s207
          %s209 = smul.addr %s205, 16
          %s210 = scalar_lea.hbm %s2, %s209
          %s212 = sshll.u32 %s204, 4
          %s213 = int_to_ptr.vmem [resolvable:$true] %s212
          %215 = dma.hbm_to_vmem [thread:$0]  %s210, 320, %s213, %s201
        $region28: #{my_nn_model_forward.4} parent=19 // pred_fallthru
          _
      $region20: #{my_nn_model_forward.4} parent=5 // pred_fallthru
        _
      %p216 = scmp.le.s32.totalorder 1, %s15
      %p217 = scmp.lt.s32.totalorder %s15, 3
      %p218 = pnand %p216, %p217
      %p219 = pneg %p218
      // Predicated region
      $region29: #{my_nn_model_forward.4} parent=5 // pred_check
        _
      $region30: #{my_nn_model_forward.4} parent=5 // pred_check_branch
        %221 = sbr.rel (%p218) target = $region32
      $region31: #{my_nn_model_forward.4} parent=5 // pred_region
        %s222 = ssub.s32 %s15, 1
        %s223 = sand.u32 %s77, 1
        %s224 = scalar_lea.sflag [#allocation4], %s223
        %s225 = sand.u32 %s77, 1
        %s226 = smul.addr %s225, 2560
        %s227 = scalar_lea.vmem [#allocation3], %s226
        // Predicated region
        $region33: #{my_nn_model_forward.4} parent=31 // pred_check
          %p228 = pneg %p90
        $region34: #{my_nn_model_forward.4} parent=31 // pred_check_branch
          %230 = sbr.rel (%p228) target = $region36
        $region35: #{my_nn_model_forward.4} parent=31 // pred_region
          %231 = dma.done %s224, 40960
        $region36: #{my_nn_model_forward.4} parent=31 // pred_fallthru
          _
        %s232 = sand.u32 %s103, 1
        %s233 = scalar_lea.sflag [#allocation6], %s232
        %s234 = sand.u32 %s103, 1
        %s235 = smul.addr %s234, 20
        %s236 = scalar_lea.vmem [#allocation5], %s235
        // Predicated region
        $region37: #{my_nn_model_forward.4} parent=31 // pred_check
          %p237 = pneg %p116
        $region38: #{my_nn_model_forward.4} parent=31 // pred_check_branch
          %239 = sbr.rel (%p237) target = $region40
        $region39: #{my_nn_model_forward.4} parent=31 // pred_region
          %240 = dma.done %s233, 320
        $region40: #{my_nn_model_forward.4} parent=31 // pred_fallthru
          _
        %p241 = scmp.lt.s32.totalorder %s25, 0
        %s242 = scalar_select %p241, %s25, 0
        %p243 = scmp.lt.s32.totalorder %s27, 0
        %s244 = scalar_select %p243, %s27, 0
        %s245 = sadd.s32 %s244, %s242
        %s246 = smul.addr %s245, 8
        %s247 = scalar_lea.vmem %s0, %s246
        %p248 = pneg %p62
        %p249 = pneg %p59
        %s250 = sand.u32 %s77, 1
        %s251 = scalar_lea.sflag [#allocation4], %s250
        %s252 = sand.u32 %s77, 1
        %s253 = smul.addr %s252, 2560
        %s254 = scalar_lea.vmem [#allocation3], %s253
        %p255 = pneg %p90
        %p256 = pneg %p87
        %s257 = sand.u32 %s103, 1
        %s258 = scalar_lea.sflag [#allocation6], %s257
        %s259 = sand.u32 %s103, 1
        %s260 = smul.addr %s259, 20
        %s261 = scalar_lea.vmem [#allocation5], %s260
        %p262 = pneg %p116
        %p263 = pneg %p113
        %p264 = pneg %p144
        %p265 = pneg %p141
        %s266 = smul.u32 20, %s26
        %p267 = scmp.lt.s32.totalorder %s25, 0
        %s268 = scalar_select %p267, %s25, 0
        %p269 = scmp.lt.s32.totalorder %s266, 39
        %s270 = scalar_select %p269, %s266, 39
        %s271 = smul.addr %s268, 40
        %s272 = sadd.s32 %s270, %s271
        %s273 = smul.addr %s272, 8
        %s274 = scalar_lea.vmem %s3, %s273
        %p275 = scmp.lt.s32.totalorder %s25, 0
        %s276 = scalar_select %p275, %s25, 0
        %p277 = scmp.lt.s32.totalorder %s27, 0
        %s278 = scalar_select %p277, %s27, 0
        %s279 = sadd.s32 %s278, %s276
        %s280 = smul.addr %s279, 8
        %s281 = scalar_lea.vmem %s0, %s280
        %s282 = smul.u32 16, %s27
        %s283 = smul.u32 20, %s26
        %s284 = smul.u32 20, %s26
        %s285 = smul.u32 20, %s26
        %p286 = scmp.lt.s32.totalorder %s25, 0
        %s287 = scalar_select %p286, %s25, 0
        %p288 = scmp.lt.s32.totalorder %s285, 39
        %s289 = scalar_select %p288, %s285, 39
        %s290 = smul.addr %s287, 40
        %s291 = sadd.s32 %s289, %s290
        %s292 = smul.addr %s291, 8
        %s293 = scalar_lea.vmem %s3, %s292
        %s294 = smul.u32 20, %s26
        %p295 = scmp.eq.s32.totalorder %s27, 0
        // Predicated region
        $region41: #{my_nn_model_forward.4} parent=31 // pred_check
          %p296 = pneg %p295
        $region42: #{my_nn_model_forward.4} parent=31 // pred_check_branch
          %298 = sbr.rel (%p296) target = $region44
        $region43: #{my_nn_model_forward.4} parent=31 // pred_region
          %299 = vst [vmem:[#allocation2] sm:$0xff] 0.0
          %300 = vst [vmem:[#allocation2 + $0x8] sm:$0xff] 0.0
          %301 = vst [vmem:[#allocation2 + $0x10] sm:$0xff] 0.0
          %302 = vst [vmem:[#allocation2 + $0x18] sm:$0xff] 0.0
          %303 = vst [vmem:[#allocation2 + $0x20] sm:$0xff] 0.0
          %304 = vst [vmem:[#allocation2 + $0x28] sm:$0xff] 0.0
          %305 = vst [vmem:[#allocation2 + $0x30] sm:$0xff] 0.0
          %306 = vst [vmem:[#allocation2 + $0x38] sm:$0xff] 0.0
          %307 = vst [vmem:[#allocation2 + $0x40] sm:$0xff] 0.0
          %308 = vst [vmem:[#allocation2 + $0x48] sm:$0xff] 0.0
          %309 = vst [vmem:[#allocation2 + $0x50] sm:$0xff] 0.0
          %310 = vst [vmem:[#allocation2 + $0x58] sm:$0xff] 0.0
          %311 = vst [vmem:[#allocation2 + $0x60] sm:$0xff] 0.0
          %312 = vst [vmem:[#allocation2 + $0x68] sm:$0xff] 0.0
          %313 = vst [vmem:[#allocation2 + $0x70] sm:$0xff] 0.0
          %314 = vst [vmem:[#allocation2 + $0x78] sm:$0xff] 0.0
          %315 = vst [vmem:[#allocation2 + $0x80] sm:$0xff] 0.0
          %316 = vst [vmem:[#allocation2 + $0x88] sm:$0xff] 0.0
          %317 = vst [vmem:[#allocation2 + $0x90] sm:$0xff] 0.0
          %318 = vst [vmem:[#allocation2 + $0x98] sm:$0xff] 0.0
        $region44: #{my_nn_model_forward.4} parent=31 // pred_fallthru
          _
        %v319 = vld [vmem:[#allocation2] sm:$0xff]
        %v320 = vld [vmem:[#allocation2 + $0x8] sm:$0xff]
        %v321 = vld [vmem:[#allocation2 + $0x10] sm:$0xff]
        %v322 = vld [vmem:[#allocation2 + $0x18] sm:$0xff]
        %v323 = vld [vmem:[#allocation2 + $0x20] sm:$0xff]
        %v324 = vld [vmem:[#allocation2 + $0x28] sm:$0xff]
        %v325 = vld [vmem:[#allocation2 + $0x30] sm:$0xff]
        %v326 = vld [vmem:[#allocation2 + $0x38] sm:$0xff]
        %v327 = vld [vmem:[#allocation2 + $0x40] sm:$0xff]
        %v328 = vld [vmem:[#allocation2 + $0x48] sm:$0xff]
        %v329 = vld [vmem:[#allocation2 + $0x50] sm:$0xff]
        %v330 = vld [vmem:[#allocation2 + $0x58] sm:$0xff]
        %v331 = vld [vmem:[#allocation2 + $0x60] sm:$0xff]
        %v332 = vld [vmem:[#allocation2 + $0x68] sm:$0xff]
        %v333 = vld [vmem:[#allocation2 + $0x70] sm:$0xff]
        %v334 = vld [vmem:[#allocation2 + $0x78] sm:$0xff]
        %v335 = vld [vmem:[#allocation2 + $0x80] sm:$0xff]
        %v336 = vld [vmem:[#allocation2 + $0x88] sm:$0xff]
        %v337 = vld [vmem:[#allocation2 + $0x90] sm:$0xff]
        %v338 = vld [vmem:[#allocation2 + $0x98] sm:$0xff]
        %v339 = vld [vmem:[%s281] sm:$0xff]
        %v340 = vld [vmem:[%s227] sm:$0xff]
        %v341 = vld [vmem:[%s227 + $0x8] sm:$0xff]
        %v342 = vld [vmem:[%s227 + $0x10] sm:$0xff]
        %v343 = vld [vmem:[%s227 + $0x18] sm:$0xff]
        %v344 = vld [vmem:[%s227 + $0x20] sm:$0xff]
        %v345 = vld [vmem:[%s227 + $0x28] sm:$0xff]
        %v346 = vld [vmem:[%s227 + $0x30] sm:$0xff]
        %v347 = vld [vmem:[%s227 + $0x38] sm:$0xff]
        %v348 = vld [vmem:[%s227 + $0x40] sm:$0xff]
        %v349 = vld [vmem:[%s227 + $0x48] sm:$0xff]
        %v350 = vld [vmem:[%s227 + $0x50] sm:$0xff]
        %v351 = vld [vmem:[%s227 + $0x58] sm:$0xff]
        %v352 = vld [vmem:[%s227 + $0x60] sm:$0xff]
        %v353 = vld [vmem:[%s227 + $0x68] sm:$0xff]
        %v354 = vld [vmem:[%s227 + $0x70] sm:$0xff]
        %v355 = vld [vmem:[%s227 + $0x78] sm:$0xff]
        %v356 = vld [vmem:[%s227 + $0x80] sm:$0xff]
        %v357 = vld [vmem:[%s227 + $0x88] sm:$0xff]
        %v358 = vld [vmem:[%s227 + $0x90] sm:$0xff]
        %v359 = vld [vmem:[%s227 + $0x98] sm:$0xff]
        %v360 = vld [vmem:[%s227 + $0xa0] sm:$0xff]
        %v361 = vld [vmem:[%s227 + $0xa8] sm:$0xff]
        %v362 = vld [vmem:[%s227 + $0xb0] sm:$0xff]
        %v363 = vld [vmem:[%s227 + $0xb8] sm:$0xff]
        %v364 = vld [vmem:[%s227 + $0xc0] sm:$0xff]
        %v365 = vld [vmem:[%s227 + $0xc8] sm:$0xff]
        %v366 = vld [vmem:[%s227 + $0xd0] sm:$0xff]
        %v367 = vld [vmem:[%s227 + $0xd8] sm:$0xff]
        %v368 = vld [vmem:[%s227 + $0xe0] sm:$0xff]
        %v369 = vld [vmem:[%s227 + $0xe8] sm:$0xff]
        %v370 = vld [vmem:[%s227 + $0xf0] sm:$0xff]
        %v371 = vld [vmem:[%s227 + $0xf8] sm:$0xff]
        %v372 = vld [vmem:[%s227 + $0x100] sm:$0xff]
        %v373 = vld [vmem:[%s227 + $0x108] sm:$0xff]
        %v374 = vld [vmem:[%s227 + $0x110] sm:$0xff]
        %v375 = vld [vmem:[%s227 + $0x118] sm:$0xff]
        %v376 = vld [vmem:[%s227 + $0x120] sm:$0xff]
        %v377 = vld [vmem:[%s227 + $0x128] sm:$0xff]
        %v378 = vld [vmem:[%s227 + $0x130] sm:$0xff]
        %v379 = vld [vmem:[%s227 + $0x138] sm:$0xff]
        %v380 = vld [vmem:[%s227 + $0x140] sm:$0xff]
        %v381 = vld [vmem:[%s227 + $0x148] sm:$0xff]
        %v382 = vld [vmem:[%s227 + $0x150] sm:$0xff]
        %v383 = vld [vmem:[%s227 + $0x158] sm:$0xff]
        %v384 = vld [vmem:[%s227 + $0x160] sm:$0xff]
        %v385 = vld [vmem:[%s227 + $0x168] sm:$0xff]
        %v386 = vld [vmem:[%s227 + $0x170] sm:$0xff]
        %v387 = vld [vmem:[%s227 + $0x178] sm:$0xff]
        %v388 = vld [vmem:[%s227 + $0x180] sm:$0xff]
        %v389 = vld [vmem:[%s227 + $0x188] sm:$0xff]
        %v390 = vld [vmem:[%s227 + $0x190] sm:$0xff]
        %v391 = vld [vmem:[%s227 + $0x198] sm:$0xff]
        %v392 = vld [vmem:[%s227 + $0x1a0] sm:$0xff]
        %v393 = vld [vmem:[%s227 + $0x1a8] sm:$0xff]
        %v394 = vld [vmem:[%s227 + $0x1b0] sm:$0xff]
        %v395 = vld [vmem:[%s227 + $0x1b8] sm:$0xff]
        %v396 = vld [vmem:[%s227 + $0x1c0] sm:$0xff]
        %v397 = vld [vmem:[%s227 + $0x1c8] sm:$0xff]
        %v398 = vld [vmem:[%s227 + $0x1d0] sm:$0xff]
        %v399 = vld [vmem:[%s227 + $0x1d8] sm:$0xff]
        %v400 = vld [vmem:[%s227 + $0x1e0] sm:$0xff]
        %v401 = vld [vmem:[%s227 + $0x1e8] sm:$0xff]
        %v402 = vld [vmem:[%s227 + $0x1f0] sm:$0xff]
        %v403 = vld [vmem:[%s227 + $0x1f8] sm:$0xff]
        %v404 = vld [vmem:[%s227 + $0x200] sm:$0xff]
        %v405 = vld [vmem:[%s227 + $0x208] sm:$0xff]
        %v406 = vld [vmem:[%s227 + $0x210] sm:$0xff]
        %v407 = vld [vmem:[%s227 + $0x218] sm:$0xff]
        %v408 = vld [vmem:[%s227 + $0x220] sm:$0xff]
        %v409 = vld [vmem:[%s227 + $0x228] sm:$0xff]
        %v410 = vld [vmem:[%s227 + $0x230] sm:$0xff]
        %v411 = vld [vmem:[%s227 + $0x238] sm:$0xff]
        %v412 = vld [vmem:[%s227 + $0x240] sm:$0xff]
        %v413 = vld [vmem:[%s227 + $0x248] sm:$0xff]
        %v414 = vld [vmem:[%s227 + $0x250] sm:$0xff]
        %v415 = vld [vmem:[%s227 + $0x258] sm:$0xff]
        %v416 = vld [vmem:[%s227 + $0x260] sm:$0xff]
        %v417 = vld [vmem:[%s227 + $0x268] sm:$0xff]
        %v418 = vld [vmem:[%s227 + $0x270] sm:$0xff]
        %v419 = vld [vmem:[%s227 + $0x278] sm:$0xff]
        %v420 = vld [vmem:[%s227 + $0x280] sm:$0xff]
        %v421 = vld [vmem:[%s227 + $0x288] sm:$0xff]
        %v422 = vld [vmem:[%s227 + $0x290] sm:$0xff]
        %v423 = vld [vmem:[%s227 + $0x298] sm:$0xff]
        %v424 = vld [vmem:[%s227 + $0x2a0] sm:$0xff]
        %v425 = vld [vmem:[%s227 + $0x2a8] sm:$0xff]
        %v426 = vld [vmem:[%s227 + $0x2b0] sm:$0xff]
        %v427 = vld [vmem:[%s227 + $0x2b8] sm:$0xff]
        %v428 = vld [vmem:[%s227 + $0x2c0] sm:$0xff]
        %v429 = vld [vmem:[%s227 + $0x2c8] sm:$0xff]
        %v430 = vld [vmem:[%s227 + $0x2d0] sm:$0xff]
        %v431 = vld [vmem:[%s227 + $0x2d8] sm:$0xff]
        %v432 = vld [vmem:[%s227 + $0x2e0] sm:$0xff]
        %v433 = vld [vmem:[%s227 + $0x2e8] sm:$0xff]
        %v434 = vld [vmem:[%s227 + $0x2f0] sm:$0xff]
        %v435 = vld [vmem:[%s227 + $0x2f8] sm:$0xff]
        %v436 = vld [vmem:[%s227 + $0x300] sm:$0xff]
        %v437 = vld [vmem:[%s227 + $0x308] sm:$0xff]
        %v438 = vld [vmem:[%s227 + $0x310] sm:$0xff]
        %v439 = vld [vmem:[%s227 + $0x318] sm:$0xff]
        %v440 = vld [vmem:[%s227 + $0x320] sm:$0xff]
        %v441 = vld [vmem:[%s227 + $0x328] sm:$0xff]
        %v442 = vld [vmem:[%s227 + $0x330] sm:$0xff]
        %v443 = vld [vmem:[%s227 + $0x338] sm:$0xff]
        %v444 = vld [vmem:[%s227 + $0x340] sm:$0xff]
        %v445 = vld [vmem:[%s227 + $0x348] sm:$0xff]
        %v446 = vld [vmem:[%s227 + $0x350] sm:$0xff]
        %v447 = vld [vmem:[%s227 + $0x358] sm:$0xff]
        %v448 = vld [vmem:[%s227 + $0x360] sm:$0xff]
        %v449 = vld [vmem:[%s227 + $0x368] sm:$0xff]
        %v450 = vld [vmem:[%s227 + $0x370] sm:$0xff]
        %v451 = vld [vmem:[%s227 + $0x378] sm:$0xff]
        %v452 = vld [vmem:[%s227 + $0x380] sm:$0xff]
        %v453 = vld [vmem:[%s227 + $0x388] sm:$0xff]
        %v454 = vld [vmem:[%s227 + $0x390] sm:$0xff]
        %v455 = vld [vmem:[%s227 + $0x398] sm:$0xff]
        %v456 = vld [vmem:[%s227 + $0x3a0] sm:$0xff]
        %v457 = vld [vmem:[%s227 + $0x3a8] sm:$0xff]
        %v458 = vld [vmem:[%s227 + $0x3b0] sm:$0xff]
        %v459 = vld [vmem:[%s227 + $0x3b8] sm:$0xff]
        %v460 = vld [vmem:[%s227 + $0x3c0] sm:$0xff]
        %v461 = vld [vmem:[%s227 + $0x3c8] sm:$0xff]
        %v462 = vld [vmem:[%s227 + $0x3d0] sm:$0xff]
        %v463 = vld [vmem:[%s227 + $0x3d8] sm:$0xff]
        %v464 = vld [vmem:[%s227 + $0x3e0] sm:$0xff]
        %v465 = vld [vmem:[%s227 + $0x3e8] sm:$0xff]
        %v466 = vld [vmem:[%s227 + $0x3f0] sm:$0xff]
        %v467 = vld [vmem:[%s227 + $0x3f8] sm:$0xff]
        %v468 = vld [vmem:[%s227 + $0x400] sm:$0xff]
        %v469 = vld [vmem:[%s227 + $0x408] sm:$0xff]
        %v470 = vld [vmem:[%s227 + $0x410] sm:$0xff]
        %v471 = vld [vmem:[%s227 + $0x418] sm:$0xff]
        %v472 = vld [vmem:[%s227 + $0x420] sm:$0xff]
        %v473 = vld [vmem:[%s227 + $0x428] sm:$0xff]
        %v474 = vld [vmem:[%s227 + $0x430] sm:$0xff]
        %v475 = vld [vmem:[%s227 + $0x438] sm:$0xff]
        %v476 = vld [vmem:[%s227 + $0x440] sm:$0xff]
        %v477 = vld [vmem:[%s227 + $0x448] sm:$0xff]
        %v478 = vld [vmem:[%s227 + $0x450] sm:$0xff]
        %v479 = vld [vmem:[%s227 + $0x458] sm:$0xff]
        %v480 = vld [vmem:[%s227 + $0x460] sm:$0xff]
        %v481 = vld [vmem:[%s227 + $0x468] sm:$0xff]
        %v482 = vld [vmem:[%s227 + $0x470] sm:$0xff]
        %v483 = vld [vmem:[%s227 + $0x478] sm:$0xff]
        %v484 = vld [vmem:[%s227 + $0x480] sm:$0xff]
        %v485 = vld [vmem:[%s227 + $0x488] sm:$0xff]
        %v486 = vld [vmem:[%s227 + $0x490] sm:$0xff]
        %v487 = vld [vmem:[%s227 + $0x498] sm:$0xff]
        %v488 = vld [vmem:[%s227 + $0x4a0] sm:$0xff]
        %v489 = vld [vmem:[%s227 + $0x4a8] sm:$0xff]
        %v490 = vld [vmem:[%s227 + $0x4b0] sm:$0xff]
        %v491 = vld [vmem:[%s227 + $0x4b8] sm:$0xff]
        %v492 = vld [vmem:[%s227 + $0x4c0] sm:$0xff]
        %v493 = vld [vmem:[%s227 + $0x4c8] sm:$0xff]
        %v494 = vld [vmem:[%s227 + $0x4d0] sm:$0xff]
        %v495 = vld [vmem:[%s227 + $0x4d8] sm:$0xff]
        %v496 = vld [vmem:[%s227 + $0x4e0] sm:$0xff]
        %v497 = vld [vmem:[%s227 + $0x4e8] sm:$0xff]
        %v498 = vld [vmem:[%s227 + $0x4f0] sm:$0xff]
        %v499 = vld [vmem:[%s227 + $0x4f8] sm:$0xff]
        %v500 = vld [vmem:[%s227 + $0x500] sm:$0xff]
        %v501 = vld [vmem:[%s227 + $0x508] sm:$0xff]
        %v502 = vld [vmem:[%s227 + $0x510] sm:$0xff]
        %v503 = vld [vmem:[%s227 + $0x518] sm:$0xff]
        %v504 = vld [vmem:[%s227 + $0x520] sm:$0xff]
        %v505 = vld [vmem:[%s227 + $0x528] sm:$0xff]
        %v506 = vld [vmem:[%s227 + $0x530] sm:$0xff]
        %v507 = vld [vmem:[%s227 + $0x538] sm:$0xff]
        %v508 = vld [vmem:[%s227 + $0x540] sm:$0xff]
        %v509 = vld [vmem:[%s227 + $0x548] sm:$0xff]
        %v510 = vld [vmem:[%s227 + $0x550] sm:$0xff]
        %v511 = vld [vmem:[%s227 + $0x558] sm:$0xff]
        %v512 = vld [vmem:[%s227 + $0x560] sm:$0xff]
        %v513 = vld [vmem:[%s227 + $0x568] sm:$0xff]
        %v514 = vld [vmem:[%s227 + $0x570] sm:$0xff]
        %v515 = vld [vmem:[%s227 + $0x578] sm:$0xff]
        %v516 = vld [vmem:[%s227 + $0x580] sm:$0xff]
        %v517 = vld [vmem:[%s227 + $0x588] sm:$0xff]
        %v518 = vld [vmem:[%s227 + $0x590] sm:$0xff]
        %v519 = vld [vmem:[%s227 + $0x598] sm:$0xff]
        %v520 = vld [vmem:[%s227 + $0x5a0] sm:$0xff]
        %v521 = vld [vmem:[%s227 + $0x5a8] sm:$0xff]
        %v522 = vld [vmem:[%s227 + $0x5b0] sm:$0xff]
        %v523 = vld [vmem:[%s227 + $0x5b8] sm:$0xff]
        %v524 = vld [vmem:[%s227 + $0x5c0] sm:$0xff]
        %v525 = vld [vmem:[%s227 + $0x5c8] sm:$0xff]
        %v526 = vld [vmem:[%s227 + $0x5d0] sm:$0xff]
        %v527 = vld [vmem:[%s227 + $0x5d8] sm:$0xff]
        %v528 = vld [vmem:[%s227 + $0x5e0] sm:$0xff]
        %v529 = vld [vmem:[%s227 + $0x5e8] sm:$0xff]
        %v530 = vld [vmem:[%s227 + $0x5f0] sm:$0xff]
        %v531 = vld [vmem:[%s227 + $0x5f8] sm:$0xff]
        %v532 = vld [vmem:[%s227 + $0x600] sm:$0xff]
        %v533 = vld [vmem:[%s227 + $0x608] sm:$0xff]
        %v534 = vld [vmem:[%s227 + $0x610] sm:$0xff]
        %v535 = vld [vmem:[%s227 + $0x618] sm:$0xff]
        %v536 = vld [vmem:[%s227 + $0x620] sm:$0xff]
        %v537 = vld [vmem:[%s227 + $0x628] sm:$0xff]
        %v538 = vld [vmem:[%s227 + $0x630] sm:$0xff]
        %v539 = vld [vmem:[%s227 + $0x638] sm:$0xff]
        %v540 = vld [vmem:[%s227 + $0x640] sm:$0xff]
        %v541 = vld [vmem:[%s227 + $0x648] sm:$0xff]
        %v542 = vld [vmem:[%s227 + $0x650] sm:$0xff]
        %v543 = vld [vmem:[%s227 + $0x658] sm:$0xff]
        %v544 = vld [vmem:[%s227 + $0x660] sm:$0xff]
        %v545 = vld [vmem:[%s227 + $0x668] sm:$0xff]
        %v546 = vld [vmem:[%s227 + $0x670] sm:$0xff]
        %v547 = vld [vmem:[%s227 + $0x678] sm:$0xff]
        %v548 = vld [vmem:[%s227 + $0x680] sm:$0xff]
        %v549 = vld [vmem:[%s227 + $0x688] sm:$0xff]
        %v550 = vld [vmem:[%s227 + $0x690] sm:$0xff]
        %v551 = vld [vmem:[%s227 + $0x698] sm:$0xff]
        %v552 = vld [vmem:[%s227 + $0x6a0] sm:$0xff]
        %v553 = vld [vmem:[%s227 + $0x6a8] sm:$0xff]
        %v554 = vld [vmem:[%s227 + $0x6b0] sm:$0xff]
        %v555 = vld [vmem:[%s227 + $0x6b8] sm:$0xff]
        %v556 = vld [vmem:[%s227 + $0x6c0] sm:$0xff]
        %v557 = vld [vmem:[%s227 + $0x6c8] sm:$0xff]
        %v558 = vld [vmem:[%s227 + $0x6d0] sm:$0xff]
        %v559 = vld [vmem:[%s227 + $0x6d8] sm:$0xff]
        %v560 = vld [vmem:[%s227 + $0x6e0] sm:$0xff]
        %v561 = vld [vmem:[%s227 + $0x6e8] sm:$0xff]
        %v562 = vld [vmem:[%s227 + $0x6f0] sm:$0xff]
        %v563 = vld [vmem:[%s227 + $0x6f8] sm:$0xff]
        %v564 = vld [vmem:[%s227 + $0x700] sm:$0xff]
        %v565 = vld [vmem:[%s227 + $0x708] sm:$0xff]
        %v566 = vld [vmem:[%s227 + $0x710] sm:$0xff]
        %v567 = vld [vmem:[%s227 + $0x718] sm:$0xff]
        %v568 = vld [vmem:[%s227 + $0x720] sm:$0xff]
        %v569 = vld [vmem:[%s227 + $0x728] sm:$0xff]
        %v570 = vld [vmem:[%s227 + $0x730] sm:$0xff]
        %v571 = vld [vmem:[%s227 + $0x738] sm:$0xff]
        %v572 = vld [vmem:[%s227 + $0x740] sm:$0xff]
        %v573 = vld [vmem:[%s227 + $0x748] sm:$0xff]
        %v574 = vld [vmem:[%s227 + $0x750] sm:$0xff]
        %v575 = vld [vmem:[%s227 + $0x758] sm:$0xff]
        %v576 = vld [vmem:[%s227 + $0x760] sm:$0xff]
        %v577 = vld [vmem:[%s227 + $0x768] sm:$0xff]
        %v578 = vld [vmem:[%s227 + $0x770] sm:$0xff]
        %v579 = vld [vmem:[%s227 + $0x778] sm:$0xff]
        %v580 = vld [vmem:[%s227 + $0x780] sm:$0xff]
        %v581 = vld [vmem:[%s227 + $0x788] sm:$0xff]
        %v582 = vld [vmem:[%s227 + $0x790] sm:$0xff]
        %v583 = vld [vmem:[%s227 + $0x798] sm:$0xff]
        %v584 = vld [vmem:[%s227 + $0x7a0] sm:$0xff]
        %v585 = vld [vmem:[%s227 + $0x7a8] sm:$0xff]
        %v586 = vld [vmem:[%s227 + $0x7b0] sm:$0xff]
        %v587 = vld [vmem:[%s227 + $0x7b8] sm:$0xff]
        %v588 = vld [vmem:[%s227 + $0x7c0] sm:$0xff]
        %v589 = vld [vmem:[%s227 + $0x7c8] sm:$0xff]
        %v590 = vld [vmem:[%s227 + $0x7d0] sm:$0xff]
        %v591 = vld [vmem:[%s227 + $0x7d8] sm:$0xff]
        %v592 = vld [vmem:[%s227 + $0x7e0] sm:$0xff]
        %v593 = vld [vmem:[%s227 + $0x7e8] sm:$0xff]
        %v594 = vld [vmem:[%s227 + $0x7f0] sm:$0xff]
        %v595 = vld [vmem:[%s227 + $0x7f8] sm:$0xff]
        %v596 = vld [vmem:[%s227 + $0x800] sm:$0xff]
        %v597 = vld [vmem:[%s227 + $0x808] sm:$0xff]
        %v598 = vld [vmem:[%s227 + $0x810] sm:$0xff]
        %v599 = vld [vmem:[%s227 + $0x818] sm:$0xff]
        %v600 = vld [vmem:[%s227 + $0x820] sm:$0xff]
        %v601 = vld [vmem:[%s227 + $0x828] sm:$0xff]
        %v602 = vld [vmem:[%s227 + $0x830] sm:$0xff]
        %v603 = vld [vmem:[%s227 + $0x838] sm:$0xff]
        %v604 = vld [vmem:[%s227 + $0x840] sm:$0xff]
        %v605 = vld [vmem:[%s227 + $0x848] sm:$0xff]
        %v606 = vld [vmem:[%s227 + $0x850] sm:$0xff]
        %v607 = vld [vmem:[%s227 + $0x858] sm:$0xff]
        %v608 = vld [vmem:[%s227 + $0x860] sm:$0xff]
        %v609 = vld [vmem:[%s227 + $0x868] sm:$0xff]
        %v610 = vld [vmem:[%s227 + $0x870] sm:$0xff]
        %v611 = vld [vmem:[%s227 + $0x878] sm:$0xff]
        %v612 = vld [vmem:[%s227 + $0x880] sm:$0xff]
        %v613 = vld [vmem:[%s227 + $0x888] sm:$0xff]
        %v614 = vld [vmem:[%s227 + $0x890] sm:$0xff]
        %v615 = vld [vmem:[%s227 + $0x898] sm:$0xff]
        %v616 = vld [vmem:[%s227 + $0x8a0] sm:$0xff]
        %v617 = vld [vmem:[%s227 + $0x8a8] sm:$0xff]
        %v618 = vld [vmem:[%s227 + $0x8b0] sm:$0xff]
        %v619 = vld [vmem:[%s227 + $0x8b8] sm:$0xff]
        %v620 = vld [vmem:[%s227 + $0x8c0] sm:$0xff]
        %v621 = vld [vmem:[%s227 + $0x8c8] sm:$0xff]
        %v622 = vld [vmem:[%s227 + $0x8d0] sm:$0xff]
        %v623 = vld [vmem:[%s227 + $0x8d8] sm:$0xff]
        %v624 = vld [vmem:[%s227 + $0x8e0] sm:$0xff]
        %v625 = vld [vmem:[%s227 + $0x8e8] sm:$0xff]
        %v626 = vld [vmem:[%s227 + $0x8f0] sm:$0xff]
        %v627 = vld [vmem:[%s227 + $0x8f8] sm:$0xff]
        %v628 = vld [vmem:[%s227 + $0x900] sm:$0xff]
        %v629 = vld [vmem:[%s227 + $0x908] sm:$0xff]
        %v630 = vld [vmem:[%s227 + $0x910] sm:$0xff]
        %v631 = vld [vmem:[%s227 + $0x918] sm:$0xff]
        %v632 = vld [vmem:[%s227 + $0x920] sm:$0xff]
        %v633 = vld [vmem:[%s227 + $0x928] sm:$0xff]
        %v634 = vld [vmem:[%s227 + $0x930] sm:$0xff]
        %v635 = vld [vmem:[%s227 + $0x938] sm:$0xff]
        %v636 = vld [vmem:[%s227 + $0x940] sm:$0xff]
        %v637 = vld [vmem:[%s227 + $0x948] sm:$0xff]
        %v638 = vld [vmem:[%s227 + $0x950] sm:$0xff]
        %v639 = vld [vmem:[%s227 + $0x958] sm:$0xff]
        %v640 = vld [vmem:[%s227 + $0x960] sm:$0xff]
        %v641 = vld [vmem:[%s227 + $0x968] sm:$0xff]
        %v642 = vld [vmem:[%s227 + $0x970] sm:$0xff]
        %v643 = vld [vmem:[%s227 + $0x978] sm:$0xff]
        %v644 = vld [vmem:[%s227 + $0x980] sm:$0xff]
        %v645 = vld [vmem:[%s227 + $0x988] sm:$0xff]
        %v646 = vld [vmem:[%s227 + $0x990] sm:$0xff]
        %v647 = vld [vmem:[%s227 + $0x998] sm:$0xff]
        %v648 = vld [vmem:[%s227 + $0x9a0] sm:$0xff]
        %v649 = vld [vmem:[%s227 + $0x9a8] sm:$0xff]
        %v650 = vld [vmem:[%s227 + $0x9b0] sm:$0xff]
        %v651 = vld [vmem:[%s227 + $0x9b8] sm:$0xff]
        %v652 = vld [vmem:[%s227 + $0x9c0] sm:$0xff]
        %v653 = vld [vmem:[%s227 + $0x9c8] sm:$0xff]
        %v654 = vld [vmem:[%s227 + $0x9d0] sm:$0xff]
        %v655 = vld [vmem:[%s227 + $0x9d8] sm:$0xff]
        %v656 = vld [vmem:[%s227 + $0x9e0] sm:$0xff]
        %v657 = vld [vmem:[%s227 + $0x9e8] sm:$0xff]
        %v658 = vld [vmem:[%s227 + $0x9f0] sm:$0xff]
        %v659 = vld [vmem:[%s227 + $0x9f8] sm:$0xff]
        %660 = vmatprep.subr.mxu0 %v341
        %661 = vmatpush1.msra.mxu0 %v340
        %662 = vmatprep.subr.mxu0 %v361
        %663 = vmatpush1.msra.mxu0 %v360
        %664 = vmatprep.subr.mxu0 %v381
        %665 = vmatpush1.msra.mxu0 %v380
        %666 = vmatprep.subr.mxu0 %v401
        %667 = vmatpush1.msra.mxu0 %v400
        %668 = vmatprep.subr.mxu0 %v421
        %669 = vmatpush1.msra.mxu0 %v420
        %670 = vmatprep.subr.mxu0 %v441
        %671 = vmatpush1.msra.mxu0 %v440
        %672 = vmatprep.subr.mxu0 %v461
        %673 = vmatpush1.msra.mxu0 %v460
        %674 = vmatprep.subr.mxu0 %v481
        %675 = vmatpush1.msra.mxu0 %v480
        %676 = vmatprep.subr.mxu0 %v501
        %677 = vmatpush1.msra.mxu0 %v500
        %678 = vmatprep.subr.mxu0 %v521
        %679 = vmatpush1.msra.mxu0 %v520
        %680 = vmatprep.subr.mxu0 %v541
        %681 = vmatpush1.msra.mxu0 %v540
        %682 = vmatprep.subr.mxu0 %v561
        %683 = vmatpush1.msra.mxu0 %v560
        %684 = vmatprep.subr.mxu0 %v581
        %685 = vmatpush1.msra.mxu0 %v580
        %686 = vmatprep.subr.mxu0 %v601
        %687 = vmatpush1.msra.mxu0 %v600
        %688 = vmatprep.subr.mxu0 %v621
        %689 = vmatpush1.msra.mxu0 %v620
        %690 = vmatprep.subr.mxu0 %v641
        %691 = vmatpush1.msra.mxu0 %v640
        %692 = vmatprep.subr.mxu0 0.0
        %693 = vmatpush1.msra.mxu0 0.0
        %694 = vmatprep.subr.mxu0 0.0
        %695 = vmatpush1.msra.mxu0 0.0
        %696 = vmatprep.subr.mxu0 0.0
        %697 = vmatpush1.msra.mxu0 0.0
        %698 = vmatprep.subr.mxu0 0.0
        %699 = vmatpush1.msra.mxu0 0.0
        %700 = vmatprep.subr.mxu0 0.0
        %701 = vmatpush1.msra.mxu0 0.0
        %702 = vmatprep.subr.mxu0 0.0
        %703 = vmatpush1.msra.mxu0 0.0
        %704 = vmatprep.subr.mxu0 0.0
        %705 = vmatpush1.msra.mxu0 0.0
        %706 = vmatprep.subr.mxu0 0.0
        %707 = vmatpush1.msra.mxu0 0.0
        %708 = vmatprep.subr.mxu0 0.0
        %709 = vmatpush1.msra.mxu0 0.0
        %710 = vmatprep.subr.mxu0 0.0
        %711 = vmatpush1.msra.mxu0 0.0
        %712 = vmatprep.subr.mxu0 0.0
        %713 = vmatpush1.msra.mxu0 0.0
        %714 = vmatprep.subr.mxu0 0.0
        %715 = vmatpush1.msra.mxu0 0.0
        %716 = vmatprep.subr.mxu0 0.0
        %717 = vmatpush1.msra.mxu0 0.0
        %718 = vmatprep.subr.mxu0 0.0
        %719 = vmatpush1.msra.mxu0 0.0
        %720 = vmatprep.subr.mxu0 0.0
        %721 = vmatpush1.msra.mxu0 0.0
        %722 = vmatprep.subr.mxu0 0.0
        %723 = vmatpush1.msra.mxu0 0.0
        %724 = vmatprep.mubr.f32.mxu0 0.0
        %725 = vmatmul.mubr.f32.gmra.mrb[0].mxu0 %v339
        %v726 = vpop.f32.mrb[0].mxu0
        %v727 = vadd.f32 0.0, %v726
        %v728 = vpop.f32.mrb[0].mxu0
        %v729 = vadd.f32 0.0, %v728
        %730 = vdwg.mxu0
        %731 = vmatprep.subr.mxu0 %v343
        %732 = vmatpush1.msra.mxu0 %v342
        %733 = vmatprep.subr.mxu0 %v363
        %734 = vmatpush1.msra.mxu0 %v362
        %735 = vmatprep.subr.mxu0 %v383
        %736 = vmatpush1.msra.mxu0 %v382
        %737 = vmatprep.subr.mxu0 %v403
        %738 = vmatpush1.msra.mxu0 %v402
        %739 = vmatprep.subr.mxu0 %v423
        %740 = vmatpush1.msra.mxu0 %v422
        %741 = vmatprep.subr.mxu0 %v443
        %742 = vmatpush1.msra.mxu0 %v442
        %743 = vmatprep.subr.mxu0 %v463
        %744 = vmatpush1.msra.mxu0 %v462
        %745 = vmatprep.subr.mxu0 %v483
        %746 = vmatpush1.msra.mxu0 %v482
        %747 = vmatprep.subr.mxu0 %v503
        %748 = vmatpush1.msra.mxu0 %v502
        %749 = vmatprep.subr.mxu0 %v523
        %750 = vmatpush1.msra.mxu0 %v522
        %751 = vmatprep.subr.mxu0 %v543
        %752 = vmatpush1.msra.mxu0 %v542
        %753 = vmatprep.subr.mxu0 %v563
        %754 = vmatpush1.msra.mxu0 %v562
        %755 = vmatprep.subr.mxu0 %v583
        %756 = vmatpush1.msra.mxu0 %v582
        %757 = vmatprep.subr.mxu0 %v603
        %758 = vmatpush1.msra.mxu0 %v602
        %759 = vmatprep.subr.mxu0 %v623
        %760 = vmatpush1.msra.mxu0 %v622
        %761 = vmatprep.subr.mxu0 %v643
        %762 = vmatpush1.msra.mxu0 %v642
        %763 = vmatprep.subr.mxu0 0.0
        %764 = vmatpush1.msra.mxu0 0.0
        %765 = vmatprep.subr.mxu0 0.0
        %766 = vmatpush1.msra.mxu0 0.0
        %767 = vmatprep.subr.mxu0 0.0
        %768 = vmatpush1.msra.mxu0 0.0
        %769 = vmatprep.subr.mxu0 0.0
        %770 = vmatpush1.msra.mxu0 0.0
        %771 = vmatprep.subr.mxu0 0.0
        %772 = vmatpush1.msra.mxu0 0.0
        %773 = vmatprep.subr.mxu0 0.0
        %774 = vmatpush1.msra.mxu0 0.0
        %775 = vmatprep.subr.mxu0 0.0
        %776 = vmatpush1.msra.mxu0 0.0
        %777 = vmatprep.subr.mxu0 0.0
        %778 = vmatpush1.msra.mxu0 0.0
        %779 = vmatprep.subr.mxu0 0.0
        %780 = vmatpush1.msra.mxu0 0.0
        %781 = vmatprep.subr.mxu0 0.0
        %782 = vmatpush1.msra.mxu0 0.0
        %783 = vmatprep.subr.mxu0 0.0
        %784 = vmatpush1.msra.mxu0 0.0
        %785 = vmatprep.subr.mxu0 0.0
        %786 = vmatpush1.msra.mxu0 0.0
        %787 = vmatprep.subr.mxu0 0.0
        %788 = vmatpush1.msra.mxu0 0.0
        %789 = vmatprep.subr.mxu0 0.0
        %790 = vmatpush1.msra.mxu0 0.0
        %791 = vmatprep.subr.mxu0 0.0
        %792 = vmatpush1.msra.mxu0 0.0
        %793 = vmatprep.subr.mxu0 0.0
        %794 = vmatpush1.msra.mxu0 0.0
        %795 = vmatprep.mubr.f32.mxu0 0.0
        %796 = vmatmul.mubr.f32.gmra.mrb[0].mxu0 %v339
        %v797 = vpop.f32.mrb[0].mxu0
        %v798 = vadd.f32 0.0, %v797
        %v799 = vpop.f32.mrb[0].mxu0
        %v800 = vadd.f32 0.0, %v799
        %801 = vdwg.mxu0
        %802 = vmatprep.subr.mxu0 %v345
        %803 = vmatpush1.msra.mxu0 %v344
        %804 = vmatprep.subr.mxu0 %v365
        %805 = vmatpush1.msra.mxu0 %v364
        %806 = vmatprep.subr.mxu0 %v385
        %807 = vmatpush1.msra.mxu0 %v384
        %808 = vmatprep.subr.mxu0 %v405
        %809 = vmatpush1.msra.mxu0 %v404
        %810 = vmatprep.subr.mxu0 %v425
        %811 = vmatpush1.msra.mxu0 %v424
        %812 = vmatprep.subr.mxu0 %v445
        %813 = vmatpush1.msra.mxu0 %v444
        %814 = vmatprep.subr.mxu0 %v465
        %815 = vmatpush1.msra.mxu0 %v464
        %816 = vmatprep.subr.mxu0 %v485
        %817 = vmatpush1.msra.mxu0 %v484
        %818 = vmatprep.subr.mxu0 %v505
        %819 = vmatpush1.msra.mxu0 %v504
        %820 = vmatprep.subr.mxu0 %v525
        %821 = vmatpush1.msra.mxu0 %v524
        %822 = vmatprep.subr.mxu0 %v545
        %823 = vmatpush1.msra.mxu0 %v544
        %824 = vmatprep.subr.mxu0 %v565
        %825 = vmatpush1.msra.mxu0 %v564
        %826 = vmatprep.subr.mxu0 %v585
        %827 = vmatpush1.msra.mxu0 %v584
        %828 = vmatprep.subr.mxu0 %v605
        %829 = vmatpush1.msra.mxu0 %v604
        %830 = vmatprep.subr.mxu0 %v625
        %831 = vmatpush1.msra.mxu0 %v624
        %832 = vmatprep.subr.mxu0 %v645
        %833 = vmatpush1.msra.mxu0 %v644
        %834 = vmatprep.subr.mxu0 0.0
        %835 = vmatpush1.msra.mxu0 0.0
        %836 = vmatprep.subr.mxu0 0.0
        %837 = vmatpush1.msra.mxu0 0.0
        %838 = vmatprep.subr.mxu0 0.0
        %839 = vmatpush1.msra.mxu0 0.0
        %840 = vmatprep.subr.mxu0 0.0
        %841 = vmatpush1.msra.mxu0 0.0
        %842 = vmatprep.subr.mxu0 0.0
        %843 = vmatpush1.msra.mxu0 0.0
        %844 = vmatprep.subr.mxu0 0.0
        %845 = vmatpush1.msra.mxu0 0.0
        %846 = vmatprep.subr.mxu0 0.0
        %847 = vmatpush1.msra.mxu0 0.0
        %848 = vmatprep.subr.mxu0 0.0
        %849 = vmatpush1.msra.mxu0 0.0
        %850 = vmatprep.subr.mxu0 0.0
        %851 = vmatpush1.msra.mxu0 0.0
        %852 = vmatprep.subr.mxu0 0.0
        %853 = vmatpush1.msra.mxu0 0.0
        %854 = vmatprep.subr.mxu0 0.0
        %855 = vmatpush1.msra.mxu0 0.0
        %856 = vmatprep.subr.mxu0 0.0
        %857 = vmatpush1.msra.mxu0 0.0
        %858 = vmatprep.subr.mxu0 0.0
        %859 = vmatpush1.msra.mxu0 0.0
        %860 = vmatprep.subr.mxu0 0.0
        %861 = vmatpush1.msra.mxu0 0.0
        %862 = vmatprep.subr.mxu0 0.0
        %863 = vmatpush1.msra.mxu0 0.0
        %864 = vmatprep.subr.mxu0 0.0
        %865 = vmatpush1.msra.mxu0 0.0
        %866 = vmatprep.mubr.f32.mxu0 0.0
        %867 = vmatmul.mubr.f32.gmra.mrb[0].mxu0 %v339
        %v868 = vpop.f32.mrb[0].mxu0
        %v869 = vadd.f32 0.0, %v868
        %v870 = vpop.f32.mrb[0].mxu0
        %v871 = vadd.f32 0.0, %v870
        %872 = vdwg.mxu0
        %873 = vmatprep.subr.mxu0 %v347
        %874 = vmatpush1.msra.mxu0 %v346
        %875 = vmatprep.subr.mxu0 %v367
        %876 = vmatpush1.msra.mxu0 %v366
        %877 = vmatprep.subr.mxu0 %v387
        %878 = vmatpush1.msra.mxu0 %v386
        %879 = vmatprep.subr.mxu0 %v407
        %880 = vmatpush1.msra.mxu0 %v406
        %881 = vmatprep.subr.mxu0 %v427
        %882 = vmatpush1.msra.mxu0 %v426
        %883 = vmatprep.subr.mxu0 %v447
        %884 = vmatpush1.msra.mxu0 %v446
        %885 = vmatprep.subr.mxu0 %v467
        %886 = vmatpush1.msra.mxu0 %v466
        %887 = vmatprep.subr.mxu0 %v487
        %888 = vmatpush1.msra.mxu0 %v486
        %889 = vmatprep.subr.mxu0 %v507
        %890 = vmatpush1.msra.mxu0 %v506
        %891 = vmatprep.subr.mxu0 %v527
        %892 = vmatpush1.msra.mxu0 %v526
        %893 = vmatprep.subr.mxu0 %v547
        %894 = vmatpush1.msra.mxu0 %v546
        %895 = vmatprep.subr.mxu0 %v567
        %896 = vmatpush1.msra.mxu0 %v566
        %897 = vmatprep.subr.mxu0 %v587
        %898 = vmatpush1.msra.mxu0 %v586
        %899 = vmatprep.subr.mxu0 %v607
        %900 = vmatpush1.msra.mxu0 %v606
        %901 = vmatprep.subr.mxu0 %v627
        %902 = vmatpush1.msra.mxu0 %v626
        %903 = vmatprep.subr.mxu0 %v647
        %904 = vmatpush1.msra.mxu0 %v646
        %905 = vmatprep.subr.mxu0 0.0
        %906 = vmatpush1.msra.mxu0 0.0
        %907 = vmatprep.subr.mxu0 0.0
        %908 = vmatpush1.msra.mxu0 0.0
        %909 = vmatprep.subr.mxu0 0.0
        %910 = vmatpush1.msra.mxu0 0.0
        %911 = vmatprep.subr.mxu0 0.0
        %912 = vmatpush1.msra.mxu0 0.0
        %913 = vmatprep.subr.mxu0 0.0
        %914 = vmatpush1.msra.mxu0 0.0
        %915 = vmatprep.subr.mxu0 0.0
        %916 = vmatpush1.msra.mxu0 0.0
        %917 = vmatprep.subr.mxu0 0.0
        %918 = vmatpush1.msra.mxu0 0.0
        %919 = vmatprep.subr.mxu0 0.0
        %920 = vmatpush1.msra.mxu0 0.0
        %921 = vmatprep.subr.mxu0 0.0
        %922 = vmatpush1.msra.mxu0 0.0
        %923 = vmatprep.subr.mxu0 0.0
        %924 = vmatpush1.msra.mxu0 0.0
        %925 = vmatprep.subr.mxu0 0.0
        %926 = vmatpush1.msra.mxu0 0.0
        %927 = vmatprep.subr.mxu0 0.0
        %928 = vmatpush1.msra.mxu0 0.0
        %929 = vmatprep.subr.mxu0 0.0
        %930 = vmatpush1.msra.mxu0 0.0
        %931 = vmatprep.subr.mxu0 0.0
        %932 = vmatpush1.msra.mxu0 0.0
        %933 = vmatprep.subr.mxu0 0.0
        %934 = vmatpush1.msra.mxu0 0.0
        %935 = vmatprep.subr.mxu0 0.0
        %936 = vmatpush1.msra.mxu0 0.0
        %937 = vmatprep.mubr.f32.mxu0 0.0
        %938 = vmatmul.mubr.f32.gmra.mrb[0].mxu0 %v339
        %v939 = vpop.f32.mrb[0].mxu0
        %v940 = vadd.f32 0.0, %v939
        %v941 = vpop.f32.mrb[0].mxu0
        %v942 = vadd.f32 0.0, %v941
        %943 = vdwg.mxu0
        %944 = vmatprep.subr.mxu0 %v349
        %945 = vmatpush1.msra.mxu0 %v348
        %946 = vmatprep.subr.mxu0 %v369
        %947 = vmatpush1.msra.mxu0 %v368
        %948 = vmatprep.subr.mxu0 %v389
        %949 = vmatpush1.msra.mxu0 %v388
        %950 = vmatprep.subr.mxu0 %v409
        %951 = vmatpush1.msra.mxu0 %v408
        %952 = vmatprep.subr.mxu0 %v429
        %953 = vmatpush1.msra.mxu0 %v428
        %954 = vmatprep.subr.mxu0 %v449
        %955 = vmatpush1.msra.mxu0 %v448
        %956 = vmatprep.subr.mxu0 %v469
        %957 = vmatpush1.msra.mxu0 %v468
        %958 = vmatprep.subr.mxu0 %v489
        %959 = vmatpush1.msra.mxu0 %v488
        %960 = vmatprep.subr.mxu0 %v509
        %961 = vmatpush1.msra.mxu0 %v508
        %962 = vmatprep.subr.mxu0 %v529
        %963 = vmatpush1.msra.mxu0 %v528
        %964 = vmatprep.subr.mxu0 %v549
        %965 = vmatpush1.msra.mxu0 %v548
        %966 = vmatprep.subr.mxu0 %v569
        %967 = vmatpush1.msra.mxu0 %v568
        %968 = vmatprep.subr.mxu0 %v589
        %969 = vmatpush1.msra.mxu0 %v588
        %970 = vmatprep.subr.mxu0 %v609
        %971 = vmatpush1.msra.mxu0 %v608
        %972 = vmatprep.subr.mxu0 %v629
        %973 = vmatpush1.msra.mxu0 %v628
        %974 = vmatprep.subr.mxu0 %v649
        %975 = vmatpush1.msra.mxu0 %v648
        %976 = vmatprep.subr.mxu0 0.0
        %977 = vmatpush1.msra.mxu0 0.0
        %978 = vmatprep.subr.mxu0 0.0
        %979 = vmatpush1.msra.mxu0 0.0
        %980 = vmatprep.subr.mxu0 0.0
        %981 = vmatpush1.msra.mxu0 0.0
        %982 = vmatprep.subr.mxu0 0.0
        %983 = vmatpush1.msra.mxu0 0.0
        %984 = vmatprep.subr.mxu0 0.0
        %985 = vmatpush1.msra.mxu0 0.0
        %986 = vmatprep.subr.mxu0 0.0
        %987 = vmatpush1.msra.mxu0 0.0
        %988 = vmatprep.subr.mxu0 0.0
        %989 = vmatpush1.msra.mxu0 0.0
        %990 = vmatprep.subr.mxu0 0.0
        %991 = vmatpush1.msra.mxu0 0.0
        %992 = vmatprep.subr.mxu0 0.0
        %993 = vmatpush1.msra.mxu0 0.0
        %994 = vmatprep.subr.mxu0 0.0
        %995 = vmatpush1.msra.mxu0 0.0
        %996 = vmatprep.subr.mxu0 0.0
        %997 = vmatpush1.msra.mxu0 0.0
        %998 = vmatprep.subr.mxu0 0.0
        %999 = vmatpush1.msra.mxu0 0.0
        %1000 = vmatprep.subr.mxu0 0.0
        %1001 = vmatpush1.msra.mxu0 0.0
        %1002 = vmatprep.subr.mxu0 0.0
        %1003 = vmatpush1.msra.mxu0 0.0
        %1004 = vmatprep.subr.mxu0 0.0
        %1005 = vmatpush1.msra.mxu0 0.0
        %1006 = vmatprep.subr.mxu0 0.0
        %1007 = vmatpush1.msra.mxu0 0.0
        %1008 = vmatprep.mubr.f32.mxu0 0.0
        %1009 = vmatmul.mubr.f32.gmra.mrb[0].mxu0 %v339
        %v1010 = vpop.f32.mrb[0].mxu0
        %v1011 = vadd.f32 0.0, %v1010
        %v1012 = vpop.f32.mrb[0].mxu0
        %v1013 = vadd.f32 0.0, %v1012
        %1014 = vdwg.mxu0
        %1015 = vmatprep.subr.mxu0 %v351
        %1016 = vmatpush1.msra.mxu0 %v350
        %1017 = vmatprep.subr.mxu0 %v371
        %1018 = vmatpush1.msra.mxu0 %v370
        %1019 = vmatprep.subr.mxu0 %v391
        %1020 = vmatpush1.msra.mxu0 %v390
        %1021 = vmatprep.subr.mxu0 %v411
        %1022 = vmatpush1.msra.mxu0 %v410
        %1023 = vmatprep.subr.mxu0 %v431
        %1024 = vmatpush1.msra.mxu0 %v430
        %1025 = vmatprep.subr.mxu0 %v451
        %1026 = vmatpush1.msra.mxu0 %v450
        %1027 = vmatprep.subr.mxu0 %v471
        %1028 = vmatpush1.msra.mxu0 %v470
        %1029 = vmatprep.subr.mxu0 %v491
        %1030 = vmatpush1.msra.mxu0 %v490
        %1031 = vmatprep.subr.mxu0 %v511
        %1032 = vmatpush1.msra.mxu0 %v510
        %1033 = vmatprep.subr.mxu0 %v531
        %1034 = vmatpush1.msra.mxu0 %v530
        %1035 = vmatprep.subr.mxu0 %v551
        %1036 = vmatpush1.msra.mxu0 %v550
        %1037 = vmatprep.subr.mxu0 %v571
        %1038 = vmatpush1.msra.mxu0 %v570
        %1039 = vmatprep.subr.mxu0 %v591
        %1040 = vmatpush1.msra.mxu0 %v590
        %1041 = vmatprep.subr.mxu0 %v611
        %1042 = vmatpush1.msra.mxu0 %v610
        %1043 = vmatprep.subr.mxu0 %v631
        %1044 = vmatpush1.msra.mxu0 %v630
        %1045 = vmatprep.subr.mxu0 %v651
        %1046 = vmatpush1.msra.mxu0 %v650
        %1047 = vmatprep.subr.mxu0 0.0
        %1048 = vmatpush1.msra.mxu0 0.0
        %1049 = vmatprep.subr.mxu0 0.0
        %1050 = vmatpush1.msra.mxu0 0.0
        %1051 = vmatprep.subr.mxu0 0.0
        %1052 = vmatpush1.msra.mxu0 0.0
        %1053 = vmatprep.subr.mxu0 0.0
        %1054 = vmatpush1.msra.mxu0 0.0
        %1055 = vmatprep.subr.mxu0 0.0
        %1056 = vmatpush1.msra.mxu0 0.0
        %1057 = vmatprep.subr.mxu0 0.0
        %1058 = vmatpush1.msra.mxu0 0.0
        %1059 = vmatprep.subr.mxu0 0.0
        %1060 = vmatpush1.msra.mxu0 0.0
        %1061 = vmatprep.subr.mxu0 0.0
        %1062 = vmatpush1.msra.mxu0 0.0
        %1063 = vmatprep.subr.mxu0 0.0
        %1064 = vmatpush1.msra.mxu0 0.0
        %1065 = vmatprep.subr.mxu0 0.0
        %1066 = vmatpush1.msra.mxu0 0.0
        %1067 = vmatprep.subr.mxu0 0.0
        %1068 = vmatpush1.msra.mxu0 0.0
        %1069 = vmatprep.subr.mxu0 0.0
        %1070 = vmatpush1.msra.mxu0 0.0
        %1071 = vmatprep.subr.mxu0 0.0
        %1072 = vmatpush1.msra.mxu0 0.0
        %1073 = vmatprep.subr.mxu0 0.0
        %1074 = vmatpush1.msra.mxu0 0.0
        %1075 = vmatprep.subr.mxu0 0.0
        %1076 = vmatpush1.msra.mxu0 0.0
        %1077 = vmatprep.subr.mxu0 0.0
        %1078 = vmatpush1.msra.mxu0 0.0
        %1079 = vmatprep.mubr.f32.mxu0 0.0
        %1080 = vmatmul.mubr.f32.gmra.mrb[0].mxu0 %v339
        %v1081 = vpop.f32.mrb[0].mxu0
        %v1082 = vadd.f32 0.0, %v1081
        %v1083 = vpop.f32.mrb[0].mxu0
        %v1084 = vadd.f32 0.0, %v1083
        %1085 = vdwg.mxu0
        %1086 = vmatprep.subr.mxu0 %v353
        %1087 = vmatpush1.msra.mxu0 %v352
        %1088 = vmatprep.subr.mxu0 %v373
        %1089 = vmatpush1.msra.mxu0 %v372
        %1090 = vmatprep.subr.mxu0 %v393
        %1091 = vmatpush1.msra.mxu0 %v392
        %1092 = vmatprep.subr.mxu0 %v413
        %1093 = vmatpush1.msra.mxu0 %v412
        %1094 = vmatprep.subr.mxu0 %v433
        %1095 = vmatpush1.msra.mxu0 %v432
        %1096 = vmatprep.subr.mxu0 %v453
        %1097 = vmatpush1.msra.mxu0 %v452
        %1098 = vmatprep.subr.mxu0 %v473
        %1099 = vmatpush1.msra.mxu0 %v472
        %1100 = vmatprep.subr.mxu0 %v493
        %1101 = vmatpush1.msra.mxu0 %v492
        %1102 = vmatprep.subr.mxu0 %v513
        %1103 = vmatpush1.msra.mxu0 %v512
        %1104 = vmatprep.subr.mxu0 %v533
        %1105 = vmatpush1.msra.mxu0 %v532
        %1106 = vmatprep.subr.mxu0 %v553
        %1107 = vmatpush1.msra.mxu0 %v552
        %1108 = vmatprep.subr.mxu0 %v573
        %1109 = vmatpush1.msra.mxu0 %v572
        %1110 = vmatprep.subr.mxu0 %v593
        %1111 = vmatpush1.msra.mxu0 %v592
        %1112 = vmatprep.subr.mxu0 %v613
        %1113 = vmatpush1.msra.mxu0 %v612
        %1114 = vmatprep.subr.mxu0 %v633
        %1115 = vmatpush1.msra.mxu0 %v632
        %1116 = vmatprep.subr.mxu0 %v653
        %1117 = vmatpush1.msra.mxu0 %v652
        %1118 = vmatprep.subr.mxu0 0.0
        %1119 = vmatpush1.msra.mxu0 0.0
        %1120 = vmatprep.subr.mxu0 0.0
        %1121 = vmatpush1.msra.mxu0 0.0
        %1122 = vmatprep.subr.mxu0 0.0
        %1123 = vmatpush1.msra.mxu0 0.0
        %1124 = vmatprep.subr.mxu0 0.0
        %1125 = vmatpush1.msra.mxu0 0.0
        %1126 = vmatprep.subr.mxu0 0.0
        %1127 = vmatpush1.msra.mxu0 0.0
        %1128 = vmatprep.subr.mxu0 0.0
        %1129 = vmatpush1.msra.mxu0 0.0
        %1130 = vmatprep.subr.mxu0 0.0
        %1131 = vmatpush1.msra.mxu0 0.0
        %1132 = vmatprep.subr.mxu0 0.0
        %1133 = vmatpush1.msra.mxu0 0.0
        %1134 = vmatprep.subr.mxu0 0.0
        %1135 = vmatpush1.msra.mxu0 0.0
        %1136 = vmatprep.subr.mxu0 0.0
        %1137 = vmatpush1.msra.mxu0 0.0
        %1138 = vmatprep.subr.mxu0 0.0
        %1139 = vmatpush1.msra.mxu0 0.0
        %1140 = vmatprep.subr.mxu0 0.0
        %1141 = vmatpush1.msra.mxu0 0.0
        %1142 = vmatprep.subr.mxu0 0.0
        %1143 = vmatpush1.msra.mxu0 0.0
        %1144 = vmatprep.subr.mxu0 0.0
        %1145 = vmatpush1.msra.mxu0 0.0
        %1146 = vmatprep.subr.mxu0 0.0
        %1147 = vmatpush1.msra.mxu0 0.0
        %1148 = vmatprep.subr.mxu0 0.0
        %1149 = vmatpush1.msra.mxu0 0.0
        %1150 = vmatprep.mubr.f32.mxu0 0.0
        %1151 = vmatmul.mubr.f32.gmra.mrb[0].mxu0 %v339
        %v1152 = vpop.f32.mrb[0].mxu0
        %v1153 = vadd.f32 0.0, %v1152
        %v1154 = vpop.f32.mrb[0].mxu0
        %v1155 = vadd.f32 0.0, %v1154
        %1156 = vdwg.mxu0
        %1157 = vmatprep.subr.mxu0 %v355
        %1158 = vmatpush1.msra.mxu0 %v354
        %1159 = vmatprep.subr.mxu0 %v375
        %1160 = vmatpush1.msra.mxu0 %v374
        %1161 = vmatprep.subr.mxu0 %v395
        %1162 = vmatpush1.msra.mxu0 %v394
        %1163 = vmatprep.subr.mxu0 %v415
        %1164 = vmatpush1.msra.mxu0 %v414
        %1165 = vmatprep.subr.mxu0 %v435
        %1166 = vmatpush1.msra.mxu0 %v434
        %1167 = vmatprep.subr.mxu0 %v455
        %1168 = vmatpush1.msra.mxu0 %v454
        %1169 = vmatprep.subr.mxu0 %v475
        %1170 = vmatpush1.msra.mxu0 %v474
        %1171 = vmatprep.subr.mxu0 %v495
        %1172 = vmatpush1.msra.mxu0 %v494
        %1173 = vmatprep.subr.mxu0 %v515
        %1174 = vmatpush1.msra.mxu0 %v514
        %1175 = vmatprep.subr.mxu0 %v535
        %1176 = vmatpush1.msra.mxu0 %v534
        %1177 = vmatprep.subr.mxu0 %v555
        %1178 = vmatpush1.msra.mxu0 %v554
        %1179 = vmatprep.subr.mxu0 %v575
        %1180 = vmatpush1.msra.mxu0 %v574
        %1181 = vmatprep.subr.mxu0 %v595
        %1182 = vmatpush1.msra.mxu0 %v594
        %1183 = vmatprep.subr.mxu0 %v615
        %1184 = vmatpush1.msra.mxu0 %v614
        %1185 = vmatprep.subr.mxu0 %v635
        %1186 = vmatpush1.msra.mxu0 %v634
        %1187 = vmatprep.subr.mxu0 %v655
        %1188 = vmatpush1.msra.mxu0 %v654
        %1189 = vmatprep.subr.mxu0 0.0
        %1190 = vmatpush1.msra.mxu0 0.0
        %1191 = vmatprep.subr.mxu0 0.0
        %1192 = vmatpush1.msra.mxu0 0.0
        %1193 = vmatprep.subr.mxu0 0.0
        %1194 = vmatpush1.msra.mxu0 0.0
        %1195 = vmatprep.subr.mxu0 0.0
        %1196 = vmatpush1.msra.mxu0 0.0
        %1197 = vmatprep.subr.mxu0 0.0
        %1198 = vmatpush1.msra.mxu0 0.0
        %1199 = vmatprep.subr.mxu0 0.0
        %1200 = vmatpush1.msra.mxu0 0.0
        %1201 = vmatprep.subr.mxu0 0.0
        %1202 = vmatpush1.msra.mxu0 0.0
        %1203 = vmatprep.subr.mxu0 0.0
        %1204 = vmatpush1.msra.mxu0 0.0
        %1205 = vmatprep.subr.mxu0 0.0
        %1206 = vmatpush1.msra.mxu0 0.0
        %1207 = vmatprep.subr.mxu0 0.0
        %1208 = vmatpush1.msra.mxu0 0.0
        %1209 = vmatprep.subr.mxu0 0.0
        %1210 = vmatpush1.msra.mxu0 0.0
        %1211 = vmatprep.subr.mxu0 0.0
        %1212 = vmatpush1.msra.mxu0 0.0
        %1213 = vmatprep.subr.mxu0 0.0
        %1214 = vmatpush1.msra.mxu0 0.0
        %1215 = vmatprep.subr.mxu0 0.0
        %1216 = vmatpush1.msra.mxu0 0.0
        %1217 = vmatprep.subr.mxu0 0.0
        %1218 = vmatpush1.msra.mxu0 0.0
        %1219 = vmatprep.subr.mxu0 0.0
        %1220 = vmatpush1.msra.mxu0 0.0
        %1221 = vmatprep.mubr.f32.mxu0 0.0
        %1222 = vmatmul.mubr.f32.gmra.mrb[0].mxu0 %v339
        %v1223 = vpop.f32.mrb[0].mxu0
        %v1224 = vadd.f32 0.0, %v1223
        %v1225 = vpop.f32.mrb[0].mxu0
        %v1226 = vadd.f32 0.0, %v1225
        %1227 = vdwg.mxu0
        %1228 = vmatprep.subr.mxu0 %v357
        %1229 = vmatpush1.msra.mxu0 %v356
        %1230 = vmatprep.subr.mxu0 %v377
        %1231 = vmatpush1.msra.mxu0 %v376
        %1232 = vmatprep.subr.mxu0 %v397
        %1233 = vmatpush1.msra.mxu0 %v396
        %1234 = vmatprep.subr.mxu0 %v417
        %1235 = vmatpush1.msra.mxu0 %v416
        %1236 = vmatprep.subr.mxu0 %v437
        %1237 = vmatpush1.msra.mxu0 %v436
        %1238 = vmatprep.subr.mxu0 %v457
        %1239 = vmatpush1.msra.mxu0 %v456
        %1240 = vmatprep.subr.mxu0 %v477
        %1241 = vmatpush1.msra.mxu0 %v476
        %1242 = vmatprep.subr.mxu0 %v497
        %1243 = vmatpush1.msra.mxu0 %v496
        %1244 = vmatprep.subr.mxu0 %v517
        %1245 = vmatpush1.msra.mxu0 %v516
        %1246 = vmatprep.subr.mxu0 %v537
        %1247 = vmatpush1.msra.mxu0 %v536
        %1248 = vmatprep.subr.mxu0 %v557
        %1249 = vmatpush1.msra.mxu0 %v556
        %1250 = vmatprep.subr.mxu0 %v577
        %1251 = vmatpush1.msra.mxu0 %v576
        %1252 = vmatprep.subr.mxu0 %v597
        %1253 = vmatpush1.msra.mxu0 %v596
        %1254 = vmatprep.subr.mxu0 %v617
        %1255 = vmatpush1.msra.mxu0 %v616
        %1256 = vmatprep.subr.mxu0 %v637
        %1257 = vmatpush1.msra.mxu0 %v636
        %1258 = vmatprep.subr.mxu0 %v657
        %1259 = vmatpush1.msra.mxu0 %v656
        %1260 = vmatprep.subr.mxu0 0.0
        %1261 = vmatpush1.msra.mxu0 0.0
        %1262 = vmatprep.subr.mxu0 0.0
        %1263 = vmatpush1.msra.mxu0 0.0
        %1264 = vmatprep.subr.mxu0 0.0
        %1265 = vmatpush1.msra.mxu0 0.0
        %1266 = vmatprep.subr.mxu0 0.0
        %1267 = vmatpush1.msra.mxu0 0.0
        %1268 = vmatprep.subr.mxu0 0.0
        %1269 = vmatpush1.msra.mxu0 0.0
        %1270 = vmatprep.subr.mxu0 0.0
        %1271 = vmatpush1.msra.mxu0 0.0
        %1272 = vmatprep.subr.mxu0 0.0
        %1273 = vmatpush1.msra.mxu0 0.0
        %1274 = vmatprep.subr.mxu0 0.0
        %1275 = vmatpush1.msra.mxu0 0.0
        %1276 = vmatprep.subr.mxu0 0.0
        %1277 = vmatpush1.msra.mxu0 0.0
        %1278 = vmatprep.subr.mxu0 0.0
        %1279 = vmatpush1.msra.mxu0 0.0
        %1280 = vmatprep.subr.mxu0 0.0
        %1281 = vmatpush1.msra.mxu0 0.0
        %1282 = vmatprep.subr.mxu0 0.0
        %1283 = vmatpush1.msra.mxu0 0.0
        %1284 = vmatprep.subr.mxu0 0.0
        %1285 = vmatpush1.msra.mxu0 0.0
        %1286 = vmatprep.subr.mxu0 0.0
        %1287 = vmatpush1.msra.mxu0 0.0
        %1288 = vmatprep.subr.mxu0 0.0
        %1289 = vmatpush1.msra.mxu0 0.0
        %1290 = vmatprep.subr.mxu0 0.0
        %1291 = vmatpush1.msra.mxu0 0.0
        %1292 = vmatprep.mubr.f32.mxu0 0.0
        %1293 = vmatmul.mubr.f32.gmra.mrb[0].mxu0 %v339
        %v1294 = vpop.f32.mrb[0].mxu0
        %v1295 = vadd.f32 0.0, %v1294
        %v1296 = vpop.f32.mrb[0].mxu0
        %v1297 = vadd.f32 0.0, %v1296
        %1298 = vdwg.mxu0
        %1299 = vmatprep.subr.mxu0 %v359
        %1300 = vmatpush1.msra.mxu0 %v358
        %1301 = vmatprep.subr.mxu0 %v379
        %1302 = vmatpush1.msra.mxu0 %v378
        %1303 = vmatprep.subr.mxu0 %v399
        %1304 = vmatpush1.msra.mxu0 %v398
        %1305 = vmatprep.subr.mxu0 %v419
        %1306 = vmatpush1.msra.mxu0 %v418
        %1307 = vmatprep.subr.mxu0 %v439
        %1308 = vmatpush1.msra.mxu0 %v438
        %1309 = vmatprep.subr.mxu0 %v459
        %1310 = vmatpush1.msra.mxu0 %v458
        %1311 = vmatprep.subr.mxu0 %v479
        %1312 = vmatpush1.msra.mxu0 %v478
        %1313 = vmatprep.subr.mxu0 %v499
        %1314 = vmatpush1.msra.mxu0 %v498
        %1315 = vmatprep.subr.mxu0 %v519
        %1316 = vmatpush1.msra.mxu0 %v518
        %1317 = vmatprep.subr.mxu0 %v539
        %1318 = vmatpush1.msra.mxu0 %v538
        %1319 = vmatprep.subr.mxu0 %v559
        %1320 = vmatpush1.msra.mxu0 %v558
        %1321 = vmatprep.subr.mxu0 %v579
        %1322 = vmatpush1.msra.mxu0 %v578
        %1323 = vmatprep.subr.mxu0 %v599
        %1324 = vmatpush1.msra.mxu0 %v598
        %1325 = vmatprep.subr.mxu0 %v619
        %1326 = vmatpush1.msra.mxu0 %v618
        %1327 = vmatprep.subr.mxu0 %v639
        %1328 = vmatpush1.msra.mxu0 %v638
        %1329 = vmatprep.subr.mxu0 %v659
        %1330 = vmatpush1.msra.mxu0 %v658
        %1331 = vmatprep.subr.mxu0 0.0
        %1332 = vmatpush1.msra.mxu0 0.0
        %1333 = vmatprep.subr.mxu0 0.0
        %1334 = vmatpush1.msra.mxu0 0.0
        %1335 = vmatprep.subr.mxu0 0.0
        %1336 = vmatpush1.msra.mxu0 0.0
        %1337 = vmatprep.subr.mxu0 0.0
        %1338 = vmatpush1.msra.mxu0 0.0
        %1339 = vmatprep.subr.mxu0 0.0
        %1340 = vmatpush1.msra.mxu0 0.0
        %1341 = vmatprep.subr.mxu0 0.0
        %1342 = vmatpush1.msra.mxu0 0.0
        %1343 = vmatprep.subr.mxu0 0.0
        %1344 = vmatpush1.msra.mxu0 0.0
        %1345 = vmatprep.subr.mxu0 0.0
        %1346 = vmatpush1.msra.mxu0 0.0
        %1347 = vmatprep.subr.mxu0 0.0
        %1348 = vmatpush1.msra.mxu0 0.0
        %1349 = vmatprep.subr.mxu0 0.0
        %1350 = vmatpush1.msra.mxu0 0.0
        %1351 = vmatprep.subr.mxu0 0.0
        %1352 = vmatpush1.msra.mxu0 0.0
        %1353 = vmatprep.subr.mxu0 0.0
        %1354 = vmatpush1.msra.mxu0 0.0
        %1355 = vmatprep.subr.mxu0 0.0
        %1356 = vmatpush1.msra.mxu0 0.0
        %1357 = vmatprep.subr.mxu0 0.0
        %1358 = vmatpush1.msra.mxu0 0.0
        %1359 = vmatprep.subr.mxu0 0.0
        %1360 = vmatpush1.msra.mxu0 0.0
        %1361 = vmatprep.subr.mxu0 0.0
        %1362 = vmatpush1.msra.mxu0 0.0
        %1363 = vmatprep.mubr.f32.mxu0 0.0
        %1364 = vmatmul.mubr.f32.gmra.mrb[0].mxu0 %v339
        %v1365 = vpop.f32.mrb[0].mxu0
        %v1366 = vadd.f32 0.0, %v1365
        %v1367 = vpop.f32.mrb[0].mxu0
        %v1368 = vadd.f32 0.0, %v1367
        %1369 = vdwg.mxu0
        %v1370 = vadd.f32 %v319, %v727
        %v1371 = vadd.f32 %v320, %v729
        %v1372 = vadd.f32 %v321, %v798
        %v1373 = vadd.f32 %v322, %v800
        %v1374 = vadd.f32 %v323, %v869
        %v1375 = vadd.f32 %v324, %v871
        %v1376 = vadd.f32 %v325, %v940
        %v1377 = vadd.f32 %v326, %v942
        %v1378 = vadd.f32 %v327, %v1011
        %v1379 = vadd.f32 %v328, %v1013
        %v1380 = vadd.f32 %v329, %v1082
        %v1381 = vadd.f32 %v330, %v1084
        %v1382 = vadd.f32 %v331, %v1153
        %v1383 = vadd.f32 %v332, %v1155
        %v1384 = vadd.f32 %v333, %v1224
        %v1385 = vadd.f32 %v334, %v1226
        %v1386 = vadd.f32 %v335, %v1295
        %v1387 = vadd.f32 %v336, %v1297
        %v1388 = vadd.f32 %v337, %v1366
        %v1389 = vadd.f32 %v338, %v1368
        %1390 = vst [vmem:[#allocation2] sm:$0xff] %v1370
        %1391 = vst [vmem:[#allocation2 + $0x8] sm:$0xff] %v1371
        %1392 = vst [vmem:[#allocation2 + $0x10] sm:$0xff] %v1372
        %1393 = vst [vmem:[#allocation2 + $0x18] sm:$0xff] %v1373
        %1394 = vst [vmem:[#allocation2 + $0x20] sm:$0xff] %v1374
        %1395 = vst [vmem:[#allocation2 + $0x28] sm:$0xff] %v1375
        %1396 = vst [vmem:[#allocation2 + $0x30] sm:$0xff] %v1376
        %1397 = vst [vmem:[#allocation2 + $0x38] sm:$0xff] %v1377
        %1398 = vst [vmem:[#allocation2 + $0x40] sm:$0xff] %v1378
        %1399 = vst [vmem:[#allocation2 + $0x48] sm:$0xff] %v1379
        %1400 = vst [vmem:[#allocation2 + $0x50] sm:$0xff] %v1380
        %1401 = vst [vmem:[#allocation2 + $0x58] sm:$0xff] %v1381
        %1402 = vst [vmem:[#allocation2 + $0x60] sm:$0xff] %v1382
        %1403 = vst [vmem:[#allocation2 + $0x68] sm:$0xff] %v1383
        %1404 = vst [vmem:[#allocation2 + $0x70] sm:$0xff] %v1384
        %1405 = vst [vmem:[#allocation2 + $0x78] sm:$0xff] %v1385
        %1406 = vst [vmem:[#allocation2 + $0x80] sm:$0xff] %v1386
        %1407 = vst [vmem:[#allocation2 + $0x88] sm:$0xff] %v1387
        %1408 = vst [vmem:[#allocation2 + $0x90] sm:$0xff] %v1388
        %1409 = vst [vmem:[#allocation2 + $0x98] sm:$0xff] %v1389
        // Predicated region
        $region45: #{my_nn_model_forward.4} parent=31 // pred_check
          %p1410 = pneg %p295
        $region46: #{my_nn_model_forward.4} parent=31 // pred_check_branch
          %1412 = sbr.rel (%p1410) target = $region48
        $region47: #{my_nn_model_forward.4} parent=31 // pred_region
          %v1413 = vld [vmem:[#allocation2] sm:$0xff]
          %v1414 = vld [vmem:[#allocation2 + $0x8] sm:$0xff]
          %v1415 = vld [vmem:[#allocation2 + $0x10] sm:$0xff]
          %v1416 = vld [vmem:[#allocation2 + $0x18] sm:$0xff]
          %v1417 = vld [vmem:[#allocation2 + $0x20] sm:$0xff]
          %v1418 = vld [vmem:[#allocation2 + $0x28] sm:$0xff]
          %v1419 = vld [vmem:[#allocation2 + $0x30] sm:$0xff]
          %v1420 = vld [vmem:[#allocation2 + $0x38] sm:$0xff]
          %v1421 = vld [vmem:[#allocation2 + $0x40] sm:$0xff]
          %v1422 = vld [vmem:[#allocation2 + $0x48] sm:$0xff]
          %v1423 = vld [vmem:[#allocation2 + $0x50] sm:$0xff]
          %v1424 = vld [vmem:[#allocation2 + $0x58] sm:$0xff]
          %v1425 = vld [vmem:[#allocation2 + $0x60] sm:$0xff]
          %v1426 = vld [vmem:[#allocation2 + $0x68] sm:$0xff]
          %v1427 = vld [vmem:[#allocation2 + $0x70] sm:$0xff]
          %v1428 = vld [vmem:[#allocation2 + $0x78] sm:$0xff]
          %v1429 = vld [vmem:[#allocation2 + $0x80] sm:$0xff]
          %v1430 = vld [vmem:[#allocation2 + $0x88] sm:$0xff]
          %v1431 = vld [vmem:[#allocation2 + $0x90] sm:$0xff]
          %v1432 = vld [vmem:[#allocation2 + $0x98] sm:$0xff]
          %v1433 = vld [vmem:[%s236] sm:$0xff]
          %v1434 = vld [vmem:[%s236 + $0x8] sm:$0xff]
          %v1435 = vld [vmem:[%s236 + $0x10] sm:$0xf]
          %v1439 = vlaneseq
          %v1440 = vshrl.u32 %v1439, 7
          %v1441 = vsub.s32 0, %v1440
          %v1442 = vrot.slane %v1433, %v1441
          %v1443 = vlaneseq
          %v1444 = vshrl.u32 %v1443, 7
          %v1445 = vsub.s32 1, %v1444
          %v1446 = vrot.slane %v1433, %v1445
          %v1447 = vlaneseq
          %v1448 = vshrl.u32 %v1447, 7
          %v1449 = vsub.s32 2, %v1448
          %v1450 = vrot.slane %v1433, %v1449
          %v1451 = vlaneseq
          %v1452 = vshrl.u32 %v1451, 7
          %v1453 = vsub.s32 3, %v1452
          %v1454 = vrot.slane %v1433, %v1453
          %v1455 = vlaneseq
          %v1456 = vshrl.u32 %v1455, 7
          %v1457 = vsub.s32 4, %v1456
          %v1458 = vrot.slane %v1433, %v1457
          %v1459 = vlaneseq
          %v1460 = vshrl.u32 %v1459, 7
          %v1461 = vsub.s32 5, %v1460
          %v1462 = vrot.slane %v1433, %v1461
          %v1463 = vlaneseq
          %v1464 = vshrl.u32 %v1463, 7
          %v1465 = vsub.s32 6, %v1464
          %v1466 = vrot.slane %v1433, %v1465
          %v1467 = vlaneseq
          %v1468 = vshrl.u32 %v1467, 7
          %v1469 = vsub.s32 7, %v1468
          %v1470 = vrot.slane %v1433, %v1469
          %v1471 = vlaneseq
          %v1472 = vshrl.u32 %v1471, 7
          %v1473 = vsub.s32 0, %v1472
          %v1474 = vrot.slane %v1434, %v1473
          %v1475 = vlaneseq
          %v1476 = vshrl.u32 %v1475, 7
          %v1477 = vsub.s32 1, %v1476
          %v1478 = vrot.slane %v1434, %v1477
          %v1479 = vlaneseq
          %v1480 = vshrl.u32 %v1479, 7
          %v1481 = vsub.s32 2, %v1480
          %v1482 = vrot.slane %v1434, %v1481
          %v1483 = vlaneseq
          %v1484 = vshrl.u32 %v1483, 7
          %v1485 = vsub.s32 3, %v1484
          %v1486 = vrot.slane %v1434, %v1485
          %v1487 = vlaneseq
          %v1488 = vshrl.u32 %v1487, 7
          %v1489 = vsub.s32 4, %v1488
          %v1490 = vrot.slane %v1434, %v1489
          %v1491 = vlaneseq
          %v1492 = vshrl.u32 %v1491, 7
          %v1493 = vsub.s32 5, %v1492
          %v1494 = vrot.slane %v1434, %v1493
          %v1495 = vlaneseq
          %v1496 = vshrl.u32 %v1495, 7
          %v1497 = vsub.s32 6, %v1496
          %v1498 = vrot.slane %v1434, %v1497
          %v1499 = vlaneseq
          %v1500 = vshrl.u32 %v1499, 7
          %v1501 = vsub.s32 7, %v1500
          %v1502 = vrot.slane %v1434, %v1501
          %v1503 = vlaneseq
          %v1504 = vshrl.u32 %v1503, 7
          %v1505 = vsub.s32 0, %v1504
          %v1506 = vrot.slane %v1435, %v1505
          %v1507 = vlaneseq
          %v1508 = vshrl.u32 %v1507, 7
          %v1509 = vsub.s32 1, %v1508
          %v1510 = vrot.slane %v1435, %v1509
          %v1511 = vlaneseq
          %v1512 = vshrl.u32 %v1511, 7
          %v1513 = vsub.s32 2, %v1512
          %v1514 = vrot.slane %v1435, %v1513
          %v1515 = vlaneseq
          %v1516 = vshrl.u32 %v1515, 7
          %v1517 = vsub.s32 3, %v1516
          %v1518 = vrot.slane %v1435, %v1517
          %v1539 = vadd.f32 %v1413, %v1442
          %v1540 = vadd.f32 %v1414, %v1446
          %v1541 = vadd.f32 %v1415, %v1450
          %v1542 = vadd.f32 %v1416, %v1454
          %v1543 = vadd.f32 %v1417, %v1458
          %v1544 = vadd.f32 %v1418, %v1462
          %v1545 = vadd.f32 %v1419, %v1466
          %v1546 = vadd.f32 %v1420, %v1470
          %v1547 = vadd.f32 %v1421, %v1474
          %v1548 = vadd.f32 %v1422, %v1478
          %v1549 = vadd.f32 %v1423, %v1482
          %v1550 = vadd.f32 %v1424, %v1486
          %v1551 = vadd.f32 %v1425, %v1490
          %v1552 = vadd.f32 %v1426, %v1494
          %v1553 = vadd.f32 %v1427, %v1498
          %v1554 = vadd.f32 %v1428, %v1502
          %v1555 = vadd.f32 %v1429, %v1506
          %v1556 = vadd.f32 %v1430, %v1510
          %v1557 = vadd.f32 %v1431, %v1514
          %v1558 = vadd.f32 %v1432, %v1518
          %v1559 = vmul.f32 %v1539, 0.5
          %v1560 = vmul.f32 %v1540, 0.5
          %v1561 = vmul.f32 %v1541, 0.5
          %v1562 = vmul.f32 %v1542, 0.5
          %v1563 = vmul.f32 %v1543, 0.5
          %v1564 = vmul.f32 %v1544, 0.5
          %v1565 = vmul.f32 %v1545, 0.5
          %v1566 = vmul.f32 %v1546, 0.5
          %v1567 = vmul.f32 %v1547, 0.5
          %v1568 = vmul.f32 %v1548, 0.5
          %v1569 = vmul.f32 %v1549, 0.5
          %v1570 = vmul.f32 %v1550, 0.5
          %v1571 = vmul.f32 %v1551, 0.5
          %v1572 = vmul.f32 %v1552, 0.5
          %v1573 = vmul.f32 %v1553, 0.5
          %v1574 = vmul.f32 %v1554, 0.5
          %v1575 = vmul.f32 %v1555, 0.5
          %v1576 = vmul.f32 %v1556, 0.5
          %v1577 = vmul.f32 %v1557, 0.5
          %v1578 = vmul.f32 %v1558, 0.5
          %v1579 = vmul.f32 %v1539, 0.70710677
          %v1580 = vmul.f32 %v1540, 0.70710677
          %v1581 = vmul.f32 %v1541, 0.70710677
          %v1582 = vmul.f32 %v1542, 0.70710677
          %v1583 = vmul.f32 %v1543, 0.70710677
          %v1584 = vmul.f32 %v1544, 0.70710677
          %v1585 = vmul.f32 %v1545, 0.70710677
          %v1586 = vmul.f32 %v1546, 0.70710677
          %v1587 = vmul.f32 %v1547, 0.70710677
          %v1588 = vmul.f32 %v1548, 0.70710677
          %v1589 = vmul.f32 %v1549, 0.70710677
          %v1590 = vmul.f32 %v1550, 0.70710677
          %v1591 = vmul.f32 %v1551, 0.70710677
          %v1592 = vmul.f32 %v1552, 0.70710677
          %v1593 = vmul.f32 %v1553, 0.70710677
          %v1594 = vmul.f32 %v1554, 0.70710677
          %v1595 = vmul.f32 %v1555, 0.70710677
          %v1596 = vmul.f32 %v1556, 0.70710677
          %v1597 = vmul.f32 %v1557, 0.70710677
          %v1598 = vmul.f32 %v1558, 0.70710677
          %v1599 = verf.f32.pop %v1579
          %v1600 = verf.f32.pop %v1580
          %v1601 = verf.f32.pop %v1581
          %v1602 = verf.f32.pop %v1582
          %v1603 = verf.f32.pop %v1583
          %v1604 = verf.f32.pop %v1584
          %v1605 = verf.f32.pop %v1585
          %v1606 = verf.f32.pop %v1586
          %v1607 = verf.f32.pop %v1587
          %v1608 = verf.f32.pop %v1588
          %v1609 = verf.f32.pop %v1589
          %v1610 = verf.f32.pop %v1590
          %v1611 = verf.f32.pop %v1591
          %v1612 = verf.f32.pop %v1592
          %v1613 = verf.f32.pop %v1593
          %v1614 = verf.f32.pop %v1594
          %v1615 = verf.f32.pop %v1595
          %v1616 = verf.f32.pop %v1596
          %v1617 = verf.f32.pop %v1597
          %v1618 = verf.f32.pop %v1598
          %v1619 = vadd.f32 %v1599, 1.0
          %v1620 = vadd.f32 %v1600, 1.0
          %v1621 = vadd.f32 %v1601, 1.0
          %v1622 = vadd.f32 %v1602, 1.0
          %v1623 = vadd.f32 %v1603, 1.0
          %v1624 = vadd.f32 %v1604, 1.0
          %v1625 = vadd.f32 %v1605, 1.0
          %v1626 = vadd.f32 %v1606, 1.0
          %v1627 = vadd.f32 %v1607, 1.0
          %v1628 = vadd.f32 %v1608, 1.0
          %v1629 = vadd.f32 %v1609, 1.0
          %v1630 = vadd.f32 %v1610, 1.0
          %v1631 = vadd.f32 %v1611, 1.0
          %v1632 = vadd.f32 %v1612, 1.0
          %v1633 = vadd.f32 %v1613, 1.0
          %v1634 = vadd.f32 %v1614, 1.0
          %v1635 = vadd.f32 %v1615, 1.0
          %v1636 = vadd.f32 %v1616, 1.0
          %v1637 = vadd.f32 %v1617, 1.0
          %v1638 = vadd.f32 %v1618, 1.0
          %v1639 = vmul.f32 %v1559, %v1619
          %v1640 = vmul.f32 %v1560, %v1620
          %v1641 = vmul.f32 %v1561, %v1621
          %v1642 = vmul.f32 %v1562, %v1622
          %v1643 = vmul.f32 %v1563, %v1623
          %v1644 = vmul.f32 %v1564, %v1624
          %v1645 = vmul.f32 %v1565, %v1625
          %v1646 = vmul.f32 %v1566, %v1626
          %v1647 = vmul.f32 %v1567, %v1627
          %v1648 = vmul.f32 %v1568, %v1628
          %v1649 = vmul.f32 %v1569, %v1629
          %v1650 = vmul.f32 %v1570, %v1630
          %v1651 = vmul.f32 %v1571, %v1631
          %v1652 = vmul.f32 %v1572, %v1632
          %v1653 = vmul.f32 %v1573, %v1633
          %v1654 = vmul.f32 %v1574, %v1634
          %v1655 = vmul.f32 %v1575, %v1635
          %v1656 = vmul.f32 %v1576, %v1636
          %v1657 = vmul.f32 %v1577, %v1637
          %v1658 = vmul.f32 %v1578, %v1638
          %1659 = vst [vmem:[%s293] sm:$0xff] %v1639
          %1660 = vst [vmem:[%s293 + $0x8] sm:$0xff] %v1640
          %1661 = vst [vmem:[%s293 + $0x10] sm:$0xff] %v1641
          %1662 = vst [vmem:[%s293 + $0x18] sm:$0xff] %v1642
          %1663 = vst [vmem:[%s293 + $0x20] sm:$0xff] %v1643
          %1664 = vst [vmem:[%s293 + $0x28] sm:$0xff] %v1644
          %1665 = vst [vmem:[%s293 + $0x30] sm:$0xff] %v1645
          %1666 = vst [vmem:[%s293 + $0x38] sm:$0xff] %v1646
          %1667 = vst [vmem:[%s293 + $0x40] sm:$0xff] %v1647
          %1668 = vst [vmem:[%s293 + $0x48] sm:$0xff] %v1648
          %1669 = vst [vmem:[%s293 + $0x50] sm:$0xff] %v1649
          %1670 = vst [vmem:[%s293 + $0x58] sm:$0xff] %v1650
          %1671 = vst [vmem:[%s293 + $0x60] sm:$0xff] %v1651
          %1672 = vst [vmem:[%s293 + $0x68] sm:$0xff] %v1652
          %1673 = vst [vmem:[%s293 + $0x70] sm:$0xff] %v1653
          %1674 = vst [vmem:[%s293 + $0x78] sm:$0xff] %v1654
          %1675 = vst [vmem:[%s293 + $0x80] sm:$0xff] %v1655
          %1676 = vst [vmem:[%s293 + $0x88] sm:$0xff] %v1656
          %1677 = vst [vmem:[%s293 + $0x90] sm:$0xff] %v1657
          %1678 = vst [vmem:[%s293 + $0x98] sm:$0xff] %v1658
        $region48: #{my_nn_model_forward.4} parent=31 // pred_fallthru
          _
        %s1679 = smul.u32 20, %s26
        %p1680 = scmp.lt.s32.totalorder %s25, 0
        %s1681 = scalar_select %p1680, %s25, 0
        %p1682 = scmp.lt.s32.totalorder %s1679, 39
        %s1683 = scalar_select %p1682, %s1679, 39
        %s1684 = smul.addr %s1681, 40
        %s1685 = sadd.s32 %s1683, %s1684
        %s1686 = smul.addr %s1685, 8
        %s1687 = scalar_lea.vmem %s3, %s1686
        // Predicated region
        $region49: #{my_nn_model_forward.4} parent=31 // pred_check
          %p1688 = pneg %p141
        $region50: #{my_nn_model_forward.4} parent=31 // pred_check_branch
          %1690 = sbr.rel (%p1688) target = $region52
        $region51: #{my_nn_model_forward.4} parent=31 // pred_region
          %s1691 = smul.u32 20, %s26
        $region52: #{my_nn_model_forward.4} parent=31 // pred_fallthru
          _
      $region32: #{my_nn_model_forward.4} parent=5 // pred_fallthru
        _
      %p1692 = scmp.le.s32.totalorder 2, %s15
      // Predicated region
      $region53: #{my_nn_model_forward.4} parent=5 // pred_check
        %p1693 = pneg %p1692
      $region54: #{my_nn_model_forward.4} parent=5 // pred_check_branch
        %1695 = sbr.rel (%p1693) target = $region56
      $region55: #{my_nn_model_forward.4} parent=5 // pred_region
        %s1696 = ssub.s32 %s15, 2
        // Predicated region
        $region57: #{my_nn_model_forward.4} parent=55 // pred_check
          %p1697 = pneg %p147
        $region58: #{my_nn_model_forward.4} parent=55 // pred_check_branch
          %1699 = sbr.rel (%p1697) target = $region60
        $region59: #{my_nn_model_forward.4} parent=55 // pred_region
          %s1700 = smul.u32 20, %s29
          %p1701 = scmp.lt.s32.totalorder %s28, 0
          %s1702 = scalar_select %p1701, %s28, 0
          %p1703 = scmp.lt.s32.totalorder %s1700, 39
          %s1704 = scalar_select %p1703, %s1700, 39
          %s1705 = smul.addr %s1702, 40
          %s1706 = sadd.s32 %s1704, %s1705
          %s1707 = smul.addr %s1706, 8
          %s1708 = scalar_lea.vmem %s3, %s1707
        $region60: #{my_nn_model_forward.4} parent=55 // pred_fallthru
          _
      $region56: #{my_nn_model_forward.4} parent=5 // pred_fallthru
        _
    $region6: #{my_nn_model_forward.4} parent=1 // loop_footer
      %s19 = sadd.s32 1, %s15
    $region7: #{my_nn_model_forward.4} parent=1 // loop_footer_branch
      %14 = sbr.rel target = $region3
    $region8: #{my_nn_model_forward.4} parent=1 // loop_exit
      _
    %1709 = vsyncpa [#allocation4], 1
    %s1710 = scalar_lea.sflag [#allocation4], 1
    %1711 = vsyncpa %s1710, 1
    %1712 = vsyncpa [#allocation6], 1
    %s1713 = scalar_lea.sflag [#allocation6], 1
    %1714 = vsyncpa %s1713, 1

// kernel: my_nn_model_forward.6
$region0: #{my_nn_model_forward.6}
  #allocation0 [shape = 'u32[]', space=smem, size = 0x4, offset = 0x4, fixed_abs, tag = 'smem constant byte address 0x4 - core index']
  #allocation1 [shape = 'u32[144,128]{1,0:T(1,128)}', space=vmem, size = 0x12000, scoped, tag = 'internal scratch']
  #allocation2 [shape = 'f32[8,1024]{1,0:T(8,128)}', space=vmem, size = 0x8000, scoped, tag = 'scratch operand']
  %s0 = inlined_call_operand.vmem [shape: f32[8,2560], index: 0, kind: input, shape index: {}]
  %s1 = inlined_call_operand.vmem [shape: f32[2560,1024], index: 1, kind: input, shape index: {}]
  %s2 = inlined_call_operand.vmem [shape: f32[1,1024], index: 2, kind: input, shape index: {}]
  %s3 = inlined_call_operand.vmem [shape: f32[8,1024], index: 3, kind: output, shape index: {}]
  %s4 = sld [smem:[#allocation0]]
  $region53: #{my_nn_model_forward.6} parent=0
    _
  %s6 = ssub.s32 1, %s4
  %s7 = scalar_select 0, %s6, %s4
  loop: start=0, step=1, limit=7
  $region2: #{my_nn_model_forward.6} parent=0 // loop_pre_header
    _
  $region3: #{my_nn_model_forward.6} parent=0 // loop_header
    %s9 = sphi 0, %s13
    %p10 = scmp.ge.s32.totalorder %s9, 7
    %s16 = sphi 0, %s35
    %s17 = sphi 0, %s31
    %s18 = sphi 0, %s27
    %s19 = sphi 0, %s16
    %s20 = sphi 0, %s17
    %s21 = sphi 0, %s18
    %s22 = sphi 0, %s19
    %s23 = sphi 0, %s20
    %s24 = sphi 0, %s21
    %s40 = sphi 0, %s42
    %s43 = sphi 0, %s40
    %s44 = sphi 0, %s43
    %s60 = sphi 0, %s44
    %s68 = sphi 0, %s70
    %s71 = sphi 0, %s68
    %s72 = sphi 0, %s71
    %s88 = sphi 0, %s72
    %s94 = sphi 0, %s96
    %s97 = sphi 0, %s94
    %s98 = sphi 0, %s97
    %s114 = sphi 0, %s98
    %s122 = sphi 0, %s124
    %s125 = sphi 0, %s122
    %s126 = sphi 0, %s125
    %s142 = sphi 0, %s126
  $region4: #{my_nn_model_forward.6} parent=0 // loop_header_branch
    %12 = sbr.rel (%p10) target = $region8
  $region5: #{my_nn_model_forward.6} parent=0 // loop_body
    %s14 = ssub.s32 %s9, 1
    %s15 = ssub.s32 %s9, 2
    %s25 = sadd.s32 1, %s18
    %p26 = scmp.ge.s32.totalorder %s25, 5
    %s27 = scalar_select %p26, 0, %s25
    %s28 = sadd.s32 1, %s17
    %s29 = scalar_select %p26, %s28, %s17
    %p30 = scmp.ge.s32.totalorder %s29, 1
    %s31 = scalar_select %p30, 0, %s29
    %s32 = sadd.s32 1, %s16
    %s33 = scalar_select %p30, %s32, %s16
    %p34 = scmp.ge.s32.totalorder %s33, 1
    %s35 = scalar_select %p34, 0, %s33
    %s36 = ssub.s32 %s16, %s35
    %s37 = ssub.s32 %s18, %s27
    %s38 = sor.u32 %s36, %s37
    %p39 = scmp.eq.s32.totalorder %s38, 0
    %s41 = sadd.s32 %s40, 1
    %s42 = scalar_select %p39, %s40, %s41
    %p45 = pneg %p39
    %p46 = scmp.eq.s32.totalorder %s9, 4
    %p47 = por %p45, %p46
    %p48 = scmp.ne.s32.totalorder %s40, %s43
    %p49 = scmp.eq.s32.totalorder %s9, 0
    %p50 = por %p48, %p49
    %p51 = scmp.ne.s32.totalorder %s40, %s43
    %p52 = scmp.eq.s32.totalorder %s14, 4
    %p53 = por %p51, %p52
    %p54 = scmp.ne.s32.totalorder %s43, %s44
    %p55 = scmp.eq.s32.totalorder %s14, 0
    %p56 = por %p54, %p55
    %p57 = scmp.ne.s32.totalorder %s43, %s44
    %p58 = scmp.eq.s32.totalorder %s15, 4
    %p59 = por %p57, %p58
    %p61 = scmp.ne.s32.totalorder %s44, %s60
    %p62 = scmp.eq.s32.totalorder %s15, 0
    %p63 = por %p61, %p62
    %s64 = ssub.s32 %s18, %s27
    %s65 = ssub.s32 %s17, %s31
    %s66 = sor.u32 %s64, %s65
    %p67 = scmp.eq.s32.totalorder %s66, 0
    %s69 = sadd.s32 %s68, 1
    %s70 = scalar_select %p67, %s68, %s69
    %p73 = pneg %p67
    %p74 = scmp.eq.s32.totalorder %s9, 4
    %p75 = por %p73, %p74
    %p76 = scmp.ne.s32.totalorder %s68, %s71
    %p77 = scmp.eq.s32.totalorder %s9, 0
    %p78 = por %p76, %p77
    %p79 = scmp.ne.s32.totalorder %s68, %s71
    %p80 = scmp.eq.s32.totalorder %s14, 4
    %p81 = por %p79, %p80
    %p82 = scmp.ne.s32.totalorder %s71, %s72
    %p83 = scmp.eq.s32.totalorder %s14, 0
    %p84 = por %p82, %p83
    %p85 = scmp.ne.s32.totalorder %s71, %s72
    %p86 = scmp.eq.s32.totalorder %s15, 4
    %p87 = por %p85, %p86
    %p89 = scmp.ne.s32.totalorder %s72, %s88
    %p90 = scmp.eq.s32.totalorder %s15, 0
    %p91 = por %p89, %p90
    %s92 = ssub.s32 %s17, %s31
    %p93 = scmp.eq.s32.totalorder %s92, 0
    %s95 = sadd.s32 %s94, 1
    %s96 = scalar_select %p93, %s94, %s95
    %p99 = pneg %p93
    %p100 = scmp.eq.s32.totalorder %s9, 4
    %p101 = por %p99, %p100
    %p102 = scmp.ne.s32.totalorder %s94, %s97
    %p103 = scmp.eq.s32.totalorder %s9, 0
    %p104 = por %p102, %p103
    %p105 = scmp.ne.s32.totalorder %s94, %s97
    %p106 = scmp.eq.s32.totalorder %s14, 4
    %p107 = por %p105, %p106
    %p108 = scmp.ne.s32.totalorder %s97, %s98
    %p109 = scmp.eq.s32.totalorder %s14, 0
    %p110 = por %p108, %p109
    %p111 = scmp.ne.s32.totalorder %s97, %s98
    %p112 = scmp.eq.s32.totalorder %s15, 4
    %p113 = por %p111, %p112
    %p115 = scmp.ne.s32.totalorder %s98, %s114
    %p116 = scmp.eq.s32.totalorder %s15, 0
    %p117 = por %p115, %p116
    %s118 = ssub.s32 %s16, %s35
    %s119 = ssub.s32 %s17, %s31
    %s120 = sor.u32 %s118, %s119
    %p121 = scmp.eq.s32.totalorder %s120, 0
    %s123 = sadd.s32 %s122, 1
    %s124 = scalar_select %p121, %s122, %s123
    %p127 = pneg %p121
    %p128 = scmp.eq.s32.totalorder %s9, 4
    %p129 = por %p127, %p128
    %p130 = scmp.ne.s32.totalorder %s122, %s125
    %p131 = scmp.eq.s32.totalorder %s9, 0
    %p132 = por %p130, %p131
    %p133 = scmp.ne.s32.totalorder %s122, %s125
    %p134 = scmp.eq.s32.totalorder %s14, 4
    %p135 = por %p133, %p134
    %p136 = scmp.ne.s32.totalorder %s125, %s126
    %p137 = scmp.eq.s32.totalorder %s14, 0
    %p138 = por %p136, %p137
    %p139 = scmp.ne.s32.totalorder %s125, %s126
    %p140 = scmp.eq.s32.totalorder %s15, 4
    %p141 = por %p139, %p140
    %p143 = scmp.ne.s32.totalorder %s126, %s142
    %p144 = scmp.eq.s32.totalorder %s15, 0
    %p145 = por %p143, %p144
    %p146 = scmp.le.s32.totalorder 1, %s9
    %p147 = scmp.lt.s32.totalorder %s9, 6
    %p148 = pnand %p146, %p147
    %p149 = pneg %p148
    // Predicated region
    $region9: #{my_nn_model_forward.6} parent=5 // pred_check
      _
    $region10: #{my_nn_model_forward.6} parent=5 // pred_check_branch
      %151 = sbr.rel (%p148) target = $region12
    $region11: #{my_nn_model_forward.6} parent=5 // pred_region
      %s152 = ssub.s32 %s9, 1
      // Predicated region
      $region13: #{my_nn_model_forward.6} parent=11 // pred_check
        %p153 = pneg %p110
      $region14: #{my_nn_model_forward.6} parent=11 // pred_check_branch
        %155 = sbr.rel (%p153) target = $region16
      $region15: #{my_nn_model_forward.6} parent=11 // pred_region
        %s156 = smul.u32 8, %s20
        %p157 = scmp.lt.s32.totalorder %s156, 7
        %s158 = scalar_select %p157, %s156, 7
        %s159 = scalar_lea.vmem %s2, %s158
        %s160 = smul.u32 8, %s20
      $region16: #{my_nn_model_forward.6} parent=11 // pred_fallthru
        _
    $region12: #{my_nn_model_forward.6} parent=5 // pred_fallthru
      _
    %p161 = scmp.lt.s32.totalorder %s9, 5
    // Predicated region
    $region17: #{my_nn_model_forward.6} parent=5 // pred_check
      %p162 = pneg %p161
    $region18: #{my_nn_model_forward.6} parent=5 // pred_check_branch
      %164 = sbr.rel (%p162) target = $region20
    $region19: #{my_nn_model_forward.6} parent=5 // pred_region
      // Predicated region
      $region21: #{my_nn_model_forward.6} parent=19 // pred_check
        %p165 = pneg %p50
      $region22: #{my_nn_model_forward.6} parent=19 // pred_check_branch
        %167 = sbr.rel (%p165) target = $region24
      $region23: #{my_nn_model_forward.6} parent=19 // pred_region
        %s168 = smul.u32 4, %s18
        %p169 = scmp.lt.s32.totalorder %s16, 0
        %s170 = scalar_select %p169, %s16, 0
        %p171 = scmp.lt.s32.totalorder %s168, 19
        %s172 = scalar_select %p171, %s168, 19
        %s173 = smul.addr %s170, 20
        %s174 = sadd.s32 %s172, %s173
        %s175 = smul.addr %s174, 8
        %s176 = scalar_lea.vmem %s0, %s175
        %s177 = smul.u32 4, %s18
      $region24: #{my_nn_model_forward.6} parent=19 // pred_fallthru
        _
      // Predicated region
      $region25: #{my_nn_model_forward.6} parent=19 // pred_check
        %p178 = pneg %p78
      $region26: #{my_nn_model_forward.6} parent=19 // pred_check_branch
        %180 = sbr.rel (%p178) target = $region28
      $region27: #{my_nn_model_forward.6} parent=19 // pred_region
        %s181 = smul.u32 64, %s18
        %s182 = smul.u32 8, %s17
        %p183 = scmp.lt.s32.totalorder %s181, 319
        %s184 = scalar_select %p183, %s181, 319
        %p185 = scmp.lt.s32.totalorder %s182, 7
        %s186 = scalar_select %p185, %s182, 7
        %s187 = smul.addr %s184, 8
        %s188 = sadd.s32 %s186, %s187
        %s189 = smul.addr %s188, 8
        %s190 = scalar_lea.vmem %s1, %s189
        %s191 = smul.u32 64, %s18
        %s192 = smul.u32 8, %s17
      $region28: #{my_nn_model_forward.6} parent=19 // pred_fallthru
        _
    $region20: #{my_nn_model_forward.6} parent=5 // pred_fallthru
      _
    %p193 = scmp.le.s32.totalorder 1, %s9
    %p194 = scmp.lt.s32.totalorder %s9, 6
    %p195 = pnand %p193, %p194
    %p196 = pneg %p195
    // Predicated region
    $region29: #{my_nn_model_forward.6} parent=5 // pred_check
      _
    $region30: #{my_nn_model_forward.6} parent=5 // pred_check_branch
      %198 = sbr.rel (%p195) target = $region32
    $region31: #{my_nn_model_forward.6} parent=5 // pred_region
      %s199 = ssub.s32 %s9, 1
      %s200 = smul.u32 4, %s21
      %p201 = scmp.lt.s32.totalorder %s19, 0
      %s202 = scalar_select %p201, %s19, 0
      %p203 = scmp.lt.s32.totalorder %s200, 19
      %s204 = scalar_select %p203, %s200, 19
      %s205 = smul.addr %s202, 20
      %s206 = sadd.s32 %s204, %s205
      %s207 = smul.addr %s206, 8
      %s208 = scalar_lea.vmem %s0, %s207
      %p209 = pneg %p56
      %p210 = pneg %p53
      %s211 = smul.u32 64, %s21
      %s212 = smul.u32 8, %s20
      %p213 = scmp.lt.s32.totalorder %s211, 319
      %s214 = scalar_select %p213, %s211, 319
      %p215 = scmp.lt.s32.totalorder %s212, 7
      %s216 = scalar_select %p215, %s212, 7
      %s217 = smul.addr %s214, 8
      %s218 = sadd.s32 %s216, %s217
      %s219 = smul.addr %s218, 8
      %s220 = scalar_lea.vmem %s1, %s219
      %p221 = pneg %p84
      %p222 = pneg %p81
      %s223 = smul.u32 8, %s20
      %p224 = scmp.lt.s32.totalorder %s223, 7
      %s225 = scalar_select %p224, %s223, 7
      %s226 = scalar_lea.vmem %s2, %s225
      %p227 = pneg %p110
      %p228 = pneg %p107
      %p229 = pneg %p138
      %p230 = pneg %p135
      %s231 = smul.u32 8, %s20
      %p232 = scmp.lt.s32.totalorder %s19, 0
      %s233 = scalar_select %p232, %s19, 0
      %p234 = scmp.lt.s32.totalorder %s231, 7
      %s235 = scalar_select %p234, %s231, 7
      %s236 = smul.addr %s233, 8
      %s237 = sadd.s32 %s235, %s236
      %s238 = smul.addr %s237, 8
      %s239 = scalar_lea.vmem %s3, %s238
      %s240 = smul.u32 4, %s21
      %p241 = scmp.lt.s32.totalorder %s19, 0
      %s242 = scalar_select %p241, %s19, 0
      %p243 = scmp.lt.s32.totalorder %s240, 19
      %s244 = scalar_select %p243, %s240, 19
      %s245 = smul.addr %s242, 20
      %s246 = sadd.s32 %s244, %s245
      %s247 = smul.addr %s246, 8
      %s248 = scalar_lea.vmem %s0, %s247
      %s249 = smul.u32 4, %s21
      %s250 = smul.u32 64, %s21
      %s251 = smul.u32 8, %s20
      %p252 = scmp.lt.s32.totalorder %s250, 319
      %s253 = scalar_select %p252, %s250, 319
      %p254 = scmp.lt.s32.totalorder %s251, 7
      %s255 = scalar_select %p254, %s251, 7
      %s256 = smul.addr %s253, 8
      %s257 = sadd.s32 %s255, %s256
      %s258 = smul.addr %s257, 8
      %s259 = scalar_lea.vmem %s1, %s258
      %s260 = smul.u32 64, %s21
      %s261 = smul.u32 8, %s20
      %s262 = smul.u32 8, %s20
      %p263 = scmp.lt.s32.totalorder %s262, 7
      %s264 = scalar_select %p263, %s262, 7
      %s265 = scalar_lea.vmem %s2, %s264
      %s266 = smul.u32 8, %s20
      %s267 = smul.u32 8, %s20
      %p268 = scmp.lt.s32.totalorder %s19, 0
      %s269 = scalar_select %p268, %s19, 0
      %p270 = scmp.lt.s32.totalorder %s267, 7
      %s271 = scalar_select %p270, %s267, 7
      %s272 = smul.addr %s269, 8
      %s273 = sadd.s32 %s271, %s272
      %s274 = smul.addr %s273, 8
      %s275 = scalar_lea.vmem %s3, %s274
      %s276 = smul.u32 8, %s20
      %p277 = scmp.eq.s32.totalorder %s21, 0
      // Predicated region
      $region33: #{my_nn_model_forward.6} parent=31 // pred_check
        %p278 = pneg %p277
      $region34: #{my_nn_model_forward.6} parent=31 // pred_check_branch
        %280 = sbr.rel (%p278) target = $region36
      $region35: #{my_nn_model_forward.6} parent=31 // pred_region
        %281 = vst [vmem:[#allocation2] sm:$0xff] 0.0
        %282 = vst [vmem:[#allocation2 + $0x8] sm:$0xff] 0.0
        %283 = vst [vmem:[#allocation2 + $0x10] sm:$0xff] 0.0
        %284 = vst [vmem:[#allocation2 + $0x18] sm:$0xff] 0.0
        %285 = vst [vmem:[#allocation2 + $0x20] sm:$0xff] 0.0
        %286 = vst [vmem:[#allocation2 + $0x28] sm:$0xff] 0.0
        %287 = vst [vmem:[#allocation2 + $0x30] sm:$0xff] 0.0
        %288 = vst [vmem:[#allocation2 + $0x38] sm:$0xff] 0.0
      $region36: #{my_nn_model_forward.6} parent=31 // pred_fallthru
        _
      %v289 = vld [vmem:[#allocation2] sm:$0xff]
      %v290 = vld [vmem:[#allocation2 + $0x8] sm:$0xff]
      %v291 = vld [vmem:[#allocation2 + $0x10] sm:$0xff]
      %v292 = vld [vmem:[#allocation2 + $0x18] sm:$0xff]
      %v293 = vld [vmem:[#allocation2 + $0x20] sm:$0xff]
      %v294 = vld [vmem:[#allocation2 + $0x28] sm:$0xff]
      %v295 = vld [vmem:[#allocation2 + $0x30] sm:$0xff]
      %v296 = vld [vmem:[#allocation2 + $0x38] sm:$0xff]
      %v297 = vld [vmem:[%s248] sm:$0xff]
      %v298 = vld [vmem:[%s248 + $0x8] sm:$0xff]
      %v299 = vld [vmem:[%s248 + $0x10] sm:$0xff]
      %v300 = vld [vmem:[%s248 + $0x18] sm:$0xff]
      %v301 = vld [vmem:[%s259] sm:$0xff]
      %v302 = vld [vmem:[%s259 + $0x8] sm:$0xff]
      %v303 = vld [vmem:[%s259 + $0x10] sm:$0xff]
      %v304 = vld [vmem:[%s259 + $0x18] sm:$0xff]
      %v305 = vld [vmem:[%s259 + $0x20] sm:$0xff]
      %v306 = vld [vmem:[%s259 + $0x28] sm:$0xff]
      %v307 = vld [vmem:[%s259 + $0x30] sm:$0xff]
      %v308 = vld [vmem:[%s259 + $0x38] sm:$0xff]
      %v309 = vld [vmem:[%s259 + $0x40] sm:$0xff]
      %v310 = vld [vmem:[%s259 + $0x48] sm:$0xff]
      %v311 = vld [vmem:[%s259 + $0x50] sm:$0xff]
      %v312 = vld [vmem:[%s259 + $0x58] sm:$0xff]
      %v313 = vld [vmem:[%s259 + $0x60] sm:$0xff]
      %v314 = vld [vmem:[%s259 + $0x68] sm:$0xff]
      %v315 = vld [vmem:[%s259 + $0x70] sm:$0xff]
      %v316 = vld [vmem:[%s259 + $0x78] sm:$0xff]
      %v317 = vld [vmem:[%s259 + $0x80] sm:$0xff]
      %v318 = vld [vmem:[%s259 + $0x88] sm:$0xff]
      %v319 = vld [vmem:[%s259 + $0x90] sm:$0xff]
      %v320 = vld [vmem:[%s259 + $0x98] sm:$0xff]
      %v321 = vld [vmem:[%s259 + $0xa0] sm:$0xff]
      %v322 = vld [vmem:[%s259 + $0xa8] sm:$0xff]
      %v323 = vld [vmem:[%s259 + $0xb0] sm:$0xff]
      %v324 = vld [vmem:[%s259 + $0xb8] sm:$0xff]
      %v325 = vld [vmem:[%s259 + $0xc0] sm:$0xff]
      %v326 = vld [vmem:[%s259 + $0xc8] sm:$0xff]
      %v327 = vld [vmem:[%s259 + $0xd0] sm:$0xff]
      %v328 = vld [vmem:[%s259 + $0xd8] sm:$0xff]
      %v329 = vld [vmem:[%s259 + $0xe0] sm:$0xff]
      %v330 = vld [vmem:[%s259 + $0xe8] sm:$0xff]
      %v331 = vld [vmem:[%s259 + $0xf0] sm:$0xff]
      %v332 = vld [vmem:[%s259 + $0xf8] sm:$0xff]
      %v333 = vld [vmem:[%s259 + $0x100] sm:$0xff]
      %v334 = vld [vmem:[%s259 + $0x108] sm:$0xff]
      %v335 = vld [vmem:[%s259 + $0x110] sm:$0xff]
      %v336 = vld [vmem:[%s259 + $0x118] sm:$0xff]
      %v337 = vld [vmem:[%s259 + $0x120] sm:$0xff]
      %v338 = vld [vmem:[%s259 + $0x128] sm:$0xff]
      %v339 = vld [vmem:[%s259 + $0x130] sm:$0xff]
      %v340 = vld [vmem:[%s259 + $0x138] sm:$0xff]
      %v341 = vld [vmem:[%s259 + $0x140] sm:$0xff]
      %v342 = vld [vmem:[%s259 + $0x148] sm:$0xff]
      %v343 = vld [vmem:[%s259 + $0x150] sm:$0xff]
      %v344 = vld [vmem:[%s259 + $0x158] sm:$0xff]
      %v345 = vld [vmem:[%s259 + $0x160] sm:$0xff]
      %v346 = vld [vmem:[%s259 + $0x168] sm:$0xff]
      %v347 = vld [vmem:[%s259 + $0x170] sm:$0xff]
      %v348 = vld [vmem:[%s259 + $0x178] sm:$0xff]
      %v349 = vld [vmem:[%s259 + $0x180] sm:$0xff]
      %v350 = vld [vmem:[%s259 + $0x188] sm:$0xff]
      %v351 = vld [vmem:[%s259 + $0x190] sm:$0xff]
      %v352 = vld [vmem:[%s259 + $0x198] sm:$0xff]
      %v353 = vld [vmem:[%s259 + $0x1a0] sm:$0xff]
      %v354 = vld [vmem:[%s259 + $0x1a8] sm:$0xff]
      %v355 = vld [vmem:[%s259 + $0x1b0] sm:$0xff]
      %v356 = vld [vmem:[%s259 + $0x1b8] sm:$0xff]
      %v357 = vld [vmem:[%s259 + $0x1c0] sm:$0xff]
      %v358 = vld [vmem:[%s259 + $0x1c8] sm:$0xff]
      %v359 = vld [vmem:[%s259 + $0x1d0] sm:$0xff]
      %v360 = vld [vmem:[%s259 + $0x1d8] sm:$0xff]
      %v361 = vld [vmem:[%s259 + $0x1e0] sm:$0xff]
      %v362 = vld [vmem:[%s259 + $0x1e8] sm:$0xff]
      %v363 = vld [vmem:[%s259 + $0x1f0] sm:$0xff]
      %v364 = vld [vmem:[%s259 + $0x1f8] sm:$0xff]
      %v365 = vld [vmem:[%s259 + $0x200] sm:$0xff]
      %v366 = vld [vmem:[%s259 + $0x208] sm:$0xff]
      %v367 = vld [vmem:[%s259 + $0x210] sm:$0xff]
      %v368 = vld [vmem:[%s259 + $0x218] sm:$0xff]
      %v369 = vld [vmem:[%s259 + $0x220] sm:$0xff]
      %v370 = vld [vmem:[%s259 + $0x228] sm:$0xff]
      %v371 = vld [vmem:[%s259 + $0x230] sm:$0xff]
      %v372 = vld [vmem:[%s259 + $0x238] sm:$0xff]
      %v373 = vld [vmem:[%s259 + $0x240] sm:$0xff]
      %v374 = vld [vmem:[%s259 + $0x248] sm:$0xff]
      %v375 = vld [vmem:[%s259 + $0x250] sm:$0xff]
      %v376 = vld [vmem:[%s259 + $0x258] sm:$0xff]
      %v377 = vld [vmem:[%s259 + $0x260] sm:$0xff]
      %v378 = vld [vmem:[%s259 + $0x268] sm:$0xff]
      %v379 = vld [vmem:[%s259 + $0x270] sm:$0xff]
      %v380 = vld [vmem:[%s259 + $0x278] sm:$0xff]
      %v381 = vld [vmem:[%s259 + $0x280] sm:$0xff]
      %v382 = vld [vmem:[%s259 + $0x288] sm:$0xff]
      %v383 = vld [vmem:[%s259 + $0x290] sm:$0xff]
      %v384 = vld [vmem:[%s259 + $0x298] sm:$0xff]
      %v385 = vld [vmem:[%s259 + $0x2a0] sm:$0xff]
      %v386 = vld [vmem:[%s259 + $0x2a8] sm:$0xff]
      %v387 = vld [vmem:[%s259 + $0x2b0] sm:$0xff]
      %v388 = vld [vmem:[%s259 + $0x2b8] sm:$0xff]
      %v389 = vld [vmem:[%s259 + $0x2c0] sm:$0xff]
      %v390 = vld [vmem:[%s259 + $0x2c8] sm:$0xff]
      %v391 = vld [vmem:[%s259 + $0x2d0] sm:$0xff]
      %v392 = vld [vmem:[%s259 + $0x2d8] sm:$0xff]
      %v393 = vld [vmem:[%s259 + $0x2e0] sm:$0xff]
      %v394 = vld [vmem:[%s259 + $0x2e8] sm:$0xff]
      %v395 = vld [vmem:[%s259 + $0x2f0] sm:$0xff]
      %v396 = vld [vmem:[%s259 + $0x2f8] sm:$0xff]
      %v397 = vld [vmem:[%s259 + $0x300] sm:$0xff]
      %v398 = vld [vmem:[%s259 + $0x308] sm:$0xff]
      %v399 = vld [vmem:[%s259 + $0x310] sm:$0xff]
      %v400 = vld [vmem:[%s259 + $0x318] sm:$0xff]
      %v401 = vld [vmem:[%s259 + $0x320] sm:$0xff]
      %v402 = vld [vmem:[%s259 + $0x328] sm:$0xff]
      %v403 = vld [vmem:[%s259 + $0x330] sm:$0xff]
      %v404 = vld [vmem:[%s259 + $0x338] sm:$0xff]
      %v405 = vld [vmem:[%s259 + $0x340] sm:$0xff]
      %v406 = vld [vmem:[%s259 + $0x348] sm:$0xff]
      %v407 = vld [vmem:[%s259 + $0x350] sm:$0xff]
      %v408 = vld [vmem:[%s259 + $0x358] sm:$0xff]
      %v409 = vld [vmem:[%s259 + $0x360] sm:$0xff]
      %v410 = vld [vmem:[%s259 + $0x368] sm:$0xff]
      %v411 = vld [vmem:[%s259 + $0x370] sm:$0xff]
      %v412 = vld [vmem:[%s259 + $0x378] sm:$0xff]
      %v413 = vld [vmem:[%s259 + $0x380] sm:$0xff]
      %v414 = vld [vmem:[%s259 + $0x388] sm:$0xff]
      %v415 = vld [vmem:[%s259 + $0x390] sm:$0xff]
      %v416 = vld [vmem:[%s259 + $0x398] sm:$0xff]
      %v417 = vld [vmem:[%s259 + $0x3a0] sm:$0xff]
      %v418 = vld [vmem:[%s259 + $0x3a8] sm:$0xff]
      %v419 = vld [vmem:[%s259 + $0x3b0] sm:$0xff]
      %v420 = vld [vmem:[%s259 + $0x3b8] sm:$0xff]
      %v421 = vld [vmem:[%s259 + $0x3c0] sm:$0xff]
      %v422 = vld [vmem:[%s259 + $0x3c8] sm:$0xff]
      %v423 = vld [vmem:[%s259 + $0x3d0] sm:$0xff]
      %v424 = vld [vmem:[%s259 + $0x3d8] sm:$0xff]
      %v425 = vld [vmem:[%s259 + $0x3e0] sm:$0xff]
      %v426 = vld [vmem:[%s259 + $0x3e8] sm:$0xff]
      %v427 = vld [vmem:[%s259 + $0x3f0] sm:$0xff]
      %v428 = vld [vmem:[%s259 + $0x3f8] sm:$0xff]
      %v429 = vld [vmem:[%s259 + $0x400] sm:$0xff]
      %v430 = vld [vmem:[%s259 + $0x408] sm:$0xff]
      %v431 = vld [vmem:[%s259 + $0x410] sm:$0xff]
      %v432 = vld [vmem:[%s259 + $0x418] sm:$0xff]
      %v433 = vld [vmem:[%s259 + $0x420] sm:$0xff]
      %v434 = vld [vmem:[%s259 + $0x428] sm:$0xff]
      %v435 = vld [vmem:[%s259 + $0x430] sm:$0xff]
      %v436 = vld [vmem:[%s259 + $0x438] sm:$0xff]
      %v437 = vld [vmem:[%s259 + $0x440] sm:$0xff]
      %v438 = vld [vmem:[%s259 + $0x448] sm:$0xff]
      %v439 = vld [vmem:[%s259 + $0x450] sm:$0xff]
      %v440 = vld [vmem:[%s259 + $0x458] sm:$0xff]
      %v441 = vld [vmem:[%s259 + $0x460] sm:$0xff]
      %v442 = vld [vmem:[%s259 + $0x468] sm:$0xff]
      %v443 = vld [vmem:[%s259 + $0x470] sm:$0xff]
      %v444 = vld [vmem:[%s259 + $0x478] sm:$0xff]
      %v445 = vld [vmem:[%s259 + $0x480] sm:$0xff]
      %v446 = vld [vmem:[%s259 + $0x488] sm:$0xff]
      %v447 = vld [vmem:[%s259 + $0x490] sm:$0xff]
      %v448 = vld [vmem:[%s259 + $0x498] sm:$0xff]
      %v449 = vld [vmem:[%s259 + $0x4a0] sm:$0xff]
      %v450 = vld [vmem:[%s259 + $0x4a8] sm:$0xff]
      %v451 = vld [vmem:[%s259 + $0x4b0] sm:$0xff]
      %v452 = vld [vmem:[%s259 + $0x4b8] sm:$0xff]
      %v453 = vld [vmem:[%s259 + $0x4c0] sm:$0xff]
      %v454 = vld [vmem:[%s259 + $0x4c8] sm:$0xff]
      %v455 = vld [vmem:[%s259 + $0x4d0] sm:$0xff]
      %v456 = vld [vmem:[%s259 + $0x4d8] sm:$0xff]
      %v457 = vld [vmem:[%s259 + $0x4e0] sm:$0xff]
      %v458 = vld [vmem:[%s259 + $0x4e8] sm:$0xff]
      %v459 = vld [vmem:[%s259 + $0x4f0] sm:$0xff]
      %v460 = vld [vmem:[%s259 + $0x4f8] sm:$0xff]
      %v461 = vld [vmem:[%s259 + $0x500] sm:$0xff]
      %v462 = vld [vmem:[%s259 + $0x508] sm:$0xff]
      %v463 = vld [vmem:[%s259 + $0x510] sm:$0xff]
      %v464 = vld [vmem:[%s259 + $0x518] sm:$0xff]
      %v465 = vld [vmem:[%s259 + $0x520] sm:$0xff]
      %v466 = vld [vmem:[%s259 + $0x528] sm:$0xff]
      %v467 = vld [vmem:[%s259 + $0x530] sm:$0xff]
      %v468 = vld [vmem:[%s259 + $0x538] sm:$0xff]
      %v469 = vld [vmem:[%s259 + $0x540] sm:$0xff]
      %v470 = vld [vmem:[%s259 + $0x548] sm:$0xff]
      %v471 = vld [vmem:[%s259 + $0x550] sm:$0xff]
      %v472 = vld [vmem:[%s259 + $0x558] sm:$0xff]
      %v473 = vld [vmem:[%s259 + $0x560] sm:$0xff]
      %v474 = vld [vmem:[%s259 + $0x568] sm:$0xff]
      %v475 = vld [vmem:[%s259 + $0x570] sm:$0xff]
      %v476 = vld [vmem:[%s259 + $0x578] sm:$0xff]
      %v477 = vld [vmem:[%s259 + $0x580] sm:$0xff]
      %v478 = vld [vmem:[%s259 + $0x588] sm:$0xff]
      %v479 = vld [vmem:[%s259 + $0x590] sm:$0xff]
      %v480 = vld [vmem:[%s259 + $0x598] sm:$0xff]
      %v481 = vld [vmem:[%s259 + $0x5a0] sm:$0xff]
      %v482 = vld [vmem:[%s259 + $0x5a8] sm:$0xff]
      %v483 = vld [vmem:[%s259 + $0x5b0] sm:$0xff]
      %v484 = vld [vmem:[%s259 + $0x5b8] sm:$0xff]
      %v485 = vld [vmem:[%s259 + $0x5c0] sm:$0xff]
      %v486 = vld [vmem:[%s259 + $0x5c8] sm:$0xff]
      %v487 = vld [vmem:[%s259 + $0x5d0] sm:$0xff]
      %v488 = vld [vmem:[%s259 + $0x5d8] sm:$0xff]
      %v489 = vld [vmem:[%s259 + $0x5e0] sm:$0xff]
      %v490 = vld [vmem:[%s259 + $0x5e8] sm:$0xff]
      %v491 = vld [vmem:[%s259 + $0x5f0] sm:$0xff]
      %v492 = vld [vmem:[%s259 + $0x5f8] sm:$0xff]
      %v493 = vld [vmem:[%s259 + $0x600] sm:$0xff]
      %v494 = vld [vmem:[%s259 + $0x608] sm:$0xff]
      %v495 = vld [vmem:[%s259 + $0x610] sm:$0xff]
      %v496 = vld [vmem:[%s259 + $0x618] sm:$0xff]
      %v497 = vld [vmem:[%s259 + $0x620] sm:$0xff]
      %v498 = vld [vmem:[%s259 + $0x628] sm:$0xff]
      %v499 = vld [vmem:[%s259 + $0x630] sm:$0xff]
      %v500 = vld [vmem:[%s259 + $0x638] sm:$0xff]
      %v501 = vld [vmem:[%s259 + $0x640] sm:$0xff]
      %v502 = vld [vmem:[%s259 + $0x648] sm:$0xff]
      %v503 = vld [vmem:[%s259 + $0x650] sm:$0xff]
      %v504 = vld [vmem:[%s259 + $0x658] sm:$0xff]
      %v505 = vld [vmem:[%s259 + $0x660] sm:$0xff]
      %v506 = vld [vmem:[%s259 + $0x668] sm:$0xff]
      %v507 = vld [vmem:[%s259 + $0x670] sm:$0xff]
      %v508 = vld [vmem:[%s259 + $0x678] sm:$0xff]
      %v509 = vld [vmem:[%s259 + $0x680] sm:$0xff]
      %v510 = vld [vmem:[%s259 + $0x688] sm:$0xff]
      %v511 = vld [vmem:[%s259 + $0x690] sm:$0xff]
      %v512 = vld [vmem:[%s259 + $0x698] sm:$0xff]
      %v513 = vld [vmem:[%s259 + $0x6a0] sm:$0xff]
      %v514 = vld [vmem:[%s259 + $0x6a8] sm:$0xff]
      %v515 = vld [vmem:[%s259 + $0x6b0] sm:$0xff]
      %v516 = vld [vmem:[%s259 + $0x6b8] sm:$0xff]
      %v517 = vld [vmem:[%s259 + $0x6c0] sm:$0xff]
      %v518 = vld [vmem:[%s259 + $0x6c8] sm:$0xff]
      %v519 = vld [vmem:[%s259 + $0x6d0] sm:$0xff]
      %v520 = vld [vmem:[%s259 + $0x6d8] sm:$0xff]
      %v521 = vld [vmem:[%s259 + $0x6e0] sm:$0xff]
      %v522 = vld [vmem:[%s259 + $0x6e8] sm:$0xff]
      %v523 = vld [vmem:[%s259 + $0x6f0] sm:$0xff]
      %v524 = vld [vmem:[%s259 + $0x6f8] sm:$0xff]
      %v525 = vld [vmem:[%s259 + $0x700] sm:$0xff]
      %v526 = vld [vmem:[%s259 + $0x708] sm:$0xff]
      %v527 = vld [vmem:[%s259 + $0x710] sm:$0xff]
      %v528 = vld [vmem:[%s259 + $0x718] sm:$0xff]
      %v529 = vld [vmem:[%s259 + $0x720] sm:$0xff]
      %v530 = vld [vmem:[%s259 + $0x728] sm:$0xff]
      %v531 = vld [vmem:[%s259 + $0x730] sm:$0xff]
      %v532 = vld [vmem:[%s259 + $0x738] sm:$0xff]
      %v533 = vld [vmem:[%s259 + $0x740] sm:$0xff]
      %v534 = vld [vmem:[%s259 + $0x748] sm:$0xff]
      %v535 = vld [vmem:[%s259 + $0x750] sm:$0xff]
      %v536 = vld [vmem:[%s259 + $0x758] sm:$0xff]
      %v537 = vld [vmem:[%s259 + $0x760] sm:$0xff]
      %v538 = vld [vmem:[%s259 + $0x768] sm:$0xff]
      %v539 = vld [vmem:[%s259 + $0x770] sm:$0xff]
      %v540 = vld [vmem:[%s259 + $0x778] sm:$0xff]
      %v541 = vld [vmem:[%s259 + $0x780] sm:$0xff]
      %v542 = vld [vmem:[%s259 + $0x788] sm:$0xff]
      %v543 = vld [vmem:[%s259 + $0x790] sm:$0xff]
      %v544 = vld [vmem:[%s259 + $0x798] sm:$0xff]
      %v545 = vld [vmem:[%s259 + $0x7a0] sm:$0xff]
      %v546 = vld [vmem:[%s259 + $0x7a8] sm:$0xff]
      %v547 = vld [vmem:[%s259 + $0x7b0] sm:$0xff]
      %v548 = vld [vmem:[%s259 + $0x7b8] sm:$0xff]
      %v549 = vld [vmem:[%s259 + $0x7c0] sm:$0xff]
      %v550 = vld [vmem:[%s259 + $0x7c8] sm:$0xff]
      %v551 = vld [vmem:[%s259 + $0x7d0] sm:$0xff]
      %v552 = vld [vmem:[%s259 + $0x7d8] sm:$0xff]
      %v553 = vld [vmem:[%s259 + $0x7e0] sm:$0xff]
      %v554 = vld [vmem:[%s259 + $0x7e8] sm:$0xff]
      %v555 = vld [vmem:[%s259 + $0x7f0] sm:$0xff]
      %v556 = vld [vmem:[%s259 + $0x7f8] sm:$0xff]
      %v557 = vld [vmem:[%s259 + $0x800] sm:$0xff]
      %v558 = vld [vmem:[%s259 + $0x808] sm:$0xff]
      %v559 = vld [vmem:[%s259 + $0x810] sm:$0xff]
      %v560 = vld [vmem:[%s259 + $0x818] sm:$0xff]
      %v561 = vld [vmem:[%s259 + $0x820] sm:$0xff]
      %v562 = vld [vmem:[%s259 + $0x828] sm:$0xff]
      %v563 = vld [vmem:[%s259 + $0x830] sm:$0xff]
      %v564 = vld [vmem:[%s259 + $0x838] sm:$0xff]
      %v565 = vld [vmem:[%s259 + $0x840] sm:$0xff]
      %v566 = vld [vmem:[%s259 + $0x848] sm:$0xff]
      %v567 = vld [vmem:[%s259 + $0x850] sm:$0xff]
      %v568 = vld [vmem:[%s259 + $0x858] sm:$0xff]
      %v569 = vld [vmem:[%s259 + $0x860] sm:$0xff]
      %v570 = vld [vmem:[%s259 + $0x868] sm:$0xff]
      %v571 = vld [vmem:[%s259 + $0x870] sm:$0xff]
      %v572 = vld [vmem:[%s259 + $0x878] sm:$0xff]
      %v573 = vld [vmem:[%s259 + $0x880] sm:$0xff]
      %v574 = vld [vmem:[%s259 + $0x888] sm:$0xff]
      %v575 = vld [vmem:[%s259 + $0x890] sm:$0xff]
      %v576 = vld [vmem:[%s259 + $0x898] sm:$0xff]
      %v577 = vld [vmem:[%s259 + $0x8a0] sm:$0xff]
      %v578 = vld [vmem:[%s259 + $0x8a8] sm:$0xff]
      %v579 = vld [vmem:[%s259 + $0x8b0] sm:$0xff]
      %v580 = vld [vmem:[%s259 + $0x8b8] sm:$0xff]
      %v581 = vld [vmem:[%s259 + $0x8c0] sm:$0xff]
      %v582 = vld [vmem:[%s259 + $0x8c8] sm:$0xff]
      %v583 = vld [vmem:[%s259 + $0x8d0] sm:$0xff]
      %v584 = vld [vmem:[%s259 + $0x8d8] sm:$0xff]
      %v585 = vld [vmem:[%s259 + $0x8e0] sm:$0xff]
      %v586 = vld [vmem:[%s259 + $0x8e8] sm:$0xff]
      %v587 = vld [vmem:[%s259 + $0x8f0] sm:$0xff]
      %v588 = vld [vmem:[%s259 + $0x8f8] sm:$0xff]
      %v589 = vld [vmem:[%s259 + $0x900] sm:$0xff]
      %v590 = vld [vmem:[%s259 + $0x908] sm:$0xff]
      %v591 = vld [vmem:[%s259 + $0x910] sm:$0xff]
      %v592 = vld [vmem:[%s259 + $0x918] sm:$0xff]
      %v593 = vld [vmem:[%s259 + $0x920] sm:$0xff]
      %v594 = vld [vmem:[%s259 + $0x928] sm:$0xff]
      %v595 = vld [vmem:[%s259 + $0x930] sm:$0xff]
      %v596 = vld [vmem:[%s259 + $0x938] sm:$0xff]
      %v597 = vld [vmem:[%s259 + $0x940] sm:$0xff]
      %v598 = vld [vmem:[%s259 + $0x948] sm:$0xff]
      %v599 = vld [vmem:[%s259 + $0x950] sm:$0xff]
      %v600 = vld [vmem:[%s259 + $0x958] sm:$0xff]
      %v601 = vld [vmem:[%s259 + $0x960] sm:$0xff]
      %v602 = vld [vmem:[%s259 + $0x968] sm:$0xff]
      %v603 = vld [vmem:[%s259 + $0x970] sm:$0xff]
      %v604 = vld [vmem:[%s259 + $0x978] sm:$0xff]
      %v605 = vld [vmem:[%s259 + $0x980] sm:$0xff]
      %v606 = vld [vmem:[%s259 + $0x988] sm:$0xff]
      %v607 = vld [vmem:[%s259 + $0x990] sm:$0xff]
      %v608 = vld [vmem:[%s259 + $0x998] sm:$0xff]
      %v609 = vld [vmem:[%s259 + $0x9a0] sm:$0xff]
      %v610 = vld [vmem:[%s259 + $0x9a8] sm:$0xff]
      %v611 = vld [vmem:[%s259 + $0x9b0] sm:$0xff]
      %v612 = vld [vmem:[%s259 + $0x9b8] sm:$0xff]
      %v613 = vld [vmem:[%s259 + $0x9c0] sm:$0xff]
      %v614 = vld [vmem:[%s259 + $0x9c8] sm:$0xff]
      %v615 = vld [vmem:[%s259 + $0x9d0] sm:$0xff]
      %v616 = vld [vmem:[%s259 + $0x9d8] sm:$0xff]
      %v617 = vld [vmem:[%s259 + $0x9e0] sm:$0xff]
      %v618 = vld [vmem:[%s259 + $0x9e8] sm:$0xff]
      %v619 = vld [vmem:[%s259 + $0x9f0] sm:$0xff]
      %v620 = vld [vmem:[%s259 + $0x9f8] sm:$0xff]
      %v621 = vld [vmem:[%s259 + $0xa00] sm:$0xff]
      %v622 = vld [vmem:[%s259 + $0xa08] sm:$0xff]
      %v623 = vld [vmem:[%s259 + $0xa10] sm:$0xff]
      %v624 = vld [vmem:[%s259 + $0xa18] sm:$0xff]
      %v625 = vld [vmem:[%s259 + $0xa20] sm:$0xff]
      %v626 = vld [vmem:[%s259 + $0xa28] sm:$0xff]
      %v627 = vld [vmem:[%s259 + $0xa30] sm:$0xff]
      %v628 = vld [vmem:[%s259 + $0xa38] sm:$0xff]
      %v629 = vld [vmem:[%s259 + $0xa40] sm:$0xff]
      %v630 = vld [vmem:[%s259 + $0xa48] sm:$0xff]
      %v631 = vld [vmem:[%s259 + $0xa50] sm:$0xff]
      %v632 = vld [vmem:[%s259 + $0xa58] sm:$0xff]
      %v633 = vld [vmem:[%s259 + $0xa60] sm:$0xff]
      %v634 = vld [vmem:[%s259 + $0xa68] sm:$0xff]
      %v635 = vld [vmem:[%s259 + $0xa70] sm:$0xff]
      %v636 = vld [vmem:[%s259 + $0xa78] sm:$0xff]
      %v637 = vld [vmem:[%s259 + $0xa80] sm:$0xff]
      %v638 = vld [vmem:[%s259 + $0xa88] sm:$0xff]
      %v639 = vld [vmem:[%s259 + $0xa90] sm:$0xff]
      %v640 = vld [vmem:[%s259 + $0xa98] sm:$0xff]
      %v641 = vld [vmem:[%s259 + $0xaa0] sm:$0xff]
      %v642 = vld [vmem:[%s259 + $0xaa8] sm:$0xff]
      %v643 = vld [vmem:[%s259 + $0xab0] sm:$0xff]
      %v644 = vld [vmem:[%s259 + $0xab8] sm:$0xff]
      %v645 = vld [vmem:[%s259 + $0xac0] sm:$0xff]
      %v646 = vld [vmem:[%s259 + $0xac8] sm:$0xff]
      %v647 = vld [vmem:[%s259 + $0xad0] sm:$0xff]
      %v648 = vld [vmem:[%s259 + $0xad8] sm:$0xff]
      %v649 = vld [vmem:[%s259 + $0xae0] sm:$0xff]
      %v650 = vld [vmem:[%s259 + $0xae8] sm:$0xff]
      %v651 = vld [vmem:[%s259 + $0xaf0] sm:$0xff]
      %v652 = vld [vmem:[%s259 + $0xaf8] sm:$0xff]
      %v653 = vld [vmem:[%s259 + $0xb00] sm:$0xff]
      %v654 = vld [vmem:[%s259 + $0xb08] sm:$0xff]
      %v655 = vld [vmem:[%s259 + $0xb10] sm:$0xff]
      %v656 = vld [vmem:[%s259 + $0xb18] sm:$0xff]
      %v657 = vld [vmem:[%s259 + $0xb20] sm:$0xff]
      %v658 = vld [vmem:[%s259 + $0xb28] sm:$0xff]
      %v659 = vld [vmem:[%s259 + $0xb30] sm:$0xff]
      %v660 = vld [vmem:[%s259 + $0xb38] sm:$0xff]
      %v661 = vld [vmem:[%s259 + $0xb40] sm:$0xff]
      %v662 = vld [vmem:[%s259 + $0xb48] sm:$0xff]
      %v663 = vld [vmem:[%s259 + $0xb50] sm:$0xff]
      %v664 = vld [vmem:[%s259 + $0xb58] sm:$0xff]
      %v665 = vld [vmem:[%s259 + $0xb60] sm:$0xff]
      %v666 = vld [vmem:[%s259 + $0xb68] sm:$0xff]
      %v667 = vld [vmem:[%s259 + $0xb70] sm:$0xff]
      %v668 = vld [vmem:[%s259 + $0xb78] sm:$0xff]
      %v669 = vld [vmem:[%s259 + $0xb80] sm:$0xff]
      %v670 = vld [vmem:[%s259 + $0xb88] sm:$0xff]
      %v671 = vld [vmem:[%s259 + $0xb90] sm:$0xff]
      %v672 = vld [vmem:[%s259 + $0xb98] sm:$0xff]
      %v673 = vld [vmem:[%s259 + $0xba0] sm:$0xff]
      %v674 = vld [vmem:[%s259 + $0xba8] sm:$0xff]
      %v675 = vld [vmem:[%s259 + $0xbb0] sm:$0xff]
      %v676 = vld [vmem:[%s259 + $0xbb8] sm:$0xff]
      %v677 = vld [vmem:[%s259 + $0xbc0] sm:$0xff]
      %v678 = vld [vmem:[%s259 + $0xbc8] sm:$0xff]
      %v679 = vld [vmem:[%s259 + $0xbd0] sm:$0xff]
      %v680 = vld [vmem:[%s259 + $0xbd8] sm:$0xff]
      %v681 = vld [vmem:[%s259 + $0xbe0] sm:$0xff]
      %v682 = vld [vmem:[%s259 + $0xbe8] sm:$0xff]
      %v683 = vld [vmem:[%s259 + $0xbf0] sm:$0xff]
      %v684 = vld [vmem:[%s259 + $0xbf8] sm:$0xff]
      %v685 = vld [vmem:[%s259 + $0xc00] sm:$0xff]
      %v686 = vld [vmem:[%s259 + $0xc08] sm:$0xff]
      %v687 = vld [vmem:[%s259 + $0xc10] sm:$0xff]
      %v688 = vld [vmem:[%s259 + $0xc18] sm:$0xff]
      %v689 = vld [vmem:[%s259 + $0xc20] sm:$0xff]
      %v690 = vld [vmem:[%s259 + $0xc28] sm:$0xff]
      %v691 = vld [vmem:[%s259 + $0xc30] sm:$0xff]
      %v692 = vld [vmem:[%s259 + $0xc38] sm:$0xff]
      %v693 = vld [vmem:[%s259 + $0xc40] sm:$0xff]
      %v694 = vld [vmem:[%s259 + $0xc48] sm:$0xff]
      %v695 = vld [vmem:[%s259 + $0xc50] sm:$0xff]
      %v696 = vld [vmem:[%s259 + $0xc58] sm:$0xff]
      %v697 = vld [vmem:[%s259 + $0xc60] sm:$0xff]
      %v698 = vld [vmem:[%s259 + $0xc68] sm:$0xff]
      %v699 = vld [vmem:[%s259 + $0xc70] sm:$0xff]
      %v700 = vld [vmem:[%s259 + $0xc78] sm:$0xff]
      %v701 = vld [vmem:[%s259 + $0xc80] sm:$0xff]
      %v702 = vld [vmem:[%s259 + $0xc88] sm:$0xff]
      %v703 = vld [vmem:[%s259 + $0xc90] sm:$0xff]
      %v704 = vld [vmem:[%s259 + $0xc98] sm:$0xff]
      %v705 = vld [vmem:[%s259 + $0xca0] sm:$0xff]
      %v706 = vld [vmem:[%s259 + $0xca8] sm:$0xff]
      %v707 = vld [vmem:[%s259 + $0xcb0] sm:$0xff]
      %v708 = vld [vmem:[%s259 + $0xcb8] sm:$0xff]
      %v709 = vld [vmem:[%s259 + $0xcc0] sm:$0xff]
      %v710 = vld [vmem:[%s259 + $0xcc8] sm:$0xff]
      %v711 = vld [vmem:[%s259 + $0xcd0] sm:$0xff]
      %v712 = vld [vmem:[%s259 + $0xcd8] sm:$0xff]
      %v713 = vld [vmem:[%s259 + $0xce0] sm:$0xff]
      %v714 = vld [vmem:[%s259 + $0xce8] sm:$0xff]
      %v715 = vld [vmem:[%s259 + $0xcf0] sm:$0xff]
      %v716 = vld [vmem:[%s259 + $0xcf8] sm:$0xff]
      %v717 = vld [vmem:[%s259 + $0xd00] sm:$0xff]
      %v718 = vld [vmem:[%s259 + $0xd08] sm:$0xff]
      %v719 = vld [vmem:[%s259 + $0xd10] sm:$0xff]
      %v720 = vld [vmem:[%s259 + $0xd18] sm:$0xff]
      %v721 = vld [vmem:[%s259 + $0xd20] sm:$0xff]
      %v722 = vld [vmem:[%s259 + $0xd28] sm:$0xff]
      %v723 = vld [vmem:[%s259 + $0xd30] sm:$0xff]
      %v724 = vld [vmem:[%s259 + $0xd38] sm:$0xff]
      %v725 = vld [vmem:[%s259 + $0xd40] sm:$0xff]
      %v726 = vld [vmem:[%s259 + $0xd48] sm:$0xff]
      %v727 = vld [vmem:[%s259 + $0xd50] sm:$0xff]
      %v728 = vld [vmem:[%s259 + $0xd58] sm:$0xff]
      %v729 = vld [vmem:[%s259 + $0xd60] sm:$0xff]
      %v730 = vld [vmem:[%s259 + $0xd68] sm:$0xff]
      %v731 = vld [vmem:[%s259 + $0xd70] sm:$0xff]
      %v732 = vld [vmem:[%s259 + $0xd78] sm:$0xff]
      %v733 = vld [vmem:[%s259 + $0xd80] sm:$0xff]
      %v734 = vld [vmem:[%s259 + $0xd88] sm:$0xff]
      %v735 = vld [vmem:[%s259 + $0xd90] sm:$0xff]
      %v736 = vld [vmem:[%s259 + $0xd98] sm:$0xff]
      %v737 = vld [vmem:[%s259 + $0xda0] sm:$0xff]
      %v738 = vld [vmem:[%s259 + $0xda8] sm:$0xff]
      %v739 = vld [vmem:[%s259 + $0xdb0] sm:$0xff]
      %v740 = vld [vmem:[%s259 + $0xdb8] sm:$0xff]
      %v741 = vld [vmem:[%s259 + $0xdc0] sm:$0xff]
      %v742 = vld [vmem:[%s259 + $0xdc8] sm:$0xff]
      %v743 = vld [vmem:[%s259 + $0xdd0] sm:$0xff]
      %v744 = vld [vmem:[%s259 + $0xdd8] sm:$0xff]
      %v745 = vld [vmem:[%s259 + $0xde0] sm:$0xff]
      %v746 = vld [vmem:[%s259 + $0xde8] sm:$0xff]
      %v747 = vld [vmem:[%s259 + $0xdf0] sm:$0xff]
      %v748 = vld [vmem:[%s259 + $0xdf8] sm:$0xff]
      %v749 = vld [vmem:[%s259 + $0xe00] sm:$0xff]
      %v750 = vld [vmem:[%s259 + $0xe08] sm:$0xff]
      %v751 = vld [vmem:[%s259 + $0xe10] sm:$0xff]
      %v752 = vld [vmem:[%s259 + $0xe18] sm:$0xff]
      %v753 = vld [vmem:[%s259 + $0xe20] sm:$0xff]
      %v754 = vld [vmem:[%s259 + $0xe28] sm:$0xff]
      %v755 = vld [vmem:[%s259 + $0xe30] sm:$0xff]
      %v756 = vld [vmem:[%s259 + $0xe38] sm:$0xff]
      %v757 = vld [vmem:[%s259 + $0xe40] sm:$0xff]
      %v758 = vld [vmem:[%s259 + $0xe48] sm:$0xff]
      %v759 = vld [vmem:[%s259 + $0xe50] sm:$0xff]
      %v760 = vld [vmem:[%s259 + $0xe58] sm:$0xff]
      %v761 = vld [vmem:[%s259 + $0xe60] sm:$0xff]
      %v762 = vld [vmem:[%s259 + $0xe68] sm:$0xff]
      %v763 = vld [vmem:[%s259 + $0xe70] sm:$0xff]
      %v764 = vld [vmem:[%s259 + $0xe78] sm:$0xff]
      %v765 = vld [vmem:[%s259 + $0xe80] sm:$0xff]
      %v766 = vld [vmem:[%s259 + $0xe88] sm:$0xff]
      %v767 = vld [vmem:[%s259 + $0xe90] sm:$0xff]
      %v768 = vld [vmem:[%s259 + $0xe98] sm:$0xff]
      %v769 = vld [vmem:[%s259 + $0xea0] sm:$0xff]
      %v770 = vld [vmem:[%s259 + $0xea8] sm:$0xff]
      %v771 = vld [vmem:[%s259 + $0xeb0] sm:$0xff]
      %v772 = vld [vmem:[%s259 + $0xeb8] sm:$0xff]
      %v773 = vld [vmem:[%s259 + $0xec0] sm:$0xff]
      %v774 = vld [vmem:[%s259 + $0xec8] sm:$0xff]
      %v775 = vld [vmem:[%s259 + $0xed0] sm:$0xff]
      %v776 = vld [vmem:[%s259 + $0xed8] sm:$0xff]
      %v777 = vld [vmem:[%s259 + $0xee0] sm:$0xff]
      %v778 = vld [vmem:[%s259 + $0xee8] sm:$0xff]
      %v779 = vld [vmem:[%s259 + $0xef0] sm:$0xff]
      %v780 = vld [vmem:[%s259 + $0xef8] sm:$0xff]
      %v781 = vld [vmem:[%s259 + $0xf00] sm:$0xff]
      %v782 = vld [vmem:[%s259 + $0xf08] sm:$0xff]
      %v783 = vld [vmem:[%s259 + $0xf10] sm:$0xff]
      %v784 = vld [vmem:[%s259 + $0xf18] sm:$0xff]
      %v785 = vld [vmem:[%s259 + $0xf20] sm:$0xff]
      %v786 = vld [vmem:[%s259 + $0xf28] sm:$0xff]
      %v787 = vld [vmem:[%s259 + $0xf30] sm:$0xff]
      %v788 = vld [vmem:[%s259 + $0xf38] sm:$0xff]
      %v789 = vld [vmem:[%s259 + $0xf40] sm:$0xff]
      %v790 = vld [vmem:[%s259 + $0xf48] sm:$0xff]
      %v791 = vld [vmem:[%s259 + $0xf50] sm:$0xff]
      %v792 = vld [vmem:[%s259 + $0xf58] sm:$0xff]
      %v793 = vld [vmem:[%s259 + $0xf60] sm:$0xff]
      %v794 = vld [vmem:[%s259 + $0xf68] sm:$0xff]
      %v795 = vld [vmem:[%s259 + $0xf70] sm:$0xff]
      %v796 = vld [vmem:[%s259 + $0xf78] sm:$0xff]
      %v797 = vld [vmem:[%s259 + $0xf80] sm:$0xff]
      %v798 = vld [vmem:[%s259 + $0xf88] sm:$0xff]
      %v799 = vld [vmem:[%s259 + $0xf90] sm:$0xff]
      %v800 = vld [vmem:[%s259 + $0xf98] sm:$0xff]
      %v801 = vld [vmem:[%s259 + $0xfa0] sm:$0xff]
      %v802 = vld [vmem:[%s259 + $0xfa8] sm:$0xff]
      %v803 = vld [vmem:[%s259 + $0xfb0] sm:$0xff]
      %v804 = vld [vmem:[%s259 + $0xfb8] sm:$0xff]
      %v805 = vld [vmem:[%s259 + $0xfc0] sm:$0xff]
      %v806 = vld [vmem:[%s259 + $0xfc8] sm:$0xff]
      %v807 = vld [vmem:[%s259 + $0xfd0] sm:$0xff]
      %v808 = vld [vmem:[%s259 + $0xfd8] sm:$0xff]
      %v809 = vld [vmem:[%s259 + $0xfe0] sm:$0xff]
      %v810 = vld [vmem:[%s259 + $0xfe8] sm:$0xff]
      %v811 = vld [vmem:[%s259 + $0xff0] sm:$0xff]
      %v812 = vld [vmem:[%s259 + $0xff8] sm:$0xff]
      %813 = vmatprep.subr.mxu0 %v302
      %814 = vmatpush1.msra.mxu0 %v301
      %815 = vmatprep.subr.mxu0 %v310
      %816 = vmatpush1.msra.mxu0 %v309
      %817 = vmatprep.subr.mxu0 %v318
      %818 = vmatpush1.msra.mxu0 %v317
      %819 = vmatprep.subr.mxu0 %v326
      %820 = vmatpush1.msra.mxu0 %v325
      %821 = vmatprep.subr.mxu0 %v334
      %822 = vmatpush1.msra.mxu0 %v333
      %823 = vmatprep.subr.mxu0 %v342
      %824 = vmatpush1.msra.mxu0 %v341
      %825 = vmatprep.subr.mxu0 %v350
      %826 = vmatpush1.msra.mxu0 %v349
      %827 = vmatprep.subr.mxu0 %v358
      %828 = vmatpush1.msra.mxu0 %v357
      %829 = vmatprep.subr.mxu0 %v366
      %830 = vmatpush1.msra.mxu0 %v365
      %831 = vmatprep.subr.mxu0 %v374
      %832 = vmatpush1.msra.mxu0 %v373
      %833 = vmatprep.subr.mxu0 %v382
      %834 = vmatpush1.msra.mxu0 %v381
      %835 = vmatprep.subr.mxu0 %v390
      %836 = vmatpush1.msra.mxu0 %v389
      %837 = vmatprep.subr.mxu0 %v398
      %838 = vmatpush1.msra.mxu0 %v397
      %839 = vmatprep.subr.mxu0 %v406
      %840 = vmatpush1.msra.mxu0 %v405
      %841 = vmatprep.subr.mxu0 %v414
      %842 = vmatpush1.msra.mxu0 %v413
      %843 = vmatprep.subr.mxu0 %v422
      %844 = vmatpush1.msra.mxu0 %v421
      %845 = vmatprep.subr.mxu0 %v430
      %846 = vmatpush1.msra.mxu0 %v429
      %847 = vmatprep.subr.mxu0 %v438
      %848 = vmatpush1.msra.mxu0 %v437
      %849 = vmatprep.subr.mxu0 %v446
      %850 = vmatpush1.msra.mxu0 %v445
      %851 = vmatprep.subr.mxu0 %v454
      %852 = vmatpush1.msra.mxu0 %v453
      %853 = vmatprep.subr.mxu0 %v462
      %854 = vmatpush1.msra.mxu0 %v461
      %855 = vmatprep.subr.mxu0 %v470
      %856 = vmatpush1.msra.mxu0 %v469
      %857 = vmatprep.subr.mxu0 %v478
      %858 = vmatpush1.msra.mxu0 %v477
      %859 = vmatprep.subr.mxu0 %v486
      %860 = vmatpush1.msra.mxu0 %v485
      %861 = vmatprep.subr.mxu0 %v494
      %862 = vmatpush1.msra.mxu0 %v493
      %863 = vmatprep.subr.mxu0 %v502
      %864 = vmatpush1.msra.mxu0 %v501
      %865 = vmatprep.subr.mxu0 %v510
      %866 = vmatpush1.msra.mxu0 %v509
      %867 = vmatprep.subr.mxu0 %v518
      %868 = vmatpush1.msra.mxu0 %v517
      %869 = vmatprep.subr.mxu0 %v526
      %870 = vmatpush1.msra.mxu0 %v525
      %871 = vmatprep.subr.mxu0 %v534
      %872 = vmatpush1.msra.mxu0 %v533
      %873 = vmatprep.subr.mxu0 %v542
      %874 = vmatpush1.msra.mxu0 %v541
      %875 = vmatprep.subr.mxu0 %v550
      %876 = vmatpush1.msra.mxu0 %v549
      %877 = vmatprep.mubr.f32.mxu0 %v298
      %878 = vmatmul.mubr.f32.gmra.mrb[0].mxu0 %v297
      %v879 = vpop.f32.mrb[0].mxu0
      %v880 = vadd.f32 0.0, %v879
      %v881 = vpop.f32.mrb[0].mxu0
      %v882 = vadd.f32 0.0, %v881
      %883 = vdwg.mxu0
      %884 = vmatprep.subr.mxu0 %v558
      %885 = vmatpush1.msra.mxu0 %v557
      %886 = vmatprep.subr.mxu0 %v566
      %887 = vmatpush1.msra.mxu0 %v565
      %888 = vmatprep.subr.mxu0 %v574
      %889 = vmatpush1.msra.mxu0 %v573
      %890 = vmatprep.subr.mxu0 %v582
      %891 = vmatpush1.msra.mxu0 %v581
      %892 = vmatprep.subr.mxu0 %v590
      %893 = vmatpush1.msra.mxu0 %v589
      %894 = vmatprep.subr.mxu0 %v598
      %895 = vmatpush1.msra.mxu0 %v597
      %896 = vmatprep.subr.mxu0 %v606
      %897 = vmatpush1.msra.mxu0 %v605
      %898 = vmatprep.subr.mxu0 %v614
      %899 = vmatpush1.msra.mxu0 %v613
      %900 = vmatprep.subr.mxu0 %v622
      %901 = vmatpush1.msra.mxu0 %v621
      %902 = vmatprep.subr.mxu0 %v630
      %903 = vmatpush1.msra.mxu0 %v629
      %904 = vmatprep.subr.mxu0 %v638
      %905 = vmatpush1.msra.mxu0 %v637
      %906 = vmatprep.subr.mxu0 %v646
      %907 = vmatpush1.msra.mxu0 %v645
      %908 = vmatprep.subr.mxu0 %v654
      %909 = vmatpush1.msra.mxu0 %v653
      %910 = vmatprep.subr.mxu0 %v662
      %911 = vmatpush1.msra.mxu0 %v661
      %912 = vmatprep.subr.mxu0 %v670
      %913 = vmatpush1.msra.mxu0 %v669
      %914 = vmatprep.subr.mxu0 %v678
      %915 = vmatpush1.msra.mxu0 %v677
      %916 = vmatprep.subr.mxu0 %v686
      %917 = vmatpush1.msra.mxu0 %v685
      %918 = vmatprep.subr.mxu0 %v694
      %919 = vmatpush1.msra.mxu0 %v693
      %920 = vmatprep.subr.mxu0 %v702
      %921 = vmatpush1.msra.mxu0 %v701
      %922 = vmatprep.subr.mxu0 %v710
      %923 = vmatpush1.msra.mxu0 %v709
      %924 = vmatprep.subr.mxu0 %v718
      %925 = vmatpush1.msra.mxu0 %v717
      %926 = vmatprep.subr.mxu0 %v726
      %927 = vmatpush1.msra.mxu0 %v725
      %928 = vmatprep.subr.mxu0 %v734
      %929 = vmatpush1.msra.mxu0 %v733
      %930 = vmatprep.subr.mxu0 %v742
      %931 = vmatpush1.msra.mxu0 %v741
      %932 = vmatprep.subr.mxu0 %v750
      %933 = vmatpush1.msra.mxu0 %v749
      %934 = vmatprep.subr.mxu0 %v758
      %935 = vmatpush1.msra.mxu0 %v757
      %936 = vmatprep.subr.mxu0 %v766
      %937 = vmatpush1.msra.mxu0 %v765
      %938 = vmatprep.subr.mxu0 %v774
      %939 = vmatpush1.msra.mxu0 %v773
      %940 = vmatprep.subr.mxu0 %v782
      %941 = vmatpush1.msra.mxu0 %v781
      %942 = vmatprep.subr.mxu0 %v790
      %943 = vmatpush1.msra.mxu0 %v789
      %944 = vmatprep.subr.mxu0 %v798
      %945 = vmatpush1.msra.mxu0 %v797
      %946 = vmatprep.subr.mxu0 %v806
      %947 = vmatpush1.msra.mxu0 %v805
      %948 = vmatprep.mubr.f32.mxu0 %v300
      %949 = vmatmul.mubr.f32.gmra.mrb[0].mxu0 %v299
      %v950 = vpop.f32.mrb[0].mxu0
      %v951 = vadd.f32 %v880, %v950
      %v952 = vpop.f32.mrb[0].mxu0
      %v953 = vadd.f32 %v882, %v952
      %954 = vdwg.mxu0
      %955 = vmatprep.subr.mxu0 %v304
      %956 = vmatpush1.msra.mxu0 %v303
      %957 = vmatprep.subr.mxu0 %v312
      %958 = vmatpush1.msra.mxu0 %v311
      %959 = vmatprep.subr.mxu0 %v320
      %960 = vmatpush1.msra.mxu0 %v319
      %961 = vmatprep.subr.mxu0 %v328
      %962 = vmatpush1.msra.mxu0 %v327
      %963 = vmatprep.subr.mxu0 %v336
      %964 = vmatpush1.msra.mxu0 %v335
      %965 = vmatprep.subr.mxu0 %v344
      %966 = vmatpush1.msra.mxu0 %v343
      %967 = vmatprep.subr.mxu0 %v352
      %968 = vmatpush1.msra.mxu0 %v351
      %969 = vmatprep.subr.mxu0 %v360
      %970 = vmatpush1.msra.mxu0 %v359
      %971 = vmatprep.subr.mxu0 %v368
      %972 = vmatpush1.msra.mxu0 %v367
      %973 = vmatprep.subr.mxu0 %v376
      %974 = vmatpush1.msra.mxu0 %v375
      %975 = vmatprep.subr.mxu0 %v384
      %976 = vmatpush1.msra.mxu0 %v383
      %977 = vmatprep.subr.mxu0 %v392
      %978 = vmatpush1.msra.mxu0 %v391
      %979 = vmatprep.subr.mxu0 %v400
      %980 = vmatpush1.msra.mxu0 %v399
      %981 = vmatprep.subr.mxu0 %v408
      %982 = vmatpush1.msra.mxu0 %v407
      %983 = vmatprep.subr.mxu0 %v416
      %984 = vmatpush1.msra.mxu0 %v415
      %985 = vmatprep.subr.mxu0 %v424
      %986 = vmatpush1.msra.mxu0 %v423
      %987 = vmatprep.subr.mxu0 %v432
      %988 = vmatpush1.msra.mxu0 %v431
      %989 = vmatprep.subr.mxu0 %v440
      %990 = vmatpush1.msra.mxu0 %v439
      %991 = vmatprep.subr.mxu0 %v448
      %992 = vmatpush1.msra.mxu0 %v447
      %993 = vmatprep.subr.mxu0 %v456
      %994 = vmatpush1.msra.mxu0 %v455
      %995 = vmatprep.subr.mxu0 %v464
      %996 = vmatpush1.msra.mxu0 %v463
      %997 = vmatprep.subr.mxu0 %v472
      %998 = vmatpush1.msra.mxu0 %v471
      %999 = vmatprep.subr.mxu0 %v480
      %1000 = vmatpush1.msra.mxu0 %v479
      %1001 = vmatprep.subr.mxu0 %v488
      %1002 = vmatpush1.msra.mxu0 %v487
      %1003 = vmatprep.subr.mxu0 %v496
      %1004 = vmatpush1.msra.mxu0 %v495
      %1005 = vmatprep.subr.mxu0 %v504
      %1006 = vmatpush1.msra.mxu0 %v503
      %1007 = vmatprep.subr.mxu0 %v512
      %1008 = vmatpush1.msra.mxu0 %v511
      %1009 = vmatprep.subr.mxu0 %v520
      %1010 = vmatpush1.msra.mxu0 %v519
      %1011 = vmatprep.subr.mxu0 %v528
      %1012 = vmatpush1.msra.mxu0 %v527
      %1013 = vmatprep.subr.mxu0 %v536
      %1014 = vmatpush1.msra.mxu0 %v535
      %1015 = vmatprep.subr.mxu0 %v544
      %1016 = vmatpush1.msra.mxu0 %v543
      %1017 = vmatprep.subr.mxu0 %v552
      %1018 = vmatpush1.msra.mxu0 %v551
      %1019 = vmatprep.mubr.f32.mxu0 %v298
      %1020 = vmatmul.mubr.f32.gmra.mrb[0].mxu0 %v297
      %v1021 = vpop.f32.mrb[0].mxu0
      %v1022 = vadd.f32 0.0, %v1021
      %v1023 = vpop.f32.mrb[0].mxu0
      %v1024 = vadd.f32 0.0, %v1023
      %1025 = vdwg.mxu0
      %1026 = vmatprep.subr.mxu0 %v560
      %1027 = vmatpush1.msra.mxu0 %v559
      %1028 = vmatprep.subr.mxu0 %v568
      %1029 = vmatpush1.msra.mxu0 %v567
      %1030 = vmatprep.subr.mxu0 %v576
      %1031 = vmatpush1.msra.mxu0 %v575
      %1032 = vmatprep.subr.mxu0 %v584
      %1033 = vmatpush1.msra.mxu0 %v583
      %1034 = vmatprep.subr.mxu0 %v592
      %1035 = vmatpush1.msra.mxu0 %v591
      %1036 = vmatprep.subr.mxu0 %v600
      %1037 = vmatpush1.msra.mxu0 %v599
      %1038 = vmatprep.subr.mxu0 %v608
      %1039 = vmatpush1.msra.mxu0 %v607
      %1040 = vmatprep.subr.mxu0 %v616
      %1041 = vmatpush1.msra.mxu0 %v615
      %1042 = vmatprep.subr.mxu0 %v624
      %1043 = vmatpush1.msra.mxu0 %v623
      %1044 = vmatprep.subr.mxu0 %v632
      %1045 = vmatpush1.msra.mxu0 %v631
      %1046 = vmatprep.subr.mxu0 %v640
      %1047 = vmatpush1.msra.mxu0 %v639
      %1048 = vmatprep.subr.mxu0 %v648
      %1049 = vmatpush1.msra.mxu0 %v647
      %1050 = vmatprep.subr.mxu0 %v656
      %1051 = vmatpush1.msra.mxu0 %v655
      %1052 = vmatprep.subr.mxu0 %v664
      %1053 = vmatpush1.msra.mxu0 %v663
      %1054 = vmatprep.subr.mxu0 %v672
      %1055 = vmatpush1.msra.mxu0 %v671
      %1056 = vmatprep.subr.mxu0 %v680
      %1057 = vmatpush1.msra.mxu0 %v679
      %1058 = vmatprep.subr.mxu0 %v688
      %1059 = vmatpush1.msra.mxu0 %v687
      %1060 = vmatprep.subr.mxu0 %v696
      %1061 = vmatpush1.msra.mxu0 %v695
      %1062 = vmatprep.subr.mxu0 %v704
      %1063 = vmatpush1.msra.mxu0 %v703
      %1064 = vmatprep.subr.mxu0 %v712
      %1065 = vmatpush1.msra.mxu0 %v711
      %1066 = vmatprep.subr.mxu0 %v720
      %1067 = vmatpush1.msra.mxu0 %v719
      %1068 = vmatprep.subr.mxu0 %v728
      %1069 = vmatpush1.msra.mxu0 %v727
      %1070 = vmatprep.subr.mxu0 %v736
      %1071 = vmatpush1.msra.mxu0 %v735
      %1072 = vmatprep.subr.mxu0 %v744
      %1073 = vmatpush1.msra.mxu0 %v743
      %1074 = vmatprep.subr.mxu0 %v752
      %1075 = vmatpush1.msra.mxu0 %v751
      %1076 = vmatprep.subr.mxu0 %v760
      %1077 = vmatpush1.msra.mxu0 %v759
      %1078 = vmatprep.subr.mxu0 %v768
      %1079 = vmatpush1.msra.mxu0 %v767
      %1080 = vmatprep.subr.mxu0 %v776
      %1081 = vmatpush1.msra.mxu0 %v775
      %1082 = vmatprep.subr.mxu0 %v784
      %1083 = vmatpush1.msra.mxu0 %v783
      %1084 = vmatprep.subr.mxu0 %v792
      %1085 = vmatpush1.msra.mxu0 %v791
      %1086 = vmatprep.subr.mxu0 %v800
      %1087 = vmatpush1.msra.mxu0 %v799
      %1088 = vmatprep.subr.mxu0 %v808
      %1089 = vmatpush1.msra.mxu0 %v807
      %1090 = vmatprep.mubr.f32.mxu0 %v300
      %1091 = vmatmul.mubr.f32.gmra.mrb[0].mxu0 %v299
      %v1092 = vpop.f32.mrb[0].mxu0
      %v1093 = vadd.f32 %v1022, %v1092
      %v1094 = vpop.f32.mrb[0].mxu0
      %v1095 = vadd.f32 %v1024, %v1094
      %1096 = vdwg.mxu0
      %1097 = vmatprep.subr.mxu0 %v306
      %1098 = vmatpush1.msra.mxu0 %v305
      %1099 = vmatprep.subr.mxu0 %v314
      %1100 = vmatpush1.msra.mxu0 %v313
      %1101 = vmatprep.subr.mxu0 %v322
      %1102 = vmatpush1.msra.mxu0 %v321
      %1103 = vmatprep.subr.mxu0 %v330
      %1104 = vmatpush1.msra.mxu0 %v329
      %1105 = vmatprep.subr.mxu0 %v338
      %1106 = vmatpush1.msra.mxu0 %v337
      %1107 = vmatprep.subr.mxu0 %v346
      %1108 = vmatpush1.msra.mxu0 %v345
      %1109 = vmatprep.subr.mxu0 %v354
      %1110 = vmatpush1.msra.mxu0 %v353
      %1111 = vmatprep.subr.mxu0 %v362
      %1112 = vmatpush1.msra.mxu0 %v361
      %1113 = vmatprep.subr.mxu0 %v370
      %1114 = vmatpush1.msra.mxu0 %v369
      %1115 = vmatprep.subr.mxu0 %v378
      %1116 = vmatpush1.msra.mxu0 %v377
      %1117 = vmatprep.subr.mxu0 %v386
      %1118 = vmatpush1.msra.mxu0 %v385
      %1119 = vmatprep.subr.mxu0 %v394
      %1120 = vmatpush1.msra.mxu0 %v393
      %1121 = vmatprep.subr.mxu0 %v402
      %1122 = vmatpush1.msra.mxu0 %v401
      %1123 = vmatprep.subr.mxu0 %v410
      %1124 = vmatpush1.msra.mxu0 %v409
      %1125 = vmatprep.subr.mxu0 %v418
      %1126 = vmatpush1.msra.mxu0 %v417
      %1127 = vmatprep.subr.mxu0 %v426
      %1128 = vmatpush1.msra.mxu0 %v425
      %1129 = vmatprep.subr.mxu0 %v434
      %1130 = vmatpush1.msra.mxu0 %v433
      %1131 = vmatprep.subr.mxu0 %v442
      %1132 = vmatpush1.msra.mxu0 %v441
      %1133 = vmatprep.subr.mxu0 %v450
      %1134 = vmatpush1.msra.mxu0 %v449
      %1135 = vmatprep.subr.mxu0 %v458
      %1136 = vmatpush1.msra.mxu0 %v457
      %1137 = vmatprep.subr.mxu0 %v466
      %1138 = vmatpush1.msra.mxu0 %v465
      %1139 = vmatprep.subr.mxu0 %v474
      %1140 = vmatpush1.msra.mxu0 %v473
      %1141 = vmatprep.subr.mxu0 %v482
      %1142 = vmatpush1.msra.mxu0 %v481
      %1143 = vmatprep.subr.mxu0 %v490
      %1144 = vmatpush1.msra.mxu0 %v489
      %1145 = vmatprep.subr.mxu0 %v498
      %1146 = vmatpush1.msra.mxu0 %v497
      %1147 = vmatprep.subr.mxu0 %v506
      %1148 = vmatpush1.msra.mxu0 %v505
      %1149 = vmatprep.subr.mxu0 %v514
      %1150 = vmatpush1.msra.mxu0 %v513
      %1151 = vmatprep.subr.mxu0 %v522
      %1152 = vmatpush1.msra.mxu0 %v521
      %1153 = vmatprep.subr.mxu0 %v530
      %1154 = vmatpush1.msra.mxu0 %v529
      %1155 = vmatprep.subr.mxu0 %v538
      %1156 = vmatpush1.msra.mxu0 %v537
      %1157 = vmatprep.subr.mxu0 %v546
      %1158 = vmatpush1.msra.mxu0 %v545
      %1159 = vmatprep.subr.mxu0 %v554
      %1160 = vmatpush1.msra.mxu0 %v553
      %1161 = vmatprep.mubr.f32.mxu0 %v298
      %1162 = vmatmul.mubr.f32.gmra.mrb[0].mxu0 %v297
      %v1163 = vpop.f32.mrb[0].mxu0
      %v1164 = vadd.f32 0.0, %v1163
      %v1165 = vpop.f32.mrb[0].mxu0
      %v1166 = vadd.f32 0.0, %v1165
      %1167 = vdwg.mxu0
      %1168 = vmatprep.subr.mxu0 %v562
      %1169 = vmatpush1.msra.mxu0 %v561
      %1170 = vmatprep.subr.mxu0 %v570
      %1171 = vmatpush1.msra.mxu0 %v569
      %1172 = vmatprep.subr.mxu0 %v578
      %1173 = vmatpush1.msra.mxu0 %v577
      %1174 = vmatprep.subr.mxu0 %v586
      %1175 = vmatpush1.msra.mxu0 %v585
      %1176 = vmatprep.subr.mxu0 %v594
      %1177 = vmatpush1.msra.mxu0 %v593
      %1178 = vmatprep.subr.mxu0 %v602
      %1179 = vmatpush1.msra.mxu0 %v601
      %1180 = vmatprep.subr.mxu0 %v610
      %1181 = vmatpush1.msra.mxu0 %v609
      %1182 = vmatprep.subr.mxu0 %v618
      %1183 = vmatpush1.msra.mxu0 %v617
      %1184 = vmatprep.subr.mxu0 %v626
      %1185 = vmatpush1.msra.mxu0 %v625
      %1186 = vmatprep.subr.mxu0 %v634
      %1187 = vmatpush1.msra.mxu0 %v633
      %1188 = vmatprep.subr.mxu0 %v642
      %1189 = vmatpush1.msra.mxu0 %v641
      %1190 = vmatprep.subr.mxu0 %v650
      %1191 = vmatpush1.msra.mxu0 %v649
      %1192 = vmatprep.subr.mxu0 %v658
      %1193 = vmatpush1.msra.mxu0 %v657
      %1194 = vmatprep.subr.mxu0 %v666
      %1195 = vmatpush1.msra.mxu0 %v665
      %1196 = vmatprep.subr.mxu0 %v674
      %1197 = vmatpush1.msra.mxu0 %v673
      %1198 = vmatprep.subr.mxu0 %v682
      %1199 = vmatpush1.msra.mxu0 %v681
      %1200 = vmatprep.subr.mxu0 %v690
      %1201 = vmatpush1.msra.mxu0 %v689
      %1202 = vmatprep.subr.mxu0 %v698
      %1203 = vmatpush1.msra.mxu0 %v697
      %1204 = vmatprep.subr.mxu0 %v706
      %1205 = vmatpush1.msra.mxu0 %v705
      %1206 = vmatprep.subr.mxu0 %v714
      %1207 = vmatpush1.msra.mxu0 %v713
      %1208 = vmatprep.subr.mxu0 %v722
      %1209 = vmatpush1.msra.mxu0 %v721
      %1210 = vmatprep.subr.mxu0 %v730
      %1211 = vmatpush1.msra.mxu0 %v729
      %1212 = vmatprep.subr.mxu0 %v738
      %1213 = vmatpush1.msra.mxu0 %v737
      %1214 = vmatprep.subr.mxu0 %v746
      %1215 = vmatpush1.msra.mxu0 %v745
      %1216 = vmatprep.subr.mxu0 %v754
      %1217 = vmatpush1.msra.mxu0 %v753
      %1218 = vmatprep.subr.mxu0 %v762
      %1219 = vmatpush1.msra.mxu0 %v761
      %1220 = vmatprep.subr.mxu0 %v770
      %1221 = vmatpush1.msra.mxu0 %v769
      %1222 = vmatprep.subr.mxu0 %v778
      %1223 = vmatpush1.msra.mxu0 %v777
      %1224 = vmatprep.subr.mxu0 %v786
      %1225 = vmatpush1.msra.mxu0 %v785
      %1226 = vmatprep.subr.mxu0 %v794
      %1227 = vmatpush1.msra.mxu0 %v793
      %1228 = vmatprep.subr.mxu0 %v802
      %1229 = vmatpush1.msra.mxu0 %v801
      %1230 = vmatprep.subr.mxu0 %v810
      %1231 = vmatpush1.msra.mxu0 %v809
      %1232 = vmatprep.mubr.f32.mxu0 %v300
      %1233 = vmatmul.mubr.f32.gmra.mrb[0].mxu0 %v299
      %v1234 = vpop.f32.mrb[0].mxu0
      %v1235 = vadd.f32 %v1164, %v1234
      %v1236 = vpop.f32.mrb[0].mxu0
      %v1237 = vadd.f32 %v1166, %v1236
      %1238 = vdwg.mxu0
      %1239 = vmatprep.subr.mxu0 %v308
      %1240 = vmatpush1.msra.mxu0 %v307
      %1241 = vmatprep.subr.mxu0 %v316
      %1242 = vmatpush1.msra.mxu0 %v315
      %1243 = vmatprep.subr.mxu0 %v324
      %1244 = vmatpush1.msra.mxu0 %v323
      %1245 = vmatprep.subr.mxu0 %v332
      %1246 = vmatpush1.msra.mxu0 %v331
      %1247 = vmatprep.subr.mxu0 %v340
      %1248 = vmatpush1.msra.mxu0 %v339
      %1249 = vmatprep.subr.mxu0 %v348
      %1250 = vmatpush1.msra.mxu0 %v347
      %1251 = vmatprep.subr.mxu0 %v356
      %1252 = vmatpush1.msra.mxu0 %v355
      %1253 = vmatprep.subr.mxu0 %v364
      %1254 = vmatpush1.msra.mxu0 %v363
      %1255 = vmatprep.subr.mxu0 %v372
      %1256 = vmatpush1.msra.mxu0 %v371
      %1257 = vmatprep.subr.mxu0 %v380
      %1258 = vmatpush1.msra.mxu0 %v379
      %1259 = vmatprep.subr.mxu0 %v388
      %1260 = vmatpush1.msra.mxu0 %v387
      %1261 = vmatprep.subr.mxu0 %v396
      %1262 = vmatpush1.msra.mxu0 %v395
      %1263 = vmatprep.subr.mxu0 %v404
      %1264 = vmatpush1.msra.mxu0 %v403
      %1265 = vmatprep.subr.mxu0 %v412
      %1266 = vmatpush1.msra.mxu0 %v411
      %1267 = vmatprep.subr.mxu0 %v420
      %1268 = vmatpush1.msra.mxu0 %v419
      %1269 = vmatprep.subr.mxu0 %v428
      %1270 = vmatpush1.msra.mxu0 %v427
      %1271 = vmatprep.subr.mxu0 %v436
      %1272 = vmatpush1.msra.mxu0 %v435
      %1273 = vmatprep.subr.mxu0 %v444
      %1274 = vmatpush1.msra.mxu0 %v443
      %1275 = vmatprep.subr.mxu0 %v452
      %1276 = vmatpush1.msra.mxu0 %v451
      %1277 = vmatprep.subr.mxu0 %v460
      %1278 = vmatpush1.msra.mxu0 %v459
      %1279 = vmatprep.subr.mxu0 %v468
      %1280 = vmatpush1.msra.mxu0 %v467
      %1281 = vmatprep.subr.mxu0 %v476
      %1282 = vmatpush1.msra.mxu0 %v475
      %1283 = vmatprep.subr.mxu0 %v484
      %1284 = vmatpush1.msra.mxu0 %v483
      %1285 = vmatprep.subr.mxu0 %v492
      %1286 = vmatpush1.msra.mxu0 %v491
      %1287 = vmatprep.subr.mxu0 %v500
      %1288 = vmatpush1.msra.mxu0 %v499
      %1289 = vmatprep.subr.mxu0 %v508
      %1290 = vmatpush1.msra.mxu0 %v507
      %1291 = vmatprep.subr.mxu0 %v516
      %1292 = vmatpush1.msra.mxu0 %v515
      %1293 = vmatprep.subr.mxu0 %v524
      %1294 = vmatpush1.msra.mxu0 %v523
      %1295 = vmatprep.subr.mxu0 %v532
      %1296 = vmatpush1.msra.mxu0 %v531
      %1297 = vmatprep.subr.mxu0 %v540
      %1298 = vmatpush1.msra.mxu0 %v539
      %1299 = vmatprep.subr.mxu0 %v548
      %1300 = vmatpush1.msra.mxu0 %v547
      %1301 = vmatprep.subr.mxu0 %v556
      %1302 = vmatpush1.msra.mxu0 %v555
      %1303 = vmatprep.mubr.f32.mxu0 %v298
      %1304 = vmatmul.mubr.f32.gmra.mrb[0].mxu0 %v297
      %v1305 = vpop.f32.mrb[0].mxu0
      %v1306 = vadd.f32 0.0, %v1305
      %v1307 = vpop.f32.mrb[0].mxu0
      %v1308 = vadd.f32 0.0, %v1307
      %1309 = vdwg.mxu0
      %1310 = vmatprep.subr.mxu0 %v564
      %1311 = vmatpush1.msra.mxu0 %v563
      %1312 = vmatprep.subr.mxu0 %v572
      %1313 = vmatpush1.msra.mxu0 %v571
      %1314 = vmatprep.subr.mxu0 %v580
      %1315 = vmatpush1.msra.mxu0 %v579
      %1316 = vmatprep.subr.mxu0 %v588
      %1317 = vmatpush1.msra.mxu0 %v587
      %1318 = vmatprep.subr.mxu0 %v596
      %1319 = vmatpush1.msra.mxu0 %v595
      %1320 = vmatprep.subr.mxu0 %v604
      %1321 = vmatpush1.msra.mxu0 %v603
      %1322 = vmatprep.subr.mxu0 %v612
      %1323 = vmatpush1.msra.mxu0 %v611
      %1324 = vmatprep.subr.mxu0 %v620
      %1325 = vmatpush1.msra.mxu0 %v619
      %1326 = vmatprep.subr.mxu0 %v628
      %1327 = vmatpush1.msra.mxu0 %v627
      %1328 = vmatprep.subr.mxu0 %v636
      %1329 = vmatpush1.msra.mxu0 %v635
      %1330 = vmatprep.subr.mxu0 %v644
      %1331 = vmatpush1.msra.mxu0 %v643
      %1332 = vmatprep.subr.mxu0 %v652
      %1333 = vmatpush1.msra.mxu0 %v651
      %1334 = vmatprep.subr.mxu0 %v660
      %1335 = vmatpush1.msra.mxu0 %v659
      %1336 = vmatprep.subr.mxu0 %v668
      %1337 = vmatpush1.msra.mxu0 %v667
      %1338 = vmatprep.subr.mxu0 %v676
      %1339 = vmatpush1.msra.mxu0 %v675
      %1340 = vmatprep.subr.mxu0 %v684
      %1341 = vmatpush1.msra.mxu0 %v683
      %1342 = vmatprep.subr.mxu0 %v692
      %1343 = vmatpush1.msra.mxu0 %v691
      %1344 = vmatprep.subr.mxu0 %v700
      %1345 = vmatpush1.msra.mxu0 %v699
      %1346 = vmatprep.subr.mxu0 %v708
      %1347 = vmatpush1.msra.mxu0 %v707
      %1348 = vmatprep.subr.mxu0 %v716
      %1349 = vmatpush1.msra.mxu0 %v715
      %1350 = vmatprep.subr.mxu0 %v724
      %1351 = vmatpush1.msra.mxu0 %v723
      %1352 = vmatprep.subr.mxu0 %v732
      %1353 = vmatpush1.msra.mxu0 %v731
      %1354 = vmatprep.subr.mxu0 %v740
      %1355 = vmatpush1.msra.mxu0 %v739
      %1356 = vmatprep.subr.mxu0 %v748
      %1357 = vmatpush1.msra.mxu0 %v747
      %1358 = vmatprep.subr.mxu0 %v756
      %1359 = vmatpush1.msra.mxu0 %v755
      %1360 = vmatprep.subr.mxu0 %v764
      %1361 = vmatpush1.msra.mxu0 %v763
      %1362 = vmatprep.subr.mxu0 %v772
      %1363 = vmatpush1.msra.mxu0 %v771
      %1364 = vmatprep.subr.mxu0 %v780
      %1365 = vmatpush1.msra.mxu0 %v779
      %1366 = vmatprep.subr.mxu0 %v788
      %1367 = vmatpush1.msra.mxu0 %v787
      %1368 = vmatprep.subr.mxu0 %v796
      %1369 = vmatpush1.msra.mxu0 %v795
      %1370 = vmatprep.subr.mxu0 %v804
      %1371 = vmatpush1.msra.mxu0 %v803
      %1372 = vmatprep.subr.mxu0 %v812
      %1373 = vmatpush1.msra.mxu0 %v811
      %1374 = vmatprep.mubr.f32.mxu0 %v300
      %1375 = vmatmul.mubr.f32.gmra.mrb[0].mxu0 %v299
      %v1376 = vpop.f32.mrb[0].mxu0
      %v1377 = vadd.f32 %v1306, %v1376
      %v1378 = vpop.f32.mrb[0].mxu0
      %v1379 = vadd.f32 %v1308, %v1378
      %1380 = vdwg.mxu0
      %v1381 = vadd.f32 %v289, %v951
      %v1382 = vadd.f32 %v290, %v953
      %v1383 = vadd.f32 %v291, %v1093
      %v1384 = vadd.f32 %v292, %v1095
      %v1385 = vadd.f32 %v293, %v1235
      %v1386 = vadd.f32 %v294, %v1237
      %v1387 = vadd.f32 %v295, %v1377
      %v1388 = vadd.f32 %v296, %v1379
      %1389 = vst [vmem:[#allocation2] sm:$0xff] %v1381
      %1390 = vst [vmem:[#allocation2 + $0x8] sm:$0xff] %v1382
      %1391 = vst [vmem:[#allocation2 + $0x10] sm:$0xff] %v1383
      %1392 = vst [vmem:[#allocation2 + $0x18] sm:$0xff] %v1384
      %1393 = vst [vmem:[#allocation2 + $0x20] sm:$0xff] %v1385
      %1394 = vst [vmem:[#allocation2 + $0x28] sm:$0xff] %v1386
      %1395 = vst [vmem:[#allocation2 + $0x30] sm:$0xff] %v1387
      %1396 = vst [vmem:[#allocation2 + $0x38] sm:$0xff] %v1388
      %p1397 = scmp.eq.s32.totalorder %s21, 4
      // Predicated region
      $region37: #{my_nn_model_forward.6} parent=31 // pred_check
        %p1398 = pneg %p1397
      $region38: #{my_nn_model_forward.6} parent=31 // pred_check_branch
        %1400 = sbr.rel (%p1398) target = $region40
      $region39: #{my_nn_model_forward.6} parent=31 // pred_region
        %v1401 = vld [vmem:[#allocation2] sm:$0xff]
        %v1402 = vld [vmem:[#allocation2 + $0x8] sm:$0xff]
        %v1403 = vld [vmem:[#allocation2 + $0x10] sm:$0xff]
        %v1404 = vld [vmem:[#allocation2 + $0x18] sm:$0xff]
        %v1405 = vld [vmem:[#allocation2 + $0x20] sm:$0xff]
        %v1406 = vld [vmem:[#allocation2 + $0x28] sm:$0xff]
        %v1407 = vld [vmem:[#allocation2 + $0x30] sm:$0xff]
        %v1408 = vld [vmem:[#allocation2 + $0x38] sm:$0xff]
        %v1409 = vld [vmem:[%s265] sm:$0xff]
        %v1411 = vlaneseq
        %v1412 = vshrl.u32 %v1411, 7
        %v1413 = vsub.s32 0, %v1412
        %v1414 = vrot.slane %v1409, %v1413
        %v1415 = vlaneseq
        %v1416 = vshrl.u32 %v1415, 7
        %v1417 = vsub.s32 1, %v1416
        %v1418 = vrot.slane %v1409, %v1417
        %v1419 = vlaneseq
        %v1420 = vshrl.u32 %v1419, 7
        %v1421 = vsub.s32 2, %v1420
        %v1422 = vrot.slane %v1409, %v1421
        %v1423 = vlaneseq
        %v1424 = vshrl.u32 %v1423, 7
        %v1425 = vsub.s32 3, %v1424
        %v1426 = vrot.slane %v1409, %v1425
        %v1427 = vlaneseq
        %v1428 = vshrl.u32 %v1427, 7
        %v1429 = vsub.s32 4, %v1428
        %v1430 = vrot.slane %v1409, %v1429
        %v1431 = vlaneseq
        %v1432 = vshrl.u32 %v1431, 7
        %v1433 = vsub.s32 5, %v1432
        %v1434 = vrot.slane %v1409, %v1433
        %v1435 = vlaneseq
        %v1436 = vshrl.u32 %v1435, 7
        %v1437 = vsub.s32 6, %v1436
        %v1438 = vrot.slane %v1409, %v1437
        %v1439 = vlaneseq
        %v1440 = vshrl.u32 %v1439, 7
        %v1441 = vsub.s32 7, %v1440
        %v1442 = vrot.slane %v1409, %v1441
        %v1451 = vadd.f32 %v1401, %v1414
        %v1452 = vadd.f32 %v1402, %v1418
        %v1453 = vadd.f32 %v1403, %v1422
        %v1454 = vadd.f32 %v1404, %v1426
        %v1455 = vadd.f32 %v1405, %v1430
        %v1456 = vadd.f32 %v1406, %v1434
        %v1457 = vadd.f32 %v1407, %v1438
        %v1458 = vadd.f32 %v1408, %v1442
        %v1459 = vmul.f32 %v1451, 0.5
        %v1460 = vmul.f32 %v1452, 0.5
        %v1461 = vmul.f32 %v1453, 0.5
        %v1462 = vmul.f32 %v1454, 0.5
        %v1463 = vmul.f32 %v1455, 0.5
        %v1464 = vmul.f32 %v1456, 0.5
        %v1465 = vmul.f32 %v1457, 0.5
        %v1466 = vmul.f32 %v1458, 0.5
        %v1467 = vmul.f32 %v1451, 0.70710677
        %v1468 = vmul.f32 %v1452, 0.70710677
        %v1469 = vmul.f32 %v1453, 0.70710677
        %v1470 = vmul.f32 %v1454, 0.70710677
        %v1471 = vmul.f32 %v1455, 0.70710677
        %v1472 = vmul.f32 %v1456, 0.70710677
        %v1473 = vmul.f32 %v1457, 0.70710677
        %v1474 = vmul.f32 %v1458, 0.70710677
        %v1475 = verf.f32.pop %v1467
        %v1476 = verf.f32.pop %v1468
        %v1477 = verf.f32.pop %v1469
        %v1478 = verf.f32.pop %v1470
        %v1479 = verf.f32.pop %v1471
        %v1480 = verf.f32.pop %v1472
        %v1481 = verf.f32.pop %v1473
        %v1482 = verf.f32.pop %v1474
        %v1483 = vadd.f32 %v1475, 1.0
        %v1484 = vadd.f32 %v1476, 1.0
        %v1485 = vadd.f32 %v1477, 1.0
        %v1486 = vadd.f32 %v1478, 1.0
        %v1487 = vadd.f32 %v1479, 1.0
        %v1488 = vadd.f32 %v1480, 1.0
        %v1489 = vadd.f32 %v1481, 1.0
        %v1490 = vadd.f32 %v1482, 1.0
        %v1491 = vmul.f32 %v1459, %v1483
        %v1492 = vmul.f32 %v1460, %v1484
        %v1493 = vmul.f32 %v1461, %v1485
        %v1494 = vmul.f32 %v1462, %v1486
        %v1495 = vmul.f32 %v1463, %v1487
        %v1496 = vmul.f32 %v1464, %v1488
        %v1497 = vmul.f32 %v1465, %v1489
        %v1498 = vmul.f32 %v1466, %v1490
        %1499 = vst [vmem:[%s275] sm:$0xff] %v1491
        %1500 = vst [vmem:[%s275 + $0x8] sm:$0xff] %v1492
        %1501 = vst [vmem:[%s275 + $0x10] sm:$0xff] %v1493
        %1502 = vst [vmem:[%s275 + $0x18] sm:$0xff] %v1494
        %1503 = vst [vmem:[%s275 + $0x20] sm:$0xff] %v1495
        %1504 = vst [vmem:[%s275 + $0x28] sm:$0xff] %v1496
        %1505 = vst [vmem:[%s275 + $0x30] sm:$0xff] %v1497
        %1506 = vst [vmem:[%s275 + $0x38] sm:$0xff] %v1498
      $region40: #{my_nn_model_forward.6} parent=31 // pred_fallthru
        _
      %s1507 = smul.u32 8, %s20
      %p1508 = scmp.lt.s32.totalorder %s19, 0
      %s1509 = scalar_select %p1508, %s19, 0
      %p1510 = scmp.lt.s32.totalorder %s1507, 7
      %s1511 = scalar_select %p1510, %s1507, 7
      %s1512 = smul.addr %s1509, 8
      %s1513 = sadd.s32 %s1511, %s1512
      %s1514 = smul.addr %s1513, 8
      %s1515 = scalar_lea.vmem %s3, %s1514
      // Predicated region
      $region41: #{my_nn_model_forward.6} parent=31 // pred_check
        %p1516 = pneg %p135
      $region42: #{my_nn_model_forward.6} parent=31 // pred_check_branch
        %1518 = sbr.rel (%p1516) target = $region44
      $region43: #{my_nn_model_forward.6} parent=31 // pred_region
        %s1519 = smul.u32 8, %s20
      $region44: #{my_nn_model_forward.6} parent=31 // pred_fallthru
        _
      // Predicated region
      $region45: #{my_nn_model_forward.6} parent=31 // pred_check
        %p1520 = pneg %p135
      $region46: #{my_nn_model_forward.6} parent=31 // pred_check_branch
        %1522 = sbr.rel (%p1520) target = $region48
      $region47: #{my_nn_model_forward.6} parent=31 // pred_region
        %s1523 = smul.u32 8, %s20
        %p1524 = scmp.lt.s32.totalorder %s19, 0
        %s1525 = scalar_select %p1524, %s19, 0
        %p1526 = scmp.lt.s32.totalorder %s1523, 7
        %s1527 = scalar_select %p1526, %s1523, 7
        %s1528 = smul.addr %s1525, 8
        %s1529 = sadd.s32 %s1527, %s1528
        %s1530 = smul.addr %s1529, 8
        %s1531 = scalar_lea.vmem %s3, %s1530
      $region48: #{my_nn_model_forward.6} parent=31 // pred_fallthru
        _
    $region32: #{my_nn_model_forward.6} parent=5 // pred_fallthru
      _
    %p1532 = scmp.le.s32.totalorder 2, %s9
    // Predicated region
    $region49: #{my_nn_model_forward.6} parent=5 // pred_check
      %p1533 = pneg %p1532
    $region50: #{my_nn_model_forward.6} parent=5 // pred_check_branch
      %1535 = sbr.rel (%p1533) target = $region52
    $region51: #{my_nn_model_forward.6} parent=5 // pred_region
      %s1536 = ssub.s32 %s9, 2
    $region52: #{my_nn_model_forward.6} parent=5 // pred_fallthru
      _
  $region6: #{my_nn_model_forward.6} parent=0 // loop_footer
    %s13 = sadd.s32 1, %s9
  $region7: #{my_nn_model_forward.6} parent=0 // loop_footer_branch
    %8 = sbr.rel target = $region3
  $region8: #{my_nn_model_forward.6} parent=0 // loop_exit
    _

// kernel: my_nn_model_forward.5
$region0: #{my_nn_model_forward.5}
  #allocation0 [shape = 'u32[]', space=smem, size = 0x4, offset = 0x4, fixed_abs, tag = 'smem constant byte address 0x4 - core index']
  #allocation1 [shape = 'u32[144,128]{1,0:T(1,128)}', space=vmem, size = 0x12000, scoped, tag = 'internal scratch']
  #allocation2 [shape = 'f32[8,1280]{1,0:T(8,128)}', space=vmem, size = 0xa000, scoped, tag = 'scratch operand']
  %s0 = inlined_call_operand.vmem [shape: f32[8,5120], index: 0, kind: input, shape index: {}]
  %s1 = inlined_call_operand.hbm [shape: f32[5120,2560], index: 1, kind: input, shape index: {}]
  %s2 = inlined_call_operand.hbm [shape: f32[1,2560], index: 2, kind: input, shape index: {}]
  %s3 = inlined_call_operand.vmem [shape: f32[8,2560], index: 3, kind: output, shape index: {}]
  %s4 = sld [smem:[#allocation0]]
  $region61: #{my_nn_model_forward.5} parent=0
    _
  %s6 = ssub.s32 1, %s4
  %s7 = scalar_select 0, %s6, %s4
  $region1: #{my_nn_model_forward.5} parent=0
    #allocation3 [shape = 'u8[10485760]{0}', space=vmem, size = 0xa00000, scoped, tag = 'input window, operand 1']
    #allocation4 [shape = 's32[2]{0}', space=sflag, size = 0x8, scoped, tag = 'scoped memory for my_nn_model_forward.5']
    #allocation5 [shape = 'u8[10240]{0}', space=vmem, size = 0x2800, scoped, tag = 'input window, operand 2']
    #allocation6 [shape = 's32[2]{0}', space=sflag, size = 0x8, scoped, tag = 'scoped memory for my_nn_model_forward.5']
    %8 = vsyncpa [#allocation4], 0
    %s9 = scalar_lea.sflag [#allocation4], 1
    %10 = vsyncpa %s9, 0
    %11 = vsyncpa [#allocation6], 0
    %s12 = scalar_lea.sflag [#allocation6], 1
    %13 = vsyncpa %s12, 0
    loop: start=0, step=1, limit=12
    $region2: #{my_nn_model_forward.5} parent=1 // loop_pre_header
      _
    $region3: #{my_nn_model_forward.5} parent=1 // loop_header
      %s15 = sphi 0, %s19
      %p16 = scmp.ge.s32.totalorder %s15, 12
      %s22 = sphi 0, %s41
      %s23 = sphi 0, %s37
      %s24 = sphi 0, %s33
      %s25 = sphi 0, %s22
      %s26 = sphi 0, %s23
      %s27 = sphi 0, %s24
      %s28 = sphi 0, %s25
      %s29 = sphi 0, %s26
      %s30 = sphi 0, %s27
      %s46 = sphi 0, %s48
      %s49 = sphi 0, %s46
      %s50 = sphi 0, %s49
      %s66 = sphi 0, %s50
      %s74 = sphi 0, %s76
      %s77 = sphi 0, %s74
      %s78 = sphi 0, %s77
      %s94 = sphi 0, %s78
      %s100 = sphi 0, %s102
      %s103 = sphi 0, %s100
      %s104 = sphi 0, %s103
      %s120 = sphi 0, %s104
      %s128 = sphi 0, %s130
      %s131 = sphi 0, %s128
      %s132 = sphi 0, %s131
      %s148 = sphi 0, %s132
    $region4: #{my_nn_model_forward.5} parent=1 // loop_header_branch
      %18 = sbr.rel (%p16) target = $region8
    $region5: #{my_nn_model_forward.5} parent=1 // loop_body
      %s20 = ssub.s32 %s15, 1
      %s21 = ssub.s32 %s15, 2
      %s31 = sadd.s32 1, %s24
      %p32 = scmp.ge.s32.totalorder %s31, 5
      %s33 = scalar_select %p32, 0, %s31
      %s34 = sadd.s32 1, %s23
      %s35 = scalar_select %p32, %s34, %s23
      %p36 = scmp.ge.s32.totalorder %s35, 2
      %s37 = scalar_select %p36, 0, %s35
      %s38 = sadd.s32 1, %s22
      %s39 = scalar_select %p36, %s38, %s22
      %p40 = scmp.ge.s32.totalorder %s39, 1
      %s41 = scalar_select %p40, 0, %s39
      %s42 = ssub.s32 %s22, %s41
      %s43 = ssub.s32 %s24, %s33
      %s44 = sor.u32 %s42, %s43
      %p45 = scmp.eq.s32.totalorder %s44, 0
      %s47 = sadd.s32 %s46, 1
      %s48 = scalar_select %p45, %s46, %s47
      %p51 = pneg %p45
      %p52 = scmp.eq.s32.totalorder %s15, 9
      %p53 = por %p51, %p52
      %p54 = scmp.ne.s32.totalorder %s46, %s49
      %p55 = scmp.eq.s32.totalorder %s15, 0
      %p56 = por %p54, %p55
      %p57 = scmp.ne.s32.totalorder %s46, %s49
      %p58 = scmp.eq.s32.totalorder %s20, 9
      %p59 = por %p57, %p58
      %p60 = scmp.ne.s32.totalorder %s49, %s50
      %p61 = scmp.eq.s32.totalorder %s20, 0
      %p62 = por %p60, %p61
      %p63 = scmp.ne.s32.totalorder %s49, %s50
      %p64 = scmp.eq.s32.totalorder %s21, 9
      %p65 = por %p63, %p64
      %p67 = scmp.ne.s32.totalorder %s50, %s66
      %p68 = scmp.eq.s32.totalorder %s21, 0
      %p69 = por %p67, %p68
      %s70 = ssub.s32 %s24, %s33
      %s71 = ssub.s32 %s23, %s37
      %s72 = sor.u32 %s70, %s71
      %p73 = scmp.eq.s32.totalorder %s72, 0
      %s75 = sadd.s32 %s74, 1
      %s76 = scalar_select %p73, %s74, %s75
      %p79 = pneg %p73
      %p80 = scmp.eq.s32.totalorder %s15, 9
      %p81 = por %p79, %p80
      %p82 = scmp.ne.s32.totalorder %s74, %s77
      %p83 = scmp.eq.s32.totalorder %s15, 0
      %p84 = por %p82, %p83
      %p85 = scmp.ne.s32.totalorder %s74, %s77
      %p86 = scmp.eq.s32.totalorder %s20, 9
      %p87 = por %p85, %p86
      %p88 = scmp.ne.s32.totalorder %s77, %s78
      %p89 = scmp.eq.s32.totalorder %s20, 0
      %p90 = por %p88, %p89
      %p91 = scmp.ne.s32.totalorder %s77, %s78
      %p92 = scmp.eq.s32.totalorder %s21, 9
      %p93 = por %p91, %p92
      %p95 = scmp.ne.s32.totalorder %s78, %s94
      %p96 = scmp.eq.s32.totalorder %s21, 0
      %p97 = por %p95, %p96
      %s98 = ssub.s32 %s23, %s37
      %p99 = scmp.eq.s32.totalorder %s98, 0
      %s101 = sadd.s32 %s100, 1
      %s102 = scalar_select %p99, %s100, %s101
      %p105 = pneg %p99
      %p106 = scmp.eq.s32.totalorder %s15, 9
      %p107 = por %p105, %p106
      %p108 = scmp.ne.s32.totalorder %s100, %s103
      %p109 = scmp.eq.s32.totalorder %s15, 0
      %p110 = por %p108, %p109
      %p111 = scmp.ne.s32.totalorder %s100, %s103
      %p112 = scmp.eq.s32.totalorder %s20, 9
      %p113 = por %p111, %p112
      %p114 = scmp.ne.s32.totalorder %s103, %s104
      %p115 = scmp.eq.s32.totalorder %s20, 0
      %p116 = por %p114, %p115
      %p117 = scmp.ne.s32.totalorder %s103, %s104
      %p118 = scmp.eq.s32.totalorder %s21, 9
      %p119 = por %p117, %p118
      %p121 = scmp.ne.s32.totalorder %s104, %s120
      %p122 = scmp.eq.s32.totalorder %s21, 0
      %p123 = por %p121, %p122
      %s124 = ssub.s32 %s22, %s41
      %s125 = ssub.s32 %s23, %s37
      %s126 = sor.u32 %s124, %s125
      %p127 = scmp.eq.s32.totalorder %s126, 0
      %s129 = sadd.s32 %s128, 1
      %s130 = scalar_select %p127, %s128, %s129
      %p133 = pneg %p127
      %p134 = scmp.eq.s32.totalorder %s15, 9
      %p135 = por %p133, %p134
      %p136 = scmp.ne.s32.totalorder %s128, %s131
      %p137 = scmp.eq.s32.totalorder %s15, 0
      %p138 = por %p136, %p137
      %p139 = scmp.ne.s32.totalorder %s128, %s131
      %p140 = scmp.eq.s32.totalorder %s20, 9
      %p141 = por %p139, %p140
      %p142 = scmp.ne.s32.totalorder %s131, %s132
      %p143 = scmp.eq.s32.totalorder %s20, 0
      %p144 = por %p142, %p143
      %p145 = scmp.ne.s32.totalorder %s131, %s132
      %p146 = scmp.eq.s32.totalorder %s21, 9
      %p147 = por %p145, %p146
      %p149 = scmp.ne.s32.totalorder %s132, %s148
      %p150 = scmp.eq.s32.totalorder %s21, 0
      %p151 = por %p149, %p150
      %p152 = scmp.le.s32.totalorder 1, %s15
      %p153 = scmp.lt.s32.totalorder %s15, 11
      %p154 = pnand %p152, %p153
      %p155 = pneg %p154
      // Predicated region
      $region9: #{my_nn_model_forward.5} parent=5 // pred_check
        _
      $region10: #{my_nn_model_forward.5} parent=5 // pred_check_branch
        %157 = sbr.rel (%p154) target = $region12
      $region11: #{my_nn_model_forward.5} parent=5 // pred_region
        %s158 = ssub.s32 %s15, 1
      $region12: #{my_nn_model_forward.5} parent=5 // pred_fallthru
        _
      %p159 = scmp.lt.s32.totalorder %s15, 10
      // Predicated region
      $region13: #{my_nn_model_forward.5} parent=5 // pred_check
        %p160 = pneg %p159
      $region14: #{my_nn_model_forward.5} parent=5 // pred_check_branch
        %162 = sbr.rel (%p160) target = $region16
      $region15: #{my_nn_model_forward.5} parent=5 // pred_region
        // Predicated region
        $region17: #{my_nn_model_forward.5} parent=15 // pred_check
          %p163 = pneg %p56
        $region18: #{my_nn_model_forward.5} parent=15 // pred_check_branch
          %165 = sbr.rel (%p163) target = $region20
        $region19: #{my_nn_model_forward.5} parent=15 // pred_region
          %s166 = smul.u32 8, %s24
          %p167 = scmp.lt.s32.totalorder %s22, 0
          %s168 = scalar_select %p167, %s22, 0
          %p169 = scmp.lt.s32.totalorder %s166, 39
          %s170 = scalar_select %p169, %s166, 39
          %s171 = smul.addr %s168, 40
          %s172 = sadd.s32 %s170, %s171
          %s173 = smul.addr %s172, 8
          %s174 = scalar_lea.vmem %s0, %s173
          %s175 = smul.u32 8, %s24
        $region20: #{my_nn_model_forward.5} parent=15 // pred_fallthru
          _
        // Predicated region
        $region21: #{my_nn_model_forward.5} parent=15 // pred_check
          %p176 = pneg %p84
        $region22: #{my_nn_model_forward.5} parent=15 // pred_check_branch
          %178 = sbr.rel (%p176) target = $region24
        $region23: #{my_nn_model_forward.5} parent=15 // pred_region
          %s179 = sand.u32 %s74, 1
          %s180 = scalar_lea.sflag [#allocation4], %s179
          %s181 = sand.u32 %s74, 1
          %s182 = smul.addr %s181, 10240
          %s183 = scalar_lea.vmem [#allocation3], %s182
          %s184 = smul.u32 128, %s24
          %s185 = smul.u32 10, %s23
          %s187 = ssub.s32 163840, 163840
          %188 = vsyncadd %s180, %s187
          %s189 = smul.addr %s184, 20
          %s190 = sadd.s32 %s185, %s189
          %s191 = smul.addr %s190, 128
          %s192 = scalar_lea.hbm %s1, %s191
          %s193 = sshll.u32 %s183, 4
          %s194 = int_to_ptr.vmem [resolvable:$true] %s193
          %199 = dma.hbm_to_vmem [thread:$0]  %s192, 163840, %s194, %s180, 2560, 1280, 80
        $region24: #{my_nn_model_forward.5} parent=15 // pred_fallthru
          _
        // Predicated region
        $region25: #{my_nn_model_forward.5} parent=15 // pred_check
          %p200 = pneg %p110
        $region26: #{my_nn_model_forward.5} parent=15 // pred_check_branch
          %202 = sbr.rel (%p200) target = $region28
        $region27: #{my_nn_model_forward.5} parent=15 // pred_region
          %s203 = sand.u32 %s100, 1
          %s204 = scalar_lea.sflag [#allocation6], %s203
          %s205 = sand.u32 %s100, 1
          %s206 = smul.addr %s205, 10
          %s207 = scalar_lea.vmem [#allocation5], %s206
          %s208 = smul.u32 10, %s23
          %s210 = ssub.s32 160, 160
          %211 = vsyncadd %s204, %s210
          %s212 = smul.addr %s208, 16
          %s213 = scalar_lea.hbm %s2, %s212
          %s215 = sshll.u32 %s207, 4
          %s216 = int_to_ptr.vmem [resolvable:$true] %s215
          %218 = dma.hbm_to_vmem [thread:$0]  %s213, 160, %s216, %s204
        $region28: #{my_nn_model_forward.5} parent=15 // pred_fallthru
          _
      $region16: #{my_nn_model_forward.5} parent=5 // pred_fallthru
        _
      %p219 = scmp.le.s32.totalorder 1, %s15
      %p220 = scmp.lt.s32.totalorder %s15, 11
      %p221 = pnand %p219, %p220
      %p222 = pneg %p221
      // Predicated region
      $region29: #{my_nn_model_forward.5} parent=5 // pred_check
        _
      $region30: #{my_nn_model_forward.5} parent=5 // pred_check_branch
        %224 = sbr.rel (%p221) target = $region32
      $region31: #{my_nn_model_forward.5} parent=5 // pred_region
        %s225 = ssub.s32 %s15, 1
        %s226 = sand.u32 %s77, 1
        %s227 = scalar_lea.sflag [#allocation4], %s226
        %s228 = sand.u32 %s77, 1
        %s229 = smul.addr %s228, 10240
        %s230 = scalar_lea.vmem [#allocation3], %s229
        // Predicated region
        $region33: #{my_nn_model_forward.5} parent=31 // pred_check
          %p231 = pneg %p90
        $region34: #{my_nn_model_forward.5} parent=31 // pred_check_branch
          %233 = sbr.rel (%p231) target = $region36
        $region35: #{my_nn_model_forward.5} parent=31 // pred_region
          %234 = dma.done %s227, 163840
        $region36: #{my_nn_model_forward.5} parent=31 // pred_fallthru
          _
        %s235 = sand.u32 %s103, 1
        %s236 = scalar_lea.sflag [#allocation6], %s235
        %s237 = sand.u32 %s103, 1
        %s238 = smul.addr %s237, 10
        %s239 = scalar_lea.vmem [#allocation5], %s238
        // Predicated region
        $region37: #{my_nn_model_forward.5} parent=31 // pred_check
          %p240 = pneg %p116
        $region38: #{my_nn_model_forward.5} parent=31 // pred_check_branch
          %242 = sbr.rel (%p240) target = $region40
        $region39: #{my_nn_model_forward.5} parent=31 // pred_region
          %243 = dma.done %s236, 160
        $region40: #{my_nn_model_forward.5} parent=31 // pred_fallthru
          _
        %s244 = smul.u32 8, %s27
        %p245 = scmp.lt.s32.totalorder %s25, 0
        %s246 = scalar_select %p245, %s25, 0
        %p247 = scmp.lt.s32.totalorder %s244, 39
        %s248 = scalar_select %p247, %s244, 39
        %s249 = smul.addr %s246, 40
        %s250 = sadd.s32 %s248, %s249
        %s251 = smul.addr %s250, 8
        %s252 = scalar_lea.vmem %s0, %s251
        %p253 = pneg %p62
        %p254 = pneg %p59
        %s255 = sand.u32 %s77, 1
        %s256 = scalar_lea.sflag [#allocation4], %s255
        %s257 = sand.u32 %s77, 1
        %s258 = smul.addr %s257, 10240
        %s259 = scalar_lea.vmem [#allocation3], %s258
        %p260 = pneg %p90
        %p261 = pneg %p87
        %s262 = sand.u32 %s103, 1
        %s263 = scalar_lea.sflag [#allocation6], %s262
        %s264 = sand.u32 %s103, 1
        %s265 = smul.addr %s264, 10
        %s266 = scalar_lea.vmem [#allocation5], %s265
        %p267 = pneg %p116
        %p268 = pneg %p113
        %p269 = pneg %p144
        %p270 = pneg %p141
        %s271 = smul.u32 10, %s26
        %p272 = scmp.lt.s32.totalorder %s25, 0
        %s273 = scalar_select %p272, %s25, 0
        %p274 = scmp.lt.s32.totalorder %s271, 19
        %s275 = scalar_select %p274, %s271, 19
        %s276 = smul.addr %s273, 20
        %s277 = sadd.s32 %s275, %s276
        %s278 = smul.addr %s277, 8
        %s279 = scalar_lea.vmem %s3, %s278
        %s280 = smul.u32 8, %s27
        %p281 = scmp.lt.s32.totalorder %s25, 0
        %s282 = scalar_select %p281, %s25, 0
        %p283 = scmp.lt.s32.totalorder %s280, 39
        %s284 = scalar_select %p283, %s280, 39
        %s285 = smul.addr %s282, 40
        %s286 = sadd.s32 %s284, %s285
        %s287 = smul.addr %s286, 8
        %s288 = scalar_lea.vmem %s0, %s287
        %s289 = smul.u32 8, %s27
        %s290 = smul.u32 128, %s27
        %s291 = smul.u32 10, %s26
        %s292 = smul.u32 10, %s26
        %s293 = smul.u32 10, %s26
        %p294 = scmp.lt.s32.totalorder %s25, 0
        %s295 = scalar_select %p294, %s25, 0
        %p296 = scmp.lt.s32.totalorder %s293, 19
        %s297 = scalar_select %p296, %s293, 19
        %s298 = smul.addr %s295, 20
        %s299 = sadd.s32 %s297, %s298
        %s300 = smul.addr %s299, 8
        %s301 = scalar_lea.vmem %s3, %s300
        %s302 = smul.u32 10, %s26
        %p303 = scmp.eq.s32.totalorder %s27, 0
        // Predicated region
        $region41: #{my_nn_model_forward.5} parent=31 // pred_check
          %p304 = pneg %p303
        $region42: #{my_nn_model_forward.5} parent=31 // pred_check_branch
          %306 = sbr.rel (%p304) target = $region44
        $region43: #{my_nn_model_forward.5} parent=31 // pred_region
          %307 = vst [vmem:[#allocation2] sm:$0xff] 0.0
          %308 = vst [vmem:[#allocation2 + $0x8] sm:$0xff] 0.0
          %309 = vst [vmem:[#allocation2 + $0x10] sm:$0xff] 0.0
          %310 = vst [vmem:[#allocation2 + $0x18] sm:$0xff] 0.0
          %311 = vst [vmem:[#allocation2 + $0x20] sm:$0xff] 0.0
          %312 = vst [vmem:[#allocation2 + $0x28] sm:$0xff] 0.0
          %313 = vst [vmem:[#allocation2 + $0x30] sm:$0xff] 0.0
          %314 = vst [vmem:[#allocation2 + $0x38] sm:$0xff] 0.0
          %315 = vst [vmem:[#allocation2 + $0x40] sm:$0xff] 0.0
          %316 = vst [vmem:[#allocation2 + $0x48] sm:$0xff] 0.0
        $region44: #{my_nn_model_forward.5} parent=31 // pred_fallthru
          _
        %v317 = vld [vmem:[#allocation2] sm:$0xff]
        %v318 = vld [vmem:[#allocation2 + $0x8] sm:$0xff]
        %v319 = vld [vmem:[#allocation2 + $0x10] sm:$0xff]
        %v320 = vld [vmem:[#allocation2 + $0x18] sm:$0xff]
        %v321 = vld [vmem:[#allocation2 + $0x20] sm:$0xff]
        %v322 = vld [vmem:[#allocation2 + $0x28] sm:$0xff]
        %v323 = vld [vmem:[#allocation2 + $0x30] sm:$0xff]
        %v324 = vld [vmem:[#allocation2 + $0x38] sm:$0xff]
        %v325 = vld [vmem:[#allocation2 + $0x40] sm:$0xff]
        %v326 = vld [vmem:[#allocation2 + $0x48] sm:$0xff]
        %v327 = vld [vmem:[%s288] sm:$0xff]
        %v328 = vld [vmem:[%s288 + $0x8] sm:$0xff]
        %v329 = vld [vmem:[%s288 + $0x10] sm:$0xff]
        %v330 = vld [vmem:[%s288 + $0x18] sm:$0xff]
        %v331 = vld [vmem:[%s288 + $0x20] sm:$0xff]
        %v332 = vld [vmem:[%s288 + $0x28] sm:$0xff]
        %v333 = vld [vmem:[%s288 + $0x30] sm:$0xff]
        %v334 = vld [vmem:[%s288 + $0x38] sm:$0xff]
        %v335 = vld [vmem:[%s230] sm:$0xff]
        %v336 = vld [vmem:[%s230 + $0x8] sm:$0xff]
        %v337 = vld [vmem:[%s230 + $0x10] sm:$0xff]
        %v338 = vld [vmem:[%s230 + $0x18] sm:$0xff]
        %v339 = vld [vmem:[%s230 + $0x20] sm:$0xff]
        %v340 = vld [vmem:[%s230 + $0x28] sm:$0xff]
        %v341 = vld [vmem:[%s230 + $0x30] sm:$0xff]
        %v342 = vld [vmem:[%s230 + $0x38] sm:$0xff]
        %v343 = vld [vmem:[%s230 + $0x40] sm:$0xff]
        %v344 = vld [vmem:[%s230 + $0x48] sm:$0xff]
        %v345 = vld [vmem:[%s230 + $0x50] sm:$0xff]
        %v346 = vld [vmem:[%s230 + $0x58] sm:$0xff]
        %v347 = vld [vmem:[%s230 + $0x60] sm:$0xff]
        %v348 = vld [vmem:[%s230 + $0x68] sm:$0xff]
        %v349 = vld [vmem:[%s230 + $0x70] sm:$0xff]
        %v350 = vld [vmem:[%s230 + $0x78] sm:$0xff]
        %v351 = vld [vmem:[%s230 + $0x80] sm:$0xff]
        %v352 = vld [vmem:[%s230 + $0x88] sm:$0xff]
        %v353 = vld [vmem:[%s230 + $0x90] sm:$0xff]
        %v354 = vld [vmem:[%s230 + $0x98] sm:$0xff]
        %v355 = vld [vmem:[%s230 + $0xa0] sm:$0xff]
        %v356 = vld [vmem:[%s230 + $0xa8] sm:$0xff]
        %v357 = vld [vmem:[%s230 + $0xb0] sm:$0xff]
        %v358 = vld [vmem:[%s230 + $0xb8] sm:$0xff]
        %v359 = vld [vmem:[%s230 + $0xc0] sm:$0xff]
        %v360 = vld [vmem:[%s230 + $0xc8] sm:$0xff]
        %v361 = vld [vmem:[%s230 + $0xd0] sm:$0xff]
        %v362 = vld [vmem:[%s230 + $0xd8] sm:$0xff]
        %v363 = vld [vmem:[%s230 + $0xe0] sm:$0xff]
        %v364 = vld [vmem:[%s230 + $0xe8] sm:$0xff]
        %v365 = vld [vmem:[%s230 + $0xf0] sm:$0xff]
        %v366 = vld [vmem:[%s230 + $0xf8] sm:$0xff]
        %v367 = vld [vmem:[%s230 + $0x100] sm:$0xff]
        %v368 = vld [vmem:[%s230 + $0x108] sm:$0xff]
        %v369 = vld [vmem:[%s230 + $0x110] sm:$0xff]
        %v370 = vld [vmem:[%s230 + $0x118] sm:$0xff]
        %v371 = vld [vmem:[%s230 + $0x120] sm:$0xff]
        %v372 = vld [vmem:[%s230 + $0x128] sm:$0xff]
        %v373 = vld [vmem:[%s230 + $0x130] sm:$0xff]
        %v374 = vld [vmem:[%s230 + $0x138] sm:$0xff]
        %v375 = vld [vmem:[%s230 + $0x140] sm:$0xff]
        %v376 = vld [vmem:[%s230 + $0x148] sm:$0xff]
        %v377 = vld [vmem:[%s230 + $0x150] sm:$0xff]
        %v378 = vld [vmem:[%s230 + $0x158] sm:$0xff]
        %v379 = vld [vmem:[%s230 + $0x160] sm:$0xff]
        %v380 = vld [vmem:[%s230 + $0x168] sm:$0xff]
        %v381 = vld [vmem:[%s230 + $0x170] sm:$0xff]
        %v382 = vld [vmem:[%s230 + $0x178] sm:$0xff]
        %v383 = vld [vmem:[%s230 + $0x180] sm:$0xff]
        %v384 = vld [vmem:[%s230 + $0x188] sm:$0xff]
        %v385 = vld [vmem:[%s230 + $0x190] sm:$0xff]
        %v386 = vld [vmem:[%s230 + $0x198] sm:$0xff]
        %v387 = vld [vmem:[%s230 + $0x1a0] sm:$0xff]
        %v388 = vld [vmem:[%s230 + $0x1a8] sm:$0xff]
        %v389 = vld [vmem:[%s230 + $0x1b0] sm:$0xff]
        %v390 = vld [vmem:[%s230 + $0x1b8] sm:$0xff]
        %v391 = vld [vmem:[%s230 + $0x1c0] sm:$0xff]
        %v392 = vld [vmem:[%s230 + $0x1c8] sm:$0xff]
        %v393 = vld [vmem:[%s230 + $0x1d0] sm:$0xff]
        %v394 = vld [vmem:[%s230 + $0x1d8] sm:$0xff]
        %v395 = vld [vmem:[%s230 + $0x1e0] sm:$0xff]
        %v396 = vld [vmem:[%s230 + $0x1e8] sm:$0xff]
        %v397 = vld [vmem:[%s230 + $0x1f0] sm:$0xff]
        %v398 = vld [vmem:[%s230 + $0x1f8] sm:$0xff]
        %v399 = vld [vmem:[%s230 + $0x200] sm:$0xff]
        %v400 = vld [vmem:[%s230 + $0x208] sm:$0xff]
        %v401 = vld [vmem:[%s230 + $0x210] sm:$0xff]
        %v402 = vld [vmem:[%s230 + $0x218] sm:$0xff]
        %v403 = vld [vmem:[%s230 + $0x220] sm:$0xff]
        %v404 = vld [vmem:[%s230 + $0x228] sm:$0xff]
        %v405 = vld [vmem:[%s230 + $0x230] sm:$0xff]
        %v406 = vld [vmem:[%s230 + $0x238] sm:$0xff]
        %v407 = vld [vmem:[%s230 + $0x240] sm:$0xff]
        %v408 = vld [vmem:[%s230 + $0x248] sm:$0xff]
        %v409 = vld [vmem:[%s230 + $0x250] sm:$0xff]
        %v410 = vld [vmem:[%s230 + $0x258] sm:$0xff]
        %v411 = vld [vmem:[%s230 + $0x260] sm:$0xff]
        %v412 = vld [vmem:[%s230 + $0x268] sm:$0xff]
        %v413 = vld [vmem:[%s230 + $0x270] sm:$0xff]
        %v414 = vld [vmem:[%s230 + $0x278] sm:$0xff]
        %v415 = vld [vmem:[%s230 + $0x280] sm:$0xff]
        %v416 = vld [vmem:[%s230 + $0x288] sm:$0xff]
        %v417 = vld [vmem:[%s230 + $0x290] sm:$0xff]
        %v418 = vld [vmem:[%s230 + $0x298] sm:$0xff]
        %v419 = vld [vmem:[%s230 + $0x2a0] sm:$0xff]
        %v420 = vld [vmem:[%s230 + $0x2a8] sm:$0xff]
        %v421 = vld [vmem:[%s230 + $0x2b0] sm:$0xff]
        %v422 = vld [vmem:[%s230 + $0x2b8] sm:$0xff]
        %v423 = vld [vmem:[%s230 + $0x2c0] sm:$0xff]
        %v424 = vld [vmem:[%s230 + $0x2c8] sm:$0xff]
        %v425 = vld [vmem:[%s230 + $0x2d0] sm:$0xff]
        %v426 = vld [vmem:[%s230 + $0x2d8] sm:$0xff]
        %v427 = vld [vmem:[%s230 + $0x2e0] sm:$0xff]
        %v428 = vld [vmem:[%s230 + $0x2e8] sm:$0xff]
        %v429 = vld [vmem:[%s230 + $0x2f0] sm:$0xff]
        %v430 = vld [vmem:[%s230 + $0x2f8] sm:$0xff]
        %v431 = vld [vmem:[%s230 + $0x300] sm:$0xff]
        %v432 = vld [vmem:[%s230 + $0x308] sm:$0xff]
        %v433 = vld [vmem:[%s230 + $0x310] sm:$0xff]
        %v434 = vld [vmem:[%s230 + $0x318] sm:$0xff]
        %v435 = vld [vmem:[%s230 + $0x320] sm:$0xff]
        %v436 = vld [vmem:[%s230 + $0x328] sm:$0xff]
        %v437 = vld [vmem:[%s230 + $0x330] sm:$0xff]
        %v438 = vld [vmem:[%s230 + $0x338] sm:$0xff]
        %v439 = vld [vmem:[%s230 + $0x340] sm:$0xff]
        %v440 = vld [vmem:[%s230 + $0x348] sm:$0xff]
        %v441 = vld [vmem:[%s230 + $0x350] sm:$0xff]
        %v442 = vld [vmem:[%s230 + $0x358] sm:$0xff]
        %v443 = vld [vmem:[%s230 + $0x360] sm:$0xff]
        %v444 = vld [vmem:[%s230 + $0x368] sm:$0xff]
        %v445 = vld [vmem:[%s230 + $0x370] sm:$0xff]
        %v446 = vld [vmem:[%s230 + $0x378] sm:$0xff]
        %v447 = vld [vmem:[%s230 + $0x380] sm:$0xff]
        %v448 = vld [vmem:[%s230 + $0x388] sm:$0xff]
        %v449 = vld [vmem:[%s230 + $0x390] sm:$0xff]
        %v450 = vld [vmem:[%s230 + $0x398] sm:$0xff]
        %v451 = vld [vmem:[%s230 + $0x3a0] sm:$0xff]
        %v452 = vld [vmem:[%s230 + $0x3a8] sm:$0xff]
        %v453 = vld [vmem:[%s230 + $0x3b0] sm:$0xff]
        %v454 = vld [vmem:[%s230 + $0x3b8] sm:$0xff]
        %v455 = vld [vmem:[%s230 + $0x3c0] sm:$0xff]
        %v456 = vld [vmem:[%s230 + $0x3c8] sm:$0xff]
        %v457 = vld [vmem:[%s230 + $0x3d0] sm:$0xff]
        %v458 = vld [vmem:[%s230 + $0x3d8] sm:$0xff]
        %v459 = vld [vmem:[%s230 + $0x3e0] sm:$0xff]
        %v460 = vld [vmem:[%s230 + $0x3e8] sm:$0xff]
        %v461 = vld [vmem:[%s230 + $0x3f0] sm:$0xff]
        %v462 = vld [vmem:[%s230 + $0x3f8] sm:$0xff]
        %v463 = vld [vmem:[%s230 + $0x400] sm:$0xff]
        %v464 = vld [vmem:[%s230 + $0x408] sm:$0xff]
        %v465 = vld [vmem:[%s230 + $0x410] sm:$0xff]
        %v466 = vld [vmem:[%s230 + $0x418] sm:$0xff]
        %v467 = vld [vmem:[%s230 + $0x420] sm:$0xff]
        %v468 = vld [vmem:[%s230 + $0x428] sm:$0xff]
        %v469 = vld [vmem:[%s230 + $0x430] sm:$0xff]
        %v470 = vld [vmem:[%s230 + $0x438] sm:$0xff]
        %v471 = vld [vmem:[%s230 + $0x440] sm:$0xff]
        %v472 = vld [vmem:[%s230 + $0x448] sm:$0xff]
        %v473 = vld [vmem:[%s230 + $0x450] sm:$0xff]
        %v474 = vld [vmem:[%s230 + $0x458] sm:$0xff]
        %v475 = vld [vmem:[%s230 + $0x460] sm:$0xff]
        %v476 = vld [vmem:[%s230 + $0x468] sm:$0xff]
        %v477 = vld [vmem:[%s230 + $0x470] sm:$0xff]
        %v478 = vld [vmem:[%s230 + $0x478] sm:$0xff]
        %v479 = vld [vmem:[%s230 + $0x480] sm:$0xff]
        %v480 = vld [vmem:[%s230 + $0x488] sm:$0xff]
        %v481 = vld [vmem:[%s230 + $0x490] sm:$0xff]
        %v482 = vld [vmem:[%s230 + $0x498] sm:$0xff]
        %v483 = vld [vmem:[%s230 + $0x4a0] sm:$0xff]
        %v484 = vld [vmem:[%s230 + $0x4a8] sm:$0xff]
        %v485 = vld [vmem:[%s230 + $0x4b0] sm:$0xff]
        %v486 = vld [vmem:[%s230 + $0x4b8] sm:$0xff]
        %v487 = vld [vmem:[%s230 + $0x4c0] sm:$0xff]
        %v488 = vld [vmem:[%s230 + $0x4c8] sm:$0xff]
        %v489 = vld [vmem:[%s230 + $0x4d0] sm:$0xff]
        %v490 = vld [vmem:[%s230 + $0x4d8] sm:$0xff]
        %v491 = vld [vmem:[%s230 + $0x4e0] sm:$0xff]
        %v492 = vld [vmem:[%s230 + $0x4e8] sm:$0xff]
        %v493 = vld [vmem:[%s230 + $0x4f0] sm:$0xff]
        %v494 = vld [vmem:[%s230 + $0x4f8] sm:$0xff]
        %v495 = vld [vmem:[%s230 + $0x500] sm:$0xff]
        %v496 = vld [vmem:[%s230 + $0x508] sm:$0xff]
        %v497 = vld [vmem:[%s230 + $0x510] sm:$0xff]
        %v498 = vld [vmem:[%s230 + $0x518] sm:$0xff]
        %v499 = vld [vmem:[%s230 + $0x520] sm:$0xff]
        %v500 = vld [vmem:[%s230 + $0x528] sm:$0xff]
        %v501 = vld [vmem:[%s230 + $0x530] sm:$0xff]
        %v502 = vld [vmem:[%s230 + $0x538] sm:$0xff]
        %v503 = vld [vmem:[%s230 + $0x540] sm:$0xff]
        %v504 = vld [vmem:[%s230 + $0x548] sm:$0xff]
        %v505 = vld [vmem:[%s230 + $0x550] sm:$0xff]
        %v506 = vld [vmem:[%s230 + $0x558] sm:$0xff]
        %v507 = vld [vmem:[%s230 + $0x560] sm:$0xff]
        %v508 = vld [vmem:[%s230 + $0x568] sm:$0xff]
        %v509 = vld [vmem:[%s230 + $0x570] sm:$0xff]
        %v510 = vld [vmem:[%s230 + $0x578] sm:$0xff]
        %v511 = vld [vmem:[%s230 + $0x580] sm:$0xff]
        %v512 = vld [vmem:[%s230 + $0x588] sm:$0xff]
        %v513 = vld [vmem:[%s230 + $0x590] sm:$0xff]
        %v514 = vld [vmem:[%s230 + $0x598] sm:$0xff]
        %v515 = vld [vmem:[%s230 + $0x5a0] sm:$0xff]
        %v516 = vld [vmem:[%s230 + $0x5a8] sm:$0xff]
        %v517 = vld [vmem:[%s230 + $0x5b0] sm:$0xff]
        %v518 = vld [vmem:[%s230 + $0x5b8] sm:$0xff]
        %v519 = vld [vmem:[%s230 + $0x5c0] sm:$0xff]
        %v520 = vld [vmem:[%s230 + $0x5c8] sm:$0xff]
        %v521 = vld [vmem:[%s230 + $0x5d0] sm:$0xff]
        %v522 = vld [vmem:[%s230 + $0x5d8] sm:$0xff]
        %v523 = vld [vmem:[%s230 + $0x5e0] sm:$0xff]
        %v524 = vld [vmem:[%s230 + $0x5e8] sm:$0xff]
        %v525 = vld [vmem:[%s230 + $0x5f0] sm:$0xff]
        %v526 = vld [vmem:[%s230 + $0x5f8] sm:$0xff]
        %v527 = vld [vmem:[%s230 + $0x600] sm:$0xff]
        %v528 = vld [vmem:[%s230 + $0x608] sm:$0xff]
        %v529 = vld [vmem:[%s230 + $0x610] sm:$0xff]
        %v530 = vld [vmem:[%s230 + $0x618] sm:$0xff]
        %v531 = vld [vmem:[%s230 + $0x620] sm:$0xff]
        %v532 = vld [vmem:[%s230 + $0x628] sm:$0xff]
        %v533 = vld [vmem:[%s230 + $0x630] sm:$0xff]
        %v534 = vld [vmem:[%s230 + $0x638] sm:$0xff]
        %v535 = vld [vmem:[%s230 + $0x640] sm:$0xff]
        %v536 = vld [vmem:[%s230 + $0x648] sm:$0xff]
        %v537 = vld [vmem:[%s230 + $0x650] sm:$0xff]
        %v538 = vld [vmem:[%s230 + $0x658] sm:$0xff]
        %v539 = vld [vmem:[%s230 + $0x660] sm:$0xff]
        %v540 = vld [vmem:[%s230 + $0x668] sm:$0xff]
        %v541 = vld [vmem:[%s230 + $0x670] sm:$0xff]
        %v542 = vld [vmem:[%s230 + $0x678] sm:$0xff]
        %v543 = vld [vmem:[%s230 + $0x680] sm:$0xff]
        %v544 = vld [vmem:[%s230 + $0x688] sm:$0xff]
        %v545 = vld [vmem:[%s230 + $0x690] sm:$0xff]
        %v546 = vld [vmem:[%s230 + $0x698] sm:$0xff]
        %v547 = vld [vmem:[%s230 + $0x6a0] sm:$0xff]
        %v548 = vld [vmem:[%s230 + $0x6a8] sm:$0xff]
        %v549 = vld [vmem:[%s230 + $0x6b0] sm:$0xff]
        %v550 = vld [vmem:[%s230 + $0x6b8] sm:$0xff]
        %v551 = vld [vmem:[%s230 + $0x6c0] sm:$0xff]
        %v552 = vld [vmem:[%s230 + $0x6c8] sm:$0xff]
        %v553 = vld [vmem:[%s230 + $0x6d0] sm:$0xff]
        %v554 = vld [vmem:[%s230 + $0x6d8] sm:$0xff]
        %v555 = vld [vmem:[%s230 + $0x6e0] sm:$0xff]
        %v556 = vld [vmem:[%s230 + $0x6e8] sm:$0xff]
        %v557 = vld [vmem:[%s230 + $0x6f0] sm:$0xff]
        %v558 = vld [vmem:[%s230 + $0x6f8] sm:$0xff]
        %v559 = vld [vmem:[%s230 + $0x700] sm:$0xff]
        %v560 = vld [vmem:[%s230 + $0x708] sm:$0xff]
        %v561 = vld [vmem:[%s230 + $0x710] sm:$0xff]
        %v562 = vld [vmem:[%s230 + $0x718] sm:$0xff]
        %v563 = vld [vmem:[%s230 + $0x720] sm:$0xff]
        %v564 = vld [vmem:[%s230 + $0x728] sm:$0xff]
        %v565 = vld [vmem:[%s230 + $0x730] sm:$0xff]
        %v566 = vld [vmem:[%s230 + $0x738] sm:$0xff]
        %v567 = vld [vmem:[%s230 + $0x740] sm:$0xff]
        %v568 = vld [vmem:[%s230 + $0x748] sm:$0xff]
        %v569 = vld [vmem:[%s230 + $0x750] sm:$0xff]
        %v570 = vld [vmem:[%s230 + $0x758] sm:$0xff]
        %v571 = vld [vmem:[%s230 + $0x760] sm:$0xff]
        %v572 = vld [vmem:[%s230 + $0x768] sm:$0xff]
        %v573 = vld [vmem:[%s230 + $0x770] sm:$0xff]
        %v574 = vld [vmem:[%s230 + $0x778] sm:$0xff]
        %v575 = vld [vmem:[%s230 + $0x780] sm:$0xff]
        %v576 = vld [vmem:[%s230 + $0x788] sm:$0xff]
        %v577 = vld [vmem:[%s230 + $0x790] sm:$0xff]
        %v578 = vld [vmem:[%s230 + $0x798] sm:$0xff]
        %v579 = vld [vmem:[%s230 + $0x7a0] sm:$0xff]
        %v580 = vld [vmem:[%s230 + $0x7a8] sm:$0xff]
        %v581 = vld [vmem:[%s230 + $0x7b0] sm:$0xff]
        %v582 = vld [vmem:[%s230 + $0x7b8] sm:$0xff]
        %v583 = vld [vmem:[%s230 + $0x7c0] sm:$0xff]
        %v584 = vld [vmem:[%s230 + $0x7c8] sm:$0xff]
        %v585 = vld [vmem:[%s230 + $0x7d0] sm:$0xff]
        %v586 = vld [vmem:[%s230 + $0x7d8] sm:$0xff]
        %v587 = vld [vmem:[%s230 + $0x7e0] sm:$0xff]
        %v588 = vld [vmem:[%s230 + $0x7e8] sm:$0xff]
        %v589 = vld [vmem:[%s230 + $0x7f0] sm:$0xff]
        %v590 = vld [vmem:[%s230 + $0x7f8] sm:$0xff]
        %v591 = vld [vmem:[%s230 + $0x800] sm:$0xff]
        %v592 = vld [vmem:[%s230 + $0x808] sm:$0xff]
        %v593 = vld [vmem:[%s230 + $0x810] sm:$0xff]
        %v594 = vld [vmem:[%s230 + $0x818] sm:$0xff]
        %v595 = vld [vmem:[%s230 + $0x820] sm:$0xff]
        %v596 = vld [vmem:[%s230 + $0x828] sm:$0xff]
        %v597 = vld [vmem:[%s230 + $0x830] sm:$0xff]
        %v598 = vld [vmem:[%s230 + $0x838] sm:$0xff]
        %v599 = vld [vmem:[%s230 + $0x840] sm:$0xff]
        %v600 = vld [vmem:[%s230 + $0x848] sm:$0xff]
        %v601 = vld [vmem:[%s230 + $0x850] sm:$0xff]
        %v602 = vld [vmem:[%s230 + $0x858] sm:$0xff]
        %v603 = vld [vmem:[%s230 + $0x860] sm:$0xff]
        %v604 = vld [vmem:[%s230 + $0x868] sm:$0xff]
        %v605 = vld [vmem:[%s230 + $0x870] sm:$0xff]
        %v606 = vld [vmem:[%s230 + $0x878] sm:$0xff]
        %v607 = vld [vmem:[%s230 + $0x880] sm:$0xff]
        %v608 = vld [vmem:[%s230 + $0x888] sm:$0xff]
        %v609 = vld [vmem:[%s230 + $0x890] sm:$0xff]
        %v610 = vld [vmem:[%s230 + $0x898] sm:$0xff]
        %v611 = vld [vmem:[%s230 + $0x8a0] sm:$0xff]
        %v612 = vld [vmem:[%s230 + $0x8a8] sm:$0xff]
        %v613 = vld [vmem:[%s230 + $0x8b0] sm:$0xff]
        %v614 = vld [vmem:[%s230 + $0x8b8] sm:$0xff]
        %v615 = vld [vmem:[%s230 + $0x8c0] sm:$0xff]
        %v616 = vld [vmem:[%s230 + $0x8c8] sm:$0xff]
        %v617 = vld [vmem:[%s230 + $0x8d0] sm:$0xff]
        %v618 = vld [vmem:[%s230 + $0x8d8] sm:$0xff]
        %v619 = vld [vmem:[%s230 + $0x8e0] sm:$0xff]
        %v620 = vld [vmem:[%s230 + $0x8e8] sm:$0xff]
        %v621 = vld [vmem:[%s230 + $0x8f0] sm:$0xff]
        %v622 = vld [vmem:[%s230 + $0x8f8] sm:$0xff]
        %v623 = vld [vmem:[%s230 + $0x900] sm:$0xff]
        %v624 = vld [vmem:[%s230 + $0x908] sm:$0xff]
        %v625 = vld [vmem:[%s230 + $0x910] sm:$0xff]
        %v626 = vld [vmem:[%s230 + $0x918] sm:$0xff]
        %v627 = vld [vmem:[%s230 + $0x920] sm:$0xff]
        %v628 = vld [vmem:[%s230 + $0x928] sm:$0xff]
        %v629 = vld [vmem:[%s230 + $0x930] sm:$0xff]
        %v630 = vld [vmem:[%s230 + $0x938] sm:$0xff]
        %v631 = vld [vmem:[%s230 + $0x940] sm:$0xff]
        %v632 = vld [vmem:[%s230 + $0x948] sm:$0xff]
        %v633 = vld [vmem:[%s230 + $0x950] sm:$0xff]
        %v634 = vld [vmem:[%s230 + $0x958] sm:$0xff]
        %v635 = vld [vmem:[%s230 + $0x960] sm:$0xff]
        %v636 = vld [vmem:[%s230 + $0x968] sm:$0xff]
        %v637 = vld [vmem:[%s230 + $0x970] sm:$0xff]
        %v638 = vld [vmem:[%s230 + $0x978] sm:$0xff]
        %v639 = vld [vmem:[%s230 + $0x980] sm:$0xff]
        %v640 = vld [vmem:[%s230 + $0x988] sm:$0xff]
        %v641 = vld [vmem:[%s230 + $0x990] sm:$0xff]
        %v642 = vld [vmem:[%s230 + $0x998] sm:$0xff]
        %v643 = vld [vmem:[%s230 + $0x9a0] sm:$0xff]
        %v644 = vld [vmem:[%s230 + $0x9a8] sm:$0xff]
        %v645 = vld [vmem:[%s230 + $0x9b0] sm:$0xff]
        %v646 = vld [vmem:[%s230 + $0x9b8] sm:$0xff]
        %v647 = vld [vmem:[%s230 + $0x9c0] sm:$0xff]
        %v648 = vld [vmem:[%s230 + $0x9c8] sm:$0xff]
        %v649 = vld [vmem:[%s230 + $0x9d0] sm:$0xff]
        %v650 = vld [vmem:[%s230 + $0x9d8] sm:$0xff]
        %v651 = vld [vmem:[%s230 + $0x9e0] sm:$0xff]
        %v652 = vld [vmem:[%s230 + $0x9e8] sm:$0xff]
        %v653 = vld [vmem:[%s230 + $0x9f0] sm:$0xff]
        %v654 = vld [vmem:[%s230 + $0x9f8] sm:$0xff]
        %v655 = vld [vmem:[%s230 + $0xa00] sm:$0xff]
        %v656 = vld [vmem:[%s230 + $0xa08] sm:$0xff]
        %v657 = vld [vmem:[%s230 + $0xa10] sm:$0xff]
        %v658 = vld [vmem:[%s230 + $0xa18] sm:$0xff]
        %v659 = vld [vmem:[%s230 + $0xa20] sm:$0xff]
        %v660 = vld [vmem:[%s230 + $0xa28] sm:$0xff]
        %v661 = vld [vmem:[%s230 + $0xa30] sm:$0xff]
        %v662 = vld [vmem:[%s230 + $0xa38] sm:$0xff]
        %v663 = vld [vmem:[%s230 + $0xa40] sm:$0xff]
        %v664 = vld [vmem:[%s230 + $0xa48] sm:$0xff]
        %v665 = vld [vmem:[%s230 + $0xa50] sm:$0xff]
        %v666 = vld [vmem:[%s230 + $0xa58] sm:$0xff]
        %v667 = vld [vmem:[%s230 + $0xa60] sm:$0xff]
        %v668 = vld [vmem:[%s230 + $0xa68] sm:$0xff]
        %v669 = vld [vmem:[%s230 + $0xa70] sm:$0xff]
        %v670 = vld [vmem:[%s230 + $0xa78] sm:$0xff]
        %v671 = vld [vmem:[%s230 + $0xa80] sm:$0xff]
        %v672 = vld [vmem:[%s230 + $0xa88] sm:$0xff]
        %v673 = vld [vmem:[%s230 + $0xa90] sm:$0xff]
        %v674 = vld [vmem:[%s230 + $0xa98] sm:$0xff]
        %v675 = vld [vmem:[%s230 + $0xaa0] sm:$0xff]
        %v676 = vld [vmem:[%s230 + $0xaa8] sm:$0xff]
        %v677 = vld [vmem:[%s230 + $0xab0] sm:$0xff]
        %v678 = vld [vmem:[%s230 + $0xab8] sm:$0xff]
        %v679 = vld [vmem:[%s230 + $0xac0] sm:$0xff]
        %v680 = vld [vmem:[%s230 + $0xac8] sm:$0xff]
        %v681 = vld [vmem:[%s230 + $0xad0] sm:$0xff]
        %v682 = vld [vmem:[%s230 + $0xad8] sm:$0xff]
        %v683 = vld [vmem:[%s230 + $0xae0] sm:$0xff]
        %v684 = vld [vmem:[%s230 + $0xae8] sm:$0xff]
        %v685 = vld [vmem:[%s230 + $0xaf0] sm:$0xff]
        %v686 = vld [vmem:[%s230 + $0xaf8] sm:$0xff]
        %v687 = vld [vmem:[%s230 + $0xb00] sm:$0xff]
        %v688 = vld [vmem:[%s230 + $0xb08] sm:$0xff]
        %v689 = vld [vmem:[%s230 + $0xb10] sm:$0xff]
        %v690 = vld [vmem:[%s230 + $0xb18] sm:$0xff]
        %v691 = vld [vmem:[%s230 + $0xb20] sm:$0xff]
        %v692 = vld [vmem:[%s230 + $0xb28] sm:$0xff]
        %v693 = vld [vmem:[%s230 + $0xb30] sm:$0xff]
        %v694 = vld [vmem:[%s230 + $0xb38] sm:$0xff]
        %v695 = vld [vmem:[%s230 + $0xb40] sm:$0xff]
        %v696 = vld [vmem:[%s230 + $0xb48] sm:$0xff]
        %v697 = vld [vmem:[%s230 + $0xb50] sm:$0xff]
        %v698 = vld [vmem:[%s230 + $0xb58] sm:$0xff]
        %v699 = vld [vmem:[%s230 + $0xb60] sm:$0xff]
        %v700 = vld [vmem:[%s230 + $0xb68] sm:$0xff]
        %v701 = vld [vmem:[%s230 + $0xb70] sm:$0xff]
        %v702 = vld [vmem:[%s230 + $0xb78] sm:$0xff]
        %v703 = vld [vmem:[%s230 + $0xb80] sm:$0xff]
        %v704 = vld [vmem:[%s230 + $0xb88] sm:$0xff]
        %v705 = vld [vmem:[%s230 + $0xb90] sm:$0xff]
        %v706 = vld [vmem:[%s230 + $0xb98] sm:$0xff]
        %v707 = vld [vmem:[%s230 + $0xba0] sm:$0xff]
        %v708 = vld [vmem:[%s230 + $0xba8] sm:$0xff]
        %v709 = vld [vmem:[%s230 + $0xbb0] sm:$0xff]
        %v710 = vld [vmem:[%s230 + $0xbb8] sm:$0xff]
        %v711 = vld [vmem:[%s230 + $0xbc0] sm:$0xff]
        %v712 = vld [vmem:[%s230 + $0xbc8] sm:$0xff]
        %v713 = vld [vmem:[%s230 + $0xbd0] sm:$0xff]
        %v714 = vld [vmem:[%s230 + $0xbd8] sm:$0xff]
        %v715 = vld [vmem:[%s230 + $0xbe0] sm:$0xff]
        %v716 = vld [vmem:[%s230 + $0xbe8] sm:$0xff]
        %v717 = vld [vmem:[%s230 + $0xbf0] sm:$0xff]
        %v718 = vld [vmem:[%s230 + $0xbf8] sm:$0xff]
        %v719 = vld [vmem:[%s230 + $0xc00] sm:$0xff]
        %v720 = vld [vmem:[%s230 + $0xc08] sm:$0xff]
        %v721 = vld [vmem:[%s230 + $0xc10] sm:$0xff]
        %v722 = vld [vmem:[%s230 + $0xc18] sm:$0xff]
        %v723 = vld [vmem:[%s230 + $0xc20] sm:$0xff]
        %v724 = vld [vmem:[%s230 + $0xc28] sm:$0xff]
        %v725 = vld [vmem:[%s230 + $0xc30] sm:$0xff]
        %v726 = vld [vmem:[%s230 + $0xc38] sm:$0xff]
        %v727 = vld [vmem:[%s230 + $0xc40] sm:$0xff]
        %v728 = vld [vmem:[%s230 + $0xc48] sm:$0xff]
        %v729 = vld [vmem:[%s230 + $0xc50] sm:$0xff]
        %v730 = vld [vmem:[%s230 + $0xc58] sm:$0xff]
        %v731 = vld [vmem:[%s230 + $0xc60] sm:$0xff]
        %v732 = vld [vmem:[%s230 + $0xc68] sm:$0xff]
        %v733 = vld [vmem:[%s230 + $0xc70] sm:$0xff]
        %v734 = vld [vmem:[%s230 + $0xc78] sm:$0xff]
        %v735 = vld [vmem:[%s230 + $0xc80] sm:$0xff]
        %v736 = vld [vmem:[%s230 + $0xc88] sm:$0xff]
        %v737 = vld [vmem:[%s230 + $0xc90] sm:$0xff]
        %v738 = vld [vmem:[%s230 + $0xc98] sm:$0xff]
        %v739 = vld [vmem:[%s230 + $0xca0] sm:$0xff]
        %v740 = vld [vmem:[%s230 + $0xca8] sm:$0xff]
        %v741 = vld [vmem:[%s230 + $0xcb0] sm:$0xff]
        %v742 = vld [vmem:[%s230 + $0xcb8] sm:$0xff]
        %v743 = vld [vmem:[%s230 + $0xcc0] sm:$0xff]
        %v744 = vld [vmem:[%s230 + $0xcc8] sm:$0xff]
        %v745 = vld [vmem:[%s230 + $0xcd0] sm:$0xff]
        %v746 = vld [vmem:[%s230 + $0xcd8] sm:$0xff]
        %v747 = vld [vmem:[%s230 + $0xce0] sm:$0xff]
        %v748 = vld [vmem:[%s230 + $0xce8] sm:$0xff]
        %v749 = vld [vmem:[%s230 + $0xcf0] sm:$0xff]
        %v750 = vld [vmem:[%s230 + $0xcf8] sm:$0xff]
        %v751 = vld [vmem:[%s230 + $0xd00] sm:$0xff]
        %v752 = vld [vmem:[%s230 + $0xd08] sm:$0xff]
        %v753 = vld [vmem:[%s230 + $0xd10] sm:$0xff]
        %v754 = vld [vmem:[%s230 + $0xd18] sm:$0xff]
        %v755 = vld [vmem:[%s230 + $0xd20] sm:$0xff]
        %v756 = vld [vmem:[%s230 + $0xd28] sm:$0xff]
        %v757 = vld [vmem:[%s230 + $0xd30] sm:$0xff]
        %v758 = vld [vmem:[%s230 + $0xd38] sm:$0xff]
        %v759 = vld [vmem:[%s230 + $0xd40] sm:$0xff]
        %v760 = vld [vmem:[%s230 + $0xd48] sm:$0xff]
        %v761 = vld [vmem:[%s230 + $0xd50] sm:$0xff]
        %v762 = vld [vmem:[%s230 + $0xd58] sm:$0xff]
        %v763 = vld [vmem:[%s230 + $0xd60] sm:$0xff]
        %v764 = vld [vmem:[%s230 + $0xd68] sm:$0xff]
        %v765 = vld [vmem:[%s230 + $0xd70] sm:$0xff]
        %v766 = vld [vmem:[%s230 + $0xd78] sm:$0xff]
        %v767 = vld [vmem:[%s230 + $0xd80] sm:$0xff]
        %v768 = vld [vmem:[%s230 + $0xd88] sm:$0xff]
        %v769 = vld [vmem:[%s230 + $0xd90] sm:$0xff]
        %v770 = vld [vmem:[%s230 + $0xd98] sm:$0xff]
        %v771 = vld [vmem:[%s230 + $0xda0] sm:$0xff]
        %v772 = vld [vmem:[%s230 + $0xda8] sm:$0xff]
        %v773 = vld [vmem:[%s230 + $0xdb0] sm:$0xff]
        %v774 = vld [vmem:[%s230 + $0xdb8] sm:$0xff]
        %v775 = vld [vmem:[%s230 + $0xdc0] sm:$0xff]
        %v776 = vld [vmem:[%s230 + $0xdc8] sm:$0xff]
        %v777 = vld [vmem:[%s230 + $0xdd0] sm:$0xff]
        %v778 = vld [vmem:[%s230 + $0xdd8] sm:$0xff]
        %v779 = vld [vmem:[%s230 + $0xde0] sm:$0xff]
        %v780 = vld [vmem:[%s230 + $0xde8] sm:$0xff]
        %v781 = vld [vmem:[%s230 + $0xdf0] sm:$0xff]
        %v782 = vld [vmem:[%s230 + $0xdf8] sm:$0xff]
        %v783 = vld [vmem:[%s230 + $0xe00] sm:$0xff]
        %v784 = vld [vmem:[%s230 + $0xe08] sm:$0xff]
        %v785 = vld [vmem:[%s230 + $0xe10] sm:$0xff]
        %v786 = vld [vmem:[%s230 + $0xe18] sm:$0xff]
        %v787 = vld [vmem:[%s230 + $0xe20] sm:$0xff]
        %v788 = vld [vmem:[%s230 + $0xe28] sm:$0xff]
        %v789 = vld [vmem:[%s230 + $0xe30] sm:$0xff]
        %v790 = vld [vmem:[%s230 + $0xe38] sm:$0xff]
        %v791 = vld [vmem:[%s230 + $0xe40] sm:$0xff]
        %v792 = vld [vmem:[%s230 + $0xe48] sm:$0xff]
        %v793 = vld [vmem:[%s230 + $0xe50] sm:$0xff]
        %v794 = vld [vmem:[%s230 + $0xe58] sm:$0xff]
        %v795 = vld [vmem:[%s230 + $0xe60] sm:$0xff]
        %v796 = vld [vmem:[%s230 + $0xe68] sm:$0xff]
        %v797 = vld [vmem:[%s230 + $0xe70] sm:$0xff]
        %v798 = vld [vmem:[%s230 + $0xe78] sm:$0xff]
        %v799 = vld [vmem:[%s230 + $0xe80] sm:$0xff]
        %v800 = vld [vmem:[%s230 + $0xe88] sm:$0xff]
        %v801 = vld [vmem:[%s230 + $0xe90] sm:$0xff]
        %v802 = vld [vmem:[%s230 + $0xe98] sm:$0xff]
        %v803 = vld [vmem:[%s230 + $0xea0] sm:$0xff]
        %v804 = vld [vmem:[%s230 + $0xea8] sm:$0xff]
        %v805 = vld [vmem:[%s230 + $0xeb0] sm:$0xff]
        %v806 = vld [vmem:[%s230 + $0xeb8] sm:$0xff]
        %v807 = vld [vmem:[%s230 + $0xec0] sm:$0xff]
        %v808 = vld [vmem:[%s230 + $0xec8] sm:$0xff]
        %v809 = vld [vmem:[%s230 + $0xed0] sm:$0xff]
        %v810 = vld [vmem:[%s230 + $0xed8] sm:$0xff]
        %v811 = vld [vmem:[%s230 + $0xee0] sm:$0xff]
        %v812 = vld [vmem:[%s230 + $0xee8] sm:$0xff]
        %v813 = vld [vmem:[%s230 + $0xef0] sm:$0xff]
        %v814 = vld [vmem:[%s230 + $0xef8] sm:$0xff]
        %v815 = vld [vmem:[%s230 + $0xf00] sm:$0xff]
        %v816 = vld [vmem:[%s230 + $0xf08] sm:$0xff]
        %v817 = vld [vmem:[%s230 + $0xf10] sm:$0xff]
        %v818 = vld [vmem:[%s230 + $0xf18] sm:$0xff]
        %v819 = vld [vmem:[%s230 + $0xf20] sm:$0xff]
        %v820 = vld [vmem:[%s230 + $0xf28] sm:$0xff]
        %v821 = vld [vmem:[%s230 + $0xf30] sm:$0xff]
        %v822 = vld [vmem:[%s230 + $0xf38] sm:$0xff]
        %v823 = vld [vmem:[%s230 + $0xf40] sm:$0xff]
        %v824 = vld [vmem:[%s230 + $0xf48] sm:$0xff]
        %v825 = vld [vmem:[%s230 + $0xf50] sm:$0xff]
        %v826 = vld [vmem:[%s230 + $0xf58] sm:$0xff]
        %v827 = vld [vmem:[%s230 + $0xf60] sm:$0xff]
        %v828 = vld [vmem:[%s230 + $0xf68] sm:$0xff]
        %v829 = vld [vmem:[%s230 + $0xf70] sm:$0xff]
        %v830 = vld [vmem:[%s230 + $0xf78] sm:$0xff]
        %v831 = vld [vmem:[%s230 + $0xf80] sm:$0xff]
        %v832 = vld [vmem:[%s230 + $0xf88] sm:$0xff]
        %v833 = vld [vmem:[%s230 + $0xf90] sm:$0xff]
        %v834 = vld [vmem:[%s230 + $0xf98] sm:$0xff]
        %v835 = vld [vmem:[%s230 + $0xfa0] sm:$0xff]
        %v836 = vld [vmem:[%s230 + $0xfa8] sm:$0xff]
        %v837 = vld [vmem:[%s230 + $0xfb0] sm:$0xff]
        %v838 = vld [vmem:[%s230 + $0xfb8] sm:$0xff]
        %v839 = vld [vmem:[%s230 + $0xfc0] sm:$0xff]
        %v840 = vld [vmem:[%s230 + $0xfc8] sm:$0xff]
        %v841 = vld [vmem:[%s230 + $0xfd0] sm:$0xff]
        %v842 = vld [vmem:[%s230 + $0xfd8] sm:$0xff]
        %v843 = vld [vmem:[%s230 + $0xfe0] sm:$0xff]
        %v844 = vld [vmem:[%s230 + $0xfe8] sm:$0xff]
        %v845 = vld [vmem:[%s230 + $0xff0] sm:$0xff]
        %v846 = vld [vmem:[%s230 + $0xff8] sm:$0xff]
        %v847 = vld [vmem:[%s230 + $0x1000] sm:$0xff]
        %v848 = vld [vmem:[%s230 + $0x1008] sm:$0xff]
        %v849 = vld [vmem:[%s230 + $0x1010] sm:$0xff]
        %v850 = vld [vmem:[%s230 + $0x1018] sm:$0xff]
        %v851 = vld [vmem:[%s230 + $0x1020] sm:$0xff]
        %v852 = vld [vmem:[%s230 + $0x1028] sm:$0xff]
        %v853 = vld [vmem:[%s230 + $0x1030] sm:$0xff]
        %v854 = vld [vmem:[%s230 + $0x1038] sm:$0xff]
        %v855 = vld [vmem:[%s230 + $0x1040] sm:$0xff]
        %v856 = vld [vmem:[%s230 + $0x1048] sm:$0xff]
        %v857 = vld [vmem:[%s230 + $0x1050] sm:$0xff]
        %v858 = vld [vmem:[%s230 + $0x1058] sm:$0xff]
        %v859 = vld [vmem:[%s230 + $0x1060] sm:$0xff]
        %v860 = vld [vmem:[%s230 + $0x1068] sm:$0xff]
        %v861 = vld [vmem:[%s230 + $0x1070] sm:$0xff]
        %v862 = vld [vmem:[%s230 + $0x1078] sm:$0xff]
        %v863 = vld [vmem:[%s230 + $0x1080] sm:$0xff]
        %v864 = vld [vmem:[%s230 + $0x1088] sm:$0xff]
        %v865 = vld [vmem:[%s230 + $0x1090] sm:$0xff]
        %v866 = vld [vmem:[%s230 + $0x1098] sm:$0xff]
        %v867 = vld [vmem:[%s230 + $0x10a0] sm:$0xff]
        %v868 = vld [vmem:[%s230 + $0x10a8] sm:$0xff]
        %v869 = vld [vmem:[%s230 + $0x10b0] sm:$0xff]
        %v870 = vld [vmem:[%s230 + $0x10b8] sm:$0xff]
        %v871 = vld [vmem:[%s230 + $0x10c0] sm:$0xff]
        %v872 = vld [vmem:[%s230 + $0x10c8] sm:$0xff]
        %v873 = vld [vmem:[%s230 + $0x10d0] sm:$0xff]
        %v874 = vld [vmem:[%s230 + $0x10d8] sm:$0xff]
        %v875 = vld [vmem:[%s230 + $0x10e0] sm:$0xff]
        %v876 = vld [vmem:[%s230 + $0x10e8] sm:$0xff]
        %v877 = vld [vmem:[%s230 + $0x10f0] sm:$0xff]
        %v878 = vld [vmem:[%s230 + $0x10f8] sm:$0xff]
        %v879 = vld [vmem:[%s230 + $0x1100] sm:$0xff]
        %v880 = vld [vmem:[%s230 + $0x1108] sm:$0xff]
        %v881 = vld [vmem:[%s230 + $0x1110] sm:$0xff]
        %v882 = vld [vmem:[%s230 + $0x1118] sm:$0xff]
        %v883 = vld [vmem:[%s230 + $0x1120] sm:$0xff]
        %v884 = vld [vmem:[%s230 + $0x1128] sm:$0xff]
        %v885 = vld [vmem:[%s230 + $0x1130] sm:$0xff]
        %v886 = vld [vmem:[%s230 + $0x1138] sm:$0xff]
        %v887 = vld [vmem:[%s230 + $0x1140] sm:$0xff]
        %v888 = vld [vmem:[%s230 + $0x1148] sm:$0xff]
        %v889 = vld [vmem:[%s230 + $0x1150] sm:$0xff]
        %v890 = vld [vmem:[%s230 + $0x1158] sm:$0xff]
        %v891 = vld [vmem:[%s230 + $0x1160] sm:$0xff]
        %v892 = vld [vmem:[%s230 + $0x1168] sm:$0xff]
        %v893 = vld [vmem:[%s230 + $0x1170] sm:$0xff]
        %v894 = vld [vmem:[%s230 + $0x1178] sm:$0xff]
        %v895 = vld [vmem:[%s230 + $0x1180] sm:$0xff]
        %v896 = vld [vmem:[%s230 + $0x1188] sm:$0xff]
        %v897 = vld [vmem:[%s230 + $0x1190] sm:$0xff]
        %v898 = vld [vmem:[%s230 + $0x1198] sm:$0xff]
        %v899 = vld [vmem:[%s230 + $0x11a0] sm:$0xff]
        %v900 = vld [vmem:[%s230 + $0x11a8] sm:$0xff]
        %v901 = vld [vmem:[%s230 + $0x11b0] sm:$0xff]
        %v902 = vld [vmem:[%s230 + $0x11b8] sm:$0xff]
        %v903 = vld [vmem:[%s230 + $0x11c0] sm:$0xff]
        %v904 = vld [vmem:[%s230 + $0x11c8] sm:$0xff]
        %v905 = vld [vmem:[%s230 + $0x11d0] sm:$0xff]
        %v906 = vld [vmem:[%s230 + $0x11d8] sm:$0xff]
        %v907 = vld [vmem:[%s230 + $0x11e0] sm:$0xff]
        %v908 = vld [vmem:[%s230 + $0x11e8] sm:$0xff]
        %v909 = vld [vmem:[%s230 + $0x11f0] sm:$0xff]
        %v910 = vld [vmem:[%s230 + $0x11f8] sm:$0xff]
        %v911 = vld [vmem:[%s230 + $0x1200] sm:$0xff]
        %v912 = vld [vmem:[%s230 + $0x1208] sm:$0xff]
        %v913 = vld [vmem:[%s230 + $0x1210] sm:$0xff]
        %v914 = vld [vmem:[%s230 + $0x1218] sm:$0xff]
        %v915 = vld [vmem:[%s230 + $0x1220] sm:$0xff]
        %v916 = vld [vmem:[%s230 + $0x1228] sm:$0xff]
        %v917 = vld [vmem:[%s230 + $0x1230] sm:$0xff]
        %v918 = vld [vmem:[%s230 + $0x1238] sm:$0xff]
        %v919 = vld [vmem:[%s230 + $0x1240] sm:$0xff]
        %v920 = vld [vmem:[%s230 + $0x1248] sm:$0xff]
        %v921 = vld [vmem:[%s230 + $0x1250] sm:$0xff]
        %v922 = vld [vmem:[%s230 + $0x1258] sm:$0xff]
        %v923 = vld [vmem:[%s230 + $0x1260] sm:$0xff]
        %v924 = vld [vmem:[%s230 + $0x1268] sm:$0xff]
        %v925 = vld [vmem:[%s230 + $0x1270] sm:$0xff]
        %v926 = vld [vmem:[%s230 + $0x1278] sm:$0xff]
        %v927 = vld [vmem:[%s230 + $0x1280] sm:$0xff]
        %v928 = vld [vmem:[%s230 + $0x1288] sm:$0xff]
        %v929 = vld [vmem:[%s230 + $0x1290] sm:$0xff]
        %v930 = vld [vmem:[%s230 + $0x1298] sm:$0xff]
        %v931 = vld [vmem:[%s230 + $0x12a0] sm:$0xff]
        %v932 = vld [vmem:[%s230 + $0x12a8] sm:$0xff]
        %v933 = vld [vmem:[%s230 + $0x12b0] sm:$0xff]
        %v934 = vld [vmem:[%s230 + $0x12b8] sm:$0xff]
        %v935 = vld [vmem:[%s230 + $0x12c0] sm:$0xff]
        %v936 = vld [vmem:[%s230 + $0x12c8] sm:$0xff]
        %v937 = vld [vmem:[%s230 + $0x12d0] sm:$0xff]
        %v938 = vld [vmem:[%s230 + $0x12d8] sm:$0xff]
        %v939 = vld [vmem:[%s230 + $0x12e0] sm:$0xff]
        %v940 = vld [vmem:[%s230 + $0x12e8] sm:$0xff]
        %v941 = vld [vmem:[%s230 + $0x12f0] sm:$0xff]
        %v942 = vld [vmem:[%s230 + $0x12f8] sm:$0xff]
        %v943 = vld [vmem:[%s230 + $0x1300] sm:$0xff]
        %v944 = vld [vmem:[%s230 + $0x1308] sm:$0xff]
        %v945 = vld [vmem:[%s230 + $0x1310] sm:$0xff]
        %v946 = vld [vmem:[%s230 + $0x1318] sm:$0xff]
        %v947 = vld [vmem:[%s230 + $0x1320] sm:$0xff]
        %v948 = vld [vmem:[%s230 + $0x1328] sm:$0xff]
        %v949 = vld [vmem:[%s230 + $0x1330] sm:$0xff]
        %v950 = vld [vmem:[%s230 + $0x1338] sm:$0xff]
        %v951 = vld [vmem:[%s230 + $0x1340] sm:$0xff]
        %v952 = vld [vmem:[%s230 + $0x1348] sm:$0xff]
        %v953 = vld [vmem:[%s230 + $0x1350] sm:$0xff]
        %v954 = vld [vmem:[%s230 + $0x1358] sm:$0xff]
        %v955 = vld [vmem:[%s230 + $0x1360] sm:$0xff]
        %v956 = vld [vmem:[%s230 + $0x1368] sm:$0xff]
        %v957 = vld [vmem:[%s230 + $0x1370] sm:$0xff]
        %v958 = vld [vmem:[%s230 + $0x1378] sm:$0xff]
        %v959 = vld [vmem:[%s230 + $0x1380] sm:$0xff]
        %v960 = vld [vmem:[%s230 + $0x1388] sm:$0xff]
        %v961 = vld [vmem:[%s230 + $0x1390] sm:$0xff]
        %v962 = vld [vmem:[%s230 + $0x1398] sm:$0xff]
        %v963 = vld [vmem:[%s230 + $0x13a0] sm:$0xff]
        %v964 = vld [vmem:[%s230 + $0x13a8] sm:$0xff]
        %v965 = vld [vmem:[%s230 + $0x13b0] sm:$0xff]
        %v966 = vld [vmem:[%s230 + $0x13b8] sm:$0xff]
        %v967 = vld [vmem:[%s230 + $0x13c0] sm:$0xff]
        %v968 = vld [vmem:[%s230 + $0x13c8] sm:$0xff]
        %v969 = vld [vmem:[%s230 + $0x13d0] sm:$0xff]
        %v970 = vld [vmem:[%s230 + $0x13d8] sm:$0xff]
        %v971 = vld [vmem:[%s230 + $0x13e0] sm:$0xff]
        %v972 = vld [vmem:[%s230 + $0x13e8] sm:$0xff]
        %v973 = vld [vmem:[%s230 + $0x13f0] sm:$0xff]
        %v974 = vld [vmem:[%s230 + $0x13f8] sm:$0xff]
        %v975 = vld [vmem:[%s230 + $0x1400] sm:$0xff]
        %v976 = vld [vmem:[%s230 + $0x1408] sm:$0xff]
        %v977 = vld [vmem:[%s230 + $0x1410] sm:$0xff]
        %v978 = vld [vmem:[%s230 + $0x1418] sm:$0xff]
        %v979 = vld [vmem:[%s230 + $0x1420] sm:$0xff]
        %v980 = vld [vmem:[%s230 + $0x1428] sm:$0xff]
        %v981 = vld [vmem:[%s230 + $0x1430] sm:$0xff]
        %v982 = vld [vmem:[%s230 + $0x1438] sm:$0xff]
        %v983 = vld [vmem:[%s230 + $0x1440] sm:$0xff]
        %v984 = vld [vmem:[%s230 + $0x1448] sm:$0xff]
        %v985 = vld [vmem:[%s230 + $0x1450] sm:$0xff]
        %v986 = vld [vmem:[%s230 + $0x1458] sm:$0xff]
        %v987 = vld [vmem:[%s230 + $0x1460] sm:$0xff]
        %v988 = vld [vmem:[%s230 + $0x1468] sm:$0xff]
        %v989 = vld [vmem:[%s230 + $0x1470] sm:$0xff]
        %v990 = vld [vmem:[%s230 + $0x1478] sm:$0xff]
        %v991 = vld [vmem:[%s230 + $0x1480] sm:$0xff]
        %v992 = vld [vmem:[%s230 + $0x1488] sm:$0xff]
        %v993 = vld [vmem:[%s230 + $0x1490] sm:$0xff]
        %v994 = vld [vmem:[%s230 + $0x1498] sm:$0xff]
        %v995 = vld [vmem:[%s230 + $0x14a0] sm:$0xff]
        %v996 = vld [vmem:[%s230 + $0x14a8] sm:$0xff]
        %v997 = vld [vmem:[%s230 + $0x14b0] sm:$0xff]
        %v998 = vld [vmem:[%s230 + $0x14b8] sm:$0xff]
        %v999 = vld [vmem:[%s230 + $0x14c0] sm:$0xff]
        %v1000 = vld [vmem:[%s230 + $0x14c8] sm:$0xff]
        %v1001 = vld [vmem:[%s230 + $0x14d0] sm:$0xff]
        %v1002 = vld [vmem:[%s230 + $0x14d8] sm:$0xff]
        %v1003 = vld [vmem:[%s230 + $0x14e0] sm:$0xff]
        %v1004 = vld [vmem:[%s230 + $0x14e8] sm:$0xff]
        %v1005 = vld [vmem:[%s230 + $0x14f0] sm:$0xff]
        %v1006 = vld [vmem:[%s230 + $0x14f8] sm:$0xff]
        %v1007 = vld [vmem:[%s230 + $0x1500] sm:$0xff]
        %v1008 = vld [vmem:[%s230 + $0x1508] sm:$0xff]
        %v1009 = vld [vmem:[%s230 + $0x1510] sm:$0xff]
        %v1010 = vld [vmem:[%s230 + $0x1518] sm:$0xff]
        %v1011 = vld [vmem:[%s230 + $0x1520] sm:$0xff]
        %v1012 = vld [vmem:[%s230 + $0x1528] sm:$0xff]
        %v1013 = vld [vmem:[%s230 + $0x1530] sm:$0xff]
        %v1014 = vld [vmem:[%s230 + $0x1538] sm:$0xff]
        %v1015 = vld [vmem:[%s230 + $0x1540] sm:$0xff]
        %v1016 = vld [vmem:[%s230 + $0x1548] sm:$0xff]
        %v1017 = vld [vmem:[%s230 + $0x1550] sm:$0xff]
        %v1018 = vld [vmem:[%s230 + $0x1558] sm:$0xff]
        %v1019 = vld [vmem:[%s230 + $0x1560] sm:$0xff]
        %v1020 = vld [vmem:[%s230 + $0x1568] sm:$0xff]
        %v1021 = vld [vmem:[%s230 + $0x1570] sm:$0xff]
        %v1022 = vld [vmem:[%s230 + $0x1578] sm:$0xff]
        %v1023 = vld [vmem:[%s230 + $0x1580] sm:$0xff]
        %v1024 = vld [vmem:[%s230 + $0x1588] sm:$0xff]
        %v1025 = vld [vmem:[%s230 + $0x1590] sm:$0xff]
        %v1026 = vld [vmem:[%s230 + $0x1598] sm:$0xff]
        %v1027 = vld [vmem:[%s230 + $0x15a0] sm:$0xff]
        %v1028 = vld [vmem:[%s230 + $0x15a8] sm:$0xff]
        %v1029 = vld [vmem:[%s230 + $0x15b0] sm:$0xff]
        %v1030 = vld [vmem:[%s230 + $0x15b8] sm:$0xff]
        %v1031 = vld [vmem:[%s230 + $0x15c0] sm:$0xff]
        %v1032 = vld [vmem:[%s230 + $0x15c8] sm:$0xff]
        %v1033 = vld [vmem:[%s230 + $0x15d0] sm:$0xff]
        %v1034 = vld [vmem:[%s230 + $0x15d8] sm:$0xff]
        %v1035 = vld [vmem:[%s230 + $0x15e0] sm:$0xff]
        %v1036 = vld [vmem:[%s230 + $0x15e8] sm:$0xff]
        %v1037 = vld [vmem:[%s230 + $0x15f0] sm:$0xff]
        %v1038 = vld [vmem:[%s230 + $0x15f8] sm:$0xff]
        %v1039 = vld [vmem:[%s230 + $0x1600] sm:$0xff]
        %v1040 = vld [vmem:[%s230 + $0x1608] sm:$0xff]
        %v1041 = vld [vmem:[%s230 + $0x1610] sm:$0xff]
        %v1042 = vld [vmem:[%s230 + $0x1618] sm:$0xff]
        %v1043 = vld [vmem:[%s230 + $0x1620] sm:$0xff]
        %v1044 = vld [vmem:[%s230 + $0x1628] sm:$0xff]
        %v1045 = vld [vmem:[%s230 + $0x1630] sm:$0xff]
        %v1046 = vld [vmem:[%s230 + $0x1638] sm:$0xff]
        %v1047 = vld [vmem:[%s230 + $0x1640] sm:$0xff]
        %v1048 = vld [vmem:[%s230 + $0x1648] sm:$0xff]
        %v1049 = vld [vmem:[%s230 + $0x1650] sm:$0xff]
        %v1050 = vld [vmem:[%s230 + $0x1658] sm:$0xff]
        %v1051 = vld [vmem:[%s230 + $0x1660] sm:$0xff]
        %v1052 = vld [vmem:[%s230 + $0x1668] sm:$0xff]
        %v1053 = vld [vmem:[%s230 + $0x1670] sm:$0xff]
        %v1054 = vld [vmem:[%s230 + $0x1678] sm:$0xff]
        %v1055 = vld [vmem:[%s230 + $0x1680] sm:$0xff]
        %v1056 = vld [vmem:[%s230 + $0x1688] sm:$0xff]
        %v1057 = vld [vmem:[%s230 + $0x1690] sm:$0xff]
        %v1058 = vld [vmem:[%s230 + $0x1698] sm:$0xff]
        %v1059 = vld [vmem:[%s230 + $0x16a0] sm:$0xff]
        %v1060 = vld [vmem:[%s230 + $0x16a8] sm:$0xff]
        %v1061 = vld [vmem:[%s230 + $0x16b0] sm:$0xff]
        %v1062 = vld [vmem:[%s230 + $0x16b8] sm:$0xff]
        %v1063 = vld [vmem:[%s230 + $0x16c0] sm:$0xff]
        %v1064 = vld [vmem:[%s230 + $0x16c8] sm:$0xff]
        %v1065 = vld [vmem:[%s230 + $0x16d0] sm:$0xff]
        %v1066 = vld [vmem:[%s230 + $0x16d8] sm:$0xff]
        %v1067 = vld [vmem:[%s230 + $0x16e0] sm:$0xff]
        %v1068 = vld [vmem:[%s230 + $0x16e8] sm:$0xff]
        %v1069 = vld [vmem:[%s230 + $0x16f0] sm:$0xff]
        %v1070 = vld [vmem:[%s230 + $0x16f8] sm:$0xff]
        %v1071 = vld [vmem:[%s230 + $0x1700] sm:$0xff]
        %v1072 = vld [vmem:[%s230 + $0x1708] sm:$0xff]
        %v1073 = vld [vmem:[%s230 + $0x1710] sm:$0xff]
        %v1074 = vld [vmem:[%s230 + $0x1718] sm:$0xff]
        %v1075 = vld [vmem:[%s230 + $0x1720] sm:$0xff]
        %v1076 = vld [vmem:[%s230 + $0x1728] sm:$0xff]
        %v1077 = vld [vmem:[%s230 + $0x1730] sm:$0xff]
        %v1078 = vld [vmem:[%s230 + $0x1738] sm:$0xff]
        %v1079 = vld [vmem:[%s230 + $0x1740] sm:$0xff]
        %v1080 = vld [vmem:[%s230 + $0x1748] sm:$0xff]
        %v1081 = vld [vmem:[%s230 + $0x1750] sm:$0xff]
        %v1082 = vld [vmem:[%s230 + $0x1758] sm:$0xff]
        %v1083 = vld [vmem:[%s230 + $0x1760] sm:$0xff]
        %v1084 = vld [vmem:[%s230 + $0x1768] sm:$0xff]
        %v1085 = vld [vmem:[%s230 + $0x1770] sm:$0xff]
        %v1086 = vld [vmem:[%s230 + $0x1778] sm:$0xff]
        %v1087 = vld [vmem:[%s230 + $0x1780] sm:$0xff]
        %v1088 = vld [vmem:[%s230 + $0x1788] sm:$0xff]
        %v1089 = vld [vmem:[%s230 + $0x1790] sm:$0xff]
        %v1090 = vld [vmem:[%s230 + $0x1798] sm:$0xff]
        %v1091 = vld [vmem:[%s230 + $0x17a0] sm:$0xff]
        %v1092 = vld [vmem:[%s230 + $0x17a8] sm:$0xff]
        %v1093 = vld [vmem:[%s230 + $0x17b0] sm:$0xff]
        %v1094 = vld [vmem:[%s230 + $0x17b8] sm:$0xff]
        %v1095 = vld [vmem:[%s230 + $0x17c0] sm:$0xff]
        %v1096 = vld [vmem:[%s230 + $0x17c8] sm:$0xff]
        %v1097 = vld [vmem:[%s230 + $0x17d0] sm:$0xff]
        %v1098 = vld [vmem:[%s230 + $0x17d8] sm:$0xff]
        %v1099 = vld [vmem:[%s230 + $0x17e0] sm:$0xff]
        %v1100 = vld [vmem:[%s230 + $0x17e8] sm:$0xff]
        %v1101 = vld [vmem:[%s230 + $0x17f0] sm:$0xff]
        %v1102 = vld [vmem:[%s230 + $0x17f8] sm:$0xff]
        %v1103 = vld [vmem:[%s230 + $0x1800] sm:$0xff]
        %v1104 = vld [vmem:[%s230 + $0x1808] sm:$0xff]
        %v1105 = vld [vmem:[%s230 + $0x1810] sm:$0xff]
        %v1106 = vld [vmem:[%s230 + $0x1818] sm:$0xff]
        %v1107 = vld [vmem:[%s230 + $0x1820] sm:$0xff]
        %v1108 = vld [vmem:[%s230 + $0x1828] sm:$0xff]
        %v1109 = vld [vmem:[%s230 + $0x1830] sm:$0xff]
        %v1110 = vld [vmem:[%s230 + $0x1838] sm:$0xff]
        %v1111 = vld [vmem:[%s230 + $0x1840] sm:$0xff]
        %v1112 = vld [vmem:[%s230 + $0x1848] sm:$0xff]
        %v1113 = vld [vmem:[%s230 + $0x1850] sm:$0xff]
        %v1114 = vld [vmem:[%s230 + $0x1858] sm:$0xff]
        %v1115 = vld [vmem:[%s230 + $0x1860] sm:$0xff]
        %v1116 = vld [vmem:[%s230 + $0x1868] sm:$0xff]
        %v1117 = vld [vmem:[%s230 + $0x1870] sm:$0xff]
        %v1118 = vld [vmem:[%s230 + $0x1878] sm:$0xff]
        %v1119 = vld [vmem:[%s230 + $0x1880] sm:$0xff]
        %v1120 = vld [vmem:[%s230 + $0x1888] sm:$0xff]
        %v1121 = vld [vmem:[%s230 + $0x1890] sm:$0xff]
        %v1122 = vld [vmem:[%s230 + $0x1898] sm:$0xff]
        %v1123 = vld [vmem:[%s230 + $0x18a0] sm:$0xff]
        %v1124 = vld [vmem:[%s230 + $0x18a8] sm:$0xff]
        %v1125 = vld [vmem:[%s230 + $0x18b0] sm:$0xff]
        %v1126 = vld [vmem:[%s230 + $0x18b8] sm:$0xff]
        %v1127 = vld [vmem:[%s230 + $0x18c0] sm:$0xff]
        %v1128 = vld [vmem:[%s230 + $0x18c8] sm:$0xff]
        %v1129 = vld [vmem:[%s230 + $0x18d0] sm:$0xff]
        %v1130 = vld [vmem:[%s230 + $0x18d8] sm:$0xff]
        %v1131 = vld [vmem:[%s230 + $0x18e0] sm:$0xff]
        %v1132 = vld [vmem:[%s230 + $0x18e8] sm:$0xff]
        %v1133 = vld [vmem:[%s230 + $0x18f0] sm:$0xff]
        %v1134 = vld [vmem:[%s230 + $0x18f8] sm:$0xff]
        %v1135 = vld [vmem:[%s230 + $0x1900] sm:$0xff]
        %v1136 = vld [vmem:[%s230 + $0x1908] sm:$0xff]
        %v1137 = vld [vmem:[%s230 + $0x1910] sm:$0xff]
        %v1138 = vld [vmem:[%s230 + $0x1918] sm:$0xff]
        %v1139 = vld [vmem:[%s230 + $0x1920] sm:$0xff]
        %v1140 = vld [vmem:[%s230 + $0x1928] sm:$0xff]
        %v1141 = vld [vmem:[%s230 + $0x1930] sm:$0xff]
        %v1142 = vld [vmem:[%s230 + $0x1938] sm:$0xff]
        %v1143 = vld [vmem:[%s230 + $0x1940] sm:$0xff]
        %v1144 = vld [vmem:[%s230 + $0x1948] sm:$0xff]
        %v1145 = vld [vmem:[%s230 + $0x1950] sm:$0xff]
        %v1146 = vld [vmem:[%s230 + $0x1958] sm:$0xff]
        %v1147 = vld [vmem:[%s230 + $0x1960] sm:$0xff]
        %v1148 = vld [vmem:[%s230 + $0x1968] sm:$0xff]
        %v1149 = vld [vmem:[%s230 + $0x1970] sm:$0xff]
        %v1150 = vld [vmem:[%s230 + $0x1978] sm:$0xff]
        %v1151 = vld [vmem:[%s230 + $0x1980] sm:$0xff]
        %v1152 = vld [vmem:[%s230 + $0x1988] sm:$0xff]
        %v1153 = vld [vmem:[%s230 + $0x1990] sm:$0xff]
        %v1154 = vld [vmem:[%s230 + $0x1998] sm:$0xff]
        %v1155 = vld [vmem:[%s230 + $0x19a0] sm:$0xff]
        %v1156 = vld [vmem:[%s230 + $0x19a8] sm:$0xff]
        %v1157 = vld [vmem:[%s230 + $0x19b0] sm:$0xff]
        %v1158 = vld [vmem:[%s230 + $0x19b8] sm:$0xff]
        %v1159 = vld [vmem:[%s230 + $0x19c0] sm:$0xff]
        %v1160 = vld [vmem:[%s230 + $0x19c8] sm:$0xff]
        %v1161 = vld [vmem:[%s230 + $0x19d0] sm:$0xff]
        %v1162 = vld [vmem:[%s230 + $0x19d8] sm:$0xff]
        %v1163 = vld [vmem:[%s230 + $0x19e0] sm:$0xff]
        %v1164 = vld [vmem:[%s230 + $0x19e8] sm:$0xff]
        %v1165 = vld [vmem:[%s230 + $0x19f0] sm:$0xff]
        %v1166 = vld [vmem:[%s230 + $0x19f8] sm:$0xff]
        %v1167 = vld [vmem:[%s230 + $0x1a00] sm:$0xff]
        %v1168 = vld [vmem:[%s230 + $0x1a08] sm:$0xff]
        %v1169 = vld [vmem:[%s230 + $0x1a10] sm:$0xff]
        %v1170 = vld [vmem:[%s230 + $0x1a18] sm:$0xff]
        %v1171 = vld [vmem:[%s230 + $0x1a20] sm:$0xff]
        %v1172 = vld [vmem:[%s230 + $0x1a28] sm:$0xff]
        %v1173 = vld [vmem:[%s230 + $0x1a30] sm:$0xff]
        %v1174 = vld [vmem:[%s230 + $0x1a38] sm:$0xff]
        %v1175 = vld [vmem:[%s230 + $0x1a40] sm:$0xff]
        %v1176 = vld [vmem:[%s230 + $0x1a48] sm:$0xff]
        %v1177 = vld [vmem:[%s230 + $0x1a50] sm:$0xff]
        %v1178 = vld [vmem:[%s230 + $0x1a58] sm:$0xff]
        %v1179 = vld [vmem:[%s230 + $0x1a60] sm:$0xff]
        %v1180 = vld [vmem:[%s230 + $0x1a68] sm:$0xff]
        %v1181 = vld [vmem:[%s230 + $0x1a70] sm:$0xff]
        %v1182 = vld [vmem:[%s230 + $0x1a78] sm:$0xff]
        %v1183 = vld [vmem:[%s230 + $0x1a80] sm:$0xff]
        %v1184 = vld [vmem:[%s230 + $0x1a88] sm:$0xff]
        %v1185 = vld [vmem:[%s230 + $0x1a90] sm:$0xff]
        %v1186 = vld [vmem:[%s230 + $0x1a98] sm:$0xff]
        %v1187 = vld [vmem:[%s230 + $0x1aa0] sm:$0xff]
        %v1188 = vld [vmem:[%s230 + $0x1aa8] sm:$0xff]
        %v1189 = vld [vmem:[%s230 + $0x1ab0] sm:$0xff]
        %v1190 = vld [vmem:[%s230 + $0x1ab8] sm:$0xff]
        %v1191 = vld [vmem:[%s230 + $0x1ac0] sm:$0xff]
        %v1192 = vld [vmem:[%s230 + $0x1ac8] sm:$0xff]
        %v1193 = vld [vmem:[%s230 + $0x1ad0] sm:$0xff]
        %v1194 = vld [vmem:[%s230 + $0x1ad8] sm:$0xff]
        %v1195 = vld [vmem:[%s230 + $0x1ae0] sm:$0xff]
        %v1196 = vld [vmem:[%s230 + $0x1ae8] sm:$0xff]
        %v1197 = vld [vmem:[%s230 + $0x1af0] sm:$0xff]
        %v1198 = vld [vmem:[%s230 + $0x1af8] sm:$0xff]
        %v1199 = vld [vmem:[%s230 + $0x1b00] sm:$0xff]
        %v1200 = vld [vmem:[%s230 + $0x1b08] sm:$0xff]
        %v1201 = vld [vmem:[%s230 + $0x1b10] sm:$0xff]
        %v1202 = vld [vmem:[%s230 + $0x1b18] sm:$0xff]
        %v1203 = vld [vmem:[%s230 + $0x1b20] sm:$0xff]
        %v1204 = vld [vmem:[%s230 + $0x1b28] sm:$0xff]
        %v1205 = vld [vmem:[%s230 + $0x1b30] sm:$0xff]
        %v1206 = vld [vmem:[%s230 + $0x1b38] sm:$0xff]
        %v1207 = vld [vmem:[%s230 + $0x1b40] sm:$0xff]
        %v1208 = vld [vmem:[%s230 + $0x1b48] sm:$0xff]
        %v1209 = vld [vmem:[%s230 + $0x1b50] sm:$0xff]
        %v1210 = vld [vmem:[%s230 + $0x1b58] sm:$0xff]
        %v1211 = vld [vmem:[%s230 + $0x1b60] sm:$0xff]
        %v1212 = vld [vmem:[%s230 + $0x1b68] sm:$0xff]
        %v1213 = vld [vmem:[%s230 + $0x1b70] sm:$0xff]
        %v1214 = vld [vmem:[%s230 + $0x1b78] sm:$0xff]
        %v1215 = vld [vmem:[%s230 + $0x1b80] sm:$0xff]
        %v1216 = vld [vmem:[%s230 + $0x1b88] sm:$0xff]
        %v1217 = vld [vmem:[%s230 + $0x1b90] sm:$0xff]
        %v1218 = vld [vmem:[%s230 + $0x1b98] sm:$0xff]
        %v1219 = vld [vmem:[%s230 + $0x1ba0] sm:$0xff]
        %v1220 = vld [vmem:[%s230 + $0x1ba8] sm:$0xff]
        %v1221 = vld [vmem:[%s230 + $0x1bb0] sm:$0xff]
        %v1222 = vld [vmem:[%s230 + $0x1bb8] sm:$0xff]
        %v1223 = vld [vmem:[%s230 + $0x1bc0] sm:$0xff]
        %v1224 = vld [vmem:[%s230 + $0x1bc8] sm:$0xff]
        %v1225 = vld [vmem:[%s230 + $0x1bd0] sm:$0xff]
        %v1226 = vld [vmem:[%s230 + $0x1bd8] sm:$0xff]
        %v1227 = vld [vmem:[%s230 + $0x1be0] sm:$0xff]
        %v1228 = vld [vmem:[%s230 + $0x1be8] sm:$0xff]
        %v1229 = vld [vmem:[%s230 + $0x1bf0] sm:$0xff]
        %v1230 = vld [vmem:[%s230 + $0x1bf8] sm:$0xff]
        %v1231 = vld [vmem:[%s230 + $0x1c00] sm:$0xff]
        %v1232 = vld [vmem:[%s230 + $0x1c08] sm:$0xff]
        %v1233 = vld [vmem:[%s230 + $0x1c10] sm:$0xff]
        %v1234 = vld [vmem:[%s230 + $0x1c18] sm:$0xff]
        %v1235 = vld [vmem:[%s230 + $0x1c20] sm:$0xff]
        %v1236 = vld [vmem:[%s230 + $0x1c28] sm:$0xff]
        %v1237 = vld [vmem:[%s230 + $0x1c30] sm:$0xff]
        %v1238 = vld [vmem:[%s230 + $0x1c38] sm:$0xff]
        %v1239 = vld [vmem:[%s230 + $0x1c40] sm:$0xff]
        %v1240 = vld [vmem:[%s230 + $0x1c48] sm:$0xff]
        %v1241 = vld [vmem:[%s230 + $0x1c50] sm:$0xff]
        %v1242 = vld [vmem:[%s230 + $0x1c58] sm:$0xff]
        %v1243 = vld [vmem:[%s230 + $0x1c60] sm:$0xff]
        %v1244 = vld [vmem:[%s230 + $0x1c68] sm:$0xff]
        %v1245 = vld [vmem:[%s230 + $0x1c70] sm:$0xff]
        %v1246 = vld [vmem:[%s230 + $0x1c78] sm:$0xff]
        %v1247 = vld [vmem:[%s230 + $0x1c80] sm:$0xff]
        %v1248 = vld [vmem:[%s230 + $0x1c88] sm:$0xff]
        %v1249 = vld [vmem:[%s230 + $0x1c90] sm:$0xff]
        %v1250 = vld [vmem:[%s230 + $0x1c98] sm:$0xff]
        %v1251 = vld [vmem:[%s230 + $0x1ca0] sm:$0xff]
        %v1252 = vld [vmem:[%s230 + $0x1ca8] sm:$0xff]
        %v1253 = vld [vmem:[%s230 + $0x1cb0] sm:$0xff]
        %v1254 = vld [vmem:[%s230 + $0x1cb8] sm:$0xff]
        %v1255 = vld [vmem:[%s230 + $0x1cc0] sm:$0xff]
        %v1256 = vld [vmem:[%s230 + $0x1cc8] sm:$0xff]
        %v1257 = vld [vmem:[%s230 + $0x1cd0] sm:$0xff]
        %v1258 = vld [vmem:[%s230 + $0x1cd8] sm:$0xff]
        %v1259 = vld [vmem:[%s230 + $0x1ce0] sm:$0xff]
        %v1260 = vld [vmem:[%s230 + $0x1ce8] sm:$0xff]
        %v1261 = vld [vmem:[%s230 + $0x1cf0] sm:$0xff]
        %v1262 = vld [vmem:[%s230 + $0x1cf8] sm:$0xff]
        %v1263 = vld [vmem:[%s230 + $0x1d00] sm:$0xff]
        %v1264 = vld [vmem:[%s230 + $0x1d08] sm:$0xff]
        %v1265 = vld [vmem:[%s230 + $0x1d10] sm:$0xff]
        %v1266 = vld [vmem:[%s230 + $0x1d18] sm:$0xff]
        %v1267 = vld [vmem:[%s230 + $0x1d20] sm:$0xff]
        %v1268 = vld [vmem:[%s230 + $0x1d28] sm:$0xff]
        %v1269 = vld [vmem:[%s230 + $0x1d30] sm:$0xff]
        %v1270 = vld [vmem:[%s230 + $0x1d38] sm:$0xff]
        %v1271 = vld [vmem:[%s230 + $0x1d40] sm:$0xff]
        %v1272 = vld [vmem:[%s230 + $0x1d48] sm:$0xff]
        %v1273 = vld [vmem:[%s230 + $0x1d50] sm:$0xff]
        %v1274 = vld [vmem:[%s230 + $0x1d58] sm:$0xff]
        %v1275 = vld [vmem:[%s230 + $0x1d60] sm:$0xff]
        %v1276 = vld [vmem:[%s230 + $0x1d68] sm:$0xff]
        %v1277 = vld [vmem:[%s230 + $0x1d70] sm:$0xff]
        %v1278 = vld [vmem:[%s230 + $0x1d78] sm:$0xff]
        %v1279 = vld [vmem:[%s230 + $0x1d80] sm:$0xff]
        %v1280 = vld [vmem:[%s230 + $0x1d88] sm:$0xff]
        %v1281 = vld [vmem:[%s230 + $0x1d90] sm:$0xff]
        %v1282 = vld [vmem:[%s230 + $0x1d98] sm:$0xff]
        %v1283 = vld [vmem:[%s230 + $0x1da0] sm:$0xff]
        %v1284 = vld [vmem:[%s230 + $0x1da8] sm:$0xff]
        %v1285 = vld [vmem:[%s230 + $0x1db0] sm:$0xff]
        %v1286 = vld [vmem:[%s230 + $0x1db8] sm:$0xff]
        %v1287 = vld [vmem:[%s230 + $0x1dc0] sm:$0xff]
        %v1288 = vld [vmem:[%s230 + $0x1dc8] sm:$0xff]
        %v1289 = vld [vmem:[%s230 + $0x1dd0] sm:$0xff]
        %v1290 = vld [vmem:[%s230 + $0x1dd8] sm:$0xff]
        %v1291 = vld [vmem:[%s230 + $0x1de0] sm:$0xff]
        %v1292 = vld [vmem:[%s230 + $0x1de8] sm:$0xff]
        %v1293 = vld [vmem:[%s230 + $0x1df0] sm:$0xff]
        %v1294 = vld [vmem:[%s230 + $0x1df8] sm:$0xff]
        %v1295 = vld [vmem:[%s230 + $0x1e00] sm:$0xff]
        %v1296 = vld [vmem:[%s230 + $0x1e08] sm:$0xff]
        %v1297 = vld [vmem:[%s230 + $0x1e10] sm:$0xff]
        %v1298 = vld [vmem:[%s230 + $0x1e18] sm:$0xff]
        %v1299 = vld [vmem:[%s230 + $0x1e20] sm:$0xff]
        %v1300 = vld [vmem:[%s230 + $0x1e28] sm:$0xff]
        %v1301 = vld [vmem:[%s230 + $0x1e30] sm:$0xff]
        %v1302 = vld [vmem:[%s230 + $0x1e38] sm:$0xff]
        %v1303 = vld [vmem:[%s230 + $0x1e40] sm:$0xff]
        %v1304 = vld [vmem:[%s230 + $0x1e48] sm:$0xff]
        %v1305 = vld [vmem:[%s230 + $0x1e50] sm:$0xff]
        %v1306 = vld [vmem:[%s230 + $0x1e58] sm:$0xff]
        %v1307 = vld [vmem:[%s230 + $0x1e60] sm:$0xff]
        %v1308 = vld [vmem:[%s230 + $0x1e68] sm:$0xff]
        %v1309 = vld [vmem:[%s230 + $0x1e70] sm:$0xff]
        %v1310 = vld [vmem:[%s230 + $0x1e78] sm:$0xff]
        %v1311 = vld [vmem:[%s230 + $0x1e80] sm:$0xff]
        %v1312 = vld [vmem:[%s230 + $0x1e88] sm:$0xff]
        %v1313 = vld [vmem:[%s230 + $0x1e90] sm:$0xff]
        %v1314 = vld [vmem:[%s230 + $0x1e98] sm:$0xff]
        %v1315 = vld [vmem:[%s230 + $0x1ea0] sm:$0xff]
        %v1316 = vld [vmem:[%s230 + $0x1ea8] sm:$0xff]
        %v1317 = vld [vmem:[%s230 + $0x1eb0] sm:$0xff]
        %v1318 = vld [vmem:[%s230 + $0x1eb8] sm:$0xff]
        %v1319 = vld [vmem:[%s230 + $0x1ec0] sm:$0xff]
        %v1320 = vld [vmem:[%s230 + $0x1ec8] sm:$0xff]
        %v1321 = vld [vmem:[%s230 + $0x1ed0] sm:$0xff]
        %v1322 = vld [vmem:[%s230 + $0x1ed8] sm:$0xff]
        %v1323 = vld [vmem:[%s230 + $0x1ee0] sm:$0xff]
        %v1324 = vld [vmem:[%s230 + $0x1ee8] sm:$0xff]
        %v1325 = vld [vmem:[%s230 + $0x1ef0] sm:$0xff]
        %v1326 = vld [vmem:[%s230 + $0x1ef8] sm:$0xff]
        %v1327 = vld [vmem:[%s230 + $0x1f00] sm:$0xff]
        %v1328 = vld [vmem:[%s230 + $0x1f08] sm:$0xff]
        %v1329 = vld [vmem:[%s230 + $0x1f10] sm:$0xff]
        %v1330 = vld [vmem:[%s230 + $0x1f18] sm:$0xff]
        %v1331 = vld [vmem:[%s230 + $0x1f20] sm:$0xff]
        %v1332 = vld [vmem:[%s230 + $0x1f28] sm:$0xff]
        %v1333 = vld [vmem:[%s230 + $0x1f30] sm:$0xff]
        %v1334 = vld [vmem:[%s230 + $0x1f38] sm:$0xff]
        %v1335 = vld [vmem:[%s230 + $0x1f40] sm:$0xff]
        %v1336 = vld [vmem:[%s230 + $0x1f48] sm:$0xff]
        %v1337 = vld [vmem:[%s230 + $0x1f50] sm:$0xff]
        %v1338 = vld [vmem:[%s230 + $0x1f58] sm:$0xff]
        %v1339 = vld [vmem:[%s230 + $0x1f60] sm:$0xff]
        %v1340 = vld [vmem:[%s230 + $0x1f68] sm:$0xff]
        %v1341 = vld [vmem:[%s230 + $0x1f70] sm:$0xff]
        %v1342 = vld [vmem:[%s230 + $0x1f78] sm:$0xff]
        %v1343 = vld [vmem:[%s230 + $0x1f80] sm:$0xff]
        %v1344 = vld [vmem:[%s230 + $0x1f88] sm:$0xff]
        %v1345 = vld [vmem:[%s230 + $0x1f90] sm:$0xff]
        %v1346 = vld [vmem:[%s230 + $0x1f98] sm:$0xff]
        %v1347 = vld [vmem:[%s230 + $0x1fa0] sm:$0xff]
        %v1348 = vld [vmem:[%s230 + $0x1fa8] sm:$0xff]
        %v1349 = vld [vmem:[%s230 + $0x1fb0] sm:$0xff]
        %v1350 = vld [vmem:[%s230 + $0x1fb8] sm:$0xff]
        %v1351 = vld [vmem:[%s230 + $0x1fc0] sm:$0xff]
        %v1352 = vld [vmem:[%s230 + $0x1fc8] sm:$0xff]
        %v1353 = vld [vmem:[%s230 + $0x1fd0] sm:$0xff]
        %v1354 = vld [vmem:[%s230 + $0x1fd8] sm:$0xff]
        %v1355 = vld [vmem:[%s230 + $0x1fe0] sm:$0xff]
        %v1356 = vld [vmem:[%s230 + $0x1fe8] sm:$0xff]
        %v1357 = vld [vmem:[%s230 + $0x1ff0] sm:$0xff]
        %v1358 = vld [vmem:[%s230 + $0x1ff8] sm:$0xff]
        %v1359 = vld [vmem:[%s230 + $0x2000] sm:$0xff]
        %v1360 = vld [vmem:[%s230 + $0x2008] sm:$0xff]
        %v1361 = vld [vmem:[%s230 + $0x2010] sm:$0xff]
        %v1362 = vld [vmem:[%s230 + $0x2018] sm:$0xff]
        %v1363 = vld [vmem:[%s230 + $0x2020] sm:$0xff]
        %v1364 = vld [vmem:[%s230 + $0x2028] sm:$0xff]
        %v1365 = vld [vmem:[%s230 + $0x2030] sm:$0xff]
        %v1366 = vld [vmem:[%s230 + $0x2038] sm:$0xff]
        %v1367 = vld [vmem:[%s230 + $0x2040] sm:$0xff]
        %v1368 = vld [vmem:[%s230 + $0x2048] sm:$0xff]
        %v1369 = vld [vmem:[%s230 + $0x2050] sm:$0xff]
        %v1370 = vld [vmem:[%s230 + $0x2058] sm:$0xff]
        %v1371 = vld [vmem:[%s230 + $0x2060] sm:$0xff]
        %v1372 = vld [vmem:[%s230 + $0x2068] sm:$0xff]
        %v1373 = vld [vmem:[%s230 + $0x2070] sm:$0xff]
        %v1374 = vld [vmem:[%s230 + $0x2078] sm:$0xff]
        %v1375 = vld [vmem:[%s230 + $0x2080] sm:$0xff]
        %v1376 = vld [vmem:[%s230 + $0x2088] sm:$0xff]
        %v1377 = vld [vmem:[%s230 + $0x2090] sm:$0xff]
        %v1378 = vld [vmem:[%s230 + $0x2098] sm:$0xff]
        %v1379 = vld [vmem:[%s230 + $0x20a0] sm:$0xff]
        %v1380 = vld [vmem:[%s230 + $0x20a8] sm:$0xff]
        %v1381 = vld [vmem:[%s230 + $0x20b0] sm:$0xff]
        %v1382 = vld [vmem:[%s230 + $0x20b8] sm:$0xff]
        %v1383 = vld [vmem:[%s230 + $0x20c0] sm:$0xff]
        %v1384 = vld [vmem:[%s230 + $0x20c8] sm:$0xff]
        %v1385 = vld [vmem:[%s230 + $0x20d0] sm:$0xff]
        %v1386 = vld [vmem:[%s230 + $0x20d8] sm:$0xff]
        %v1387 = vld [vmem:[%s230 + $0x20e0] sm:$0xff]
        %v1388 = vld [vmem:[%s230 + $0x20e8] sm:$0xff]
        %v1389 = vld [vmem:[%s230 + $0x20f0] sm:$0xff]
        %v1390 = vld [vmem:[%s230 + $0x20f8] sm:$0xff]
        %v1391 = vld [vmem:[%s230 + $0x2100] sm:$0xff]
        %v1392 = vld [vmem:[%s230 + $0x2108] sm:$0xff]
        %v1393 = vld [vmem:[%s230 + $0x2110] sm:$0xff]
        %v1394 = vld [vmem:[%s230 + $0x2118] sm:$0xff]
        %v1395 = vld [vmem:[%s230 + $0x2120] sm:$0xff]
        %v1396 = vld [vmem:[%s230 + $0x2128] sm:$0xff]
        %v1397 = vld [vmem:[%s230 + $0x2130] sm:$0xff]
        %v1398 = vld [vmem:[%s230 + $0x2138] sm:$0xff]
        %v1399 = vld [vmem:[%s230 + $0x2140] sm:$0xff]
        %v1400 = vld [vmem:[%s230 + $0x2148] sm:$0xff]
        %v1401 = vld [vmem:[%s230 + $0x2150] sm:$0xff]
        %v1402 = vld [vmem:[%s230 + $0x2158] sm:$0xff]
        %v1403 = vld [vmem:[%s230 + $0x2160] sm:$0xff]
        %v1404 = vld [vmem:[%s230 + $0x2168] sm:$0xff]
        %v1405 = vld [vmem:[%s230 + $0x2170] sm:$0xff]
        %v1406 = vld [vmem:[%s230 + $0x2178] sm:$0xff]
        %v1407 = vld [vmem:[%s230 + $0x2180] sm:$0xff]
        %v1408 = vld [vmem:[%s230 + $0x2188] sm:$0xff]
        %v1409 = vld [vmem:[%s230 + $0x2190] sm:$0xff]
        %v1410 = vld [vmem:[%s230 + $0x2198] sm:$0xff]
        %v1411 = vld [vmem:[%s230 + $0x21a0] sm:$0xff]
        %v1412 = vld [vmem:[%s230 + $0x21a8] sm:$0xff]
        %v1413 = vld [vmem:[%s230 + $0x21b0] sm:$0xff]
        %v1414 = vld [vmem:[%s230 + $0x21b8] sm:$0xff]
        %v1415 = vld [vmem:[%s230 + $0x21c0] sm:$0xff]
        %v1416 = vld [vmem:[%s230 + $0x21c8] sm:$0xff]
        %v1417 = vld [vmem:[%s230 + $0x21d0] sm:$0xff]
        %v1418 = vld [vmem:[%s230 + $0x21d8] sm:$0xff]
        %v1419 = vld [vmem:[%s230 + $0x21e0] sm:$0xff]
        %v1420 = vld [vmem:[%s230 + $0x21e8] sm:$0xff]
        %v1421 = vld [vmem:[%s230 + $0x21f0] sm:$0xff]
        %v1422 = vld [vmem:[%s230 + $0x21f8] sm:$0xff]
        %v1423 = vld [vmem:[%s230 + $0x2200] sm:$0xff]
        %v1424 = vld [vmem:[%s230 + $0x2208] sm:$0xff]
        %v1425 = vld [vmem:[%s230 + $0x2210] sm:$0xff]
        %v1426 = vld [vmem:[%s230 + $0x2218] sm:$0xff]
        %v1427 = vld [vmem:[%s230 + $0x2220] sm:$0xff]
        %v1428 = vld [vmem:[%s230 + $0x2228] sm:$0xff]
        %v1429 = vld [vmem:[%s230 + $0x2230] sm:$0xff]
        %v1430 = vld [vmem:[%s230 + $0x2238] sm:$0xff]
        %v1431 = vld [vmem:[%s230 + $0x2240] sm:$0xff]
        %v1432 = vld [vmem:[%s230 + $0x2248] sm:$0xff]
        %v1433 = vld [vmem:[%s230 + $0x2250] sm:$0xff]
        %v1434 = vld [vmem:[%s230 + $0x2258] sm:$0xff]
        %v1435 = vld [vmem:[%s230 + $0x2260] sm:$0xff]
        %v1436 = vld [vmem:[%s230 + $0x2268] sm:$0xff]
        %v1437 = vld [vmem:[%s230 + $0x2270] sm:$0xff]
        %v1438 = vld [vmem:[%s230 + $0x2278] sm:$0xff]
        %v1439 = vld [vmem:[%s230 + $0x2280] sm:$0xff]
        %v1440 = vld [vmem:[%s230 + $0x2288] sm:$0xff]
        %v1441 = vld [vmem:[%s230 + $0x2290] sm:$0xff]
        %v1442 = vld [vmem:[%s230 + $0x2298] sm:$0xff]
        %v1443 = vld [vmem:[%s230 + $0x22a0] sm:$0xff]
        %v1444 = vld [vmem:[%s230 + $0x22a8] sm:$0xff]
        %v1445 = vld [vmem:[%s230 + $0x22b0] sm:$0xff]
        %v1446 = vld [vmem:[%s230 + $0x22b8] sm:$0xff]
        %v1447 = vld [vmem:[%s230 + $0x22c0] sm:$0xff]
        %v1448 = vld [vmem:[%s230 + $0x22c8] sm:$0xff]
        %v1449 = vld [vmem:[%s230 + $0x22d0] sm:$0xff]
        %v1450 = vld [vmem:[%s230 + $0x22d8] sm:$0xff]
        %v1451 = vld [vmem:[%s230 + $0x22e0] sm:$0xff]
        %v1452 = vld [vmem:[%s230 + $0x22e8] sm:$0xff]
        %v1453 = vld [vmem:[%s230 + $0x22f0] sm:$0xff]
        %v1454 = vld [vmem:[%s230 + $0x22f8] sm:$0xff]
        %v1455 = vld [vmem:[%s230 + $0x2300] sm:$0xff]
        %v1456 = vld [vmem:[%s230 + $0x2308] sm:$0xff]
        %v1457 = vld [vmem:[%s230 + $0x2310] sm:$0xff]
        %v1458 = vld [vmem:[%s230 + $0x2318] sm:$0xff]
        %v1459 = vld [vmem:[%s230 + $0x2320] sm:$0xff]
        %v1460 = vld [vmem:[%s230 + $0x2328] sm:$0xff]
        %v1461 = vld [vmem:[%s230 + $0x2330] sm:$0xff]
        %v1462 = vld [vmem:[%s230 + $0x2338] sm:$0xff]
        %v1463 = vld [vmem:[%s230 + $0x2340] sm:$0xff]
        %v1464 = vld [vmem:[%s230 + $0x2348] sm:$0xff]
        %v1465 = vld [vmem:[%s230 + $0x2350] sm:$0xff]
        %v1466 = vld [vmem:[%s230 + $0x2358] sm:$0xff]
        %v1467 = vld [vmem:[%s230 + $0x2360] sm:$0xff]
        %v1468 = vld [vmem:[%s230 + $0x2368] sm:$0xff]
        %v1469 = vld [vmem:[%s230 + $0x2370] sm:$0xff]
        %v1470 = vld [vmem:[%s230 + $0x2378] sm:$0xff]
        %v1471 = vld [vmem:[%s230 + $0x2380] sm:$0xff]
        %v1472 = vld [vmem:[%s230 + $0x2388] sm:$0xff]
        %v1473 = vld [vmem:[%s230 + $0x2390] sm:$0xff]
        %v1474 = vld [vmem:[%s230 + $0x2398] sm:$0xff]
        %v1475 = vld [vmem:[%s230 + $0x23a0] sm:$0xff]
        %v1476 = vld [vmem:[%s230 + $0x23a8] sm:$0xff]
        %v1477 = vld [vmem:[%s230 + $0x23b0] sm:$0xff]
        %v1478 = vld [vmem:[%s230 + $0x23b8] sm:$0xff]
        %v1479 = vld [vmem:[%s230 + $0x23c0] sm:$0xff]
        %v1480 = vld [vmem:[%s230 + $0x23c8] sm:$0xff]
        %v1481 = vld [vmem:[%s230 + $0x23d0] sm:$0xff]
        %v1482 = vld [vmem:[%s230 + $0x23d8] sm:$0xff]
        %v1483 = vld [vmem:[%s230 + $0x23e0] sm:$0xff]
        %v1484 = vld [vmem:[%s230 + $0x23e8] sm:$0xff]
        %v1485 = vld [vmem:[%s230 + $0x23f0] sm:$0xff]
        %v1486 = vld [vmem:[%s230 + $0x23f8] sm:$0xff]
        %v1487 = vld [vmem:[%s230 + $0x2400] sm:$0xff]
        %v1488 = vld [vmem:[%s230 + $0x2408] sm:$0xff]
        %v1489 = vld [vmem:[%s230 + $0x2410] sm:$0xff]
        %v1490 = vld [vmem:[%s230 + $0x2418] sm:$0xff]
        %v1491 = vld [vmem:[%s230 + $0x2420] sm:$0xff]
        %v1492 = vld [vmem:[%s230 + $0x2428] sm:$0xff]
        %v1493 = vld [vmem:[%s230 + $0x2430] sm:$0xff]
        %v1494 = vld [vmem:[%s230 + $0x2438] sm:$0xff]
        %v1495 = vld [vmem:[%s230 + $0x2440] sm:$0xff]
        %v1496 = vld [vmem:[%s230 + $0x2448] sm:$0xff]
        %v1497 = vld [vmem:[%s230 + $0x2450] sm:$0xff]
        %v1498 = vld [vmem:[%s230 + $0x2458] sm:$0xff]
        %v1499 = vld [vmem:[%s230 + $0x2460] sm:$0xff]
        %v1500 = vld [vmem:[%s230 + $0x2468] sm:$0xff]
        %v1501 = vld [vmem:[%s230 + $0x2470] sm:$0xff]
        %v1502 = vld [vmem:[%s230 + $0x2478] sm:$0xff]
        %v1503 = vld [vmem:[%s230 + $0x2480] sm:$0xff]
        %v1504 = vld [vmem:[%s230 + $0x2488] sm:$0xff]
        %v1505 = vld [vmem:[%s230 + $0x2490] sm:$0xff]
        %v1506 = vld [vmem:[%s230 + $0x2498] sm:$0xff]
        %v1507 = vld [vmem:[%s230 + $0x24a0] sm:$0xff]
        %v1508 = vld [vmem:[%s230 + $0x24a8] sm:$0xff]
        %v1509 = vld [vmem:[%s230 + $0x24b0] sm:$0xff]
        %v1510 = vld [vmem:[%s230 + $0x24b8] sm:$0xff]
        %v1511 = vld [vmem:[%s230 + $0x24c0] sm:$0xff]
        %v1512 = vld [vmem:[%s230 + $0x24c8] sm:$0xff]
        %v1513 = vld [vmem:[%s230 + $0x24d0] sm:$0xff]
        %v1514 = vld [vmem:[%s230 + $0x24d8] sm:$0xff]
        %v1515 = vld [vmem:[%s230 + $0x24e0] sm:$0xff]
        %v1516 = vld [vmem:[%s230 + $0x24e8] sm:$0xff]
        %v1517 = vld [vmem:[%s230 + $0x24f0] sm:$0xff]
        %v1518 = vld [vmem:[%s230 + $0x24f8] sm:$0xff]
        %v1519 = vld [vmem:[%s230 + $0x2500] sm:$0xff]
        %v1520 = vld [vmem:[%s230 + $0x2508] sm:$0xff]
        %v1521 = vld [vmem:[%s230 + $0x2510] sm:$0xff]
        %v1522 = vld [vmem:[%s230 + $0x2518] sm:$0xff]
        %v1523 = vld [vmem:[%s230 + $0x2520] sm:$0xff]
        %v1524 = vld [vmem:[%s230 + $0x2528] sm:$0xff]
        %v1525 = vld [vmem:[%s230 + $0x2530] sm:$0xff]
        %v1526 = vld [vmem:[%s230 + $0x2538] sm:$0xff]
        %v1527 = vld [vmem:[%s230 + $0x2540] sm:$0xff]
        %v1528 = vld [vmem:[%s230 + $0x2548] sm:$0xff]
        %v1529 = vld [vmem:[%s230 + $0x2550] sm:$0xff]
        %v1530 = vld [vmem:[%s230 + $0x2558] sm:$0xff]
        %v1531 = vld [vmem:[%s230 + $0x2560] sm:$0xff]
        %v1532 = vld [vmem:[%s230 + $0x2568] sm:$0xff]
        %v1533 = vld [vmem:[%s230 + $0x2570] sm:$0xff]
        %v1534 = vld [vmem:[%s230 + $0x2578] sm:$0xff]
        %v1535 = vld [vmem:[%s230 + $0x2580] sm:$0xff]
        %v1536 = vld [vmem:[%s230 + $0x2588] sm:$0xff]
        %v1537 = vld [vmem:[%s230 + $0x2590] sm:$0xff]
        %v1538 = vld [vmem:[%s230 + $0x2598] sm:$0xff]
        %v1539 = vld [vmem:[%s230 + $0x25a0] sm:$0xff]
        %v1540 = vld [vmem:[%s230 + $0x25a8] sm:$0xff]
        %v1541 = vld [vmem:[%s230 + $0x25b0] sm:$0xff]
        %v1542 = vld [vmem:[%s230 + $0x25b8] sm:$0xff]
        %v1543 = vld [vmem:[%s230 + $0x25c0] sm:$0xff]
        %v1544 = vld [vmem:[%s230 + $0x25c8] sm:$0xff]
        %v1545 = vld [vmem:[%s230 + $0x25d0] sm:$0xff]
        %v1546 = vld [vmem:[%s230 + $0x25d8] sm:$0xff]
        %v1547 = vld [vmem:[%s230 + $0x25e0] sm:$0xff]
        %v1548 = vld [vmem:[%s230 + $0x25e8] sm:$0xff]
        %v1549 = vld [vmem:[%s230 + $0x25f0] sm:$0xff]
        %v1550 = vld [vmem:[%s230 + $0x25f8] sm:$0xff]
        %v1551 = vld [vmem:[%s230 + $0x2600] sm:$0xff]
        %v1552 = vld [vmem:[%s230 + $0x2608] sm:$0xff]
        %v1553 = vld [vmem:[%s230 + $0x2610] sm:$0xff]
        %v1554 = vld [vmem:[%s230 + $0x2618] sm:$0xff]
        %v1555 = vld [vmem:[%s230 + $0x2620] sm:$0xff]
        %v1556 = vld [vmem:[%s230 + $0x2628] sm:$0xff]
        %v1557 = vld [vmem:[%s230 + $0x2630] sm:$0xff]
        %v1558 = vld [vmem:[%s230 + $0x2638] sm:$0xff]
        %v1559 = vld [vmem:[%s230 + $0x2640] sm:$0xff]
        %v1560 = vld [vmem:[%s230 + $0x2648] sm:$0xff]
        %v1561 = vld [vmem:[%s230 + $0x2650] sm:$0xff]
        %v1562 = vld [vmem:[%s230 + $0x2658] sm:$0xff]
        %v1563 = vld [vmem:[%s230 + $0x2660] sm:$0xff]
        %v1564 = vld [vmem:[%s230 + $0x2668] sm:$0xff]
        %v1565 = vld [vmem:[%s230 + $0x2670] sm:$0xff]
        %v1566 = vld [vmem:[%s230 + $0x2678] sm:$0xff]
        %v1567 = vld [vmem:[%s230 + $0x2680] sm:$0xff]
        %v1568 = vld [vmem:[%s230 + $0x2688] sm:$0xff]
        %v1569 = vld [vmem:[%s230 + $0x2690] sm:$0xff]
        %v1570 = vld [vmem:[%s230 + $0x2698] sm:$0xff]
        %v1571 = vld [vmem:[%s230 + $0x26a0] sm:$0xff]
        %v1572 = vld [vmem:[%s230 + $0x26a8] sm:$0xff]
        %v1573 = vld [vmem:[%s230 + $0x26b0] sm:$0xff]
        %v1574 = vld [vmem:[%s230 + $0x26b8] sm:$0xff]
        %v1575 = vld [vmem:[%s230 + $0x26c0] sm:$0xff]
        %v1576 = vld [vmem:[%s230 + $0x26c8] sm:$0xff]
        %v1577 = vld [vmem:[%s230 + $0x26d0] sm:$0xff]
        %v1578 = vld [vmem:[%s230 + $0x26d8] sm:$0xff]
        %v1579 = vld [vmem:[%s230 + $0x26e0] sm:$0xff]
        %v1580 = vld [vmem:[%s230 + $0x26e8] sm:$0xff]
        %v1581 = vld [vmem:[%s230 + $0x26f0] sm:$0xff]
        %v1582 = vld [vmem:[%s230 + $0x26f8] sm:$0xff]
        %v1583 = vld [vmem:[%s230 + $0x2700] sm:$0xff]
        %v1584 = vld [vmem:[%s230 + $0x2708] sm:$0xff]
        %v1585 = vld [vmem:[%s230 + $0x2710] sm:$0xff]
        %v1586 = vld [vmem:[%s230 + $0x2718] sm:$0xff]
        %v1587 = vld [vmem:[%s230 + $0x2720] sm:$0xff]
        %v1588 = vld [vmem:[%s230 + $0x2728] sm:$0xff]
        %v1589 = vld [vmem:[%s230 + $0x2730] sm:$0xff]
        %v1590 = vld [vmem:[%s230 + $0x2738] sm:$0xff]
        %v1591 = vld [vmem:[%s230 + $0x2740] sm:$0xff]
        %v1592 = vld [vmem:[%s230 + $0x2748] sm:$0xff]
        %v1593 = vld [vmem:[%s230 + $0x2750] sm:$0xff]
        %v1594 = vld [vmem:[%s230 + $0x2758] sm:$0xff]
        %v1595 = vld [vmem:[%s230 + $0x2760] sm:$0xff]
        %v1596 = vld [vmem:[%s230 + $0x2768] sm:$0xff]
        %v1597 = vld [vmem:[%s230 + $0x2770] sm:$0xff]
        %v1598 = vld [vmem:[%s230 + $0x2778] sm:$0xff]
        %v1599 = vld [vmem:[%s230 + $0x2780] sm:$0xff]
        %v1600 = vld [vmem:[%s230 + $0x2788] sm:$0xff]
        %v1601 = vld [vmem:[%s230 + $0x2790] sm:$0xff]
        %v1602 = vld [vmem:[%s230 + $0x2798] sm:$0xff]
        %v1603 = vld [vmem:[%s230 + $0x27a0] sm:$0xff]
        %v1604 = vld [vmem:[%s230 + $0x27a8] sm:$0xff]
        %v1605 = vld [vmem:[%s230 + $0x27b0] sm:$0xff]
        %v1606 = vld [vmem:[%s230 + $0x27b8] sm:$0xff]
        %v1607 = vld [vmem:[%s230 + $0x27c0] sm:$0xff]
        %v1608 = vld [vmem:[%s230 + $0x27c8] sm:$0xff]
        %v1609 = vld [vmem:[%s230 + $0x27d0] sm:$0xff]
        %v1610 = vld [vmem:[%s230 + $0x27d8] sm:$0xff]
        %v1611 = vld [vmem:[%s230 + $0x27e0] sm:$0xff]
        %v1612 = vld [vmem:[%s230 + $0x27e8] sm:$0xff]
        %v1613 = vld [vmem:[%s230 + $0x27f0] sm:$0xff]
        %v1614 = vld [vmem:[%s230 + $0x27f8] sm:$0xff]
        %1615 = vmatprep.subr.mxu0 %v336
        %1616 = vmatpush1.msra.mxu0 %v335
        %1617 = vmatprep.subr.mxu0 %v346
        %1618 = vmatpush1.msra.mxu0 %v345
        %1619 = vmatprep.subr.mxu0 %v356
        %1620 = vmatpush1.msra.mxu0 %v355
        %1621 = vmatprep.subr.mxu0 %v366
        %1622 = vmatpush1.msra.mxu0 %v365
        %1623 = vmatprep.subr.mxu0 %v376
        %1624 = vmatpush1.msra.mxu0 %v375
        %1625 = vmatprep.subr.mxu0 %v386
        %1626 = vmatpush1.msra.mxu0 %v385
        %1627 = vmatprep.subr.mxu0 %v396
        %1628 = vmatpush1.msra.mxu0 %v395
        %1629 = vmatprep.subr.mxu0 %v406
        %1630 = vmatpush1.msra.mxu0 %v405
        %1631 = vmatprep.subr.mxu0 %v416
        %1632 = vmatpush1.msra.mxu0 %v415
        %1633 = vmatprep.subr.mxu0 %v426
        %1634 = vmatpush1.msra.mxu0 %v425
        %1635 = vmatprep.subr.mxu0 %v436
        %1636 = vmatpush1.msra.mxu0 %v435
        %1637 = vmatprep.subr.mxu0 %v446
        %1638 = vmatpush1.msra.mxu0 %v445
        %1639 = vmatprep.subr.mxu0 %v456
        %1640 = vmatpush1.msra.mxu0 %v455
        %1641 = vmatprep.subr.mxu0 %v466
        %1642 = vmatpush1.msra.mxu0 %v465
        %1643 = vmatprep.subr.mxu0 %v476
        %1644 = vmatpush1.msra.mxu0 %v475
        %1645 = vmatprep.subr.mxu0 %v486
        %1646 = vmatpush1.msra.mxu0 %v485
        %1647 = vmatprep.subr.mxu0 %v496
        %1648 = vmatpush1.msra.mxu0 %v495
        %1649 = vmatprep.subr.mxu0 %v506
        %1650 = vmatpush1.msra.mxu0 %v505
        %1651 = vmatprep.subr.mxu0 %v516
        %1652 = vmatpush1.msra.mxu0 %v515
        %1653 = vmatprep.subr.mxu0 %v526
        %1654 = vmatpush1.msra.mxu0 %v525
        %1655 = vmatprep.subr.mxu0 %v536
        %1656 = vmatpush1.msra.mxu0 %v535
        %1657 = vmatprep.subr.mxu0 %v546
        %1658 = vmatpush1.msra.mxu0 %v545
        %1659 = vmatprep.subr.mxu0 %v556
        %1660 = vmatpush1.msra.mxu0 %v555
        %1661 = vmatprep.subr.mxu0 %v566
        %1662 = vmatpush1.msra.mxu0 %v565
        %1663 = vmatprep.subr.mxu0 %v576
        %1664 = vmatpush1.msra.mxu0 %v575
        %1665 = vmatprep.subr.mxu0 %v586
        %1666 = vmatpush1.msra.mxu0 %v585
        %1667 = vmatprep.subr.mxu0 %v596
        %1668 = vmatpush1.msra.mxu0 %v595
        %1669 = vmatprep.subr.mxu0 %v606
        %1670 = vmatpush1.msra.mxu0 %v605
        %1671 = vmatprep.subr.mxu0 %v616
        %1672 = vmatpush1.msra.mxu0 %v615
        %1673 = vmatprep.subr.mxu0 %v626
        %1674 = vmatpush1.msra.mxu0 %v625
        %1675 = vmatprep.subr.mxu0 %v636
        %1676 = vmatpush1.msra.mxu0 %v635
        %1677 = vmatprep.subr.mxu0 %v646
        %1678 = vmatpush1.msra.mxu0 %v645
        %1679 = vmatprep.mubr.f32.mxu0 %v328
        %1680 = vmatmul.mubr.f32.gmra.mrb[0].mxu0 %v327
        %v1681 = vpop.f32.mrb[0].mxu0
        %v1682 = vadd.f32 0.0, %v1681
        %v1683 = vpop.f32.mrb[0].mxu0
        %v1684 = vadd.f32 0.0, %v1683
        %1685 = vdwg.mxu0
        %1686 = vmatprep.subr.mxu0 %v656
        %1687 = vmatpush1.msra.mxu0 %v655
        %1688 = vmatprep.subr.mxu0 %v666
        %1689 = vmatpush1.msra.mxu0 %v665
        %1690 = vmatprep.subr.mxu0 %v676
        %1691 = vmatpush1.msra.mxu0 %v675
        %1692 = vmatprep.subr.mxu0 %v686
        %1693 = vmatpush1.msra.mxu0 %v685
        %1694 = vmatprep.subr.mxu0 %v696
        %1695 = vmatpush1.msra.mxu0 %v695
        %1696 = vmatprep.subr.mxu0 %v706
        %1697 = vmatpush1.msra.mxu0 %v705
        %1698 = vmatprep.subr.mxu0 %v716
        %1699 = vmatpush1.msra.mxu0 %v715
        %1700 = vmatprep.subr.mxu0 %v726
        %1701 = vmatpush1.msra.mxu0 %v725
        %1702 = vmatprep.subr.mxu0 %v736
        %1703 = vmatpush1.msra.mxu0 %v735
        %1704 = vmatprep.subr.mxu0 %v746
        %1705 = vmatpush1.msra.mxu0 %v745
        %1706 = vmatprep.subr.mxu0 %v756
        %1707 = vmatpush1.msra.mxu0 %v755
        %1708 = vmatprep.subr.mxu0 %v766
        %1709 = vmatpush1.msra.mxu0 %v765
        %1710 = vmatprep.subr.mxu0 %v776
        %1711 = vmatpush1.msra.mxu0 %v775
        %1712 = vmatprep.subr.mxu0 %v786
        %1713 = vmatpush1.msra.mxu0 %v785
        %1714 = vmatprep.subr.mxu0 %v796
        %1715 = vmatpush1.msra.mxu0 %v795
        %1716 = vmatprep.subr.mxu0 %v806
        %1717 = vmatpush1.msra.mxu0 %v805
        %1718 = vmatprep.subr.mxu0 %v816
        %1719 = vmatpush1.msra.mxu0 %v815
        %1720 = vmatprep.subr.mxu0 %v826
        %1721 = vmatpush1.msra.mxu0 %v825
        %1722 = vmatprep.subr.mxu0 %v836
        %1723 = vmatpush1.msra.mxu0 %v835
        %1724 = vmatprep.subr.mxu0 %v846
        %1725 = vmatpush1.msra.mxu0 %v845
        %1726 = vmatprep.subr.mxu0 %v856
        %1727 = vmatpush1.msra.mxu0 %v855
        %1728 = vmatprep.subr.mxu0 %v866
        %1729 = vmatpush1.msra.mxu0 %v865
        %1730 = vmatprep.subr.mxu0 %v876
        %1731 = vmatpush1.msra.mxu0 %v875
        %1732 = vmatprep.subr.mxu0 %v886
        %1733 = vmatpush1.msra.mxu0 %v885
        %1734 = vmatprep.subr.mxu0 %v896
        %1735 = vmatpush1.msra.mxu0 %v895
        %1736 = vmatprep.subr.mxu0 %v906
        %1737 = vmatpush1.msra.mxu0 %v905
        %1738 = vmatprep.subr.mxu0 %v916
        %1739 = vmatpush1.msra.mxu0 %v915
        %1740 = vmatprep.subr.mxu0 %v926
        %1741 = vmatpush1.msra.mxu0 %v925
        %1742 = vmatprep.subr.mxu0 %v936
        %1743 = vmatpush1.msra.mxu0 %v935
        %1744 = vmatprep.subr.mxu0 %v946
        %1745 = vmatpush1.msra.mxu0 %v945
        %1746 = vmatprep.subr.mxu0 %v956
        %1747 = vmatpush1.msra.mxu0 %v955
        %1748 = vmatprep.subr.mxu0 %v966
        %1749 = vmatpush1.msra.mxu0 %v965
        %1750 = vmatprep.mubr.f32.mxu0 %v330
        %1751 = vmatmul.mubr.f32.gmra.mrb[0].mxu0 %v329
        %v1752 = vpop.f32.mrb[0].mxu0
        %v1753 = vadd.f32 %v1682, %v1752
        %v1754 = vpop.f32.mrb[0].mxu0
        %v1755 = vadd.f32 %v1684, %v1754
        %1756 = vdwg.mxu0
        %1757 = vmatprep.subr.mxu0 %v976
        %1758 = vmatpush1.msra.mxu0 %v975
        %1759 = vmatprep.subr.mxu0 %v986
        %1760 = vmatpush1.msra.mxu0 %v985
        %1761 = vmatprep.subr.mxu0 %v996
        %1762 = vmatpush1.msra.mxu0 %v995
        %1763 = vmatprep.subr.mxu0 %v1006
        %1764 = vmatpush1.msra.mxu0 %v1005
        %1765 = vmatprep.subr.mxu0 %v1016
        %1766 = vmatpush1.msra.mxu0 %v1015
        %1767 = vmatprep.subr.mxu0 %v1026
        %1768 = vmatpush1.msra.mxu0 %v1025
        %1769 = vmatprep.subr.mxu0 %v1036
        %1770 = vmatpush1.msra.mxu0 %v1035
        %1771 = vmatprep.subr.mxu0 %v1046
        %1772 = vmatpush1.msra.mxu0 %v1045
        %1773 = vmatprep.subr.mxu0 %v1056
        %1774 = vmatpush1.msra.mxu0 %v1055
        %1775 = vmatprep.subr.mxu0 %v1066
        %1776 = vmatpush1.msra.mxu0 %v1065
        %1777 = vmatprep.subr.mxu0 %v1076
        %1778 = vmatpush1.msra.mxu0 %v1075
        %1779 = vmatprep.subr.mxu0 %v1086
        %1780 = vmatpush1.msra.mxu0 %v1085
        %1781 = vmatprep.subr.mxu0 %v1096
        %1782 = vmatpush1.msra.mxu0 %v1095
        %1783 = vmatprep.subr.mxu0 %v1106
        %1784 = vmatpush1.msra.mxu0 %v1105
        %1785 = vmatprep.subr.mxu0 %v1116
        %1786 = vmatpush1.msra.mxu0 %v1115
        %1787 = vmatprep.subr.mxu0 %v1126
        %1788 = vmatpush1.msra.mxu0 %v1125
        %1789 = vmatprep.subr.mxu0 %v1136
        %1790 = vmatpush1.msra.mxu0 %v1135
        %1791 = vmatprep.subr.mxu0 %v1146
        %1792 = vmatpush1.msra.mxu0 %v1145
        %1793 = vmatprep.subr.mxu0 %v1156
        %1794 = vmatpush1.msra.mxu0 %v1155
        %1795 = vmatprep.subr.mxu0 %v1166
        %1796 = vmatpush1.msra.mxu0 %v1165
        %1797 = vmatprep.subr.mxu0 %v1176
        %1798 = vmatpush1.msra.mxu0 %v1175
        %1799 = vmatprep.subr.mxu0 %v1186
        %1800 = vmatpush1.msra.mxu0 %v1185
        %1801 = vmatprep.subr.mxu0 %v1196
        %1802 = vmatpush1.msra.mxu0 %v1195
        %1803 = vmatprep.subr.mxu0 %v1206
        %1804 = vmatpush1.msra.mxu0 %v1205
        %1805 = vmatprep.subr.mxu0 %v1216
        %1806 = vmatpush1.msra.mxu0 %v1215
        %1807 = vmatprep.subr.mxu0 %v1226
        %1808 = vmatpush1.msra.mxu0 %v1225
        %1809 = vmatprep.subr.mxu0 %v1236
        %1810 = vmatpush1.msra.mxu0 %v1235
        %1811 = vmatprep.subr.mxu0 %v1246
        %1812 = vmatpush1.msra.mxu0 %v1245
        %1813 = vmatprep.subr.mxu0 %v1256
        %1814 = vmatpush1.msra.mxu0 %v1255
        %1815 = vmatprep.subr.mxu0 %v1266
        %1816 = vmatpush1.msra.mxu0 %v1265
        %1817 = vmatprep.subr.mxu0 %v1276
        %1818 = vmatpush1.msra.mxu0 %v1275
        %1819 = vmatprep.subr.mxu0 %v1286
        %1820 = vmatpush1.msra.mxu0 %v1285
        %1821 = vmatprep.mubr.f32.mxu0 %v332
        %1822 = vmatmul.mubr.f32.gmra.mrb[0].mxu0 %v331
        %v1823 = vpop.f32.mrb[0].mxu0
        %v1824 = vadd.f32 %v1753, %v1823
        %v1825 = vpop.f32.mrb[0].mxu0
        %v1826 = vadd.f32 %v1755, %v1825
        %1827 = vdwg.mxu0
        %1828 = vmatprep.subr.mxu0 %v1296
        %1829 = vmatpush1.msra.mxu0 %v1295
        %1830 = vmatprep.subr.mxu0 %v1306
        %1831 = vmatpush1.msra.mxu0 %v1305
        %1832 = vmatprep.subr.mxu0 %v1316
        %1833 = vmatpush1.msra.mxu0 %v1315
        %1834 = vmatprep.subr.mxu0 %v1326
        %1835 = vmatpush1.msra.mxu0 %v1325
        %1836 = vmatprep.subr.mxu0 %v1336
        %1837 = vmatpush1.msra.mxu0 %v1335
        %1838 = vmatprep.subr.mxu0 %v1346
        %1839 = vmatpush1.msra.mxu0 %v1345
        %1840 = vmatprep.subr.mxu0 %v1356
        %1841 = vmatpush1.msra.mxu0 %v1355
        %1842 = vmatprep.subr.mxu0 %v1366
        %1843 = vmatpush1.msra.mxu0 %v1365
        %1844 = vmatprep.subr.mxu0 %v1376
        %1845 = vmatpush1.msra.mxu0 %v1375
        %1846 = vmatprep.subr.mxu0 %v1386
        %1847 = vmatpush1.msra.mxu0 %v1385
        %1848 = vmatprep.subr.mxu0 %v1396
        %1849 = vmatpush1.msra.mxu0 %v1395
        %1850 = vmatprep.subr.mxu0 %v1406
        %1851 = vmatpush1.msra.mxu0 %v1405
        %1852 = vmatprep.subr.mxu0 %v1416
        %1853 = vmatpush1.msra.mxu0 %v1415
        %1854 = vmatprep.subr.mxu0 %v1426
        %1855 = vmatpush1.msra.mxu0 %v1425
        %1856 = vmatprep.subr.mxu0 %v1436
        %1857 = vmatpush1.msra.mxu0 %v1435
        %1858 = vmatprep.subr.mxu0 %v1446
        %1859 = vmatpush1.msra.mxu0 %v1445
        %1860 = vmatprep.subr.mxu0 %v1456
        %1861 = vmatpush1.msra.mxu0 %v1455
        %1862 = vmatprep.subr.mxu0 %v1466
        %1863 = vmatpush1.msra.mxu0 %v1465
        %1864 = vmatprep.subr.mxu0 %v1476
        %1865 = vmatpush1.msra.mxu0 %v1475
        %1866 = vmatprep.subr.mxu0 %v1486
        %1867 = vmatpush1.msra.mxu0 %v1485
        %1868 = vmatprep.subr.mxu0 %v1496
        %1869 = vmatpush1.msra.mxu0 %v1495
        %1870 = vmatprep.subr.mxu0 %v1506
        %1871 = vmatpush1.msra.mxu0 %v1505
        %1872 = vmatprep.subr.mxu0 %v1516
        %1873 = vmatpush1.msra.mxu0 %v1515
        %1874 = vmatprep.subr.mxu0 %v1526
        %1875 = vmatpush1.msra.mxu0 %v1525
        %1876 = vmatprep.subr.mxu0 %v1536
        %1877 = vmatpush1.msra.mxu0 %v1535
        %1878 = vmatprep.subr.mxu0 %v1546
        %1879 = vmatpush1.msra.mxu0 %v1545
        %1880 = vmatprep.subr.mxu0 %v1556
        %1881 = vmatpush1.msra.mxu0 %v1555
        %1882 = vmatprep.subr.mxu0 %v1566
        %1883 = vmatpush1.msra.mxu0 %v1565
        %1884 = vmatprep.subr.mxu0 %v1576
        %1885 = vmatpush1.msra.mxu0 %v1575
        %1886 = vmatprep.subr.mxu0 %v1586
        %1887 = vmatpush1.msra.mxu0 %v1585
        %1888 = vmatprep.subr.mxu0 %v1596
        %1889 = vmatpush1.msra.mxu0 %v1595
        %1890 = vmatprep.subr.mxu0 %v1606
        %1891 = vmatpush1.msra.mxu0 %v1605
        %1892 = vmatprep.mubr.f32.mxu0 %v334
        %1893 = vmatmul.mubr.f32.gmra.mrb[0].mxu0 %v333
        %v1894 = vpop.f32.mrb[0].mxu0
        %v1895 = vadd.f32 %v1824, %v1894
        %v1896 = vpop.f32.mrb[0].mxu0
        %v1897 = vadd.f32 %v1826, %v1896
        %1898 = vdwg.mxu0
        %1899 = vmatprep.subr.mxu0 %v338
        %1900 = vmatpush1.msra.mxu0 %v337
        %1901 = vmatprep.subr.mxu0 %v348
        %1902 = vmatpush1.msra.mxu0 %v347
        %1903 = vmatprep.subr.mxu0 %v358
        %1904 = vmatpush1.msra.mxu0 %v357
        %1905 = vmatprep.subr.mxu0 %v368
        %1906 = vmatpush1.msra.mxu0 %v367
        %1907 = vmatprep.subr.mxu0 %v378
        %1908 = vmatpush1.msra.mxu0 %v377
        %1909 = vmatprep.subr.mxu0 %v388
        %1910 = vmatpush1.msra.mxu0 %v387
        %1911 = vmatprep.subr.mxu0 %v398
        %1912 = vmatpush1.msra.mxu0 %v397
        %1913 = vmatprep.subr.mxu0 %v408
        %1914 = vmatpush1.msra.mxu0 %v407
        %1915 = vmatprep.subr.mxu0 %v418
        %1916 = vmatpush1.msra.mxu0 %v417
        %1917 = vmatprep.subr.mxu0 %v428
        %1918 = vmatpush1.msra.mxu0 %v427
        %1919 = vmatprep.subr.mxu0 %v438
        %1920 = vmatpush1.msra.mxu0 %v437
        %1921 = vmatprep.subr.mxu0 %v448
        %1922 = vmatpush1.msra.mxu0 %v447
        %1923 = vmatprep.subr.mxu0 %v458
        %1924 = vmatpush1.msra.mxu0 %v457
        %1925 = vmatprep.subr.mxu0 %v468
        %1926 = vmatpush1.msra.mxu0 %v467
        %1927 = vmatprep.subr.mxu0 %v478
        %1928 = vmatpush1.msra.mxu0 %v477
        %1929 = vmatprep.subr.mxu0 %v488
        %1930 = vmatpush1.msra.mxu0 %v487
        %1931 = vmatprep.subr.mxu0 %v498
        %1932 = vmatpush1.msra.mxu0 %v497
        %1933 = vmatprep.subr.mxu0 %v508
        %1934 = vmatpush1.msra.mxu0 %v507
        %1935 = vmatprep.subr.mxu0 %v518
        %1936 = vmatpush1.msra.mxu0 %v517
        %1937 = vmatprep.subr.mxu0 %v528
        %1938 = vmatpush1.msra.mxu0 %v527
        %1939 = vmatprep.subr.mxu0 %v538
        %1940 = vmatpush1.msra.mxu0 %v537
        %1941 = vmatprep.subr.mxu0 %v548
        %1942 = vmatpush1.msra.mxu0 %v547
        %1943 = vmatprep.subr.mxu0 %v558
        %1944 = vmatpush1.msra.mxu0 %v557
        %1945 = vmatprep.subr.mxu0 %v568
        %1946 = vmatpush1.msra.mxu0 %v567
        %1947 = vmatprep.subr.mxu0 %v578
        %1948 = vmatpush1.msra.mxu0 %v577
        %1949 = vmatprep.subr.mxu0 %v588
        %1950 = vmatpush1.msra.mxu0 %v587
        %1951 = vmatprep.subr.mxu0 %v598
        %1952 = vmatpush1.msra.mxu0 %v597
        %1953 = vmatprep.subr.mxu0 %v608
        %1954 = vmatpush1.msra.mxu0 %v607
        %1955 = vmatprep.subr.mxu0 %v618
        %1956 = vmatpush1.msra.mxu0 %v617
        %1957 = vmatprep.subr.mxu0 %v628
        %1958 = vmatpush1.msra.mxu0 %v627
        %1959 = vmatprep.subr.mxu0 %v638
        %1960 = vmatpush1.msra.mxu0 %v637
        %1961 = vmatprep.subr.mxu0 %v648
        %1962 = vmatpush1.msra.mxu0 %v647
        %1963 = vmatprep.mubr.f32.mxu0 %v328
        %1964 = vmatmul.mubr.f32.gmra.mrb[0].mxu0 %v327
        %v1965 = vpop.f32.mrb[0].mxu0
        %v1966 = vadd.f32 0.0, %v1965
        %v1967 = vpop.f32.mrb[0].mxu0
        %v1968 = vadd.f32 0.0, %v1967
        %1969 = vdwg.mxu0
        %1970 = vmatprep.subr.mxu0 %v658
        %1971 = vmatpush1.msra.mxu0 %v657
        %1972 = vmatprep.subr.mxu0 %v668
        %1973 = vmatpush1.msra.mxu0 %v667
        %1974 = vmatprep.subr.mxu0 %v678
        %1975 = vmatpush1.msra.mxu0 %v677
        %1976 = vmatprep.subr.mxu0 %v688
        %1977 = vmatpush1.msra.mxu0 %v687
        %1978 = vmatprep.subr.mxu0 %v698
        %1979 = vmatpush1.msra.mxu0 %v697
        %1980 = vmatprep.subr.mxu0 %v708
        %1981 = vmatpush1.msra.mxu0 %v707
        %1982 = vmatprep.subr.mxu0 %v718
        %1983 = vmatpush1.msra.mxu0 %v717
        %1984 = vmatprep.subr.mxu0 %v728
        %1985 = vmatpush1.msra.mxu0 %v727
        %1986 = vmatprep.subr.mxu0 %v738
        %1987 = vmatpush1.msra.mxu0 %v737
        %1988 = vmatprep.subr.mxu0 %v748
        %1989 = vmatpush1.msra.mxu0 %v747
        %1990 = vmatprep.subr.mxu0 %v758
        %1991 = vmatpush1.msra.mxu0 %v757
        %1992 = vmatprep.subr.mxu0 %v768
        %1993 = vmatpush1.msra.mxu0 %v767
        %1994 = vmatprep.subr.mxu0 %v778
        %1995 = vmatpush1.msra.mxu0 %v777
        %1996 = vmatprep.subr.mxu0 %v788
        %1997 = vmatpush1.msra.mxu0 %v787
        %1998 = vmatprep.subr.mxu0 %v798
        %1999 = vmatpush1.msra.mxu0 %v797
        %2000 = vmatprep.subr.mxu0 %v808
        %2001 = vmatpush1.msra.mxu0 %v807
        %2002 = vmatprep.subr.mxu0 %v818
        %2003 = vmatpush1.msra.mxu0 %v817
        %2004 = vmatprep.subr.mxu0 %v828
        %2005 = vmatpush1.msra.mxu0 %v827
        %2006 = vmatprep.subr.mxu0 %v838
        %2007 = vmatpush1.msra.mxu0 %v837
        %2008 = vmatprep.subr.mxu0 %v848
        %2009 = vmatpush1.msra.mxu0 %v847
        %2010 = vmatprep.subr.mxu0 %v858
        %2011 = vmatpush1.msra.mxu0 %v857
        %2012 = vmatprep.subr.mxu0 %v868
        %2013 = vmatpush1.msra.mxu0 %v867
        %2014 = vmatprep.subr.mxu0 %v878
        %2015 = vmatpush1.msra.mxu0 %v877
        %2016 = vmatprep.subr.mxu0 %v888
        %2017 = vmatpush1.msra.mxu0 %v887
        %2018 = vmatprep.subr.mxu0 %v898
        %2019 = vmatpush1.msra.mxu0 %v897
        %2020 = vmatprep.subr.mxu0 %v908
        %2021 = vmatpush1.msra.mxu0 %v907
        %2022 = vmatprep.subr.mxu0 %v918
        %2023 = vmatpush1.msra.mxu0 %v917
        %2024 = vmatprep.subr.mxu0 %v928
        %2025 = vmatpush1.msra.mxu0 %v927
        %2026 = vmatprep.subr.mxu0 %v938
        %2027 = vmatpush1.msra.mxu0 %v937
        %2028 = vmatprep.subr.mxu0 %v948
        %2029 = vmatpush1.msra.mxu0 %v947
        %2030 = vmatprep.subr.mxu0 %v958
        %2031 = vmatpush1.msra.mxu0 %v957
        %2032 = vmatprep.subr.mxu0 %v968
        %2033 = vmatpush1.msra.mxu0 %v967
        %2034 = vmatprep.mubr.f32.mxu0 %v330
        %2035 = vmatmul.mubr.f32.gmra.mrb[0].mxu0 %v329
        %v2036 = vpop.f32.mrb[0].mxu0
        %v2037 = vadd.f32 %v1966, %v2036
        %v2038 = vpop.f32.mrb[0].mxu0
        %v2039 = vadd.f32 %v1968, %v2038
        %2040 = vdwg.mxu0
        %2041 = vmatprep.subr.mxu0 %v978
        %2042 = vmatpush1.msra.mxu0 %v977
        %2043 = vmatprep.subr.mxu0 %v988
        %2044 = vmatpush1.msra.mxu0 %v987
        %2045 = vmatprep.subr.mxu0 %v998
        %2046 = vmatpush1.msra.mxu0 %v997
        %2047 = vmatprep.subr.mxu0 %v1008
        %2048 = vmatpush1.msra.mxu0 %v1007
        %2049 = vmatprep.subr.mxu0 %v1018
        %2050 = vmatpush1.msra.mxu0 %v1017
        %2051 = vmatprep.subr.mxu0 %v1028
        %2052 = vmatpush1.msra.mxu0 %v1027
        %2053 = vmatprep.subr.mxu0 %v1038
        %2054 = vmatpush1.msra.mxu0 %v1037
        %2055 = vmatprep.subr.mxu0 %v1048
        %2056 = vmatpush1.msra.mxu0 %v1047
        %2057 = vmatprep.subr.mxu0 %v1058
        %2058 = vmatpush1.msra.mxu0 %v1057
        %2059 = vmatprep.subr.mxu0 %v1068
        %2060 = vmatpush1.msra.mxu0 %v1067
        %2061 = vmatprep.subr.mxu0 %v1078
        %2062 = vmatpush1.msra.mxu0 %v1077
        %2063 = vmatprep.subr.mxu0 %v1088
        %2064 = vmatpush1.msra.mxu0 %v1087
        %2065 = vmatprep.subr.mxu0 %v1098
        %2066 = vmatpush1.msra.mxu0 %v1097
        %2067 = vmatprep.subr.mxu0 %v1108
        %2068 = vmatpush1.msra.mxu0 %v1107
        %2069 = vmatprep.subr.mxu0 %v1118
        %2070 = vmatpush1.msra.mxu0 %v1117
        %2071 = vmatprep.subr.mxu0 %v1128
        %2072 = vmatpush1.msra.mxu0 %v1127
        %2073 = vmatprep.subr.mxu0 %v1138
        %2074 = vmatpush1.msra.mxu0 %v1137
        %2075 = vmatprep.subr.mxu0 %v1148
        %2076 = vmatpush1.msra.mxu0 %v1147
        %2077 = vmatprep.subr.mxu0 %v1158
        %2078 = vmatpush1.msra.mxu0 %v1157
        %2079 = vmatprep.subr.mxu0 %v1168
        %2080 = vmatpush1.msra.mxu0 %v1167
        %2081 = vmatprep.subr.mxu0 %v1178
        %2082 = vmatpush1.msra.mxu0 %v1177
        %2083 = vmatprep.subr.mxu0 %v1188
        %2084 = vmatpush1.msra.mxu0 %v1187
        %2085 = vmatprep.subr.mxu0 %v1198
        %2086 = vmatpush1.msra.mxu0 %v1197
        %2087 = vmatprep.subr.mxu0 %v1208
        %2088 = vmatpush1.msra.mxu0 %v1207
        %2089 = vmatprep.subr.mxu0 %v1218
        %2090 = vmatpush1.msra.mxu0 %v1217
        %2091 = vmatprep.subr.mxu0 %v1228
        %2092 = vmatpush1.msra.mxu0 %v1227
        %2093 = vmatprep.subr.mxu0 %v1238
        %2094 = vmatpush1.msra.mxu0 %v1237
        %2095 = vmatprep.subr.mxu0 %v1248
        %2096 = vmatpush1.msra.mxu0 %v1247
        %2097 = vmatprep.subr.mxu0 %v1258
        %2098 = vmatpush1.msra.mxu0 %v1257
        %2099 = vmatprep.subr.mxu0 %v1268
        %2100 = vmatpush1.msra.mxu0 %v1267
        %2101 = vmatprep.subr.mxu0 %v1278
        %2102 = vmatpush1.msra.mxu0 %v1277
        %2103 = vmatprep.subr.mxu0 %v1288
        %2104 = vmatpush1.msra.mxu0 %v1287
        %2105 = vmatprep.mubr.f32.mxu0 %v332
        %2106 = vmatmul.mubr.f32.gmra.mrb[0].mxu0 %v331
        %v2107 = vpop.f32.mrb[0].mxu0
        %v2108 = vadd.f32 %v2037, %v2107
        %v2109 = vpop.f32.mrb[0].mxu0
        %v2110 = vadd.f32 %v2039, %v2109
        %2111 = vdwg.mxu0
        %2112 = vmatprep.subr.mxu0 %v1298
        %2113 = vmatpush1.msra.mxu0 %v1297
        %2114 = vmatprep.subr.mxu0 %v1308
        %2115 = vmatpush1.msra.mxu0 %v1307
        %2116 = vmatprep.subr.mxu0 %v1318
        %2117 = vmatpush1.msra.mxu0 %v1317
        %2118 = vmatprep.subr.mxu0 %v1328
        %2119 = vmatpush1.msra.mxu0 %v1327
        %2120 = vmatprep.subr.mxu0 %v1338
        %2121 = vmatpush1.msra.mxu0 %v1337
        %2122 = vmatprep.subr.mxu0 %v1348
        %2123 = vmatpush1.msra.mxu0 %v1347
        %2124 = vmatprep.subr.mxu0 %v1358
        %2125 = vmatpush1.msra.mxu0 %v1357
        %2126 = vmatprep.subr.mxu0 %v1368
        %2127 = vmatpush1.msra.mxu0 %v1367
        %2128 = vmatprep.subr.mxu0 %v1378
        %2129 = vmatpush1.msra.mxu0 %v1377
        %2130 = vmatprep.subr.mxu0 %v1388
        %2131 = vmatpush1.msra.mxu0 %v1387
        %2132 = vmatprep.subr.mxu0 %v1398
        %2133 = vmatpush1.msra.mxu0 %v1397
        %2134 = vmatprep.subr.mxu0 %v1408
        %2135 = vmatpush1.msra.mxu0 %v1407
        %2136 = vmatprep.subr.mxu0 %v1418
        %2137 = vmatpush1.msra.mxu0 %v1417
        %2138 = vmatprep.subr.mxu0 %v1428
        %2139 = vmatpush1.msra.mxu0 %v1427
        %2140 = vmatprep.subr.mxu0 %v1438
        %2141 = vmatpush1.msra.mxu0 %v1437
        %2142 = vmatprep.subr.mxu0 %v1448
        %2143 = vmatpush1.msra.mxu0 %v1447
        %2144 = vmatprep.subr.mxu0 %v1458
        %2145 = vmatpush1.msra.mxu0 %v1457
        %2146 = vmatprep.subr.mxu0 %v1468
        %2147 = vmatpush1.msra.mxu0 %v1467
        %2148 = vmatprep.subr.mxu0 %v1478
        %2149 = vmatpush1.msra.mxu0 %v1477
        %2150 = vmatprep.subr.mxu0 %v1488
        %2151 = vmatpush1.msra.mxu0 %v1487
        %2152 = vmatprep.subr.mxu0 %v1498
        %2153 = vmatpush1.msra.mxu0 %v1497
        %2154 = vmatprep.subr.mxu0 %v1508
        %2155 = vmatpush1.msra.mxu0 %v1507
        %2156 = vmatprep.subr.mxu0 %v1518
        %2157 = vmatpush1.msra.mxu0 %v1517
        %2158 = vmatprep.subr.mxu0 %v1528
        %2159 = vmatpush1.msra.mxu0 %v1527
        %2160 = vmatprep.subr.mxu0 %v1538
        %2161 = vmatpush1.msra.mxu0 %v1537
        %2162 = vmatprep.subr.mxu0 %v1548
        %2163 = vmatpush1.msra.mxu0 %v1547
        %2164 = vmatprep.subr.mxu0 %v1558
        %2165 = vmatpush1.msra.mxu0 %v1557
        %2166 = vmatprep.subr.mxu0 %v1568
        %2167 = vmatpush1.msra.mxu0 %v1567
        %2168 = vmatprep.subr.mxu0 %v1578
        %2169 = vmatpush1.msra.mxu0 %v1577
        %2170 = vmatprep.subr.mxu0 %v1588
        %2171 = vmatpush1.msra.mxu0 %v1587
        %2172 = vmatprep.subr.mxu0 %v1598
        %2173 = vmatpush1.msra.mxu0 %v1597
        %2174 = vmatprep.subr.mxu0 %v1608
        %2175 = vmatpush1.msra.mxu0 %v1607
        %2176 = vmatprep.mubr.f32.mxu0 %v334
        %2177 = vmatmul.mubr.f32.gmra.mrb[0].mxu0 %v333
        %v2178 = vpop.f32.mrb[0].mxu0
        %v2179 = vadd.f32 %v2108, %v2178
        %v2180 = vpop.f32.mrb[0].mxu0
        %v2181 = vadd.f32 %v2110, %v2180
        %2182 = vdwg.mxu0
        %2183 = vmatprep.subr.mxu0 %v340
        %2184 = vmatpush1.msra.mxu0 %v339
        %2185 = vmatprep.subr.mxu0 %v350
        %2186 = vmatpush1.msra.mxu0 %v349
        %2187 = vmatprep.subr.mxu0 %v360
        %2188 = vmatpush1.msra.mxu0 %v359
        %2189 = vmatprep.subr.mxu0 %v370
        %2190 = vmatpush1.msra.mxu0 %v369
        %2191 = vmatprep.subr.mxu0 %v380
        %2192 = vmatpush1.msra.mxu0 %v379
        %2193 = vmatprep.subr.mxu0 %v390
        %2194 = vmatpush1.msra.mxu0 %v389
        %2195 = vmatprep.subr.mxu0 %v400
        %2196 = vmatpush1.msra.mxu0 %v399
        %2197 = vmatprep.subr.mxu0 %v410
        %2198 = vmatpush1.msra.mxu0 %v409
        %2199 = vmatprep.subr.mxu0 %v420
        %2200 = vmatpush1.msra.mxu0 %v419
        %2201 = vmatprep.subr.mxu0 %v430
        %2202 = vmatpush1.msra.mxu0 %v429
        %2203 = vmatprep.subr.mxu0 %v440
        %2204 = vmatpush1.msra.mxu0 %v439
        %2205 = vmatprep.subr.mxu0 %v450
        %2206 = vmatpush1.msra.mxu0 %v449
        %2207 = vmatprep.subr.mxu0 %v460
        %2208 = vmatpush1.msra.mxu0 %v459
        %2209 = vmatprep.subr.mxu0 %v470
        %2210 = vmatpush1.msra.mxu0 %v469
        %2211 = vmatprep.subr.mxu0 %v480
        %2212 = vmatpush1.msra.mxu0 %v479
        %2213 = vmatprep.subr.mxu0 %v490
        %2214 = vmatpush1.msra.mxu0 %v489
        %2215 = vmatprep.subr.mxu0 %v500
        %2216 = vmatpush1.msra.mxu0 %v499
        %2217 = vmatprep.subr.mxu0 %v510
        %2218 = vmatpush1.msra.mxu0 %v509
        %2219 = vmatprep.subr.mxu0 %v520
        %2220 = vmatpush1.msra.mxu0 %v519
        %2221 = vmatprep.subr.mxu0 %v530
        %2222 = vmatpush1.msra.mxu0 %v529
        %2223 = vmatprep.subr.mxu0 %v540
        %2224 = vmatpush1.msra.mxu0 %v539
        %2225 = vmatprep.subr.mxu0 %v550
        %2226 = vmatpush1.msra.mxu0 %v549
        %2227 = vmatprep.subr.mxu0 %v560
        %2228 = vmatpush1.msra.mxu0 %v559
        %2229 = vmatprep.subr.mxu0 %v570
        %2230 = vmatpush1.msra.mxu0 %v569
        %2231 = vmatprep.subr.mxu0 %v580
        %2232 = vmatpush1.msra.mxu0 %v579
        %2233 = vmatprep.subr.mxu0 %v590
        %2234 = vmatpush1.msra.mxu0 %v589
        %2235 = vmatprep.subr.mxu0 %v600
        %2236 = vmatpush1.msra.mxu0 %v599
        %2237 = vmatprep.subr.mxu0 %v610
        %2238 = vmatpush1.msra.mxu0 %v609
        %2239 = vmatprep.subr.mxu0 %v620
        %2240 = vmatpush1.msra.mxu0 %v619
        %2241 = vmatprep.subr.mxu0 %v630
        %2242 = vmatpush1.msra.mxu0 %v629
        %2243 = vmatprep.subr.mxu0 %v640
        %2244 = vmatpush1.msra.mxu0 %v639
        %2245 = vmatprep.subr.mxu0 %v650
        %2246 = vmatpush1.msra.mxu0 %v649
        %2247 = vmatprep.mubr.f32.mxu0 %v328
        %2248 = vmatmul.mubr.f32.gmra.mrb[0].mxu0 %v327
        %v2249 = vpop.f32.mrb[0].mxu0
        %v2250 = vadd.f32 0.0, %v2249
        %v2251 = vpop.f32.mrb[0].mxu0
        %v2252 = vadd.f32 0.0, %v2251
        %2253 = vdwg.mxu0
        %2254 = vmatprep.subr.mxu0 %v660
        %2255 = vmatpush1.msra.mxu0 %v659
        %2256 = vmatprep.subr.mxu0 %v670
        %2257 = vmatpush1.msra.mxu0 %v669
        %2258 = vmatprep.subr.mxu0 %v680
        %2259 = vmatpush1.msra.mxu0 %v679
        %2260 = vmatprep.subr.mxu0 %v690
        %2261 = vmatpush1.msra.mxu0 %v689
        %2262 = vmatprep.subr.mxu0 %v700
        %2263 = vmatpush1.msra.mxu0 %v699
        %2264 = vmatprep.subr.mxu0 %v710
        %2265 = vmatpush1.msra.mxu0 %v709
        %2266 = vmatprep.subr.mxu0 %v720
        %2267 = vmatpush1.msra.mxu0 %v719
        %2268 = vmatprep.subr.mxu0 %v730
        %2269 = vmatpush1.msra.mxu0 %v729
        %2270 = vmatprep.subr.mxu0 %v740
        %2271 = vmatpush1.msra.mxu0 %v739
        %2272 = vmatprep.subr.mxu0 %v750
        %2273 = vmatpush1.msra.mxu0 %v749
        %2274 = vmatprep.subr.mxu0 %v760
        %2275 = vmatpush1.msra.mxu0 %v759
        %2276 = vmatprep.subr.mxu0 %v770
        %2277 = vmatpush1.msra.mxu0 %v769
        %2278 = vmatprep.subr.mxu0 %v780
        %2279 = vmatpush1.msra.mxu0 %v779
        %2280 = vmatprep.subr.mxu0 %v790
        %2281 = vmatpush1.msra.mxu0 %v789
        %2282 = vmatprep.subr.mxu0 %v800
        %2283 = vmatpush1.msra.mxu0 %v799
        %2284 = vmatprep.subr.mxu0 %v810
        %2285 = vmatpush1.msra.mxu0 %v809
        %2286 = vmatprep.subr.mxu0 %v820
        %2287 = vmatpush1.msra.mxu0 %v819
        %2288 = vmatprep.subr.mxu0 %v830
        %2289 = vmatpush1.msra.mxu0 %v829
        %2290 = vmatprep.subr.mxu0 %v840
        %2291 = vmatpush1.msra.mxu0 %v839
        %2292 = vmatprep.subr.mxu0 %v850
        %2293 = vmatpush1.msra.mxu0 %v849
        %2294 = vmatprep.subr.mxu0 %v860
        %2295 = vmatpush1.msra.mxu0 %v859
        %2296 = vmatprep.subr.mxu0 %v870
        %2297 = vmatpush1.msra.mxu0 %v869
        %2298 = vmatprep.subr.mxu0 %v880
        %2299 = vmatpush1.msra.mxu0 %v879
        %2300 = vmatprep.subr.mxu0 %v890
        %2301 = vmatpush1.msra.mxu0 %v889
        %2302 = vmatprep.subr.mxu0 %v900
        %2303 = vmatpush1.msra.mxu0 %v899
        %2304 = vmatprep.subr.mxu0 %v910
        %2305 = vmatpush1.msra.mxu0 %v909
        %2306 = vmatprep.subr.mxu0 %v920
        %2307 = vmatpush1.msra.mxu0 %v919
        %2308 = vmatprep.subr.mxu0 %v930
        %2309 = vmatpush1.msra.mxu0 %v929
        %2310 = vmatprep.subr.mxu0 %v940
        %2311 = vmatpush1.msra.mxu0 %v939
        %2312 = vmatprep.subr.mxu0 %v950
        %2313 = vmatpush1.msra.mxu0 %v949
        %2314 = vmatprep.subr.mxu0 %v960
        %2315 = vmatpush1.msra.mxu0 %v959
        %2316 = vmatprep.subr.mxu0 %v970
        %2317 = vmatpush1.msra.mxu0 %v969
        %2318 = vmatprep.mubr.f32.mxu0 %v330
        %2319 = vmatmul.mubr.f32.gmra.mrb[0].mxu0 %v329
        %v2320 = vpop.f32.mrb[0].mxu0
        %v2321 = vadd.f32 %v2250, %v2320
        %v2322 = vpop.f32.mrb[0].mxu0
        %v2323 = vadd.f32 %v2252, %v2322
        %2324 = vdwg.mxu0
        %2325 = vmatprep.subr.mxu0 %v980
        %2326 = vmatpush1.msra.mxu0 %v979
        %2327 = vmatprep.subr.mxu0 %v990
        %2328 = vmatpush1.msra.mxu0 %v989
        %2329 = vmatprep.subr.mxu0 %v1000
        %2330 = vmatpush1.msra.mxu0 %v999
        %2331 = vmatprep.subr.mxu0 %v1010
        %2332 = vmatpush1.msra.mxu0 %v1009
        %2333 = vmatprep.subr.mxu0 %v1020
        %2334 = vmatpush1.msra.mxu0 %v1019
        %2335 = vmatprep.subr.mxu0 %v1030
        %2336 = vmatpush1.msra.mxu0 %v1029
        %2337 = vmatprep.subr.mxu0 %v1040
        %2338 = vmatpush1.msra.mxu0 %v1039
        %2339 = vmatprep.subr.mxu0 %v1050
        %2340 = vmatpush1.msra.mxu0 %v1049
        %2341 = vmatprep.subr.mxu0 %v1060
        %2342 = vmatpush1.msra.mxu0 %v1059
        %2343 = vmatprep.subr.mxu0 %v1070
        %2344 = vmatpush1.msra.mxu0 %v1069
        %2345 = vmatprep.subr.mxu0 %v1080
        %2346 = vmatpush1.msra.mxu0 %v1079
        %2347 = vmatprep.subr.mxu0 %v1090
        %2348 = vmatpush1.msra.mxu0 %v1089
        %2349 = vmatprep.subr.mxu0 %v1100
        %2350 = vmatpush1.msra.mxu0 %v1099
        %2351 = vmatprep.subr.mxu0 %v1110
        %2352 = vmatpush1.msra.mxu0 %v1109
        %2353 = vmatprep.subr.mxu0 %v1120
        %2354 = vmatpush1.msra.mxu0 %v1119
        %2355 = vmatprep.subr.mxu0 %v1130
        %2356 = vmatpush1.msra.mxu0 %v1129
        %2357 = vmatprep.subr.mxu0 %v1140
        %2358 = vmatpush1.msra.mxu0 %v1139
        %2359 = vmatprep.subr.mxu0 %v1150
        %2360 = vmatpush1.msra.mxu0 %v1149
        %2361 = vmatprep.subr.mxu0 %v1160
        %2362 = vmatpush1.msra.mxu0 %v1159
        %2363 = vmatprep.subr.mxu0 %v1170
        %2364 = vmatpush1.msra.mxu0 %v1169
        %2365 = vmatprep.subr.mxu0 %v1180
        %2366 = vmatpush1.msra.mxu0 %v1179
        %2367 = vmatprep.subr.mxu0 %v1190
        %2368 = vmatpush1.msra.mxu0 %v1189
        %2369 = vmatprep.subr.mxu0 %v1200
        %2370 = vmatpush1.msra.mxu0 %v1199
        %2371 = vmatprep.subr.mxu0 %v1210
        %2372 = vmatpush1.msra.mxu0 %v1209
        %2373 = vmatprep.subr.mxu0 %v1220
        %2374 = vmatpush1.msra.mxu0 %v1219
        %2375 = vmatprep.subr.mxu0 %v1230
        %2376 = vmatpush1.msra.mxu0 %v1229
        %2377 = vmatprep.subr.mxu0 %v1240
        %2378 = vmatpush1.msra.mxu0 %v1239
        %2379 = vmatprep.subr.mxu0 %v1250
        %2380 = vmatpush1.msra.mxu0 %v1249
        %2381 = vmatprep.subr.mxu0 %v1260
        %2382 = vmatpush1.msra.mxu0 %v1259
        %2383 = vmatprep.subr.mxu0 %v1270
        %2384 = vmatpush1.msra.mxu0 %v1269
        %2385 = vmatprep.subr.mxu0 %v1280
        %2386 = vmatpush1.msra.mxu0 %v1279
        %2387 = vmatprep.subr.mxu0 %v1290
        %2388 = vmatpush1.msra.mxu0 %v1289
        %2389 = vmatprep.mubr.f32.mxu0 %v332
        %2390 = vmatmul.mubr.f32.gmra.mrb[0].mxu0 %v331
        %v2391 = vpop.f32.mrb[0].mxu0
        %v2392 = vadd.f32 %v2321, %v2391
        %v2393 = vpop.f32.mrb[0].mxu0
        %v2394 = vadd.f32 %v2323, %v2393
        %2395 = vdwg.mxu0
        %2396 = vmatprep.subr.mxu0 %v1300
        %2397 = vmatpush1.msra.mxu0 %v1299
        %2398 = vmatprep.subr.mxu0 %v1310
        %2399 = vmatpush1.msra.mxu0 %v1309
        %2400 = vmatprep.subr.mxu0 %v1320
        %2401 = vmatpush1.msra.mxu0 %v1319
        %2402 = vmatprep.subr.mxu0 %v1330
        %2403 = vmatpush1.msra.mxu0 %v1329
        %2404 = vmatprep.subr.mxu0 %v1340
        %2405 = vmatpush1.msra.mxu0 %v1339
        %2406 = vmatprep.subr.mxu0 %v1350
        %2407 = vmatpush1.msra.mxu0 %v1349
        %2408 = vmatprep.subr.mxu0 %v1360
        %2409 = vmatpush1.msra.mxu0 %v1359
        %2410 = vmatprep.subr.mxu0 %v1370
        %2411 = vmatpush1.msra.mxu0 %v1369
        %2412 = vmatprep.subr.mxu0 %v1380
        %2413 = vmatpush1.msra.mxu0 %v1379
        %2414 = vmatprep.subr.mxu0 %v1390
        %2415 = vmatpush1.msra.mxu0 %v1389
        %2416 = vmatprep.subr.mxu0 %v1400
        %2417 = vmatpush1.msra.mxu0 %v1399
        %2418 = vmatprep.subr.mxu0 %v1410
        %2419 = vmatpush1.msra.mxu0 %v1409
        %2420 = vmatprep.subr.mxu0 %v1420
        %2421 = vmatpush1.msra.mxu0 %v1419
        %2422 = vmatprep.subr.mxu0 %v1430
        %2423 = vmatpush1.msra.mxu0 %v1429
        %2424 = vmatprep.subr.mxu0 %v1440
        %2425 = vmatpush1.msra.mxu0 %v1439
        %2426 = vmatprep.subr.mxu0 %v1450
        %2427 = vmatpush1.msra.mxu0 %v1449
        %2428 = vmatprep.subr.mxu0 %v1460
        %2429 = vmatpush1.msra.mxu0 %v1459
        %2430 = vmatprep.subr.mxu0 %v1470
        %2431 = vmatpush1.msra.mxu0 %v1469
        %2432 = vmatprep.subr.mxu0 %v1480
        %2433 = vmatpush1.msra.mxu0 %v1479
        %2434 = vmatprep.subr.mxu0 %v1490
        %2435 = vmatpush1.msra.mxu0 %v1489
        %2436 = vmatprep.subr.mxu0 %v1500
        %2437 = vmatpush1.msra.mxu0 %v1499
        %2438 = vmatprep.subr.mxu0 %v1510
        %2439 = vmatpush1.msra.mxu0 %v1509
        %2440 = vmatprep.subr.mxu0 %v1520
        %2441 = vmatpush1.msra.mxu0 %v1519
        %2442 = vmatprep.subr.mxu0 %v1530
        %2443 = vmatpush1.msra.mxu0 %v1529
        %2444 = vmatprep.subr.mxu0 %v1540
        %2445 = vmatpush1.msra.mxu0 %v1539
        %2446 = vmatprep.subr.mxu0 %v1550
        %2447 = vmatpush1.msra.mxu0 %v1549
        %2448 = vmatprep.subr.mxu0 %v1560
        %2449 = vmatpush1.msra.mxu0 %v1559
        %2450 = vmatprep.subr.mxu0 %v1570
        %2451 = vmatpush1.msra.mxu0 %v1569
        %2452 = vmatprep.subr.mxu0 %v1580
        %2453 = vmatpush1.msra.mxu0 %v1579
        %2454 = vmatprep.subr.mxu0 %v1590
        %2455 = vmatpush1.msra.mxu0 %v1589
        %2456 = vmatprep.subr.mxu0 %v1600
        %2457 = vmatpush1.msra.mxu0 %v1599
        %2458 = vmatprep.subr.mxu0 %v1610
        %2459 = vmatpush1.msra.mxu0 %v1609
        %2460 = vmatprep.mubr.f32.mxu0 %v334
        %2461 = vmatmul.mubr.f32.gmra.mrb[0].mxu0 %v333
        %v2462 = vpop.f32.mrb[0].mxu0
        %v2463 = vadd.f32 %v2392, %v2462
        %v2464 = vpop.f32.mrb[0].mxu0
        %v2465 = vadd.f32 %v2394, %v2464
        %2466 = vdwg.mxu0
        %2467 = vmatprep.subr.mxu0 %v342
        %2468 = vmatpush1.msra.mxu0 %v341
        %2469 = vmatprep.subr.mxu0 %v352
        %2470 = vmatpush1.msra.mxu0 %v351
        %2471 = vmatprep.subr.mxu0 %v362
        %2472 = vmatpush1.msra.mxu0 %v361
        %2473 = vmatprep.subr.mxu0 %v372
        %2474 = vmatpush1.msra.mxu0 %v371
        %2475 = vmatprep.subr.mxu0 %v382
        %2476 = vmatpush1.msra.mxu0 %v381
        %2477 = vmatprep.subr.mxu0 %v392
        %2478 = vmatpush1.msra.mxu0 %v391
        %2479 = vmatprep.subr.mxu0 %v402
        %2480 = vmatpush1.msra.mxu0 %v401
        %2481 = vmatprep.subr.mxu0 %v412
        %2482 = vmatpush1.msra.mxu0 %v411
        %2483 = vmatprep.subr.mxu0 %v422
        %2484 = vmatpush1.msra.mxu0 %v421
        %2485 = vmatprep.subr.mxu0 %v432
        %2486 = vmatpush1.msra.mxu0 %v431
        %2487 = vmatprep.subr.mxu0 %v442
        %2488 = vmatpush1.msra.mxu0 %v441
        %2489 = vmatprep.subr.mxu0 %v452
        %2490 = vmatpush1.msra.mxu0 %v451
        %2491 = vmatprep.subr.mxu0 %v462
        %2492 = vmatpush1.msra.mxu0 %v461
        %2493 = vmatprep.subr.mxu0 %v472
        %2494 = vmatpush1.msra.mxu0 %v471
        %2495 = vmatprep.subr.mxu0 %v482
        %2496 = vmatpush1.msra.mxu0 %v481
        %2497 = vmatprep.subr.mxu0 %v492
        %2498 = vmatpush1.msra.mxu0 %v491
        %2499 = vmatprep.subr.mxu0 %v502
        %2500 = vmatpush1.msra.mxu0 %v501
        %2501 = vmatprep.subr.mxu0 %v512
        %2502 = vmatpush1.msra.mxu0 %v511
        %2503 = vmatprep.subr.mxu0 %v522
        %2504 = vmatpush1.msra.mxu0 %v521
        %2505 = vmatprep.subr.mxu0 %v532
        %2506 = vmatpush1.msra.mxu0 %v531
        %2507 = vmatprep.subr.mxu0 %v542
        %2508 = vmatpush1.msra.mxu0 %v541
        %2509 = vmatprep.subr.mxu0 %v552
        %2510 = vmatpush1.msra.mxu0 %v551
        %2511 = vmatprep.subr.mxu0 %v562
        %2512 = vmatpush1.msra.mxu0 %v561
        %2513 = vmatprep.subr.mxu0 %v572
        %2514 = vmatpush1.msra.mxu0 %v571
        %2515 = vmatprep.subr.mxu0 %v582
        %2516 = vmatpush1.msra.mxu0 %v581
        %2517 = vmatprep.subr.mxu0 %v592
        %2518 = vmatpush1.msra.mxu0 %v591
        %2519 = vmatprep.subr.mxu0 %v602
        %2520 = vmatpush1.msra.mxu0 %v601
        %2521 = vmatprep.subr.mxu0 %v612
        %2522 = vmatpush1.msra.mxu0 %v611
        %2523 = vmatprep.subr.mxu0 %v622
        %2524 = vmatpush1.msra.mxu0 %v621
        %2525 = vmatprep.subr.mxu0 %v632
        %2526 = vmatpush1.msra.mxu0 %v631
        %2527 = vmatprep.subr.mxu0 %v642
        %2528 = vmatpush1.msra.mxu0 %v641
        %2529 = vmatprep.subr.mxu0 %v652
        %2530 = vmatpush1.msra.mxu0 %v651
        %2531 = vmatprep.mubr.f32.mxu0 %v328
        %2532 = vmatmul.mubr.f32.gmra.mrb[0].mxu0 %v327
        %v2533 = vpop.f32.mrb[0].mxu0
        %v2534 = vadd.f32 0.0, %v2533
        %v2535 = vpop.f32.mrb[0].mxu0
        %v2536 = vadd.f32 0.0, %v2535
        %2537 = vdwg.mxu0
        %2538 = vmatprep.subr.mxu0 %v662
        %2539 = vmatpush1.msra.mxu0 %v661
        %2540 = vmatprep.subr.mxu0 %v672
        %2541 = vmatpush1.msra.mxu0 %v671
        %2542 = vmatprep.subr.mxu0 %v682
        %2543 = vmatpush1.msra.mxu0 %v681
        %2544 = vmatprep.subr.mxu0 %v692
        %2545 = vmatpush1.msra.mxu0 %v691
        %2546 = vmatprep.subr.mxu0 %v702
        %2547 = vmatpush1.msra.mxu0 %v701
        %2548 = vmatprep.subr.mxu0 %v712
        %2549 = vmatpush1.msra.mxu0 %v711
        %2550 = vmatprep.subr.mxu0 %v722
        %2551 = vmatpush1.msra.mxu0 %v721
        %2552 = vmatprep.subr.mxu0 %v732
        %2553 = vmatpush1.msra.mxu0 %v731
        %2554 = vmatprep.subr.mxu0 %v742
        %2555 = vmatpush1.msra.mxu0 %v741
        %2556 = vmatprep.subr.mxu0 %v752
        %2557 = vmatpush1.msra.mxu0 %v751
        %2558 = vmatprep.subr.mxu0 %v762
        %2559 = vmatpush1.msra.mxu0 %v761
        %2560 = vmatprep.subr.mxu0 %v772
        %2561 = vmatpush1.msra.mxu0 %v771
        %2562 = vmatprep.subr.mxu0 %v782
        %2563 = vmatpush1.msra.mxu0 %v781
        %2564 = vmatprep.subr.mxu0 %v792
        %2565 = vmatpush1.msra.mxu0 %v791
        %2566 = vmatprep.subr.mxu0 %v802
        %2567 = vmatpush1.msra.mxu0 %v801
        %2568 = vmatprep.subr.mxu0 %v812
        %2569 = vmatpush1.msra.mxu0 %v811
        %2570 = vmatprep.subr.mxu0 %v822
        %2571 = vmatpush1.msra.mxu0 %v821
        %2572 = vmatprep.subr.mxu0 %v832
        %2573 = vmatpush1.msra.mxu0 %v831
        %2574 = vmatprep.subr.mxu0 %v842
        %2575 = vmatpush1.msra.mxu0 %v841
        %2576 = vmatprep.subr.mxu0 %v852
        %2577 = vmatpush1.msra.mxu0 %v851
        %2578 = vmatprep.subr.mxu0 %v862
        %2579 = vmatpush1.msra.mxu0 %v861
        %2580 = vmatprep.subr.mxu0 %v872
        %2581 = vmatpush1.msra.mxu0 %v871
        %2582 = vmatprep.subr.mxu0 %v882
        %2583 = vmatpush1.msra.mxu0 %v881
        %2584 = vmatprep.subr.mxu0 %v892
        %2585 = vmatpush1.msra.mxu0 %v891
        %2586 = vmatprep.subr.mxu0 %v902
        %2587 = vmatpush1.msra.mxu0 %v901
        %2588 = vmatprep.subr.mxu0 %v912
        %2589 = vmatpush1.msra.mxu0 %v911
        %2590 = vmatprep.subr.mxu0 %v922
        %2591 = vmatpush1.msra.mxu0 %v921
        %2592 = vmatprep.subr.mxu0 %v932
        %2593 = vmatpush1.msra.mxu0 %v931
        %2594 = vmatprep.subr.mxu0 %v942
        %2595 = vmatpush1.msra.mxu0 %v941
        %2596 = vmatprep.subr.mxu0 %v952
        %2597 = vmatpush1.msra.mxu0 %v951
        %2598 = vmatprep.subr.mxu0 %v962
        %2599 = vmatpush1.msra.mxu0 %v961
        %2600 = vmatprep.subr.mxu0 %v972
        %2601 = vmatpush1.msra.mxu0 %v971
        %2602 = vmatprep.mubr.f32.mxu0 %v330
        %2603 = vmatmul.mubr.f32.gmra.mrb[0].mxu0 %v329
        %v2604 = vpop.f32.mrb[0].mxu0
        %v2605 = vadd.f32 %v2534, %v2604
        %v2606 = vpop.f32.mrb[0].mxu0
        %v2607 = vadd.f32 %v2536, %v2606
        %2608 = vdwg.mxu0
        %2609 = vmatprep.subr.mxu0 %v982
        %2610 = vmatpush1.msra.mxu0 %v981
        %2611 = vmatprep.subr.mxu0 %v992
        %2612 = vmatpush1.msra.mxu0 %v991
        %2613 = vmatprep.subr.mxu0 %v1002
        %2614 = vmatpush1.msra.mxu0 %v1001
        %2615 = vmatprep.subr.mxu0 %v1012
        %2616 = vmatpush1.msra.mxu0 %v1011
        %2617 = vmatprep.subr.mxu0 %v1022
        %2618 = vmatpush1.msra.mxu0 %v1021
        %2619 = vmatprep.subr.mxu0 %v1032
        %2620 = vmatpush1.msra.mxu0 %v1031
        %2621 = vmatprep.subr.mxu0 %v1042
        %2622 = vmatpush1.msra.mxu0 %v1041
        %2623 = vmatprep.subr.mxu0 %v1052
        %2624 = vmatpush1.msra.mxu0 %v1051
        %2625 = vmatprep.subr.mxu0 %v1062
        %2626 = vmatpush1.msra.mxu0 %v1061
        %2627 = vmatprep.subr.mxu0 %v1072
        %2628 = vmatpush1.msra.mxu0 %v1071
        %2629 = vmatprep.subr.mxu0 %v1082
        %2630 = vmatpush1.msra.mxu0 %v1081
        %2631 = vmatprep.subr.mxu0 %v1092
        %2632 = vmatpush1.msra.mxu0 %v1091
        %2633 = vmatprep.subr.mxu0 %v1102
        %2634 = vmatpush1.msra.mxu0 %v1101
        %2635 = vmatprep.subr.mxu0 %v1112
        %2636 = vmatpush1.msra.mxu0 %v1111
        %2637 = vmatprep.subr.mxu0 %v1122
        %2638 = vmatpush1.msra.mxu0 %v1121
        %2639 = vmatprep.subr.mxu0 %v1132
        %2640 = vmatpush1.msra.mxu0 %v1131
        %2641 = vmatprep.subr.mxu0 %v1142
        %2642 = vmatpush1.msra.mxu0 %v1141
        %2643 = vmatprep.subr.mxu0 %v1152
        %2644 = vmatpush1.msra.mxu0 %v1151
        %2645 = vmatprep.subr.mxu0 %v1162
        %2646 = vmatpush1.msra.mxu0 %v1161
        %2647 = vmatprep.subr.mxu0 %v1172
        %2648 = vmatpush1.msra.mxu0 %v1171
        %2649 = vmatprep.subr.mxu0 %v1182
        %2650 = vmatpush1.msra.mxu0 %v1181
        %2651 = vmatprep.subr.mxu0 %v1192
        %2652 = vmatpush1.msra.mxu0 %v1191
        %2653 = vmatprep.subr.mxu0 %v1202
        %2654 = vmatpush1.msra.mxu0 %v1201
        %2655 = vmatprep.subr.mxu0 %v1212
        %2656 = vmatpush1.msra.mxu0 %v1211
        %2657 = vmatprep.subr.mxu0 %v1222
        %2658 = vmatpush1.msra.mxu0 %v1221
        %2659 = vmatprep.subr.mxu0 %v1232
        %2660 = vmatpush1.msra.mxu0 %v1231
        %2661 = vmatprep.subr.mxu0 %v1242
        %2662 = vmatpush1.msra.mxu0 %v1241
        %2663 = vmatprep.subr.mxu0 %v1252
        %2664 = vmatpush1.msra.mxu0 %v1251
        %2665 = vmatprep.subr.mxu0 %v1262
        %2666 = vmatpush1.msra.mxu0 %v1261
        %2667 = vmatprep.subr.mxu0 %v1272
        %2668 = vmatpush1.msra.mxu0 %v1271
        %2669 = vmatprep.subr.mxu0 %v1282
        %2670 = vmatpush1.msra.mxu0 %v1281
        %2671 = vmatprep.subr.mxu0 %v1292
        %2672 = vmatpush1.msra.mxu0 %v1291
        %2673 = vmatprep.mubr.f32.mxu0 %v332
        %2674 = vmatmul.mubr.f32.gmra.mrb[0].mxu0 %v331
        %v2675 = vpop.f32.mrb[0].mxu0
        %v2676 = vadd.f32 %v2605, %v2675
        %v2677 = vpop.f32.mrb[0].mxu0
        %v2678 = vadd.f32 %v2607, %v2677
        %2679 = vdwg.mxu0
        %2680 = vmatprep.subr.mxu0 %v1302
        %2681 = vmatpush1.msra.mxu0 %v1301
        %2682 = vmatprep.subr.mxu0 %v1312
        %2683 = vmatpush1.msra.mxu0 %v1311
        %2684 = vmatprep.subr.mxu0 %v1322
        %2685 = vmatpush1.msra.mxu0 %v1321
        %2686 = vmatprep.subr.mxu0 %v1332
        %2687 = vmatpush1.msra.mxu0 %v1331
        %2688 = vmatprep.subr.mxu0 %v1342
        %2689 = vmatpush1.msra.mxu0 %v1341
        %2690 = vmatprep.subr.mxu0 %v1352
        %2691 = vmatpush1.msra.mxu0 %v1351
        %2692 = vmatprep.subr.mxu0 %v1362
        %2693 = vmatpush1.msra.mxu0 %v1361
        %2694 = vmatprep.subr.mxu0 %v1372
        %2695 = vmatpush1.msra.mxu0 %v1371
        %2696 = vmatprep.subr.mxu0 %v1382
        %2697 = vmatpush1.msra.mxu0 %v1381
        %2698 = vmatprep.subr.mxu0 %v1392
        %2699 = vmatpush1.msra.mxu0 %v1391
        %2700 = vmatprep.subr.mxu0 %v1402
        %2701 = vmatpush1.msra.mxu0 %v1401
        %2702 = vmatprep.subr.mxu0 %v1412
        %2703 = vmatpush1.msra.mxu0 %v1411
        %2704 = vmatprep.subr.mxu0 %v1422
        %2705 = vmatpush1.msra.mxu0 %v1421
        %2706 = vmatprep.subr.mxu0 %v1432
        %2707 = vmatpush1.msra.mxu0 %v1431
        %2708 = vmatprep.subr.mxu0 %v1442
        %2709 = vmatpush1.msra.mxu0 %v1441
        %2710 = vmatprep.subr.mxu0 %v1452
        %2711 = vmatpush1.msra.mxu0 %v1451
        %2712 = vmatprep.subr.mxu0 %v1462
        %2713 = vmatpush1.msra.mxu0 %v1461
        %2714 = vmatprep.subr.mxu0 %v1472
        %2715 = vmatpush1.msra.mxu0 %v1471
        %2716 = vmatprep.subr.mxu0 %v1482
        %2717 = vmatpush1.msra.mxu0 %v1481
        %2718 = vmatprep.subr.mxu0 %v1492
        %2719 = vmatpush1.msra.mxu0 %v1491
        %2720 = vmatprep.subr.mxu0 %v1502
        %2721 = vmatpush1.msra.mxu0 %v1501
        %2722 = vmatprep.subr.mxu0 %v1512
        %2723 = vmatpush1.msra.mxu0 %v1511
        %2724 = vmatprep.subr.mxu0 %v1522
        %2725 = vmatpush1.msra.mxu0 %v1521
        %2726 = vmatprep.subr.mxu0 %v1532
        %2727 = vmatpush1.msra.mxu0 %v1531
        %2728 = vmatprep.subr.mxu0 %v1542
        %2729 = vmatpush1.msra.mxu0 %v1541
        %2730 = vmatprep.subr.mxu0 %v1552
        %2731 = vmatpush1.msra.mxu0 %v1551
        %2732 = vmatprep.subr.mxu0 %v1562
        %2733 = vmatpush1.msra.mxu0 %v1561
        %2734 = vmatprep.subr.mxu0 %v1572
        %2735 = vmatpush1.msra.mxu0 %v1571
        %2736 = vmatprep.subr.mxu0 %v1582
        %2737 = vmatpush1.msra.mxu0 %v1581
        %2738 = vmatprep.subr.mxu0 %v1592
        %2739 = vmatpush1.msra.mxu0 %v1591
        %2740 = vmatprep.subr.mxu0 %v1602
        %2741 = vmatpush1.msra.mxu0 %v1601
        %2742 = vmatprep.subr.mxu0 %v1612
        %2743 = vmatpush1.msra.mxu0 %v1611
        %2744 = vmatprep.mubr.f32.mxu0 %v334
        %2745 = vmatmul.mubr.f32.gmra.mrb[0].mxu0 %v333
        %v2746 = vpop.f32.mrb[0].mxu0
        %v2747 = vadd.f32 %v2676, %v2746
        %v2748 = vpop.f32.mrb[0].mxu0
        %v2749 = vadd.f32 %v2678, %v2748
        %2750 = vdwg.mxu0
        %2751 = vmatprep.subr.mxu0 %v344
        %2752 = vmatpush1.msra.mxu0 %v343
        %2753 = vmatprep.subr.mxu0 %v354
        %2754 = vmatpush1.msra.mxu0 %v353
        %2755 = vmatprep.subr.mxu0 %v364
        %2756 = vmatpush1.msra.mxu0 %v363
        %2757 = vmatprep.subr.mxu0 %v374
        %2758 = vmatpush1.msra.mxu0 %v373
        %2759 = vmatprep.subr.mxu0 %v384
        %2760 = vmatpush1.msra.mxu0 %v383
        %2761 = vmatprep.subr.mxu0 %v394
        %2762 = vmatpush1.msra.mxu0 %v393
        %2763 = vmatprep.subr.mxu0 %v404
        %2764 = vmatpush1.msra.mxu0 %v403
        %2765 = vmatprep.subr.mxu0 %v414
        %2766 = vmatpush1.msra.mxu0 %v413
        %2767 = vmatprep.subr.mxu0 %v424
        %2768 = vmatpush1.msra.mxu0 %v423
        %2769 = vmatprep.subr.mxu0 %v434
        %2770 = vmatpush1.msra.mxu0 %v433
        %2771 = vmatprep.subr.mxu0 %v444
        %2772 = vmatpush1.msra.mxu0 %v443
        %2773 = vmatprep.subr.mxu0 %v454
        %2774 = vmatpush1.msra.mxu0 %v453
        %2775 = vmatprep.subr.mxu0 %v464
        %2776 = vmatpush1.msra.mxu0 %v463
        %2777 = vmatprep.subr.mxu0 %v474
        %2778 = vmatpush1.msra.mxu0 %v473
        %2779 = vmatprep.subr.mxu0 %v484
        %2780 = vmatpush1.msra.mxu0 %v483
        %2781 = vmatprep.subr.mxu0 %v494
        %2782 = vmatpush1.msra.mxu0 %v493
        %2783 = vmatprep.subr.mxu0 %v504
        %2784 = vmatpush1.msra.mxu0 %v503
        %2785 = vmatprep.subr.mxu0 %v514
        %2786 = vmatpush1.msra.mxu0 %v513
        %2787 = vmatprep.subr.mxu0 %v524
        %2788 = vmatpush1.msra.mxu0 %v523
        %2789 = vmatprep.subr.mxu0 %v534
        %2790 = vmatpush1.msra.mxu0 %v533
        %2791 = vmatprep.subr.mxu0 %v544
        %2792 = vmatpush1.msra.mxu0 %v543
        %2793 = vmatprep.subr.mxu0 %v554
        %2794 = vmatpush1.msra.mxu0 %v553
        %2795 = vmatprep.subr.mxu0 %v564
        %2796 = vmatpush1.msra.mxu0 %v563
        %2797 = vmatprep.subr.mxu0 %v574
        %2798 = vmatpush1.msra.mxu0 %v573
        %2799 = vmatprep.subr.mxu0 %v584
        %2800 = vmatpush1.msra.mxu0 %v583
        %2801 = vmatprep.subr.mxu0 %v594
        %2802 = vmatpush1.msra.mxu0 %v593
        %2803 = vmatprep.subr.mxu0 %v604
        %2804 = vmatpush1.msra.mxu0 %v603
        %2805 = vmatprep.subr.mxu0 %v614
        %2806 = vmatpush1.msra.mxu0 %v613
        %2807 = vmatprep.subr.mxu0 %v624
        %2808 = vmatpush1.msra.mxu0 %v623
        %2809 = vmatprep.subr.mxu0 %v634
        %2810 = vmatpush1.msra.mxu0 %v633
        %2811 = vmatprep.subr.mxu0 %v644
        %2812 = vmatpush1.msra.mxu0 %v643
        %2813 = vmatprep.subr.mxu0 %v654
        %2814 = vmatpush1.msra.mxu0 %v653
        %2815 = vmatprep.mubr.f32.mxu0 %v328
        %2816 = vmatmul.mubr.f32.gmra.mrb[0].mxu0 %v327
        %v2817 = vpop.f32.mrb[0].mxu0
        %v2818 = vadd.f32 0.0, %v2817
        %v2819 = vpop.f32.mrb[0].mxu0
        %v2820 = vadd.f32 0.0, %v2819
        %2821 = vdwg.mxu0
        %2822 = vmatprep.subr.mxu0 %v664
        %2823 = vmatpush1.msra.mxu0 %v663
        %2824 = vmatprep.subr.mxu0 %v674
        %2825 = vmatpush1.msra.mxu0 %v673
        %2826 = vmatprep.subr.mxu0 %v684
        %2827 = vmatpush1.msra.mxu0 %v683
        %2828 = vmatprep.subr.mxu0 %v694
        %2829 = vmatpush1.msra.mxu0 %v693
        %2830 = vmatprep.subr.mxu0 %v704
        %2831 = vmatpush1.msra.mxu0 %v703
        %2832 = vmatprep.subr.mxu0 %v714
        %2833 = vmatpush1.msra.mxu0 %v713
        %2834 = vmatprep.subr.mxu0 %v724
        %2835 = vmatpush1.msra.mxu0 %v723
        %2836 = vmatprep.subr.mxu0 %v734
        %2837 = vmatpush1.msra.mxu0 %v733
        %2838 = vmatprep.subr.mxu0 %v744
        %2839 = vmatpush1.msra.mxu0 %v743
        %2840 = vmatprep.subr.mxu0 %v754
        %2841 = vmatpush1.msra.mxu0 %v753
        %2842 = vmatprep.subr.mxu0 %v764
        %2843 = vmatpush1.msra.mxu0 %v763
        %2844 = vmatprep.subr.mxu0 %v774
        %2845 = vmatpush1.msra.mxu0 %v773
        %2846 = vmatprep.subr.mxu0 %v784
        %2847 = vmatpush1.msra.mxu0 %v783
        %2848 = vmatprep.subr.mxu0 %v794
        %2849 = vmatpush1.msra.mxu0 %v793
        %2850 = vmatprep.subr.mxu0 %v804
        %2851 = vmatpush1.msra.mxu0 %v803
        %2852 = vmatprep.subr.mxu0 %v814
        %2853 = vmatpush1.msra.mxu0 %v813
        %2854 = vmatprep.subr.mxu0 %v824
        %2855 = vmatpush1.msra.mxu0 %v823
        %2856 = vmatprep.subr.mxu0 %v834
        %2857 = vmatpush1.msra.mxu0 %v833
        %2858 = vmatprep.subr.mxu0 %v844
        %2859 = vmatpush1.msra.mxu0 %v843
        %2860 = vmatprep.subr.mxu0 %v854
        %2861 = vmatpush1.msra.mxu0 %v853
        %2862 = vmatprep.subr.mxu0 %v864
        %2863 = vmatpush1.msra.mxu0 %v863
        %2864 = vmatprep.subr.mxu0 %v874
        %2865 = vmatpush1.msra.mxu0 %v873
        %2866 = vmatprep.subr.mxu0 %v884
        %2867 = vmatpush1.msra.mxu0 %v883
        %2868 = vmatprep.subr.mxu0 %v894
        %2869 = vmatpush1.msra.mxu0 %v893
        %2870 = vmatprep.subr.mxu0 %v904
        %2871 = vmatpush1.msra.mxu0 %v903
        %2872 = vmatprep.subr.mxu0 %v914
        %2873 = vmatpush1.msra.mxu0 %v913
        %2874 = vmatprep.subr.mxu0 %v924
        %2875 = vmatpush1.msra.mxu0 %v923
        %2876 = vmatprep.subr.mxu0 %v934
        %2877 = vmatpush1.msra.mxu0 %v933
        %2878 = vmatprep.subr.mxu0 %v944
        %2879 = vmatpush1.msra.mxu0 %v943
        %2880 = vmatprep.subr.mxu0 %v954
        %2881 = vmatpush1.msra.mxu0 %v953
        %2882 = vmatprep.subr.mxu0 %v964
        %2883 = vmatpush1.msra.mxu0 %v963
        %2884 = vmatprep.subr.mxu0 %v974
        %2885 = vmatpush1.msra.mxu0 %v973
        %2886 = vmatprep.mubr.f32.mxu0 %v330
        %2887 = vmatmul.mubr.f32.gmra.mrb[0].mxu0 %v329
        %v2888 = vpop.f32.mrb[0].mxu0
        %v2889 = vadd.f32 %v2818, %v2888
        %v2890 = vpop.f32.mrb[0].mxu0
        %v2891 = vadd.f32 %v2820, %v2890
        %2892 = vdwg.mxu0
        %2893 = vmatprep.subr.mxu0 %v984
        %2894 = vmatpush1.msra.mxu0 %v983
        %2895 = vmatprep.subr.mxu0 %v994
        %2896 = vmatpush1.msra.mxu0 %v993
        %2897 = vmatprep.subr.mxu0 %v1004
        %2898 = vmatpush1.msra.mxu0 %v1003
        %2899 = vmatprep.subr.mxu0 %v1014
        %2900 = vmatpush1.msra.mxu0 %v1013
        %2901 = vmatprep.subr.mxu0 %v1024
        %2902 = vmatpush1.msra.mxu0 %v1023
        %2903 = vmatprep.subr.mxu0 %v1034
        %2904 = vmatpush1.msra.mxu0 %v1033
        %2905 = vmatprep.subr.mxu0 %v1044
        %2906 = vmatpush1.msra.mxu0 %v1043
        %2907 = vmatprep.subr.mxu0 %v1054
        %2908 = vmatpush1.msra.mxu0 %v1053
        %2909 = vmatprep.subr.mxu0 %v1064
        %2910 = vmatpush1.msra.mxu0 %v1063
        %2911 = vmatprep.subr.mxu0 %v1074
        %2912 = vmatpush1.msra.mxu0 %v1073
        %2913 = vmatprep.subr.mxu0 %v1084
        %2914 = vmatpush1.msra.mxu0 %v1083
        %2915 = vmatprep.subr.mxu0 %v1094
        %2916 = vmatpush1.msra.mxu0 %v1093
        %2917 = vmatprep.subr.mxu0 %v1104
        %2918 = vmatpush1.msra.mxu0 %v1103
        %2919 = vmatprep.subr.mxu0 %v1114
        %2920 = vmatpush1.msra.mxu0 %v1113
        %2921 = vmatprep.subr.mxu0 %v1124
        %2922 = vmatpush1.msra.mxu0 %v1123
        %2923 = vmatprep.subr.mxu0 %v1134
        %2924 = vmatpush1.msra.mxu0 %v1133
        %2925 = vmatprep.subr.mxu0 %v1144
        %2926 = vmatpush1.msra.mxu0 %v1143
        %2927 = vmatprep.subr.mxu0 %v1154
        %2928 = vmatpush1.msra.mxu0 %v1153
        %2929 = vmatprep.subr.mxu0 %v1164
        %2930 = vmatpush1.msra.mxu0 %v1163
        %2931 = vmatprep.subr.mxu0 %v1174
        %2932 = vmatpush1.msra.mxu0 %v1173
        %2933 = vmatprep.subr.mxu0 %v1184
        %2934 = vmatpush1.msra.mxu0 %v1183
        %2935 = vmatprep.subr.mxu0 %v1194
        %2936 = vmatpush1.msra.mxu0 %v1193
        %2937 = vmatprep.subr.mxu0 %v1204
        %2938 = vmatpush1.msra.mxu0 %v1203
        %2939 = vmatprep.subr.mxu0 %v1214
        %2940 = vmatpush1.msra.mxu0 %v1213
        %2941 = vmatprep.subr.mxu0 %v1224
        %2942 = vmatpush1.msra.mxu0 %v1223
        %2943 = vmatprep.subr.mxu0 %v1234
        %2944 = vmatpush1.msra.mxu0 %v1233
        %2945 = vmatprep.subr.mxu0 %v1244
        %2946 = vmatpush1.msra.mxu0 %v1243
        %2947 = vmatprep.subr.mxu0 %v1254
        %2948 = vmatpush1.msra.mxu0 %v1253
        %2949 = vmatprep.subr.mxu0 %v1264
        %2950 = vmatpush1.msra.mxu0 %v1263
        %2951 = vmatprep.subr.mxu0 %v1274
        %2952 = vmatpush1.msra.mxu0 %v1273
        %2953 = vmatprep.subr.mxu0 %v1284
        %2954 = vmatpush1.msra.mxu0 %v1283
        %2955 = vmatprep.subr.mxu0 %v1294
        %2956 = vmatpush1.msra.mxu0 %v1293
        %2957 = vmatprep.mubr.f32.mxu0 %v332
        %2958 = vmatmul.mubr.f32.gmra.mrb[0].mxu0 %v331
        %v2959 = vpop.f32.mrb[0].mxu0
        %v2960 = vadd.f32 %v2889, %v2959
        %v2961 = vpop.f32.mrb[0].mxu0
        %v2962 = vadd.f32 %v2891, %v2961
        %2963 = vdwg.mxu0
        %2964 = vmatprep.subr.mxu0 %v1304
        %2965 = vmatpush1.msra.mxu0 %v1303
        %2966 = vmatprep.subr.mxu0 %v1314
        %2967 = vmatpush1.msra.mxu0 %v1313
        %2968 = vmatprep.subr.mxu0 %v1324
        %2969 = vmatpush1.msra.mxu0 %v1323
        %2970 = vmatprep.subr.mxu0 %v1334
        %2971 = vmatpush1.msra.mxu0 %v1333
        %2972 = vmatprep.subr.mxu0 %v1344
        %2973 = vmatpush1.msra.mxu0 %v1343
        %2974 = vmatprep.subr.mxu0 %v1354
        %2975 = vmatpush1.msra.mxu0 %v1353
        %2976 = vmatprep.subr.mxu0 %v1364
        %2977 = vmatpush1.msra.mxu0 %v1363
        %2978 = vmatprep.subr.mxu0 %v1374
        %2979 = vmatpush1.msra.mxu0 %v1373
        %2980 = vmatprep.subr.mxu0 %v1384
        %2981 = vmatpush1.msra.mxu0 %v1383
        %2982 = vmatprep.subr.mxu0 %v1394
        %2983 = vmatpush1.msra.mxu0 %v1393
        %2984 = vmatprep.subr.mxu0 %v1404
        %2985 = vmatpush1.msra.mxu0 %v1403
        %2986 = vmatprep.subr.mxu0 %v1414
        %2987 = vmatpush1.msra.mxu0 %v1413
        %2988 = vmatprep.subr.mxu0 %v1424
        %2989 = vmatpush1.msra.mxu0 %v1423
        %2990 = vmatprep.subr.mxu0 %v1434
        %2991 = vmatpush1.msra.mxu0 %v1433
        %2992 = vmatprep.subr.mxu0 %v1444
        %2993 = vmatpush1.msra.mxu0 %v1443
        %2994 = vmatprep.subr.mxu0 %v1454
        %2995 = vmatpush1.msra.mxu0 %v1453
        %2996 = vmatprep.subr.mxu0 %v1464
        %2997 = vmatpush1.msra.mxu0 %v1463
        %2998 = vmatprep.subr.mxu0 %v1474
        %2999 = vmatpush1.msra.mxu0 %v1473
        %3000 = vmatprep.subr.mxu0 %v1484
        %3001 = vmatpush1.msra.mxu0 %v1483
        %3002 = vmatprep.subr.mxu0 %v1494
        %3003 = vmatpush1.msra.mxu0 %v1493
        %3004 = vmatprep.subr.mxu0 %v1504
        %3005 = vmatpush1.msra.mxu0 %v1503
        %3006 = vmatprep.subr.mxu0 %v1514
        %3007 = vmatpush1.msra.mxu0 %v1513
        %3008 = vmatprep.subr.mxu0 %v1524
        %3009 = vmatpush1.msra.mxu0 %v1523
        %3010 = vmatprep.subr.mxu0 %v1534
        %3011 = vmatpush1.msra.mxu0 %v1533
        %3012 = vmatprep.subr.mxu0 %v1544
        %3013 = vmatpush1.msra.mxu0 %v1543
        %3014 = vmatprep.subr.mxu0 %v1554
        %3015 = vmatpush1.msra.mxu0 %v1553
        %3016 = vmatprep.subr.mxu0 %v1564
        %3017 = vmatpush1.msra.mxu0 %v1563
        %3018 = vmatprep.subr.mxu0 %v1574
        %3019 = vmatpush1.msra.mxu0 %v1573
        %3020 = vmatprep.subr.mxu0 %v1584
        %3021 = vmatpush1.msra.mxu0 %v1583
        %3022 = vmatprep.subr.mxu0 %v1594
        %3023 = vmatpush1.msra.mxu0 %v1593
        %3024 = vmatprep.subr.mxu0 %v1604
        %3025 = vmatpush1.msra.mxu0 %v1603
        %3026 = vmatprep.subr.mxu0 %v1614
        %3027 = vmatpush1.msra.mxu0 %v1613
        %3028 = vmatprep.mubr.f32.mxu0 %v334
        %3029 = vmatmul.mubr.f32.gmra.mrb[0].mxu0 %v333
        %v3030 = vpop.f32.mrb[0].mxu0
        %v3031 = vadd.f32 %v2960, %v3030
        %v3032 = vpop.f32.mrb[0].mxu0
        %v3033 = vadd.f32 %v2962, %v3032
        %3034 = vdwg.mxu0
        %v3035 = vadd.f32 %v317, %v1895
        %v3036 = vadd.f32 %v318, %v1897
        %v3037 = vadd.f32 %v319, %v2179
        %v3038 = vadd.f32 %v320, %v2181
        %v3039 = vadd.f32 %v321, %v2463
        %v3040 = vadd.f32 %v322, %v2465
        %v3041 = vadd.f32 %v323, %v2747
        %v3042 = vadd.f32 %v324, %v2749
        %v3043 = vadd.f32 %v325, %v3031
        %v3044 = vadd.f32 %v326, %v3033
        %3045 = vst [vmem:[#allocation2] sm:$0xff] %v3035
        %3046 = vst [vmem:[#allocation2 + $0x8] sm:$0xff] %v3036
        %3047 = vst [vmem:[#allocation2 + $0x10] sm:$0xff] %v3037
        %3048 = vst [vmem:[#allocation2 + $0x18] sm:$0xff] %v3038
        %3049 = vst [vmem:[#allocation2 + $0x20] sm:$0xff] %v3039
        %3050 = vst [vmem:[#allocation2 + $0x28] sm:$0xff] %v3040
        %3051 = vst [vmem:[#allocation2 + $0x30] sm:$0xff] %v3041
        %3052 = vst [vmem:[#allocation2 + $0x38] sm:$0xff] %v3042
        %3053 = vst [vmem:[#allocation2 + $0x40] sm:$0xff] %v3043
        %3054 = vst [vmem:[#allocation2 + $0x48] sm:$0xff] %v3044
        %p3055 = scmp.eq.s32.totalorder %s27, 4
        // Predicated region
        $region45: #{my_nn_model_forward.5} parent=31 // pred_check
          %p3056 = pneg %p3055
        $region46: #{my_nn_model_forward.5} parent=31 // pred_check_branch
          %3058 = sbr.rel (%p3056) target = $region48
        $region47: #{my_nn_model_forward.5} parent=31 // pred_region
          %v3059 = vld [vmem:[#allocation2] sm:$0xff]
          %v3060 = vld [vmem:[#allocation2 + $0x8] sm:$0xff]
          %v3061 = vld [vmem:[#allocation2 + $0x10] sm:$0xff]
          %v3062 = vld [vmem:[#allocation2 + $0x18] sm:$0xff]
          %v3063 = vld [vmem:[#allocation2 + $0x20] sm:$0xff]
          %v3064 = vld [vmem:[#allocation2 + $0x28] sm:$0xff]
          %v3065 = vld [vmem:[#allocation2 + $0x30] sm:$0xff]
          %v3066 = vld [vmem:[#allocation2 + $0x38] sm:$0xff]
          %v3067 = vld [vmem:[#allocation2 + $0x40] sm:$0xff]
          %v3068 = vld [vmem:[#allocation2 + $0x48] sm:$0xff]
          %v3069 = vld [vmem:[%s239] sm:$0xff]
          %v3070 = vld [vmem:[%s239 + $0x8] sm:$0x3]
          %v3073 = vlaneseq
          %v3074 = vshrl.u32 %v3073, 7
          %v3075 = vsub.s32 0, %v3074
          %v3076 = vrot.slane %v3069, %v3075
          %v3077 = vlaneseq
          %v3078 = vshrl.u32 %v3077, 7
          %v3079 = vsub.s32 1, %v3078
          %v3080 = vrot.slane %v3069, %v3079
          %v3081 = vlaneseq
          %v3082 = vshrl.u32 %v3081, 7
          %v3083 = vsub.s32 2, %v3082
          %v3084 = vrot.slane %v3069, %v3083
          %v3085 = vlaneseq
          %v3086 = vshrl.u32 %v3085, 7
          %v3087 = vsub.s32 3, %v3086
          %v3088 = vrot.slane %v3069, %v3087
          %v3089 = vlaneseq
          %v3090 = vshrl.u32 %v3089, 7
          %v3091 = vsub.s32 4, %v3090
          %v3092 = vrot.slane %v3069, %v3091
          %v3093 = vlaneseq
          %v3094 = vshrl.u32 %v3093, 7
          %v3095 = vsub.s32 5, %v3094
          %v3096 = vrot.slane %v3069, %v3095
          %v3097 = vlaneseq
          %v3098 = vshrl.u32 %v3097, 7
          %v3099 = vsub.s32 6, %v3098
          %v3100 = vrot.slane %v3069, %v3099
          %v3101 = vlaneseq
          %v3102 = vshrl.u32 %v3101, 7
          %v3103 = vsub.s32 7, %v3102
          %v3104 = vrot.slane %v3069, %v3103
          %v3105 = vlaneseq
          %v3106 = vshrl.u32 %v3105, 7
          %v3107 = vsub.s32 0, %v3106
          %v3108 = vrot.slane %v3070, %v3107
          %v3109 = vlaneseq
          %v3110 = vshrl.u32 %v3109, 7
          %v3111 = vsub.s32 1, %v3110
          %v3112 = vrot.slane %v3070, %v3111
          %v3123 = vadd.f32 %v3059, %v3076
          %v3124 = vadd.f32 %v3060, %v3080
          %v3125 = vadd.f32 %v3061, %v3084
          %v3126 = vadd.f32 %v3062, %v3088
          %v3127 = vadd.f32 %v3063, %v3092
          %v3128 = vadd.f32 %v3064, %v3096
          %v3129 = vadd.f32 %v3065, %v3100
          %v3130 = vadd.f32 %v3066, %v3104
          %v3131 = vadd.f32 %v3067, %v3108
          %v3132 = vadd.f32 %v3068, %v3112
          %v3133 = vmul.f32 %v3123, 0.5
          %v3134 = vmul.f32 %v3124, 0.5
          %v3135 = vmul.f32 %v3125, 0.5
          %v3136 = vmul.f32 %v3126, 0.5
          %v3137 = vmul.f32 %v3127, 0.5
          %v3138 = vmul.f32 %v3128, 0.5
          %v3139 = vmul.f32 %v3129, 0.5
          %v3140 = vmul.f32 %v3130, 0.5
          %v3141 = vmul.f32 %v3131, 0.5
          %v3142 = vmul.f32 %v3132, 0.5
          %v3143 = vmul.f32 %v3123, 0.70710677
          %v3144 = vmul.f32 %v3124, 0.70710677
          %v3145 = vmul.f32 %v3125, 0.70710677
          %v3146 = vmul.f32 %v3126, 0.70710677
          %v3147 = vmul.f32 %v3127, 0.70710677
          %v3148 = vmul.f32 %v3128, 0.70710677
          %v3149 = vmul.f32 %v3129, 0.70710677
          %v3150 = vmul.f32 %v3130, 0.70710677
          %v3151 = vmul.f32 %v3131, 0.70710677
          %v3152 = vmul.f32 %v3132, 0.70710677
          %v3153 = verf.f32.pop %v3143
          %v3154 = verf.f32.pop %v3144
          %v3155 = verf.f32.pop %v3145
          %v3156 = verf.f32.pop %v3146
          %v3157 = verf.f32.pop %v3147
          %v3158 = verf.f32.pop %v3148
          %v3159 = verf.f32.pop %v3149
          %v3160 = verf.f32.pop %v3150
          %v3161 = verf.f32.pop %v3151
          %v3162 = verf.f32.pop %v3152
          %v3163 = vadd.f32 %v3153, 1.0
          %v3164 = vadd.f32 %v3154, 1.0
          %v3165 = vadd.f32 %v3155, 1.0
          %v3166 = vadd.f32 %v3156, 1.0
          %v3167 = vadd.f32 %v3157, 1.0
          %v3168 = vadd.f32 %v3158, 1.0
          %v3169 = vadd.f32 %v3159, 1.0
          %v3170 = vadd.f32 %v3160, 1.0
          %v3171 = vadd.f32 %v3161, 1.0
          %v3172 = vadd.f32 %v3162, 1.0
          %v3173 = vmul.f32 %v3133, %v3163
          %v3174 = vmul.f32 %v3134, %v3164
          %v3175 = vmul.f32 %v3135, %v3165
          %v3176 = vmul.f32 %v3136, %v3166
          %v3177 = vmul.f32 %v3137, %v3167
          %v3178 = vmul.f32 %v3138, %v3168
          %v3179 = vmul.f32 %v3139, %v3169
          %v3180 = vmul.f32 %v3140, %v3170
          %v3181 = vmul.f32 %v3141, %v3171
          %v3182 = vmul.f32 %v3142, %v3172
          %3183 = vst [vmem:[%s301] sm:$0xff] %v3173
          %3184 = vst [vmem:[%s301 + $0x8] sm:$0xff] %v3174
          %3185 = vst [vmem:[%s301 + $0x10] sm:$0xff] %v3175
          %3186 = vst [vmem:[%s301 + $0x18] sm:$0xff] %v3176
          %3187 = vst [vmem:[%s301 + $0x20] sm:$0xff] %v3177
          %3188 = vst [vmem:[%s301 + $0x28] sm:$0xff] %v3178
          %3189 = vst [vmem:[%s301 + $0x30] sm:$0xff] %v3179
          %3190 = vst [vmem:[%s301 + $0x38] sm:$0xff] %v3180
          %3191 = vst [vmem:[%s301 + $0x40] sm:$0xff] %v3181
          %3192 = vst [vmem:[%s301 + $0x48] sm:$0xff] %v3182
        $region48: #{my_nn_model_forward.5} parent=31 // pred_fallthru
          _
        %s3193 = smul.u32 10, %s26
        %p3194 = scmp.lt.s32.totalorder %s25, 0
        %s3195 = scalar_select %p3194, %s25, 0
        %p3196 = scmp.lt.s32.totalorder %s3193, 19
        %s3197 = scalar_select %p3196, %s3193, 19
        %s3198 = smul.addr %s3195, 20
        %s3199 = sadd.s32 %s3197, %s3198
        %s3200 = smul.addr %s3199, 8
        %s3201 = scalar_lea.vmem %s3, %s3200
        // Predicated region
        $region49: #{my_nn_model_forward.5} parent=31 // pred_check
          %p3202 = pneg %p141
        $region50: #{my_nn_model_forward.5} parent=31 // pred_check_branch
          %3204 = sbr.rel (%p3202) target = $region52
        $region51: #{my_nn_model_forward.5} parent=31 // pred_region
          %s3205 = smul.u32 10, %s26
        $region52: #{my_nn_model_forward.5} parent=31 // pred_fallthru
          _
      $region32: #{my_nn_model_forward.5} parent=5 // pred_fallthru
        _
      %p3206 = scmp.le.s32.totalorder 2, %s15
      // Predicated region
      $region53: #{my_nn_model_forward.5} parent=5 // pred_check
        %p3207 = pneg %p3206
      $region54: #{my_nn_model_forward.5} parent=5 // pred_check_branch
        %3209 = sbr.rel (%p3207) target = $region56
      $region55: #{my_nn_model_forward.5} parent=5 // pred_region
        %s3210 = ssub.s32 %s15, 2
        // Predicated region
        $region57: #{my_nn_model_forward.5} parent=55 // pred_check
          %p3211 = pneg %p147
        $region58: #{my_nn_model_forward.5} parent=55 // pred_check_branch
          %3213 = sbr.rel (%p3211) target = $region60
        $region59: #{my_nn_model_forward.5} parent=55 // pred_region
          %s3214 = smul.u32 10, %s29
          %p3215 = scmp.lt.s32.totalorder %s28, 0
          %s3216 = scalar_select %p3215, %s28, 0
          %p3217 = scmp.lt.s32.totalorder %s3214, 19
          %s3218 = scalar_select %p3217, %s3214, 19
          %s3219 = smul.addr %s3216, 20
          %s3220 = sadd.s32 %s3218, %s3219
          %s3221 = smul.addr %s3220, 8
          %s3222 = scalar_lea.vmem %s3, %s3221
        $region60: #{my_nn_model_forward.5} parent=55 // pred_fallthru
          _
      $region56: #{my_nn_model_forward.5} parent=5 // pred_fallthru
        _
    $region6: #{my_nn_model_forward.5} parent=1 // loop_footer
      %s19 = sadd.s32 1, %s15
    $region7: #{my_nn_model_forward.5} parent=1 // loop_footer_branch
      %14 = sbr.rel target = $region3
    $region8: #{my_nn_model_forward.5} parent=1 // loop_exit
      _
    %3223 = vsyncpa [#allocation4], 1
    %s3224 = scalar_lea.sflag [#allocation4], 1
    %3225 = vsyncpa %s3224, 1
    %3226 = vsyncpa [#allocation6], 1
    %s3227 = scalar_lea.sflag [#allocation6], 1
    %3228 = vsyncpa %s3227, 1

</llo_original>
